<compile_context>
chip_gen: v7x
topology: tpu7x:2x2x1
jax: 0.10.0
libtpu: 0.0.40
codegen_flags: <defaults>
</compile_context>

<pallas_src>
import jax
import jax.numpy as jnp
from jax.experimental import pallas as pl
from jax.experimental.pallas import tpu as pltpu

SPECTRUM_LEN = 2101             # fixed by the module (self.spectrum_length)
SPECTRUM_PAD = 2176             # 17 * 128  (lane-aligned padding)
HIDDEN_CORR = 4 * SPECTRUM_LEN  # 8404
HIDDEN_PAD = 8448               # 66 * 128
BATCH_PAD = 8                   # sublane-aligned batch padding for the big matmuls
TK = 768                        # K-chunk of the fused correction kernel (8448/768 = 11 steps)

# RTM parameter ranges from the module (order defines the latent layout):
#   0:cab 1:cw 2:cm 3:LAI 4:cp 5:cbc 6:car 7:anth
RTM_MIN = jnp.array([4.44830458, 4.8333333e-05, 1.36666667e-05, 0.063333333,
                     3.1320099999999997e-06, 0.001350791, 1.182576236,
                     0.561035015], dtype=jnp.float32)
RTM_MAX = jnp.array([229.4974769, 0.08062008166, 0.06638073277, 8.77,
                     0.00420423377267, 0.046180855, 40.44321686,
                     2.981116889], dtype=jnp.float32)


# ----------------------------------------------------------------------------
# Encoder kernel: Linear-LN-ReLU x3 -> Linear, plus the para[:,5] adjustment.
# Single-block kernel; all operands fit trivially in VMEM at these sizes.
# ----------------------------------------------------------------------------
def _encoder_kernel(x_ref, w1, b1, g1, be1, w2, b2, g2, be2,
                    w3, b3, g3, be3, w4, b4, enc_ref, para_ref):
    def ln_relu(h, g, be):
        mu = jnp.mean(h, axis=-1, keepdims=True)
        var = jnp.mean((h - mu) ** 2, axis=-1, keepdims=True)
        h = (h - mu) * jax.lax.rsqrt(var + 1e-5) * g[...] + be[...]
        return jnp.maximum(h, 0.0)

    h = jnp.dot(x_ref[...], w1[...], preferred_element_type=jnp.float32) + b1[...]
    h = ln_relu(h, g1, be1)
    h = jnp.dot(h, w2[...], preferred_element_type=jnp.float32) + b2[...]
    h = ln_relu(h, g2, be2)
    h = jnp.dot(h, w3[...], preferred_element_type=jnp.float32) + b3[...]
    h = ln_relu(h, g3, be3)
    enc = jnp.dot(h, w4[...], preferred_element_type=jnp.float32) + b4[...]
    enc_ref[...] = enc

    # para_tensor = encoded.clone(); para_tensor[:, 5] = para[:, 2] - para[:, 4]
    col = jax.lax.broadcasted_iota(jnp.int32, enc.shape, 1)
    para_ref[...] = jnp.where(col == 5, enc[:, 2:3] - enc[:, 4:5], enc)


def encoder_forward(x, p):
    B = x.shape[0]
    H = p["w4"].shape[1]
    out_shapes = (jax.ShapeDtypeStruct((B, H), jnp.float32),
                  jax.ShapeDtypeStruct((B, H), jnp.float32))
    return pl.pallas_call(_encoder_kernel, out_shape=out_shapes)(
        x, p["w1"], p["b1"], p["g1"], p["be1"],
        p["w2"], p["b2"], p["g2"], p["be2"],
        p["w3"], p["b3"], p["g3"], p["be3"],
        p["w4"], p["b4"])


# ----------------------------------------------------------------------------
# Fused RTM-surrogate + correction MLP kernel.
#   grid = (HIDDEN_PAD // TK,)  -- reduction over the 8448 hidden features.
#   step 0   : spectrum = sigmoid(phys @ W_rtm + b_rtm)  -> VMEM scratch
#              acc = 0
#   each step: h_k = relu(spectrum @ W1[:, k*TK:(k+1)*TK] + b1[k])
#              acc += h_k @ W2[k*TK:(k+1)*TK, :]
#   last step: out = acc + b2
# Every W1/W2 byte is streamed from HBM exactly once in ~6.4 MB DMA chunks.
# ----------------------------------------------------------------------------
def _fused_corr_kernel(phys_ref, w_rtm_ref, b_rtm_ref,
                       w1_ref, b1_ref, w2_ref, b2_ref,
                       out_ref, spec_sc, acc_sc):
    k = pl.program_id(0)

    @pl.when(k == 0)
    def _():
        s = jnp.dot(phys_ref[...], w_rtm_ref[...],
                    preferred_element_type=jnp.float32) + b_rtm_ref[...]
        spec_sc[...] = jax.nn.sigmoid(s)
        acc_sc[...] = jnp.zeros_like(acc_sc)

    h = jnp.dot(spec_sc[...], w1_ref[...],
                preferred_element_type=jnp.float32) + b1_ref[...]
    h = jnp.maximum(h, 0.0)
    acc_sc[...] += jnp.dot(h, w2_ref[...], preferred_element_type=jnp.float32)

    @pl.when(k == pl.num_programs(0) - 1)
    def _():
        out_ref[...] = acc_sc[...] + b2_ref[...]


def fused_rtm_correction(phys_pad, params):
    H = phys_pad.shape[1]                      # 8 latent / physical params
    grid = (HIDDEN_PAD // TK,)
    return pl.pallas_call(
        _fused_corr_kernel,
        out_shape=jax.ShapeDtypeStruct((BATCH_PAD, SPECTRUM_PAD), jnp.float32),
        grid_spec=pltpu.PrefetchScalarGridSpec(
            num_scalar_prefetch=0,
            grid=grid,
            in_specs=[
                pl.BlockSpec((BATCH_PAD, H), lambda k: (0, 0)),          # phys
                pl.BlockSpec((H, SPECTRUM_PAD), lambda k: (0, 0)),       # W_rtm
                pl.BlockSpec((1, SPECTRUM_PAD), lambda k: (0, 0)),       # b_rtm
                pl.BlockSpec((SPECTRUM_PAD, TK), lambda k: (0, k)),      # W1 chunk
                pl.BlockSpec((1, TK), lambda k: (0, k)),                 # b1 chunk
                pl.BlockSpec((TK, SPECTRUM_PAD), lambda k: (k, 0)),      # W2 chunk
                pl.BlockSpec((1, SPECTRUM_PAD), lambda k: (0, 0)),       # b2
            ],
            out_specs=pl.BlockSpec((BATCH_PAD, SPECTRUM_PAD), lambda k: (0, 0)),
            scratch_shapes=[
                pltpu.VMEM((BATCH_PAD, SPECTRUM_PAD), jnp.float32),      # spectrum
                pltpu.VMEM((BATCH_PAD, SPECTRUM_PAD), jnp.float32),      # accumulator
            ]),
        compiler_params=pltpu.CompilerParams(
            dimension_semantics=("arbitrary",),       # reduction axis, resident output
            vmem_limit_bytes=40 * 1024 * 1024),       # ~26 MiB of blocks at TK=768
    )(phys_pad, params["w_rtm"], params["b_rtm"],
      params["w_c1"], params["b_c1"], params["w_c2"], params["b_c2"])


# ----------------------------------------------------------------------------
# Parameter init (deterministic, in-script).
# ----------------------------------------------------------------------------
def _pad2(a, rows, cols):
    return jnp.pad(a, ((0, rows - a.shape[0]), (0, cols - a.shape[1])))


def init_params(input_dim, hidden_dim=8):
    key = jax.random.PRNGKey(0)
    ks = jax.random.split(key, 12)

    def dense(k, fi, fo):
        k1, k2 = jax.random.split(k)
        w = jax.random.normal(k1, (fi, fo), jnp.float32) / jnp.sqrt(float(fi))
        b = 0.01 * jax.random.normal(k2, (1, fo), jnp.float32)
        return w, b

    enc = {}
    enc["w1"], enc["b1"] = dense(ks[0], input_dim, 64)
    enc["g1"], enc["be1"] = jnp.ones((1, 64), jnp.float32), jnp.zeros((1, 64), jnp.float32)
    enc["w2"], enc["b2"] = dense(ks[1], 64, 32)
    enc["g2"], enc["be2"] = jnp.ones((1, 32), jnp.float32), jnp.zeros((1, 32), jnp.float32)
    enc["w3"], enc["b3"] = dense(ks[2], 32, 16)
    enc["g3"], enc["be3"] = jnp.ones((1, 16), jnp.float32), jnp.zeros((1, 16), jnp.float32)
    enc["w4"], enc["b4"] = dense(ks[3], 16, hidden_dim)

    # RTM surrogate (see TODO in ae_rtm_corr_forward): deterministic 8 -> 2101 map.
    w_rtm, b_rtm = dense(ks[4], hidden_dim, SPECTRUM_LEN)
    # Correction MLP: Linear(2101 -> 8404) -> ReLU -> Linear(8404 -> 2101).
    w_c1, b_c1 = dense(ks[5], SPECTRUM_LEN, HIDDEN_CORR)
    w_c2, b_c2 = dense(ks[6], HIDDEN_CORR, SPECTRUM_LEN)

    # Zero-pad to lane-aligned shapes; zero padding keeps the real 2101/8404
    # columns exact (padded spectrum columns multiply zero rows of w_c1, and
    # padded hidden columns multiply zero rows of w_c2).
    params = {
        "enc": enc,
        "rtm_min": RTM_MIN,
        "rtm_max": RTM_MAX,
        "w_rtm": _pad2(w_rtm, hidden_dim, SPECTRUM_PAD),
        "b_rtm": _pad2(b_rtm, 1, SPECTRUM_PAD),
        "w_c1": _pad2(w_c1, SPECTRUM_PAD, HIDDEN_PAD),
        "b_c1": _pad2(b_c1, 1, HIDDEN_PAD),
        "w_c2": _pad2(w_c2, HIDDEN_PAD, SPECTRUM_PAD),
        "b_c2": _pad2(b_c2, 1, SPECTRUM_PAD),
    }
    return params


# ----------------------------------------------------------------------------
# Full forward pass.
# ----------------------------------------------------------------------------
def ae_rtm_corr_forward(x, params):
    B = x.shape[0]
    encoded, para = encoder_forward(x, params["enc"])           # (B, 8), (B, 8)

    # para_reset surrogate: map latent values onto the physical parameter ranges.
    # TODO(synk): the reference's para_reset implementation is external to the
    # provided module; a linear min/max mapping is used here.
    phys = (params["rtm_min"][None, :]
            + para * (params["rtm_max"] - params["rtm_min"])[None, :])
    phys_pad = jnp.pad(phys, ((0, BATCH_PAD - B), (0, 0)))       # (8, 8)

    # TODO(synk): the true decoder is the PROSPECT-Pro + 4SAIL radiative transfer
    # model (needs external spectral absorption/refraction coefficient tables);
    # here it is a deterministic linear+sigmoid surrogate fused into the
    # correction kernel's prologue.
    corr = fused_rtm_correction(phys_pad, params)                # (8, 2176)

    return encoded, corr[:B, :SPECTRUM_LEN]


if __name__ == "__main__":
    INPUT_DIM = 64   # number of input bands fed to the encoder
    HIDDEN_DIM = 8   # must equal len(rtm_paras)
    BATCH = 2

    params = init_params(INPUT_DIM, HIDDEN_DIM)
    x = jax.random.normal(jax.random.PRNGKey(0), (BATCH, INPUT_DIM), jnp.float32)

    encoded, corrected = jax.jit(ae_rtm_corr_forward)(x, params)
    jax.block_until_ready((encoded, corrected))

    assert encoded.shape == (BATCH, HIDDEN_DIM), encoded.shape
    assert corrected.shape == (BATCH, SPECTRUM_LEN), corrected.shape
    assert bool(jnp.all(jnp.isfinite(encoded))) and bool(jnp.all(jnp.isfinite(corrected)))
    print("KERNEL_OK")
</pallas_src>

<mosaic_0001>
module attributes {stable_mosaic.version = 11 : i64} {
  func.func @_fused_corr_kernel(%arg0: i32, %arg1: memref<8x8xf32, #tpu.memory_space<vmem>>, %arg2: memref<8x2176xf32, #tpu.memory_space<vmem>>, %arg3: memref<1x2176xf32, #tpu.memory_space<vmem>>, %arg4: memref<2176x768xf32, #tpu.memory_space<vmem>>, %arg5: memref<1x768xf32, #tpu.memory_space<vmem>>, %arg6: memref<768x2176xf32, #tpu.memory_space<vmem>>, %arg7: memref<1x2176xf32, #tpu.memory_space<vmem>>, %arg8: memref<8x2176xf32, #tpu.memory_space<vmem>>, %arg9: memref<8x2176xf32, #tpu.memory_space<vmem>>, %arg10: memref<8x2176xf32, #tpu.memory_space<vmem>>) attributes {dimension_semantics = [#tpu.dimension_semantics<arbitrary>], iteration_bounds = array<i64: 11>, scalar_prefetch = 0 : i64, scratch_operands = 2 : i64, tpu.core_type = #tpu.core_type<tc>, window_params = [{pipeline_mode = #tpu.pipeline_mode<synchronous>, transform_indices = @transform_0, window_bounds = array<i64: 8, 8>}, {pipeline_mode = #tpu.pipeline_mode<synchronous>, transform_indices = @transform_1, window_bounds = array<i64: 8, 2176>}, {pipeline_mode = #tpu.pipeline_mode<synchronous>, transform_indices = @transform_2, window_bounds = array<i64: 1, 2176>}, {transform_indices = @transform_3, window_bounds = array<i64: 2176, 768>}, {transform_indices = @transform_4, window_bounds = array<i64: 1, 768>}, {transform_indices = @transform_5, window_bounds = array<i64: 768, 2176>}, {pipeline_mode = #tpu.pipeline_mode<synchronous>, transform_indices = @transform_6, window_bounds = array<i64: 1, 2176>}, {pipeline_mode = #tpu.pipeline_mode<synchronous>, transform_indices = @transform_7, window_bounds = array<i64: 8, 2176>}]} {
    %c0_i32 = arith.constant 0 : i32
    %0 = arith.cmpi eq, %arg0, %c0_i32 : i32
    %1 = arith.extui %0 : i1 to i32
    %c0_i32_0 = arith.constant 0 : i32
    %2 = arith.cmpi ne, %1, %c0_i32_0 : i32
    scf.if %2 {
      %c0_15 = arith.constant 0 : index
      %c0_16 = arith.constant 0 : index
      %19 = vector.load %arg1[%c0_15, %c0_16] : memref<8x8xf32, #tpu.memory_space<vmem>>, vector<8x8xf32>
      %c0_17 = arith.constant 0 : index
      %c0_18 = arith.constant 0 : index
      %20 = vector.load %arg2[%c0_17, %c0_18] : memref<8x2176xf32, #tpu.memory_space<vmem>>, vector<8x2176xf32>
      %cst_19 = arith.constant dense<0.000000e+00> : vector<8x2176xf32>
      %21 = tpu.matmul %19, %20, %cst_19 {dimension_numbers = #tpu.dot_dimension_numbers<[1], [0], [0], [1], [0, 0, 1, 1], [], []>} : vector<8x8xf32>, vector<8x2176xf32>, vector<8x2176xf32> -> vector<8x2176xf32>
      %c0_20 = arith.constant 0 : index
      %c0_21 = arith.constant 0 : index
      %22 = vector.load %arg3[%c0_20, %c0_21] : memref<1x2176xf32, #tpu.memory_space<vmem>>, vector<1x2176xf32>
      %23 = vector.broadcast %22 : vector<1x2176xf32> to vector<8x2176xf32>
      %24 = arith.addf %21, %23 : vector<8x2176xf32>
      %25 = arith.negf %24 : vector<8x2176xf32>
      %26 = math.exp %25 : vector<8x2176xf32>
      %cst_22 = arith.constant 1.000000e+00 : f32
      %27 = vector.broadcast %cst_22 : f32 to vector<8x2176xf32>
      %28 = arith.addf %27, %26 : vector<8x2176xf32>
      %29 = arith.divf %27, %28 : vector<8x2176xf32>
      %c0_23 = arith.constant 0 : index
      %c0_24 = arith.constant 0 : index
      %30 = vector.load %arg9[%c0_23, %c0_24] : memref<8x2176xf32, #tpu.memory_space<vmem>>, vector<8x2176xf32>
      tpu.vector_store %arg9[%c0_23, %c0_24], %29 {strides = array<i32>} : memref<8x2176xf32, #tpu.memory_space<vmem>>, vector<8x2176xf32>,
      %cst_25 = arith.constant 0.000000e+00 : f32
      %31 = vector.broadcast %cst_25 : f32 to vector<8x2176xf32>
      %c0_26 = arith.constant 0 : index
      %c0_27 = arith.constant 0 : index
      %32 = vector.load %arg10[%c0_26, %c0_27] : memref<8x2176xf32, #tpu.memory_space<vmem>>, vector<8x2176xf32>
      tpu.vector_store %arg10[%c0_26, %c0_27], %31 {strides = array<i32>} : memref<8x2176xf32, #tpu.memory_space<vmem>>, vector<8x2176xf32>,
    } else {
    }
    %c0 = arith.constant 0 : index
    %c0_1 = arith.constant 0 : index
    %3 = vector.load %arg9[%c0, %c0_1] : memref<8x2176xf32, #tpu.memory_space<vmem>>, vector<8x2176xf32>
    %c0_2 = arith.constant 0 : index
    %c0_3 = arith.constant 0 : index
    %4 = vector.load %arg4[%c0_2, %c0_3] : memref<2176x768xf32, #tpu.memory_space<vmem>>, vector<2176x768xf32>
    %cst = arith.constant dense<0.000000e+00> : vector<8x768xf32>
    %5 = tpu.matmul %3, %4, %cst {dimension_numbers = #tpu.dot_dimension_numbers<[1], [0], [0], [1], [0, 0, 1, 1], [], []>} : vector<8x2176xf32>, vector<2176x768xf32>, vector<8x768xf32> -> vector<8x768xf32>
    %c0_4 = arith.constant 0 : index
    %c0_5 = arith.constant 0 : index
    %6 = vector.load %arg5[%c0_4, %c0_5] : memref<1x768xf32, #tpu.memory_space<vmem>>, vector<1x768xf32>
    %7 = vector.broadcast %6 : vector<1x768xf32> to vector<8x768xf32>
    %8 = arith.addf %5, %7 : vector<8x768xf32>
    %cst_6 = arith.constant 0.000000e+00 : f32
    %9 = vector.broadcast %cst_6 : f32 to vector<8x768xf32>
    %10 = arith.maximumf %8, %9 : vector<8x768xf32>
    %c0_7 = arith.constant 0 : index
    %c0_8 = arith.constant 0 : index
    %11 = vector.load %arg10[%c0_7, %c0_8] : memref<8x2176xf32, #tpu.memory_space<vmem>>, vector<8x2176xf32>
    %c0_9 = arith.constant 0 : index
    %c0_10 = arith.constant 0 : index
    %12 = vector.load %arg6[%c0_9, %c0_10] : memref<768x2176xf32, #tpu.memory_space<vmem>>, vector<768x2176xf32>
    %cst_11 = arith.constant dense<0.000000e+00> : vector<8x2176xf32>
    %13 = tpu.matmul %10, %12, %cst_11 {dimension_numbers = #tpu.dot_dimension_numbers<[1], [0], [0], [1], [0, 0, 1, 1], [], []>} : vector<8x768xf32>, vector<768x2176xf32>, vector<8x2176xf32> -> vector<8x2176xf32>
    %14 = arith.addf %11, %13 : vector<8x2176xf32>
    %c0_12 = arith.constant 0 : index
    %c0_13 = arith.constant 0 : index
    %15 = vector.load %arg10[%c0_12, %c0_13] : memref<8x2176xf32, #tpu.memory_space<vmem>>, vector<8x2176xf32>
    tpu.vector_store %arg10[%c0_12, %c0_13], %14 {strides = array<i32>} : memref<8x2176xf32, #tpu.memory_space<vmem>>, vector<8x2176xf32>,
    %c10_i32 = arith.constant 10 : i32
    %16 = arith.cmpi eq, %arg0, %c10_i32 : i32
    %17 = arith.extui %16 : i1 to i32
    %c0_i32_14 = arith.constant 0 : i32
    %18 = arith.cmpi ne, %17, %c0_i32_14 : i32
    scf.if %18 {
      %c0_15 = arith.constant 0 : index
      %c0_16 = arith.constant 0 : index
      %19 = vector.load %arg10[%c0_15, %c0_16] : memref<8x2176xf32, #tpu.memory_space<vmem>>, vector<8x2176xf32>
      %c0_17 = arith.constant 0 : index
      %c0_18 = arith.constant 0 : index
      %20 = vector.load %arg7[%c0_17, %c0_18] : memref<1x2176xf32, #tpu.memory_space<vmem>>, vector<1x2176xf32>
      %21 = vector.broadcast %20 : vector<1x2176xf32> to vector<8x2176xf32>
      %22 = arith.addf %19, %21 : vector<8x2176xf32>
      %c0_19 = arith.constant 0 : index
      %c0_20 = arith.constant 0 : index
      %23 = vector.load %arg8[%c0_19, %c0_20] : memref<8x2176xf32, #tpu.memory_space<vmem>>, vector<8x2176xf32>
      tpu.vector_store %arg8[%c0_19, %c0_20], %22 {strides = array<i32>} : memref<8x2176xf32, #tpu.memory_space<vmem>>, vector<8x2176xf32>,
    } else {
    }
    return
  }
  func.func @transform_0(%arg0: i32) -> (i32, i32) {
    %c0_i32 = arith.constant 0 : i32
    %c0_i32_0 = arith.constant 0 : i32
    %c0_i32_1 = arith.constant 0 : i32
    return %c0_i32, %c0_i32_0 : i32, i32
  }
  func.func @transform_1(%arg0: i32) -> (i32, i32) {
    %c0_i32 = arith.constant 0 : i32
    %c0_i32_0 = arith.constant 0 : i32
    %c0_i32_1 = arith.constant 0 : i32
    return %c0_i32, %c0_i32_0 : i32, i32
  }
  func.func @transform_2(%arg0: i32) -> (i32, i32) {
    %c0_i32 = arith.constant 0 : i32
    %c0_i32_0 = arith.constant 0 : i32
    %c0_i32_1 = arith.constant 0 : i32
    return %c0_i32, %c0_i32_0 : i32, i32
  }
  func.func @transform_3(%arg0: i32) -> (i32, i32) {
    %c0_i32 = arith.constant 0 : i32
    %c0_i32_0 = arith.constant 0 : i32
    return %c0_i32, %arg0 : i32, i32
  }
  func.func @transform_4(%arg0: i32) -> (i32, i32) {
    %c0_i32 = arith.constant 0 : i32
    %c0_i32_0 = arith.constant 0 : i32
    return %c0_i32, %arg0 : i32, i32
  }
  func.func @transform_5(%arg0: i32) -> (i32, i32) {
    %c0_i32 = arith.constant 0 : i32
    %c0_i32_0 = arith.constant 0 : i32
    return %arg0, %c0_i32 : i32, i32
  }
  func.func @transform_6(%arg0: i32) -> (i32, i32) {
    %c0_i32 = arith.constant 0 : i32
    %c0_i32_0 = arith.constant 0 : i32
    %c0_i32_1 = arith.constant 0 : i32
    return %c0_i32, %c0_i32_0 : i32, i32
  }
  func.func @transform_7(%arg0: i32) -> (i32, i32) {
    %c0_i32 = arith.constant 0 : i32
    %c0_i32_0 = arith.constant 0 : i32
    %c0_i32_1 = arith.constant 0 : i32
    return %c0_i32, %c0_i32_0 : i32, i32
  }
}

module attributes {stable_mosaic.version = 11 : i64} {
  func.func @_encoder_kernel(%arg0: memref<2x64xf32, #tpu.memory_space<vmem>>, %arg1: memref<64x64xf32, #tpu.memory_space<vmem>>, %arg2: memref<1x64xf32, #tpu.memory_space<vmem>>, %arg3: memref<1x64xf32, #tpu.memory_space<vmem>>, %arg4: memref<1x64xf32, #tpu.memory_space<vmem>>, %arg5: memref<64x32xf32, #tpu.memory_space<vmem>>, %arg6: memref<1x32xf32, #tpu.memory_space<vmem>>, %arg7: memref<1x32xf32, #tpu.memory_space<vmem>>, %arg8: memref<1x32xf32, #tpu.memory_space<vmem>>, %arg9: memref<32x16xf32, #tpu.memory_space<vmem>>, %arg10: memref<1x16xf32, #tpu.memory_space<vmem>>, %arg11: memref<1x16xf32, #tpu.memory_space<vmem>>, %arg12: memref<1x16xf32, #tpu.memory_space<vmem>>, %arg13: memref<16x8xf32, #tpu.memory_space<vmem>>, %arg14: memref<1x8xf32, #tpu.memory_space<vmem>>, %arg15: memref<2x8xf32, #tpu.memory_space<vmem>>, %arg16: memref<2x8xf32, #tpu.memory_space<vmem>>) attributes {dimension_semantics = [], scalar_prefetch = 0 : i64, scratch_operands = 0 : i64, tpu.core_type = #tpu.core_type<tc>} {
    %c0 = arith.constant 0 : index
    %c0_0 = arith.constant 0 : index
    %0 = vector.load %arg0[%c0, %c0_0] : memref<2x64xf32, #tpu.memory_space<vmem>>, vector<2x64xf32>
    %c0_1 = arith.constant 0 : index
    %c0_2 = arith.constant 0 : index
    %1 = vector.load %arg1[%c0_1, %c0_2] : memref<64x64xf32, #tpu.memory_space<vmem>>, vector<64x64xf32>
    %cst = arith.constant dense<0.000000e+00> : vector<2x64xf32>
    %2 = tpu.matmul %0, %1, %cst {dimension_numbers = #tpu.dot_dimension_numbers<[1], [0], [0], [1], [0, 0, 1, 1], [], []>} : vector<2x64xf32>, vector<64x64xf32>, vector<2x64xf32> -> vector<2x64xf32>
    %c0_3 = arith.constant 0 : index
    %c0_4 = arith.constant 0 : index
    %3 = vector.load %arg2[%c0_3, %c0_4] : memref<1x64xf32, #tpu.memory_space<vmem>>, vector<1x64xf32>
    %4 = vector.broadcast %3 : vector<1x64xf32> to vector<2x64xf32>
    %5 = arith.addf %2, %4 : vector<2x64xf32>
    %cst_5 = arith.constant dense<0.000000e+00> : vector<2xf32>
    %6 = vector.multi_reduction <add>, %5, %cst_5 [1] : vector<2x64xf32> to vector<2xf32>
    %7 = vector.shape_cast %6 : vector<2xf32> to vector<2x1xf32>
    %cst_6 = arith.constant 6.400000e+01 : f32
    %8 = vector.broadcast %cst_6 : f32 to vector<2x1xf32>
    %9 = arith.divf %7, %8 : vector<2x1xf32>
    %10 = vector.broadcast %9 : vector<2x1xf32> to vector<2x64xf32>
    %11 = arith.subf %5, %10 : vector<2x64xf32>
    %12 = arith.mulf %11, %11 : vector<2x64xf32>
    %cst_7 = arith.constant dense<0.000000e+00> : vector<2xf32>
    %13 = vector.multi_reduction <add>, %12, %cst_7 [1] : vector<2x64xf32> to vector<2xf32>
    %14 = vector.shape_cast %13 : vector<2xf32> to vector<2x1xf32>
    %cst_8 = arith.constant 6.400000e+01 : f32
    %15 = vector.broadcast %cst_8 : f32 to vector<2x1xf32>
    %16 = arith.divf %14, %15 : vector<2x1xf32>
    %17 = vector.broadcast %9 : vector<2x1xf32> to vector<2x64xf32>
    %18 = arith.subf %5, %17 : vector<2x64xf32>
    %cst_9 = arith.constant 9.99999974E-6 : f32
    %19 = vector.broadcast %cst_9 : f32 to vector<2x1xf32>
    %20 = arith.addf %16, %19 : vector<2x1xf32>
    %21 = math.rsqrt %20 : vector<2x1xf32>
    %22 = vector.broadcast %21 : vector<2x1xf32> to vector<2x64xf32>
    %23 = arith.mulf %18, %22 : vector<2x64xf32>
    %c0_10 = arith.constant 0 : index
    %c0_11 = arith.constant 0 : index
    %24 = vector.load %arg3[%c0_10, %c0_11] : memref<1x64xf32, #tpu.memory_space<vmem>>, vector<1x64xf32>
    %25 = vector.broadcast %24 : vector<1x64xf32> to vector<2x64xf32>
    %26 = arith.mulf %23, %25 : vector<2x64xf32>
    %c0_12 = arith.constant 0 : index
    %c0_13 = arith.constant 0 : index
    %27 = vector.load %arg4[%c0_12, %c0_13] : memref<1x64xf32, #tpu.memory_space<vmem>>, vector<1x64xf32>
    %28 = vector.broadcast %27 : vector<1x64xf32> to vector<2x64xf32>
    %29 = arith.addf %26, %28 : vector<2x64xf32>
    %cst_14 = arith.constant 0.000000e+00 : f32
    %30 = vector.broadcast %cst_14 : f32 to vector<2x64xf32>
    %31 = arith.maximumf %29, %30 : vector<2x64xf32>
    %c0_15 = arith.constant 0 : index
    %c0_16 = arith.constant 0 : index
    %32 = vector.load %arg5[%c0_15, %c0_16] : memref<64x32xf32, #tpu.memory_space<vmem>>, vector<64x32xf32>
    %cst_17 = arith.constant dense<0.000000e+00> : vector<2x32xf32>
    %33 = tpu.matmul %31, %32, %cst_17 {dimension_numbers = #tpu.dot_dimension_numbers<[1], [0], [0], [1], [0, 0, 1, 1], [], []>} : vector<2x64xf32>, vector<64x32xf32>, vector<2x32xf32> -> vector<2x32xf32>
    %c0_18 = arith.constant 0 : index
    %c0_19 = arith.constant 0 : index
    %34 = vector.load %arg6[%c0_18, %c0_19] : memref<1x32xf32, #tpu.memory_space<vmem>>, vector<1x32xf32>
    %35 = vector.broadcast %34 : vector<1x32xf32> to vector<2x32xf32>
    %36 = arith.addf %33, %35 : vector<2x32xf32>
    %cst_20 = arith.constant dense<0.000000e+00> : vector<2xf32>
    %37 = vector.multi_reduction <add>, %36, %cst_20 [1] : vector<2x32xf32> to vector<2xf32>
    %38 = vector.shape_cast %37 : vector<2xf32> to vector<2x1xf32>
    %cst_21 = arith.constant 3.200000e+01 : f32
    %39 = vector.broadcast %cst_21 : f32 to vector<2x1xf32>
    %40 = arith.divf %38, %39 : vector<2x1xf32>
    %41 = vector.broadcast %40 : vector<2x1xf32> to vector<2x32xf32>
    %42 = arith.subf %36, %41 : vector<2x32xf32>
    %43 = arith.mulf %42, %42 : vector<2x32xf32>
    %cst_22 = arith.constant dense<0.000000e+00> : vector<2xf32>
    %44 = vector.multi_reduction <add>, %43, %cst_22 [1] : vector<2x32xf32> to vector<2xf32>
    %45 = vector.shape_cast %44 : vector<2xf32> to vector<2x1xf32>
    %cst_23 = arith.constant 3.200000e+01 : f32
    %46 = vector.broadcast %cst_23 : f32 to vector<2x1xf32>
    %47 = arith.divf %45, %46 : vector<2x1xf32>
    %48 = vector.broadcast %40 : vector<2x1xf32> to vector<2x32xf32>
    %49 = arith.subf %36, %48 : vector<2x32xf32>
    %cst_24 = arith.constant 9.99999974E-6 : f32
    %50 = vector.broadcast %cst_24 : f32 to vector<2x1xf32>
    %51 = arith.addf %47, %50 : vector<2x1xf32>
    %52 = math.rsqrt %51 : vector<2x1xf32>
    %53 = vector.broadcast %52 : vector<2x1xf32> to vector<2x32xf32>
    %54 = arith.mulf %49, %53 : vector<2x32xf32>
    %c0_25 = arith.constant 0 : index
    %c0_26 = arith.constant 0 : index
    %55 = vector.load %arg7[%c0_25, %c0_26] : memref<1x32xf32, #tpu.memory_space<vmem>>, vector<1x32xf32>
    %56 = vector.broadcast %55 : vector<1x32xf32> to vector<2x32xf32>
    %57 = arith.mulf %54, %56 : vector<2x32xf32>
    %c0_27 = arith.constant 0 : index
    %c0_28 = arith.constant 0 : index
    %58 = vector.load %arg8[%c0_27, %c0_28] : memref<1x32xf32, #tpu.memory_space<vmem>>, vector<1x32xf32>
    %59 = vector.broadcast %58 : vector<1x32xf32> to vector<2x32xf32>
    %60 = arith.addf %57, %59 : vector<2x32xf32>
    %cst_29 = arith.constant 0.000000e+00 : f32
    %61 = vector.broadcast %cst_29 : f32 to vector<2x32xf32>
    %62 = arith.maximumf %60, %61 : vector<2x32xf32>
    %c0_30 = arith.constant 0 : index
    %c0_31 = arith.constant 0 : index
    %63 = vector.load %arg9[%c0_30, %c0_31] : memref<32x16xf32, #tpu.memory_space<vmem>>, vector<32x16xf32>
    %cst_32 = arith.constant dense<0.000000e+00> : vector<2x16xf32>
    %64 = tpu.matmul %62, %63, %cst_32 {dimension_numbers = #tpu.dot_dimension_numbers<[1], [0], [0], [1], [0, 0, 1, 1], [], []>} : vector<2x32xf32>, vector<32x16xf32>, vector<2x16xf32> -> vector<2x16xf32>
    %c0_33 = arith.constant 0 : index
    %c0_34 = arith.constant 0 : index
    %65 = vector.load %arg10[%c0_33, %c0_34] : memref<1x16xf32, #tpu.memory_space<vmem>>, vector<1x16xf32>
    %66 = vector.broadcast %65 : vector<1x16xf32> to vector<2x16xf32>
    %67 = arith.addf %64, %66 : vector<2x16xf32>
    %cst_35 = arith.constant dense<0.000000e+00> : vector<2xf32>
    %68 = vector.multi_reduction <add>, %67, %cst_35 [1] : vector<2x16xf32> to vector<2xf32>
    %69 = vector.shape_cast %68 : vector<2xf32> to vector<2x1xf32>
    %cst_36 = arith.constant 1.600000e+01 : f32
    %70 = vector.broadcast %cst_36 : f32 to vector<2x1xf32>
    %71 = arith.divf %69, %70 : vector<2x1xf32>
    %72 = vector.broadcast %71 : vector<2x1xf32> to vector<2x16xf32>
    %73 = arith.subf %67, %72 : vector<2x16xf32>
    %74 = arith.mulf %73, %73 : vector<2x16xf32>
    %cst_37 = arith.constant dense<0.000000e+00> : vector<2xf32>
    %75 = vector.multi_reduction <add>, %74, %cst_37 [1] : vector<2x16xf32> to vector<2xf32>
    %76 = vector.shape_cast %75 : vector<2xf32> to vector<2x1xf32>
    %cst_38 = arith.constant 1.600000e+01 : f32
    %77 = vector.broadcast %cst_38 : f32 to vector<2x1xf32>
    %78 = arith.divf %76, %77 : vector<2x1xf32>
    %79 = vector.broadcast %71 : vector<2x1xf32> to vector<2x16xf32>
    %80 = arith.subf %67, %79 : vector<2x16xf32>
    %cst_39 = arith.constant 9.99999974E-6 : f32
    %81 = vector.broadcast %cst_39 : f32 to vector<2x1xf32>
    %82 = arith.addf %78, %81 : vector<2x1xf32>
    %83 = math.rsqrt %82 : vector<2x1xf32>
    %84 = vector.broadcast %83 : vector<2x1xf32> to vector<2x16xf32>
    %85 = arith.mulf %80, %84 : vector<2x16xf32>
    %c0_40 = arith.constant 0 : index
    %c0_41 = arith.constant 0 : index
    %86 = vector.load %arg11[%c0_40, %c0_41] : memref<1x16xf32, #tpu.memory_space<vmem>>, vector<1x16xf32>
    %87 = vector.broadcast %86 : vector<1x16xf32> to vector<2x16xf32>
    %88 = arith.mulf %85, %87 : vector<2x16xf32>
    %c0_42 = arith.constant 0 : index
    %c0_43 = arith.constant 0 : index
    %89 = vector.load %arg12[%c0_42, %c0_43] : memref<1x16xf32, #tpu.memory_space<vmem>>, vector<1x16xf32>
    %90 = vector.broadcast %89 : vector<1x16xf32> to vector<2x16xf32>
    %91 = arith.addf %88, %90 : vector<2x16xf32>
    %cst_44 = arith.constant 0.000000e+00 : f32
    %92 = vector.broadcast %cst_44 : f32 to vector<2x16xf32>
    %93 = arith.maximumf %91, %92 : vector<2x16xf32>
    %c0_45 = arith.constant 0 : index
    %c0_46 = arith.constant 0 : index
    %94 = vector.load %arg13[%c0_45, %c0_46] : memref<16x8xf32, #tpu.memory_space<vmem>>, vector<16x8xf32>
    %cst_47 = arith.constant dense<0.000000e+00> : vector<2x8xf32>
    %95 = tpu.matmul %93, %94, %cst_47 {dimension_numbers = #tpu.dot_dimension_numbers<[1], [0], [0], [1], [0, 0, 1, 1], [], []>} : vector<2x16xf32>, vector<16x8xf32>, vector<2x8xf32> -> vector<2x8xf32>
    %c0_48 = arith.constant 0 : index
    %c0_49 = arith.constant 0 : index
    %96 = vector.load %arg14[%c0_48, %c0_49] : memref<1x8xf32, #tpu.memory_space<vmem>>, vector<1x8xf32>
    %97 = vector.broadcast %96 : vector<1x8xf32> to vector<2x8xf32>
    %98 = arith.addf %95, %97 : vector<2x8xf32>
    %c0_50 = arith.constant 0 : index
    %c0_51 = arith.constant 0 : index
    %99 = vector.load %arg15[%c0_50, %c0_51] : memref<2x8xf32, #tpu.memory_space<vmem>>, vector<2x8xf32>
    tpu.vector_store %arg15[%c0_50, %c0_51], %98 {strides = array<i32>} : memref<2x8xf32, #tpu.memory_space<vmem>>, vector<2x8xf32>,
    %100 = tpu.iota {dimensions = array<i32: 1>} : vector<2x8xi32>
    %c5_i32 = arith.constant 5 : i32
    %101 = vector.broadcast %c5_i32 : i32 to vector<2x8xi32>
    %102 = arith.cmpi eq, %100, %101 : vector<2x8xi32>
    %103 = vector.extract_strided_slice %98 {offsets = [0, 2], sizes = [2, 1], strides = [1, 1]} : vector<2x8xf32> to vector<2x1xf32>
    %104 = vector.extract_strided_slice %98 {offsets = [0, 4], sizes = [2, 1], strides = [1, 1]} : vector<2x8xf32> to vector<2x1xf32>
    %105 = arith.subf %103, %104 : vector<2x1xf32>
    %106 = vector.shape_cast %105 : vector<2x1xf32> to vector<2x1xf32>
    %107 = vector.broadcast %106 : vector<2x1xf32> to vector<2x8xf32>
    %108 = arith.select %102, %107, %98 : vector<2x8xi1>, vector<2x8xf32>
    %c0_52 = arith.constant 0 : index
    %c0_53 = arith.constant 0 : index
    %109 = vector.load %arg16[%c0_52, %c0_53] : memref<2x8xf32, #tpu.memory_space<vmem>>, vector<2x8xf32>
    tpu.vector_store %arg16[%c0_52, %c0_53], %108 {strides = array<i32>} : memref<2x8xf32, #tpu.memory_space<vmem>>, vector<2x8xf32>,
    return
  }
}

</mosaic_0001>

<llo_original>
// kernel: sub.1
$region0: #{sub.1}
  #allocation4 [shape = 's32[1]{0}', space=sflag, size = 0x4, scoped, tag = 'scoped memory for sub.1']
  %s0 = inlined_call_operand.hbm [shape: f32[8], index: 0, kind: input, shape index: {}]
  %s1 = inlined_call_operand.hbm [shape: f32[8], index: 1, kind: input, shape index: {}]
  %s2 = inlined_call_operand.vmem [shape: f32[8], index: 2, kind: output, shape index: {}]
  $region1: #{sub.1} parent=0
    #allocation0 [shape = 'u8[512]{0}', space=vmem, size = 0x400, scoped, tag = 'operand span for operand 0']
    #allocation1 [shape = 's32[1]{0}', space=sflag, size = 0x4, scoped, tag = 'scoped memory for sub.1']
    #allocation2 [shape = 'u8[512]{0}', space=vmem, size = 0x400, scoped, tag = 'operand span for operand 1']
    #allocation3 [shape = 's32[1]{0}', space=sflag, size = 0x4, scoped, tag = 'scoped memory for sub.1']
    %3 = vsyncpa [#allocation1], 0
    %4 = vsyncpa [#allocation3], 0
    %s6 = ssub.s32 16, 16
    %7 = vsyncadd [#allocation1], %s6
    %s9 = sshll.u32 [#allocation0], 4
    %s10 = int_to_ptr.vmem [resolvable:$true] %s9
    %12 = dma.hbm_to_vmem [thread:$0]  %s0, 16, %s10, [#allocation1]
    %s14 = ssub.s32 16, 16
    %15 = vsyncadd [#allocation3], %s14
    %s17 = sshll.u32 [#allocation2], 4
    %s18 = int_to_ptr.vmem [resolvable:$true] %s17
    %20 = dma.hbm_to_vmem [thread:$0]  %s1, 16, %s18, [#allocation3]
    %21 = dma.done [#allocation1], 16
    %22 = dma.done [#allocation3], 16
    %v23 = vld [vmem:[#allocation0] sm:$0x1]
    %v24 = vld [vmem:[#allocation2] sm:$0x1]
    %25 = xla_tuple %v23, %v24
    %26 = xla_tuple %25
    %v27 = vsub.f32 %v23, %v24
    %28 = xla_tuple %v27
    %29 = vst [vmem:[%s2] sm:$0x1] %v27
    %30 = vsyncpa [#allocation1], 1
    %31 = vsyncpa [#allocation3], 1

// kernel: ae_rtm_corr_forward.2
$region0: #{ae_rtm_corr_forward.2}
  #allocation0 [shape = 'u32[]', space=smem, size = 0x4, offset = 0x4, fixed_abs, tag = 'smem constant byte address 0x4 - core index']
  #allocation1 [shape = 'u32[144,128]{1,0:T(1,128)}', space=vmem, size = 0x12000, scoped, tag = 'internal scratch']
  %s0 = inlined_call_operand.hbm [shape: f32[2,64], index: 0, kind: input, shape index: {}]
  %s1 = inlined_call_operand.hbm [shape: f32[64,64], index: 1, kind: input, shape index: {}]
  %s2 = inlined_call_operand.hbm [shape: f32[1,64], index: 2, kind: input, shape index: {}]
  %s3 = inlined_call_operand.hbm [shape: f32[1,64], index: 3, kind: input, shape index: {}]
  %s4 = inlined_call_operand.hbm [shape: f32[1,64], index: 4, kind: input, shape index: {}]
  %s5 = inlined_call_operand.vmem [shape: f32[64,32], index: 5, kind: input, shape index: {}]
  %s6 = inlined_call_operand.hbm [shape: f32[1,32], index: 6, kind: input, shape index: {}]
  %s7 = inlined_call_operand.hbm [shape: f32[1,32], index: 7, kind: input, shape index: {}]
  %s8 = inlined_call_operand.hbm [shape: f32[1,32], index: 8, kind: input, shape index: {}]
  %s9 = inlined_call_operand.vmem [shape: f32[32,16], index: 9, kind: input, shape index: {}]
  %s10 = inlined_call_operand.hbm [shape: f32[1,16], index: 10, kind: input, shape index: {}]
  %s11 = inlined_call_operand.hbm [shape: f32[1,16], index: 11, kind: input, shape index: {}]
  %s12 = inlined_call_operand.hbm [shape: f32[1,16], index: 12, kind: input, shape index: {}]
  %s13 = inlined_call_operand.vmem [shape: f32[16,8], index: 13, kind: input, shape index: {}]
  %s14 = inlined_call_operand.hbm [shape: f32[1,8], index: 14, kind: input, shape index: {}]
  %s15 = inlined_call_operand.hbm [shape: f32[2,8], index: 15, kind: output, shape index: {0}]
  %s16 = inlined_call_operand.vmem [shape: f32[2,8], index: 16, kind: output, shape index: {1}]
  %17 = xla_tuple %s15, %s16
  %s18 = sld [smem:[#allocation0]]
  $region126: #{ae_rtm_corr_forward.2} parent=0
    _
  %s20 = ssub.s32 1, %s18
  %s21 = scalar_select 0, %s20, %s18
  $region1: #{ae_rtm_corr_forward.2} parent=0
    #allocation2 [shape = 'u8[1024]{0}', space=vmem, size = 0x400, scoped, tag = 'input window, operand 0, single buffered']
    #allocation3 [shape = 's32[1]{0}', space=sflag, size = 0x4, scoped, tag = 'scoped memory for ae_rtm_corr_forward.2']
    #allocation4 [shape = 's32[1]{0}', space=sflag, size = 0x4, scoped, tag = 'scoped memory for ae_rtm_corr_forward.2']
    #allocation5 [shape = 'u8[32768]{0}', space=vmem, size = 0x8000, scoped, tag = 'input window, operand 1, single buffered']
    #allocation6 [shape = 's32[1]{0}', space=sflag, size = 0x4, scoped, tag = 'scoped memory for ae_rtm_corr_forward.2']
    #allocation7 [shape = 'u8[512]{0}', space=vmem, size = 0x400, scoped, tag = 'input window, operand 2, single buffered']
    #allocation8 [shape = 'u8[512]{0}', space=vmem, size = 0x400, scoped, tag = 'input window, operand 3, single buffered']
    #allocation9 [shape = 's32[1]{0}', space=sflag, size = 0x4, scoped, tag = 'scoped memory for ae_rtm_corr_forward.2']
    #allocation10 [shape = 'u8[512]{0}', space=vmem, size = 0x400, scoped, tag = 'input window, operand 4, single buffered']
    #allocation11 [shape = 'u8[512]{0}', space=vmem, size = 0x400, scoped, tag = 'input window, operand 6, single buffered']
    #allocation12 [shape = 's32[1]{0}', space=sflag, size = 0x4, scoped, tag = 'scoped memory for ae_rtm_corr_forward.2']
    #allocation13 [shape = 'u8[512]{0}', space=vmem, size = 0x400, scoped, tag = 'input window, operand 7, single buffered']
    #allocation14 [shape = 'u8[512]{0}', space=vmem, size = 0x400, scoped, tag = 'input window, operand 8, single buffered']
    #allocation15 [shape = 's32[1]{0}', space=sflag, size = 0x4, scoped, tag = 'scoped memory for ae_rtm_corr_forward.2']
    #allocation16 [shape = 'u8[512]{0}', space=vmem, size = 0x400, scoped, tag = 'input window, operand 10, single buffered']
    #allocation17 [shape = 'u8[512]{0}', space=vmem, size = 0x400, scoped, tag = 'input window, operand 11, single buffered']
    #allocation18 [shape = 's32[1]{0}', space=sflag, size = 0x4, scoped, tag = 'scoped memory for ae_rtm_corr_forward.2']
    #allocation19 [shape = 'u8[512]{0}', space=vmem, size = 0x400, scoped, tag = 'input window, operand 12, single buffered']
    #allocation20 [shape = 'u8[512]{0}', space=vmem, size = 0x400, scoped, tag = 'input window, operand 14, single buffered']
    #allocation21 [shape = 's32[1]{0}', space=sflag, size = 0x4, scoped, tag = 'scoped memory for ae_rtm_corr_forward.2']
    #allocation22 [shape = 'u8[1024]{0}', space=vmem, size = 0x400, scoped, tag = 'output window, operand 0, single buffered']
    %22 = vsyncpa [#allocation3], 0
    %23 = vsyncpa [#allocation6], 0
    %24 = vsyncpa [#allocation9], 0
    %25 = vsyncpa [#allocation12], 0
    %26 = vsyncpa [#allocation15], 0
    %27 = vsyncpa [#allocation18], 0
    %28 = vsyncpa [#allocation21], 0
    %29 = vsyncpa [#allocation4], 0
    // Predicated region
    $region2: #{ae_rtm_corr_forward.2} parent=1 // pred_check
      _
    $region3: #{ae_rtm_corr_forward.2} parent=1 // pred_check_branch
      %31 = sbr.rel (0) target = $region5
    $region4: #{ae_rtm_corr_forward.2} parent=1 // pred_region
      %s33 = ssub.s32 32, 32
      %34 = vsyncadd [#allocation3], %s33
      %s36 = sshll.u32 [#allocation2], 4
      %s37 = int_to_ptr.vmem [resolvable:$true] %s36
      %39 = dma.hbm_to_vmem [thread:$0]  %s0, 32, %s37, [#allocation3]
    $region5: #{ae_rtm_corr_forward.2} parent=1 // pred_fallthru
      _
    // Predicated region
    $region6: #{ae_rtm_corr_forward.2} parent=1 // pred_check
      _
    $region7: #{ae_rtm_corr_forward.2} parent=1 // pred_check_branch
      %41 = sbr.rel (0) target = $region9
    $region8: #{ae_rtm_corr_forward.2} parent=1 // pred_region
      %s43 = ssub.s32 1024, 1024
      %44 = vsyncadd [#allocation6], %s43
      %s45 = sshll.u32 [#allocation5], 4
      %s46 = int_to_ptr.vmem [resolvable:$true] %s45
      %51 = dma.hbm_to_vmem [thread:$0]  %s1, 1024, %s46, [#allocation6], 128, 128, 8
    $region9: #{ae_rtm_corr_forward.2} parent=1 // pred_fallthru
      _
    // Predicated region
    $region10: #{ae_rtm_corr_forward.2} parent=1 // pred_check
      _
    $region11: #{ae_rtm_corr_forward.2} parent=1 // pred_check_branch
      %53 = sbr.rel (0) target = $region13
    $region12: #{ae_rtm_corr_forward.2} parent=1 // pred_region
      %s55 = ssub.s32 16, 16
      %56 = vsyncadd [#allocation6], %s55
      %s58 = sshll.u32 [#allocation7], 4
      %s59 = int_to_ptr.vmem [resolvable:$true] %s58
      %61 = dma.hbm_to_vmem [thread:$0]  %s2, 16, %s59, [#allocation6]
    $region13: #{ae_rtm_corr_forward.2} parent=1 // pred_fallthru
      _
    // Predicated region
    $region14: #{ae_rtm_corr_forward.2} parent=1 // pred_check
      _
    $region15: #{ae_rtm_corr_forward.2} parent=1 // pred_check_branch
      %63 = sbr.rel (0) target = $region17
    $region16: #{ae_rtm_corr_forward.2} parent=1 // pred_region
      %s65 = ssub.s32 16, 16
      %66 = vsyncadd [#allocation9], %s65
      %s68 = sshll.u32 [#allocation8], 4
      %s69 = int_to_ptr.vmem [resolvable:$true] %s68
      %71 = dma.hbm_to_vmem [thread:$0]  %s3, 16, %s69, [#allocation9]
    $region17: #{ae_rtm_corr_forward.2} parent=1 // pred_fallthru
      _
    // Predicated region
    $region18: #{ae_rtm_corr_forward.2} parent=1 // pred_check
      _
    $region19: #{ae_rtm_corr_forward.2} parent=1 // pred_check_branch
      %73 = sbr.rel (0) target = $region21
    $region20: #{ae_rtm_corr_forward.2} parent=1 // pred_region
      %s75 = ssub.s32 16, 16
      %76 = vsyncadd [#allocation9], %s75
      %s78 = sshll.u32 [#allocation10], 4
      %s79 = int_to_ptr.vmem [resolvable:$true] %s78
      %81 = dma.hbm_to_vmem [thread:$0]  %s4, 16, %s79, [#allocation9]
    $region21: #{ae_rtm_corr_forward.2} parent=1 // pred_fallthru
      _
    // Predicated region
    $region22: #{ae_rtm_corr_forward.2} parent=1 // pred_check
      _
    $region23: #{ae_rtm_corr_forward.2} parent=1 // pred_check_branch
      %83 = sbr.rel (0) target = $region25
    $region24: #{ae_rtm_corr_forward.2} parent=1 // pred_region
      _
    $region25: #{ae_rtm_corr_forward.2} parent=1 // pred_fallthru
      _
    // Predicated region
    $region26: #{ae_rtm_corr_forward.2} parent=1 // pred_check
      _
    $region27: #{ae_rtm_corr_forward.2} parent=1 // pred_check_branch
      %85 = sbr.rel (0) target = $region29
    $region28: #{ae_rtm_corr_forward.2} parent=1 // pred_region
      %s87 = ssub.s32 16, 16
      %88 = vsyncadd [#allocation12], %s87
      %s90 = sshll.u32 [#allocation11], 4
      %s91 = int_to_ptr.vmem [resolvable:$true] %s90
      %93 = dma.hbm_to_vmem [thread:$0]  %s6, 16, %s91, [#allocation12]
    $region29: #{ae_rtm_corr_forward.2} parent=1 // pred_fallthru
      _
    // Predicated region
    $region30: #{ae_rtm_corr_forward.2} parent=1 // pred_check
      _
    $region31: #{ae_rtm_corr_forward.2} parent=1 // pred_check_branch
      %95 = sbr.rel (0) target = $region33
    $region32: #{ae_rtm_corr_forward.2} parent=1 // pred_region
      %s97 = ssub.s32 16, 16
      %98 = vsyncadd [#allocation12], %s97
      %s100 = sshll.u32 [#allocation13], 4
      %s101 = int_to_ptr.vmem [resolvable:$true] %s100
      %103 = dma.hbm_to_vmem [thread:$0]  %s7, 16, %s101, [#allocation12]
    $region33: #{ae_rtm_corr_forward.2} parent=1 // pred_fallthru
      _
    // Predicated region
    $region34: #{ae_rtm_corr_forward.2} parent=1 // pred_check
      _
    $region35: #{ae_rtm_corr_forward.2} parent=1 // pred_check_branch
      %105 = sbr.rel (0) target = $region37
    $region36: #{ae_rtm_corr_forward.2} parent=1 // pred_region
      %s107 = ssub.s32 16, 16
      %108 = vsyncadd [#allocation15], %s107
      %s110 = sshll.u32 [#allocation14], 4
      %s111 = int_to_ptr.vmem [resolvable:$true] %s110
      %113 = dma.hbm_to_vmem [thread:$0]  %s8, 16, %s111, [#allocation15]
    $region37: #{ae_rtm_corr_forward.2} parent=1 // pred_fallthru
      _
    // Predicated region
    $region38: #{ae_rtm_corr_forward.2} parent=1 // pred_check
      _
    $region39: #{ae_rtm_corr_forward.2} parent=1 // pred_check_branch
      %115 = sbr.rel (0) target = $region41
    $region40: #{ae_rtm_corr_forward.2} parent=1 // pred_region
      _
    $region41: #{ae_rtm_corr_forward.2} parent=1 // pred_fallthru
      _
    // Predicated region
    $region42: #{ae_rtm_corr_forward.2} parent=1 // pred_check
      _
    $region43: #{ae_rtm_corr_forward.2} parent=1 // pred_check_branch
      %117 = sbr.rel (0) target = $region45
    $region44: #{ae_rtm_corr_forward.2} parent=1 // pred_region
      %s119 = ssub.s32 16, 16
      %120 = vsyncadd [#allocation15], %s119
      %s122 = sshll.u32 [#allocation16], 4
      %s123 = int_to_ptr.vmem [resolvable:$true] %s122
      %125 = dma.hbm_to_vmem [thread:$0]  %s10, 16, %s123, [#allocation15]
    $region45: #{ae_rtm_corr_forward.2} parent=1 // pred_fallthru
      _
    // Predicated region
    $region46: #{ae_rtm_corr_forward.2} parent=1 // pred_check
      _
    $region47: #{ae_rtm_corr_forward.2} parent=1 // pred_check_branch
      %127 = sbr.rel (0) target = $region49
    $region48: #{ae_rtm_corr_forward.2} parent=1 // pred_region
      %s129 = ssub.s32 16, 16
      %130 = vsyncadd [#allocation18], %s129
      %s132 = sshll.u32 [#allocation17], 4
      %s133 = int_to_ptr.vmem [resolvable:$true] %s132
      %135 = dma.hbm_to_vmem [thread:$0]  %s11, 16, %s133, [#allocation18]
    $region49: #{ae_rtm_corr_forward.2} parent=1 // pred_fallthru
      _
    // Predicated region
    $region50: #{ae_rtm_corr_forward.2} parent=1 // pred_check
      _
    $region51: #{ae_rtm_corr_forward.2} parent=1 // pred_check_branch
      %137 = sbr.rel (0) target = $region53
    $region52: #{ae_rtm_corr_forward.2} parent=1 // pred_region
      %s139 = ssub.s32 16, 16
      %140 = vsyncadd [#allocation18], %s139
      %s142 = sshll.u32 [#allocation19], 4
      %s143 = int_to_ptr.vmem [resolvable:$true] %s142
      %145 = dma.hbm_to_vmem [thread:$0]  %s12, 16, %s143, [#allocation18]
    $region53: #{ae_rtm_corr_forward.2} parent=1 // pred_fallthru
      _
    // Predicated region
    $region54: #{ae_rtm_corr_forward.2} parent=1 // pred_check
      _
    $region55: #{ae_rtm_corr_forward.2} parent=1 // pred_check_branch
      %147 = sbr.rel (0) target = $region57
    $region56: #{ae_rtm_corr_forward.2} parent=1 // pred_region
      _
    $region57: #{ae_rtm_corr_forward.2} parent=1 // pred_fallthru
      _
    // Predicated region
    $region58: #{ae_rtm_corr_forward.2} parent=1 // pred_check
      _
    $region59: #{ae_rtm_corr_forward.2} parent=1 // pred_check_branch
      %149 = sbr.rel (0) target = $region61
    $region60: #{ae_rtm_corr_forward.2} parent=1 // pred_region
      %s151 = ssub.s32 16, 16
      %152 = vsyncadd [#allocation21], %s151
      %s154 = sshll.u32 [#allocation20], 4
      %s155 = int_to_ptr.vmem [resolvable:$true] %s154
      %157 = dma.hbm_to_vmem [thread:$0]  %s14, 16, %s155, [#allocation21]
    $region61: #{ae_rtm_corr_forward.2} parent=1 // pred_fallthru
      _
    // Predicated region
    $region62: #{ae_rtm_corr_forward.2} parent=1 // pred_check
      _
    $region63: #{ae_rtm_corr_forward.2} parent=1 // pred_check_branch
      %159 = sbr.rel (0) target = $region65
    $region64: #{ae_rtm_corr_forward.2} parent=1 // pred_region
      %160 = dma.done [#allocation3], 32
    $region65: #{ae_rtm_corr_forward.2} parent=1 // pred_fallthru
      _
    // Predicated region
    $region66: #{ae_rtm_corr_forward.2} parent=1 // pred_check
      _
    $region67: #{ae_rtm_corr_forward.2} parent=1 // pred_check_branch
      %162 = sbr.rel (0) target = $region69
    $region68: #{ae_rtm_corr_forward.2} parent=1 // pred_region
      %163 = dma.done [#allocation6], 1024
    $region69: #{ae_rtm_corr_forward.2} parent=1 // pred_fallthru
      _
    // Predicated region
    $region70: #{ae_rtm_corr_forward.2} parent=1 // pred_check
      _
    $region71: #{ae_rtm_corr_forward.2} parent=1 // pred_check_branch
      %165 = sbr.rel (0) target = $region73
    $region72: #{ae_rtm_corr_forward.2} parent=1 // pred_region
      %166 = dma.done [#allocation6], 16
    $region73: #{ae_rtm_corr_forward.2} parent=1 // pred_fallthru
      _
    // Predicated region
    $region74: #{ae_rtm_corr_forward.2} parent=1 // pred_check
      _
    $region75: #{ae_rtm_corr_forward.2} parent=1 // pred_check_branch
      %168 = sbr.rel (0) target = $region77
    $region76: #{ae_rtm_corr_forward.2} parent=1 // pred_region
      %169 = dma.done [#allocation9], 16
    $region77: #{ae_rtm_corr_forward.2} parent=1 // pred_fallthru
      _
    // Predicated region
    $region78: #{ae_rtm_corr_forward.2} parent=1 // pred_check
      _
    $region79: #{ae_rtm_corr_forward.2} parent=1 // pred_check_branch
      %171 = sbr.rel (0) target = $region81
    $region80: #{ae_rtm_corr_forward.2} parent=1 // pred_region
      %172 = dma.done [#allocation9], 16
    $region81: #{ae_rtm_corr_forward.2} parent=1 // pred_fallthru
      _
    // Predicated region
    $region82: #{ae_rtm_corr_forward.2} parent=1 // pred_check
      _
    $region83: #{ae_rtm_corr_forward.2} parent=1 // pred_check_branch
      %174 = sbr.rel (0) target = $region85
    $region84: #{ae_rtm_corr_forward.2} parent=1 // pred_region
      %175 = dma.done [#allocation12], 16
    $region85: #{ae_rtm_corr_forward.2} parent=1 // pred_fallthru
      _
    // Predicated region
    $region86: #{ae_rtm_corr_forward.2} parent=1 // pred_check
      _
    $region87: #{ae_rtm_corr_forward.2} parent=1 // pred_check_branch
      %177 = sbr.rel (0) target = $region89
    $region88: #{ae_rtm_corr_forward.2} parent=1 // pred_region
      %178 = dma.done [#allocation12], 16
    $region89: #{ae_rtm_corr_forward.2} parent=1 // pred_fallthru
      _
    // Predicated region
    $region90: #{ae_rtm_corr_forward.2} parent=1 // pred_check
      _
    $region91: #{ae_rtm_corr_forward.2} parent=1 // pred_check_branch
      %180 = sbr.rel (0) target = $region93
    $region92: #{ae_rtm_corr_forward.2} parent=1 // pred_region
      %181 = dma.done [#allocation15], 16
    $region93: #{ae_rtm_corr_forward.2} parent=1 // pred_fallthru
      _
    // Predicated region
    $region94: #{ae_rtm_corr_forward.2} parent=1 // pred_check
      _
    $region95: #{ae_rtm_corr_forward.2} parent=1 // pred_check_branch
      %183 = sbr.rel (0) target = $region97
    $region96: #{ae_rtm_corr_forward.2} parent=1 // pred_region
      %184 = dma.done [#allocation15], 16
    $region97: #{ae_rtm_corr_forward.2} parent=1 // pred_fallthru
      _
    // Predicated region
    $region98: #{ae_rtm_corr_forward.2} parent=1 // pred_check
      _
    $region99: #{ae_rtm_corr_forward.2} parent=1 // pred_check_branch
      %186 = sbr.rel (0) target = $region101
    $region100: #{ae_rtm_corr_forward.2} parent=1 // pred_region
      %187 = dma.done [#allocation18], 16
    $region101: #{ae_rtm_corr_forward.2} parent=1 // pred_fallthru
      _
    // Predicated region
    $region102: #{ae_rtm_corr_forward.2} parent=1 // pred_check
      _
    $region103: #{ae_rtm_corr_forward.2} parent=1 // pred_check_branch
      %189 = sbr.rel (0) target = $region105
    $region104: #{ae_rtm_corr_forward.2} parent=1 // pred_region
      %190 = dma.done [#allocation18], 16
    $region105: #{ae_rtm_corr_forward.2} parent=1 // pred_fallthru
      _
    // Predicated region
    $region106: #{ae_rtm_corr_forward.2} parent=1 // pred_check
      _
    $region107: #{ae_rtm_corr_forward.2} parent=1 // pred_check_branch
      %192 = sbr.rel (0) target = $region109
    $region108: #{ae_rtm_corr_forward.2} parent=1 // pred_region
      %193 = dma.done [#allocation21], 16
    $region109: #{ae_rtm_corr_forward.2} parent=1 // pred_fallthru
      _
    %v194 = vld [vmem:[#allocation2] sm:$0x3]
    %v195 = vld [vmem:[#allocation5] sm:$0xff]
    %v196 = vld [vmem:[#allocation5 + $0x8] sm:$0xff]
    %v197 = vld [vmem:[#allocation5 + $0x10] sm:$0xff]
    %v198 = vld [vmem:[#allocation5 + $0x18] sm:$0xff]
    %v199 = vld [vmem:[#allocation5 + $0x20] sm:$0xff]
    %v200 = vld [vmem:[#allocation5 + $0x28] sm:$0xff]
    %v201 = vld [vmem:[#allocation5 + $0x30] sm:$0xff]
    %v202 = vld [vmem:[#allocation5 + $0x38] sm:$0xff]
    %v203 = vld [vmem:[#allocation7] sm:$0x1]
    %v205 = vlaneseq
    %v206 = vshrl.u32 %v205, 7
    %v207 = vsub.s32 0, %v206
    %v208 = vrot.slane %v203, %v207
    %vm210 = vcmask 523264
    %v212 = vsel %vm210, %v194, 0
    %214 = vmatprep.subr.mxu0 0.0
    %215 = vmatpush1.msra.mxu0 %v195
    %216 = vmatprep.subr.mxu0 0.0
    %217 = vmatpush1.msra.mxu0 %v196
    %218 = vmatprep.subr.mxu0 0.0
    %219 = vmatpush1.msra.mxu0 %v197
    %220 = vmatprep.subr.mxu0 0.0
    %221 = vmatpush1.msra.mxu0 %v198
    %222 = vmatprep.subr.mxu0 0.0
    %223 = vmatpush1.msra.mxu0 %v199
    %224 = vmatprep.subr.mxu0 0.0
    %225 = vmatpush1.msra.mxu0 %v200
    %226 = vmatprep.subr.mxu0 0.0
    %227 = vmatpush1.msra.mxu0 %v201
    %228 = vmatprep.subr.mxu0 0.0
    %229 = vmatpush1.msra.mxu0 %v202
    %230 = vmatprep.subr.mxu0 0.0
    %231 = vmatpush1.msra.mxu0 0.0
    %232 = vmatprep.subr.mxu0 0.0
    %233 = vmatpush1.msra.mxu0 0.0
    %234 = vmatprep.subr.mxu0 0.0
    %235 = vmatpush1.msra.mxu0 0.0
    %236 = vmatprep.subr.mxu0 0.0
    %237 = vmatpush1.msra.mxu0 0.0
    %238 = vmatprep.subr.mxu0 0.0
    %239 = vmatpush1.msra.mxu0 0.0
    %240 = vmatprep.subr.mxu0 0.0
    %241 = vmatpush1.msra.mxu0 0.0
    %242 = vmatprep.subr.mxu0 0.0
    %243 = vmatpush1.msra.mxu0 0.0
    %244 = vmatprep.subr.mxu0 0.0
    %245 = vmatpush1.msra.mxu0 0.0
    %246 = vmatprep.subr.mxu0 0.0
    %247 = vmatpush1.msra.mxu0 0.0
    %248 = vmatprep.subr.mxu0 0.0
    %249 = vmatpush1.msra.mxu0 0.0
    %250 = vmatprep.subr.mxu0 0.0
    %251 = vmatpush1.msra.mxu0 0.0
    %252 = vmatprep.subr.mxu0 0.0
    %253 = vmatpush1.msra.mxu0 0.0
    %254 = vmatprep.subr.mxu0 0.0
    %255 = vmatpush1.msra.mxu0 0.0
    %256 = vmatprep.subr.mxu0 0.0
    %257 = vmatpush1.msra.mxu0 0.0
    %258 = vmatprep.subr.mxu0 0.0
    %259 = vmatpush1.msra.mxu0 0.0
    %260 = vmatprep.subr.mxu0 0.0
    %261 = vmatpush1.msra.mxu0 0.0
    %262 = vmatprep.subr.mxu0 0.0
    %263 = vmatpush1.msra.mxu0 0.0
    %264 = vmatprep.subr.mxu0 0.0
    %265 = vmatpush1.msra.mxu0 0.0
    %266 = vmatprep.subr.mxu0 0.0
    %267 = vmatpush1.msra.mxu0 0.0
    %268 = vmatprep.subr.mxu0 0.0
    %269 = vmatpush1.msra.mxu0 0.0
    %270 = vmatprep.subr.mxu0 0.0
    %271 = vmatpush1.msra.mxu0 0.0
    %272 = vmatprep.subr.mxu0 0.0
    %273 = vmatpush1.msra.mxu0 0.0
    %274 = vmatprep.subr.mxu0 0.0
    %275 = vmatpush1.msra.mxu0 0.0
    %276 = vmatprep.subr.mxu0 0.0
    %277 = vmatpush1.msra.mxu0 0.0
    %278 = vmatprep.mubr.f32.mxu0 0.0
    %279 = vmatmul.mubr.f32.gmra.mrb[0].mxu0 %v212
    %v280 = vpop.f32.mrb[0].mxu0
    %v281 = vadd.f32 %v208, %v280
    %v282 = vpop.f32.mrb[0].mxu0
    %283 = vdwg.mxu0
    %vm284 = vcmask 517120
    %v285 = vsel %vm284, %v281, 0.0
    %286 = vadd.xlane.f32.xlu0 %v285
    %v287 = vpop.xlane.xlu0 %286
    %v288 = vrcp.pop 64.0
    %v289 = vmul.f32 %v287, %v288
    %v290 = vsub.f32 %v281, %v289
    %v291 = vmul.f32 %v290, %v290
    %v292 = vsel %vm284, %v291, 0.0
    %293 = vadd.xlane.f32.xlu0 %v292
    %v294 = vpop.xlane.xlu0 %293
    %v295 = vmul.f32 %v294, %v288
    %v296 = vadd.f32 %v295, 1e-05
    %v297 = vrsqrt.pop %v296
    %v298 = vmul.f32 %v290, %v297
    %v299 = vld [vmem:[#allocation8] sm:$0x1]
    %v301 = vlaneseq
    %v302 = vshrl.u32 %v301, 7
    %v303 = vsub.s32 0, %v302
    %v304 = vrot.slane %v299, %v303
    %v306 = vmul.f32 %v298, %v304
    %v307 = vld [vmem:[#allocation10] sm:$0x1]
    %v309 = vlaneseq
    %v310 = vshrl.u32 %v309, 7
    %v311 = vsub.s32 0, %v310
    %v312 = vrot.slane %v307, %v311
    %v314 = vadd.f32 %v306, %v312
    %v315 = vmax.f32 %v314, 0.0
    %v316 = vld [vmem:[%s5] sm:$0xff]
    %v317 = vld [vmem:[%s5 + $0x8] sm:$0xff]
    %v318 = vld [vmem:[%s5 + $0x10] sm:$0xff]
    %v319 = vld [vmem:[%s5 + $0x18] sm:$0xff]
    %v320 = vld [vmem:[%s5 + $0x20] sm:$0xff]
    %v321 = vld [vmem:[%s5 + $0x28] sm:$0xff]
    %v322 = vld [vmem:[%s5 + $0x30] sm:$0xff]
    %v323 = vld [vmem:[%s5 + $0x38] sm:$0xff]
    %v324 = vld [vmem:[#allocation11] sm:$0x1]
    %v326 = vlaneseq
    %v327 = vshrl.u32 %v326, 7
    %v328 = vsub.s32 0, %v327
    %v329 = vrot.slane %v324, %v328
    %v332 = vsel %vm210, %v315, 0
    %334 = vmatprep.subr.mxu0 0.0
    %335 = vmatpush1.msra.mxu0 %v316
    %336 = vmatprep.subr.mxu0 0.0
    %337 = vmatpush1.msra.mxu0 %v317
    %338 = vmatprep.subr.mxu0 0.0
    %339 = vmatpush1.msra.mxu0 %v318
    %340 = vmatprep.subr.mxu0 0.0
    %341 = vmatpush1.msra.mxu0 %v319
    %342 = vmatprep.subr.mxu0 0.0
    %343 = vmatpush1.msra.mxu0 %v320
    %344 = vmatprep.subr.mxu0 0.0
    %345 = vmatpush1.msra.mxu0 %v321
    %346 = vmatprep.subr.mxu0 0.0
    %347 = vmatpush1.msra.mxu0 %v322
    %348 = vmatprep.subr.mxu0 0.0
    %349 = vmatpush1.msra.mxu0 %v323
    %350 = vmatprep.subr.mxu0 0.0
    %351 = vmatpush1.msra.mxu0 0.0
    %352 = vmatprep.subr.mxu0 0.0
    %353 = vmatpush1.msra.mxu0 0.0
    %354 = vmatprep.subr.mxu0 0.0
    %355 = vmatpush1.msra.mxu0 0.0
    %356 = vmatprep.subr.mxu0 0.0
    %357 = vmatpush1.msra.mxu0 0.0
    %358 = vmatprep.subr.mxu0 0.0
    %359 = vmatpush1.msra.mxu0 0.0
    %360 = vmatprep.subr.mxu0 0.0
    %361 = vmatpush1.msra.mxu0 0.0
    %362 = vmatprep.subr.mxu0 0.0
    %363 = vmatpush1.msra.mxu0 0.0
    %364 = vmatprep.subr.mxu0 0.0
    %365 = vmatpush1.msra.mxu0 0.0
    %366 = vmatprep.subr.mxu0 0.0
    %367 = vmatpush1.msra.mxu0 0.0
    %368 = vmatprep.subr.mxu0 0.0
    %369 = vmatpush1.msra.mxu0 0.0
    %370 = vmatprep.subr.mxu0 0.0
    %371 = vmatpush1.msra.mxu0 0.0
    %372 = vmatprep.subr.mxu0 0.0
    %373 = vmatpush1.msra.mxu0 0.0
    %374 = vmatprep.subr.mxu0 0.0
    %375 = vmatpush1.msra.mxu0 0.0
    %376 = vmatprep.subr.mxu0 0.0
    %377 = vmatpush1.msra.mxu0 0.0
    %378 = vmatprep.subr.mxu0 0.0
    %379 = vmatpush1.msra.mxu0 0.0
    %380 = vmatprep.subr.mxu0 0.0
    %381 = vmatpush1.msra.mxu0 0.0
    %382 = vmatprep.subr.mxu0 0.0
    %383 = vmatpush1.msra.mxu0 0.0
    %384 = vmatprep.subr.mxu0 0.0
    %385 = vmatpush1.msra.mxu0 0.0
    %386 = vmatprep.subr.mxu0 0.0
    %387 = vmatpush1.msra.mxu0 0.0
    %388 = vmatprep.subr.mxu0 0.0
    %389 = vmatpush1.msra.mxu0 0.0
    %390 = vmatprep.subr.mxu0 0.0
    %391 = vmatpush1.msra.mxu0 0.0
    %392 = vmatprep.subr.mxu0 0.0
    %393 = vmatpush1.msra.mxu0 0.0
    %394 = vmatprep.subr.mxu0 0.0
    %395 = vmatpush1.msra.mxu0 0.0
    %396 = vmatprep.subr.mxu0 0.0
    %397 = vmatpush1.msra.mxu0 0.0
    %398 = vmatprep.mubr.f32.mxu0 0.0
    %399 = vmatmul.mubr.f32.gmra.mrb[0].mxu0 %v332
    %v400 = vpop.f32.mrb[0].mxu0
    %v401 = vadd.f32 %v329, %v400
    %v402 = vpop.f32.mrb[0].mxu0
    %403 = vdwg.mxu0
    %vm404 = vcmask 254976
    %v405 = vsel %vm404, %v401, 0.0
    %406 = vadd.xlane.f32.xlu0 %v405
    %v407 = vpop.xlane.xlu0 %406
    %v408 = vrcp.pop 32.0
    %v409 = vmul.f32 %v407, %v408
    %v410 = vsub.f32 %v401, %v409
    %v411 = vmul.f32 %v410, %v410
    %v412 = vsel %vm404, %v411, 0.0
    %413 = vadd.xlane.f32.xlu0 %v412
    %v414 = vpop.xlane.xlu0 %413
    %v415 = vmul.f32 %v414, %v408
    %v416 = vadd.f32 %v415, 1e-05
    %v417 = vrsqrt.pop %v416
    %v418 = vmul.f32 %v410, %v417
    %v419 = vld [vmem:[#allocation13] sm:$0x1]
    %v421 = vlaneseq
    %v422 = vshrl.u32 %v421, 7
    %v423 = vsub.s32 0, %v422
    %v424 = vrot.slane %v419, %v423
    %v426 = vmul.f32 %v418, %v424
    %v427 = vld [vmem:[#allocation14] sm:$0x1]
    %v429 = vlaneseq
    %v430 = vshrl.u32 %v429, 7
    %v431 = vsub.s32 0, %v430
    %v432 = vrot.slane %v427, %v431
    %v434 = vadd.f32 %v426, %v432
    %v435 = vmax.f32 %v434, 0.0
    %v436 = vld [vmem:[%s9] sm:$0xff]
    %v437 = vld [vmem:[%s9 + $0x8] sm:$0xff]
    %v438 = vld [vmem:[%s9 + $0x10] sm:$0xff]
    %v439 = vld [vmem:[%s9 + $0x18] sm:$0xff]
    %v440 = vld [vmem:[#allocation16] sm:$0x1]
    %v442 = vlaneseq
    %v443 = vshrl.u32 %v442, 7
    %v444 = vsub.s32 0, %v443
    %v445 = vrot.slane %v440, %v444
    %vm447 = vcmask 261120
    %v449 = vsel %vm447, %v435, 0
    %451 = vmatprep.subr.mxu0 0.0
    %452 = vmatpush1.msra.mxu0 %v436
    %453 = vmatprep.subr.mxu0 0.0
    %454 = vmatpush1.msra.mxu0 %v437
    %455 = vmatprep.subr.mxu0 0.0
    %456 = vmatpush1.msra.mxu0 %v438
    %457 = vmatprep.subr.mxu0 0.0
    %458 = vmatpush1.msra.mxu0 %v439
    %459 = vmatprep.subr.mxu0 0.0
    %460 = vmatpush1.msra.mxu0 0.0
    %461 = vmatprep.subr.mxu0 0.0
    %462 = vmatpush1.msra.mxu0 0.0
    %463 = vmatprep.subr.mxu0 0.0
    %464 = vmatpush1.msra.mxu0 0.0
    %465 = vmatprep.subr.mxu0 0.0
    %466 = vmatpush1.msra.mxu0 0.0
    %467 = vmatprep.subr.mxu0 0.0
    %468 = vmatpush1.msra.mxu0 0.0
    %469 = vmatprep.subr.mxu0 0.0
    %470 = vmatpush1.msra.mxu0 0.0
    %471 = vmatprep.subr.mxu0 0.0
    %472 = vmatpush1.msra.mxu0 0.0
    %473 = vmatprep.subr.mxu0 0.0
    %474 = vmatpush1.msra.mxu0 0.0
    %475 = vmatprep.subr.mxu0 0.0
    %476 = vmatpush1.msra.mxu0 0.0
    %477 = vmatprep.subr.mxu0 0.0
    %478 = vmatpush1.msra.mxu0 0.0
    %479 = vmatprep.subr.mxu0 0.0
    %480 = vmatpush1.msra.mxu0 0.0
    %481 = vmatprep.subr.mxu0 0.0
    %482 = vmatpush1.msra.mxu0 0.0
    %483 = vmatprep.subr.mxu0 0.0
    %484 = vmatpush1.msra.mxu0 0.0
    %485 = vmatprep.subr.mxu0 0.0
    %486 = vmatpush1.msra.mxu0 0.0
    %487 = vmatprep.subr.mxu0 0.0
    %488 = vmatpush1.msra.mxu0 0.0
    %489 = vmatprep.subr.mxu0 0.0
    %490 = vmatpush1.msra.mxu0 0.0
    %491 = vmatprep.subr.mxu0 0.0
    %492 = vmatpush1.msra.mxu0 0.0
    %493 = vmatprep.subr.mxu0 0.0
    %494 = vmatpush1.msra.mxu0 0.0
    %495 = vmatprep.subr.mxu0 0.0
    %496 = vmatpush1.msra.mxu0 0.0
    %497 = vmatprep.subr.mxu0 0.0
    %498 = vmatpush1.msra.mxu0 0.0
    %499 = vmatprep.subr.mxu0 0.0
    %500 = vmatpush1.msra.mxu0 0.0
    %501 = vmatprep.subr.mxu0 0.0
    %502 = vmatpush1.msra.mxu0 0.0
    %503 = vmatprep.subr.mxu0 0.0
    %504 = vmatpush1.msra.mxu0 0.0
    %505 = vmatprep.subr.mxu0 0.0
    %506 = vmatpush1.msra.mxu0 0.0
    %507 = vmatprep.subr.mxu0 0.0
    %508 = vmatpush1.msra.mxu0 0.0
    %509 = vmatprep.subr.mxu0 0.0
    %510 = vmatpush1.msra.mxu0 0.0
    %511 = vmatprep.subr.mxu0 0.0
    %512 = vmatpush1.msra.mxu0 0.0
    %513 = vmatprep.subr.mxu0 0.0
    %514 = vmatpush1.msra.mxu0 0.0
    %515 = vmatprep.mubr.f32.mxu0 0.0
    %516 = vmatmul.mubr.f32.gmra.mrb[0].mxu0 %v449
    %v517 = vpop.f32.mrb[0].mxu0
    %v518 = vadd.f32 %v445, %v517
    %v519 = vpop.f32.mrb[0].mxu0
    %520 = vdwg.mxu0
    %vm521 = vcmask 123904
    %v522 = vsel %vm521, %v518, 0.0
    %523 = vadd.xlane.f32.xlu0 %v522
    %v524 = vpop.xlane.xlu0 %523
    %v525 = vrcp.pop 16.0
    %v526 = vmul.f32 %v524, %v525
    %v527 = vsub.f32 %v518, %v526
    %v528 = vmul.f32 %v527, %v527
    %v529 = vsel %vm521, %v528, 0.0
    %530 = vadd.xlane.f32.xlu0 %v529
    %v531 = vpop.xlane.xlu0 %530
    %v532 = vmul.f32 %v531, %v525
    %v533 = vadd.f32 %v532, 1e-05
    %v534 = vrsqrt.pop %v533
    %v535 = vmul.f32 %v527, %v534
    %v536 = vld [vmem:[#allocation17] sm:$0x1]
    %v538 = vlaneseq
    %v539 = vshrl.u32 %v538, 7
    %v540 = vsub.s32 0, %v539
    %v541 = vrot.slane %v536, %v540
    %v543 = vmul.f32 %v535, %v541
    %v544 = vld [vmem:[#allocation19] sm:$0x1]
    %v546 = vlaneseq
    %v547 = vshrl.u32 %v546, 7
    %v548 = vsub.s32 0, %v547
    %v549 = vrot.slane %v544, %v548
    %v551 = vadd.f32 %v543, %v549
    %v552 = vmax.f32 %v551, 0.0
    %v553 = vld [vmem:[%s13] sm:$0xff]
    %v554 = vld [vmem:[%s13 + $0x8] sm:$0xff]
    %v555 = vld [vmem:[#allocation20] sm:$0x1]
    %v557 = vlaneseq
    %v558 = vshrl.u32 %v557, 7
    %v559 = vsub.s32 0, %v558
    %v560 = vrot.slane %v555, %v559
    %vm562 = vcmask 130048
    %v564 = vsel %vm562, %v552, 0
    %566 = vmatprep.subr.mxu0 0.0
    %567 = vmatpush1.msra.mxu0 %v553
    %568 = vmatprep.subr.mxu0 0.0
    %569 = vmatpush1.msra.mxu0 %v554
    %570 = vmatprep.subr.mxu0 0.0
    %571 = vmatpush1.msra.mxu0 0.0
    %572 = vmatprep.subr.mxu0 0.0
    %573 = vmatpush1.msra.mxu0 0.0
    %574 = vmatprep.subr.mxu0 0.0
    %575 = vmatpush1.msra.mxu0 0.0
    %576 = vmatprep.subr.mxu0 0.0
    %577 = vmatpush1.msra.mxu0 0.0
    %578 = vmatprep.subr.mxu0 0.0
    %579 = vmatpush1.msra.mxu0 0.0
    %580 = vmatprep.subr.mxu0 0.0
    %581 = vmatpush1.msra.mxu0 0.0
    %582 = vmatprep.subr.mxu0 0.0
    %583 = vmatpush1.msra.mxu0 0.0
    %584 = vmatprep.subr.mxu0 0.0
    %585 = vmatpush1.msra.mxu0 0.0
    %586 = vmatprep.subr.mxu0 0.0
    %587 = vmatpush1.msra.mxu0 0.0
    %588 = vmatprep.subr.mxu0 0.0
    %589 = vmatpush1.msra.mxu0 0.0
    %590 = vmatprep.subr.mxu0 0.0
    %591 = vmatpush1.msra.mxu0 0.0
    %592 = vmatprep.subr.mxu0 0.0
    %593 = vmatpush1.msra.mxu0 0.0
    %594 = vmatprep.subr.mxu0 0.0
    %595 = vmatpush1.msra.mxu0 0.0
    %596 = vmatprep.subr.mxu0 0.0
    %597 = vmatpush1.msra.mxu0 0.0
    %598 = vmatprep.subr.mxu0 0.0
    %599 = vmatpush1.msra.mxu0 0.0
    %600 = vmatprep.subr.mxu0 0.0
    %601 = vmatpush1.msra.mxu0 0.0
    %602 = vmatprep.subr.mxu0 0.0
    %603 = vmatpush1.msra.mxu0 0.0
    %604 = vmatprep.subr.mxu0 0.0
    %605 = vmatpush1.msra.mxu0 0.0
    %606 = vmatprep.subr.mxu0 0.0
    %607 = vmatpush1.msra.mxu0 0.0
    %608 = vmatprep.subr.mxu0 0.0
    %609 = vmatpush1.msra.mxu0 0.0
    %610 = vmatprep.subr.mxu0 0.0
    %611 = vmatpush1.msra.mxu0 0.0
    %612 = vmatprep.subr.mxu0 0.0
    %613 = vmatpush1.msra.mxu0 0.0
    %614 = vmatprep.subr.mxu0 0.0
    %615 = vmatpush1.msra.mxu0 0.0
    %616 = vmatprep.subr.mxu0 0.0
    %617 = vmatpush1.msra.mxu0 0.0
    %618 = vmatprep.subr.mxu0 0.0
    %619 = vmatpush1.msra.mxu0 0.0
    %620 = vmatprep.subr.mxu0 0.0
    %621 = vmatpush1.msra.mxu0 0.0
    %622 = vmatprep.subr.mxu0 0.0
    %623 = vmatpush1.msra.mxu0 0.0
    %624 = vmatprep.subr.mxu0 0.0
    %625 = vmatpush1.msra.mxu0 0.0
    %626 = vmatprep.subr.mxu0 0.0
    %627 = vmatpush1.msra.mxu0 0.0
    %628 = vmatprep.subr.mxu0 0.0
    %629 = vmatpush1.msra.mxu0 0.0
    %630 = vmatprep.mubr.f32.mxu0 0.0
    %631 = vmatmul.mubr.f32.gmra.mrb[0].mxu0 %v564
    %v632 = vpop.f32.mrb[0].mxu0
    %v633 = vadd.f32 %v560, %v632
    %v634 = vpop.f32.mrb[0].mxu0
    %635 = vdwg.mxu0
    %vm636 = vcmask 58368
    %637 = vst.msk [vmem:[#allocation22] sm:$0x3] %vm636, %v633
    %v638 = vlaneseq
    %v639 = vand.u32 %v638, 127
    %vm640 = vcmp.eq.s32.totalorder %v639, 5
    %642 = vrot.lane.b32.xlu0 %v633, 126
    %v643 = vpop.permute.xlu0 %642
    %v645 = vsub.f32 %v633, %v643
    %647 = vset.pattern.permute.xlu0 2
    %648 = vperm.xlu0 %647, %v645
    %v649 = vpop.permute.xlu0 %648
    %v651 = vsel %vm640, %v649, %v633
    %652 = vst.msk [vmem:[%s16] sm:$0x3] %vm636, %v651
    // Predicated region
    $region110: #{ae_rtm_corr_forward.2} parent=1 // pred_check
      _
    $region111: #{ae_rtm_corr_forward.2} parent=1 // pred_check_branch
      %654 = sbr.rel (0) target = $region113
    $region112: #{ae_rtm_corr_forward.2} parent=1 // pred_region
      %s656 = ssub.s32 32, 32
      %657 = vsyncadd [#allocation4], %s656
      %s659 = sshll.u32 [#allocation22], 4
      %s660 = int_to_ptr.vmem [resolvable:$true] %s659
      %662 = dma.vmem_to_hbm [thread:$0]  %s660, 32, %s15, [#allocation4]
    $region113: #{ae_rtm_corr_forward.2} parent=1 // pred_fallthru
      _
    // Predicated region
    $region114: #{ae_rtm_corr_forward.2} parent=1 // pred_check
      _
    $region115: #{ae_rtm_corr_forward.2} parent=1 // pred_check_branch
      %664 = sbr.rel (0) target = $region117
    $region116: #{ae_rtm_corr_forward.2} parent=1 // pred_region
      _
    $region117: #{ae_rtm_corr_forward.2} parent=1 // pred_fallthru
      _
    // Predicated region
    $region118: #{ae_rtm_corr_forward.2} parent=1 // pred_check
      _
    $region119: #{ae_rtm_corr_forward.2} parent=1 // pred_check_branch
      %666 = sbr.rel (0) target = $region121
    $region120: #{ae_rtm_corr_forward.2} parent=1 // pred_region
      %667 = dma.done [#allocation4], 32
    $region121: #{ae_rtm_corr_forward.2} parent=1 // pred_fallthru
      _
    // Predicated region
    $region122: #{ae_rtm_corr_forward.2} parent=1 // pred_check
      _
    $region123: #{ae_rtm_corr_forward.2} parent=1 // pred_check_branch
      %669 = sbr.rel (0) target = $region125
    $region124: #{ae_rtm_corr_forward.2} parent=1 // pred_region
      _
    $region125: #{ae_rtm_corr_forward.2} parent=1 // pred_fallthru
      _
    %670 = vsyncpa [#allocation3], 1
    %671 = vsyncpa [#allocation6], 1
    %672 = vsyncpa [#allocation9], 1
    %673 = vsyncpa [#allocation12], 1
    %674 = vsyncpa [#allocation15], 1
    %675 = vsyncpa [#allocation18], 1
    %676 = vsyncpa [#allocation21], 1
    %677 = vsyncpa [#allocation4], 1

// kernel: ae_rtm_corr_forward.3
$region0: #{ae_rtm_corr_forward.3}
  #allocation0 [shape = 'u32[]', space=smem, size = 0x4, offset = 0x4, fixed_abs, tag = 'smem constant byte address 0x4 - core index']
  #allocation1 [shape = 'u32[144,128]{1,0:T(1,128)}', space=vmem, size = 0x12000, scoped, tag = 'internal scratch']
  #allocation2 [shape = 'f32[8,2176]{1,0:T(8,128)}', space=vmem, size = 0x11000, scoped, tag = 'scratch operand']
  #allocation3 [shape = 'f32[8,2176]{1,0:T(8,128)}', space=vmem, size = 0x11000, scoped, tag = 'scratch operand']
  %s0 = inlined_call_operand.vmem [shape: f32[8,8], index: 0, kind: input, shape index: {}]
  %s1 = inlined_call_operand.hbm [shape: f32[8,2176], index: 1, kind: input, shape index: {}]
  %s2 = inlined_call_operand.hbm [shape: f32[1,2176], index: 2, kind: input, shape index: {}]
  %s3 = inlined_call_operand.hbm [shape: f32[2176,8448], index: 3, kind: input, shape index: {}]
  %s4 = inlined_call_operand.hbm [shape: f32[1,8448], index: 4, kind: input, shape index: {}]
  %s5 = inlined_call_operand.hbm [shape: f32[8448,2176], index: 5, kind: input, shape index: {}]
  %s6 = inlined_call_operand.hbm [shape: f32[1,2176], index: 6, kind: input, shape index: {}]
  %s7 = inlined_call_operand.vmem [shape: f32[8,2176], index: 7, kind: output, shape index: {}]
  %s8 = sld [smem:[#allocation0]]
  $region93: #{ae_rtm_corr_forward.3} parent=0
    _
  %s10 = ssub.s32 1, %s8
  %s11 = scalar_select 0, %s10, %s8
  $region1: #{ae_rtm_corr_forward.3} parent=0
    #allocation4 [shape = 'u8[69632]{0}', space=vmem, size = 0x11000, scoped, tag = 'input window, operand 1, single buffered']
    #allocation5 [shape = 's32[2]{0}', space=sflag, size = 0x8, scoped, tag = 'scoped memory for ae_rtm_corr_forward.3']
    #allocation6 [shape = 'u8[8704]{0}', space=vmem, size = 0x2400, scoped, tag = 'input window, operand 2, single buffered']
    #allocation7 [shape = 's32[1]{0}', space=sflag, size = 0x4, scoped, tag = 'scoped memory for ae_rtm_corr_forward.3']
    #allocation8 [shape = 'u8[13369344]{0}', space=vmem, size = 0xcc0000, scoped, tag = 'input window, operand 3']
    #allocation9 [shape = 'u8[6144]{0}', space=vmem, size = 0x1800, scoped, tag = 'input window, operand 4']
    #allocation10 [shape = 'u8[13369344]{0}', space=vmem, size = 0xcc0000, scoped, tag = 'input window, operand 5']
    #allocation11 [shape = 'u8[8704]{0}', space=vmem, size = 0x2400, scoped, tag = 'input window, operand 6, single buffered']
    %12 = vsyncpa [#allocation5], 0
    %13 = vsyncpa [#allocation7], 0
    loop: start=0, step=1, limit=13
    $region2: #{ae_rtm_corr_forward.3} parent=1 // loop_pre_header
      _
    $region3: #{ae_rtm_corr_forward.3} parent=1 // loop_header
      %s15 = sphi 0, %s19
      %p16 = scmp.ge.s32.totalorder %s15, 13
      %s23 = sphi 0, %s23
      %s25 = sphi 0, %s23
      %s26 = sphi 0, %s25
      %s40 = sphi 0, %s26
      %s44 = sphi 0, %s44
      %s46 = sphi 0, %s44
      %s47 = sphi 0, %s46
      %s61 = sphi 0, %s47
      %s65 = sphi 0, %s65
      %s67 = sphi 0, %s65
      %s68 = sphi 0, %s67
      %s82 = sphi 0, %s68
      %s88 = sphi 0, %s90
      %s91 = sphi 0, %s88
      %s92 = sphi 0, %s91
      %s108 = sphi 0, %s92
      %s114 = sphi 0, %s116
      %s117 = sphi 0, %s114
      %s118 = sphi 0, %s117
      %s134 = sphi 0, %s118
      %s140 = sphi 0, %s142
      %s143 = sphi 0, %s140
      %s144 = sphi 0, %s143
      %s160 = sphi 0, %s144
      %s164 = sphi 0, %s164
      %s166 = sphi 0, %s164
      %s167 = sphi 0, %s166
      %s181 = sphi 0, %s167
      %s185 = sphi 0, %s185
      %s187 = sphi 0, %s185
      %s188 = sphi 0, %s187
      %s202 = sphi 0, %s188
    $region4: #{ae_rtm_corr_forward.3} parent=1 // loop_header_branch
      %18 = sbr.rel (%p16) target = $region8
    $region5: #{ae_rtm_corr_forward.3} parent=1 // loop_body
      %s20 = ssub.s32 %s15, 1
      %s21 = ssub.s32 %s15, 2
      %s22 = sadd.s32 %s15, 1
      %s24 = sadd.s32 %s23, 1
      %p27 = scmp.eq.s32.totalorder %s15, 10
      %p28 = scmp.ne.s32.totalorder %s23, %s25
      %p29 = scmp.eq.s32.totalorder %s15, 0
      %p30 = por %p28, %p29
      %p31 = scmp.ne.s32.totalorder %s23, %s25
      %p32 = scmp.eq.s32.totalorder %s20, 10
      %p33 = por %p31, %p32
      %p34 = scmp.ne.s32.totalorder %s25, %s26
      %p35 = scmp.eq.s32.totalorder %s20, 0
      %p36 = por %p34, %p35
      %p37 = scmp.ne.s32.totalorder %s25, %s26
      %p38 = scmp.eq.s32.totalorder %s21, 10
      %p39 = por %p37, %p38
      %p41 = scmp.ne.s32.totalorder %s26, %s40
      %p42 = scmp.eq.s32.totalorder %s21, 0
      %p43 = por %p41, %p42
      %s45 = sadd.s32 %s44, 1
      %p48 = scmp.eq.s32.totalorder %s15, 10
      %p49 = scmp.ne.s32.totalorder %s44, %s46
      %p50 = scmp.eq.s32.totalorder %s15, 0
      %p51 = por %p49, %p50
      %p52 = scmp.ne.s32.totalorder %s44, %s46
      %p53 = scmp.eq.s32.totalorder %s20, 10
      %p54 = por %p52, %p53
      %p55 = scmp.ne.s32.totalorder %s46, %s47
      %p56 = scmp.eq.s32.totalorder %s20, 0
      %p57 = por %p55, %p56
      %p58 = scmp.ne.s32.totalorder %s46, %s47
      %p59 = scmp.eq.s32.totalorder %s21, 10
      %p60 = por %p58, %p59
      %p62 = scmp.ne.s32.totalorder %s47, %s61
      %p63 = scmp.eq.s32.totalorder %s21, 0
      %p64 = por %p62, %p63
      %s66 = sadd.s32 %s65, 1
      %p69 = scmp.eq.s32.totalorder %s15, 10
      %p70 = scmp.ne.s32.totalorder %s65, %s67
      %p71 = scmp.eq.s32.totalorder %s15, 0
      %p72 = por %p70, %p71
      %p73 = scmp.ne.s32.totalorder %s65, %s67
      %p74 = scmp.eq.s32.totalorder %s20, 10
      %p75 = por %p73, %p74
      %p76 = scmp.ne.s32.totalorder %s67, %s68
      %p77 = scmp.eq.s32.totalorder %s20, 0
      %p78 = por %p76, %p77
      %p79 = scmp.ne.s32.totalorder %s67, %s68
      %p80 = scmp.eq.s32.totalorder %s21, 10
      %p81 = por %p79, %p80
      %p83 = scmp.ne.s32.totalorder %s68, %s82
      %p84 = scmp.eq.s32.totalorder %s21, 0
      %p85 = por %p83, %p84
      %s86 = ssub.s32 %s15, %s22
      %p87 = scmp.eq.s32.totalorder %s86, 0
      %s89 = sadd.s32 %s88, 1
      %s90 = scalar_select %p87, %s88, %s89
      %p93 = pneg %p87
      %p94 = scmp.eq.s32.totalorder %s15, 10
      %p95 = por %p93, %p94
      %p96 = scmp.ne.s32.totalorder %s88, %s91
      %p97 = scmp.eq.s32.totalorder %s15, 0
      %p98 = por %p96, %p97
      %p99 = scmp.ne.s32.totalorder %s88, %s91
      %p100 = scmp.eq.s32.totalorder %s20, 10
      %p101 = por %p99, %p100
      %p102 = scmp.ne.s32.totalorder %s91, %s92
      %p103 = scmp.eq.s32.totalorder %s20, 0
      %p104 = por %p102, %p103
      %p105 = scmp.ne.s32.totalorder %s91, %s92
      %p106 = scmp.eq.s32.totalorder %s21, 10
      %p107 = por %p105, %p106
      %p109 = scmp.ne.s32.totalorder %s92, %s108
      %p110 = scmp.eq.s32.totalorder %s21, 0
      %p111 = por %p109, %p110
      %s112 = ssub.s32 %s15, %s22
      %p113 = scmp.eq.s32.totalorder %s112, 0
      %s115 = sadd.s32 %s114, 1
      %s116 = scalar_select %p113, %s114, %s115
      %p119 = pneg %p113
      %p120 = scmp.eq.s32.totalorder %s15, 10
      %p121 = por %p119, %p120
      %p122 = scmp.ne.s32.totalorder %s114, %s117
      %p123 = scmp.eq.s32.totalorder %s15, 0
      %p124 = por %p122, %p123
      %p125 = scmp.ne.s32.totalorder %s114, %s117
      %p126 = scmp.eq.s32.totalorder %s20, 10
      %p127 = por %p125, %p126
      %p128 = scmp.ne.s32.totalorder %s117, %s118
      %p129 = scmp.eq.s32.totalorder %s20, 0
      %p130 = por %p128, %p129
      %p131 = scmp.ne.s32.totalorder %s117, %s118
      %p132 = scmp.eq.s32.totalorder %s21, 10
      %p133 = por %p131, %p132
      %p135 = scmp.ne.s32.totalorder %s118, %s134
      %p136 = scmp.eq.s32.totalorder %s21, 0
      %p137 = por %p135, %p136
      %s138 = ssub.s32 %s15, %s22
      %p139 = scmp.eq.s32.totalorder %s138, 0
      %s141 = sadd.s32 %s140, 1
      %s142 = scalar_select %p139, %s140, %s141
      %p145 = pneg %p139
      %p146 = scmp.eq.s32.totalorder %s15, 10
      %p147 = por %p145, %p146
      %p148 = scmp.ne.s32.totalorder %s140, %s143
      %p149 = scmp.eq.s32.totalorder %s15, 0
      %p150 = por %p148, %p149
      %p151 = scmp.ne.s32.totalorder %s140, %s143
      %p152 = scmp.eq.s32.totalorder %s20, 10
      %p153 = por %p151, %p152
      %p154 = scmp.ne.s32.totalorder %s143, %s144
      %p155 = scmp.eq.s32.totalorder %s20, 0
      %p156 = por %p154, %p155
      %p157 = scmp.ne.s32.totalorder %s143, %s144
      %p158 = scmp.eq.s32.totalorder %s21, 10
      %p159 = por %p157, %p158
      %p161 = scmp.ne.s32.totalorder %s144, %s160
      %p162 = scmp.eq.s32.totalorder %s21, 0
      %p163 = por %p161, %p162
      %s165 = sadd.s32 %s164, 1
      %p168 = scmp.eq.s32.totalorder %s15, 10
      %p169 = scmp.ne.s32.totalorder %s164, %s166
      %p170 = scmp.eq.s32.totalorder %s15, 0
      %p171 = por %p169, %p170
      %p172 = scmp.ne.s32.totalorder %s164, %s166
      %p173 = scmp.eq.s32.totalorder %s20, 10
      %p174 = por %p172, %p173
      %p175 = scmp.ne.s32.totalorder %s166, %s167
      %p176 = scmp.eq.s32.totalorder %s20, 0
      %p177 = por %p175, %p176
      %p178 = scmp.ne.s32.totalorder %s166, %s167
      %p179 = scmp.eq.s32.totalorder %s21, 10
      %p180 = por %p178, %p179
      %p182 = scmp.ne.s32.totalorder %s167, %s181
      %p183 = scmp.eq.s32.totalorder %s21, 0
      %p184 = por %p182, %p183
      %s186 = sadd.s32 %s185, 1
      %p189 = scmp.eq.s32.totalorder %s15, 10
      %p190 = scmp.ne.s32.totalorder %s185, %s187
      %p191 = scmp.eq.s32.totalorder %s15, 0
      %p192 = por %p190, %p191
      %p193 = scmp.ne.s32.totalorder %s185, %s187
      %p194 = scmp.eq.s32.totalorder %s20, 10
      %p195 = por %p193, %p194
      %p196 = scmp.ne.s32.totalorder %s187, %s188
      %p197 = scmp.eq.s32.totalorder %s20, 0
      %p198 = por %p196, %p197
      %p199 = scmp.ne.s32.totalorder %s187, %s188
      %p200 = scmp.eq.s32.totalorder %s21, 10
      %p201 = por %p199, %p200
      %p203 = scmp.ne.s32.totalorder %s188, %s202
      %p204 = scmp.eq.s32.totalorder %s21, 0
      %p205 = por %p203, %p204
      %p206 = scmp.le.s32.totalorder 1, %s15
      %p207 = scmp.lt.s32.totalorder %s15, 12
      %p208 = pnand %p206, %p207
      %p209 = pneg %p208
      // Predicated region
      $region9: #{ae_rtm_corr_forward.3} parent=5 // pred_check
        _
      $region10: #{ae_rtm_corr_forward.3} parent=5 // pred_check_branch
        %211 = sbr.rel (%p208) target = $region12
      $region11: #{ae_rtm_corr_forward.3} parent=5 // pred_region
        %s212 = ssub.s32 %s15, 1
        // Predicated region
        $region13: #{ae_rtm_corr_forward.3} parent=11 // pred_check
          %p213 = pneg %p36
        $region14: #{ae_rtm_corr_forward.3} parent=11 // pred_check_branch
          %215 = sbr.rel (%p213) target = $region16
        $region15: #{ae_rtm_corr_forward.3} parent=11 // pred_region
          _
        $region16: #{ae_rtm_corr_forward.3} parent=11 // pred_fallthru
          _
        // Predicated region
        $region17: #{ae_rtm_corr_forward.3} parent=11 // pred_check
          %p216 = pneg %p57
        $region18: #{ae_rtm_corr_forward.3} parent=11 // pred_check_branch
          %218 = sbr.rel (%p216) target = $region20
        $region19: #{ae_rtm_corr_forward.3} parent=11 // pred_region
          %s220 = ssub.s32 2176, 2176
          %221 = vsyncadd [#allocation5], %s220
          %s223 = sshll.u32 [#allocation4], 4
          %s224 = int_to_ptr.vmem [resolvable:$true] %s223
          %226 = dma.hbm_to_vmem [thread:$0]  %s1, 2176, %s224, [#allocation5]
        $region20: #{ae_rtm_corr_forward.3} parent=11 // pred_fallthru
          _
        // Predicated region
        $region21: #{ae_rtm_corr_forward.3} parent=11 // pred_check
          %p227 = pneg %p78
        $region22: #{ae_rtm_corr_forward.3} parent=11 // pred_check_branch
          %229 = sbr.rel (%p227) target = $region24
        $region23: #{ae_rtm_corr_forward.3} parent=11 // pred_region
          %s231 = ssub.s32 272, 272
          %232 = vsyncadd [#allocation7], %s231
          %s234 = sshll.u32 [#allocation6], 4
          %s235 = int_to_ptr.vmem [resolvable:$true] %s234
          %237 = dma.hbm_to_vmem [thread:$0]  %s2, 272, %s235, [#allocation7]
        $region24: #{ae_rtm_corr_forward.3} parent=11 // pred_fallthru
          _
        // Predicated region
        $region25: #{ae_rtm_corr_forward.3} parent=11 // pred_check
          %p238 = pneg %p177
        $region26: #{ae_rtm_corr_forward.3} parent=11 // pred_check_branch
          %240 = sbr.rel (%p238) target = $region28
        $region27: #{ae_rtm_corr_forward.3} parent=11 // pred_region
          %s242 = ssub.s32 272, 272
          %243 = vsyncadd [#allocation7], %s242
          %s245 = sshll.u32 [#allocation11], 4
          %s246 = int_to_ptr.vmem [resolvable:$true] %s245
          %248 = dma.hbm_to_vmem [thread:$0]  %s6, 272, %s246, [#allocation7]
        $region28: #{ae_rtm_corr_forward.3} parent=11 // pred_fallthru
          _
      $region12: #{ae_rtm_corr_forward.3} parent=5 // pred_fallthru
        _
      %p249 = scmp.lt.s32.totalorder %s15, 11
      // Predicated region
      $region29: #{ae_rtm_corr_forward.3} parent=5 // pred_check
        %p250 = pneg %p249
      $region30: #{ae_rtm_corr_forward.3} parent=5 // pred_check_branch
        %252 = sbr.rel (%p250) target = $region32
      $region31: #{ae_rtm_corr_forward.3} parent=5 // pred_region
        // Predicated region
        $region33: #{ae_rtm_corr_forward.3} parent=31 // pred_check
          %p253 = pneg %p98
        $region34: #{ae_rtm_corr_forward.3} parent=31 // pred_check_branch
          %255 = sbr.rel (%p253) target = $region36
        $region35: #{ae_rtm_corr_forward.3} parent=31 // pred_region
          %s256 = sand.u32 %s15, 1
          %s257 = scalar_lea.sflag [#allocation5], %s256
          %s258 = sand.u32 %s88, 1
          %s259 = smul.addr %s258, 13056
          %s260 = scalar_lea.vmem [#allocation8], %s259
          %s261 = smul.u32 6, %s15
          %s263 = ssub.s32 208896, 208896
          %264 = vsyncadd %s257, %s263
          %s265 = smul.addr %s261, 128
          %s266 = scalar_lea.hbm %s3, %s265
          %s267 = sshll.u32 %s260, 4
          %s268 = int_to_ptr.vmem [resolvable:$true] %s267
          %273 = dma.hbm_to_vmem [thread:$0]  %s266, 208896, %s268, %s257, 8448, 768, 48
        $region36: #{ae_rtm_corr_forward.3} parent=31 // pred_fallthru
          _
        // Predicated region
        $region37: #{ae_rtm_corr_forward.3} parent=31 // pred_check
          %p274 = pneg %p124
        $region38: #{ae_rtm_corr_forward.3} parent=31 // pred_check_branch
          %276 = sbr.rel (%p274) target = $region40
        $region39: #{ae_rtm_corr_forward.3} parent=31 // pred_region
          %s277 = sand.u32 %s15, 1
          %s278 = scalar_lea.sflag [#allocation5], %s277
          %s279 = sand.u32 %s114, 1
          %s280 = smul.addr %s279, 6
          %s281 = scalar_lea.vmem [#allocation9], %s280
          %s282 = smul.u32 6, %s15
          %s284 = ssub.s32 96, 96
          %285 = vsyncadd %s278, %s284
          %s286 = smul.addr %s282, 16
          %s287 = scalar_lea.hbm %s4, %s286
          %s289 = sshll.u32 %s281, 4
          %s290 = int_to_ptr.vmem [resolvable:$true] %s289
          %292 = dma.hbm_to_vmem [thread:$0]  %s287, 96, %s290, %s278
        $region40: #{ae_rtm_corr_forward.3} parent=31 // pred_fallthru
          _
        // Predicated region
        $region41: #{ae_rtm_corr_forward.3} parent=31 // pred_check
          %p293 = pneg %p150
        $region42: #{ae_rtm_corr_forward.3} parent=31 // pred_check_branch
          %295 = sbr.rel (%p293) target = $region44
        $region43: #{ae_rtm_corr_forward.3} parent=31 // pred_region
          %s296 = sand.u32 %s15, 1
          %s297 = scalar_lea.sflag [#allocation5], %s296
          %s298 = sand.u32 %s140, 1
          %s299 = smul.addr %s298, 13056
          %s300 = scalar_lea.vmem [#allocation10], %s299
          %s301 = smul.u32 96, %s15
          %s303 = ssub.s32 208896, 208896
          %304 = vsyncadd %s297, %s303
          %s305 = smul.addr %s301, 17
          %s306 = smul.addr %s305, 128
          %s307 = scalar_lea.hbm %s5, %s306
          %s308 = sshll.u32 %s300, 4
          %s309 = int_to_ptr.vmem [resolvable:$true] %s308
          %314 = dma.hbm_to_vmem [thread:$0]  %s307, 208896, %s309, %s297, 2176, 2176, 136
        $region44: #{ae_rtm_corr_forward.3} parent=31 // pred_fallthru
          _
      $region32: #{ae_rtm_corr_forward.3} parent=5 // pred_fallthru
        _
      %p315 = scmp.le.s32.totalorder 1, %s15
      %p316 = scmp.lt.s32.totalorder %s15, 12
      %p317 = pnand %p315, %p316
      %p318 = pneg %p317
      // Predicated region
      $region45: #{ae_rtm_corr_forward.3} parent=5 // pred_check
        _
      $region46: #{ae_rtm_corr_forward.3} parent=5 // pred_check_branch
        %320 = sbr.rel (%p317) target = $region48
      $region47: #{ae_rtm_corr_forward.3} parent=5 // pred_region
        %s321 = ssub.s32 %s15, 1
        // Predicated region
        $region49: #{ae_rtm_corr_forward.3} parent=47 // pred_check
          %p322 = pneg %p57
        $region50: #{ae_rtm_corr_forward.3} parent=47 // pred_check_branch
          %324 = sbr.rel (%p322) target = $region52
        $region51: #{ae_rtm_corr_forward.3} parent=47 // pred_region
          %325 = dma.done [#allocation5], 2176
        $region52: #{ae_rtm_corr_forward.3} parent=47 // pred_fallthru
          _
        // Predicated region
        $region53: #{ae_rtm_corr_forward.3} parent=47 // pred_check
          %p326 = pneg %p78
        $region54: #{ae_rtm_corr_forward.3} parent=47 // pred_check_branch
          %328 = sbr.rel (%p326) target = $region56
        $region55: #{ae_rtm_corr_forward.3} parent=47 // pred_region
          %329 = dma.done [#allocation7], 272
        $region56: #{ae_rtm_corr_forward.3} parent=47 // pred_fallthru
          _
        %s330 = sand.u32 %s20, 1
        %s331 = scalar_lea.sflag [#allocation5], %s330
        %s332 = sand.u32 %s91, 1
        %s333 = smul.addr %s332, 13056
        %s334 = scalar_lea.vmem [#allocation8], %s333
        // Predicated region
        $region57: #{ae_rtm_corr_forward.3} parent=47 // pred_check
          %p335 = pneg %p104
        $region58: #{ae_rtm_corr_forward.3} parent=47 // pred_check_branch
          %337 = sbr.rel (%p335) target = $region60
        $region59: #{ae_rtm_corr_forward.3} parent=47 // pred_region
          %338 = dma.done %s331, 208896
        $region60: #{ae_rtm_corr_forward.3} parent=47 // pred_fallthru
          _
        %s339 = sand.u32 %s20, 1
        %s340 = scalar_lea.sflag [#allocation5], %s339
        %s341 = sand.u32 %s117, 1
        %s342 = smul.addr %s341, 6
        %s343 = scalar_lea.vmem [#allocation9], %s342
        // Predicated region
        $region61: #{ae_rtm_corr_forward.3} parent=47 // pred_check
          %p344 = pneg %p130
        $region62: #{ae_rtm_corr_forward.3} parent=47 // pred_check_branch
          %346 = sbr.rel (%p344) target = $region64
        $region63: #{ae_rtm_corr_forward.3} parent=47 // pred_region
          %347 = dma.done %s340, 96
        $region64: #{ae_rtm_corr_forward.3} parent=47 // pred_fallthru
          _
        %s348 = sand.u32 %s20, 1
        %s349 = scalar_lea.sflag [#allocation5], %s348
        %s350 = sand.u32 %s143, 1
        %s351 = smul.addr %s350, 13056
        %s352 = scalar_lea.vmem [#allocation10], %s351
        // Predicated region
        $region65: #{ae_rtm_corr_forward.3} parent=47 // pred_check
          %p353 = pneg %p156
        $region66: #{ae_rtm_corr_forward.3} parent=47 // pred_check_branch
          %355 = sbr.rel (%p353) target = $region68
        $region67: #{ae_rtm_corr_forward.3} parent=47 // pred_region
          %356 = dma.done %s349, 208896
        $region68: #{ae_rtm_corr_forward.3} parent=47 // pred_fallthru
          _
        // Predicated region
        $region69: #{ae_rtm_corr_forward.3} parent=47 // pred_check
          %p357 = pneg %p177
        $region70: #{ae_rtm_corr_forward.3} parent=47 // pred_check_branch
          %359 = sbr.rel (%p357) target = $region72
        $region71: #{ae_rtm_corr_forward.3} parent=47 // pred_region
          %360 = dma.done [#allocation7], 272
        $region72: #{ae_rtm_corr_forward.3} parent=47 // pred_fallthru
          _
        %p361 = pneg %p36
        %p362 = pneg %p33
        %p363 = pneg %p57
        %p364 = pneg %p54
        %p365 = pneg %p78
        %p366 = pneg %p75
        %s367 = sand.u32 %s20, 1
        %s368 = scalar_lea.sflag [#allocation5], %s367
        %s369 = sand.u32 %s91, 1
        %s370 = smul.addr %s369, 13056
        %s371 = scalar_lea.vmem [#allocation8], %s370
        %p372 = pneg %p104
        %p373 = pneg %p101
        %s374 = sand.u32 %s20, 1
        %s375 = scalar_lea.sflag [#allocation5], %s374
        %s376 = sand.u32 %s117, 1
        %s377 = smul.addr %s376, 6
        %s378 = scalar_lea.vmem [#allocation9], %s377
        %p379 = pneg %p130
        %p380 = pneg %p127
        %s381 = sand.u32 %s20, 1
        %s382 = scalar_lea.sflag [#allocation5], %s381
        %s383 = sand.u32 %s143, 1
        %s384 = smul.addr %s383, 13056
        %s385 = scalar_lea.vmem [#allocation10], %s384
        %p386 = pneg %p156
        %p387 = pneg %p153
        %p388 = pneg %p177
        %p389 = pneg %p174
        %p390 = pneg %p198
        %p391 = pneg %p195
        %s392 = smul.u32 6, %s20
        %s393 = smul.u32 6, %s20
        %s394 = smul.u32 96, %s20
        %p395 = scmp.eq.s32.totalorder %s20, 0
        // Predicated region
        $region73: #{ae_rtm_corr_forward.3} parent=47 // pred_check
          %p396 = pneg %p395
        $region74: #{ae_rtm_corr_forward.3} parent=47 // pred_check_branch
          %398 = sbr.rel (%p396) target = $region76
        $region75: #{ae_rtm_corr_forward.3} parent=47 // pred_region
          %v399 = vld [vmem:[%s0] sm:$0xff]
          %v400 = vld [vmem:[#allocation4] sm:$0xff]
          %v401 = vld [vmem:[#allocation4 + $0x8] sm:$0xff]
          %v402 = vld [vmem:[#allocation4 + $0x10] sm:$0xff]
          %v403 = vld [vmem:[#allocation4 + $0x18] sm:$0xff]
          %v404 = vld [vmem:[#allocation4 + $0x20] sm:$0xff]
          %v405 = vld [vmem:[#allocation4 + $0x28] sm:$0xff]
          %v406 = vld [vmem:[#allocation4 + $0x30] sm:$0xff]
          %v407 = vld [vmem:[#allocation4 + $0x38] sm:$0xff]
          %v408 = vld [vmem:[#allocation4 + $0x40] sm:$0xff]
          %v409 = vld [vmem:[#allocation4 + $0x48] sm:$0xff]
          %v410 = vld [vmem:[#allocation4 + $0x50] sm:$0xff]
          %v411 = vld [vmem:[#allocation4 + $0x58] sm:$0xff]
          %v412 = vld [vmem:[#allocation4 + $0x60] sm:$0xff]
          %v413 = vld [vmem:[#allocation4 + $0x68] sm:$0xff]
          %v414 = vld [vmem:[#allocation4 + $0x70] sm:$0xff]
          %v415 = vld [vmem:[#allocation4 + $0x78] sm:$0xff]
          %v416 = vld [vmem:[#allocation4 + $0x80] sm:$0xff]
          %v417 = vld [vmem:[#allocation6] sm:$0xff]
          %v418 = vld [vmem:[#allocation6 + $0x8] sm:$0xff]
          %v419 = vld [vmem:[#allocation6 + $0x10] sm:$0x1]
          %v423 = vlaneseq
          %v424 = vshrl.u32 %v423, 7
          %v425 = vsub.s32 0, %v424
          %v426 = vrot.slane %v417, %v425
          %v427 = vlaneseq
          %v428 = vshrl.u32 %v427, 7
          %v429 = vsub.s32 1, %v428
          %v430 = vrot.slane %v417, %v429
          %v431 = vlaneseq
          %v432 = vshrl.u32 %v431, 7
          %v433 = vsub.s32 2, %v432
          %v434 = vrot.slane %v417, %v433
          %v435 = vlaneseq
          %v436 = vshrl.u32 %v435, 7
          %v437 = vsub.s32 3, %v436
          %v438 = vrot.slane %v417, %v437
          %v439 = vlaneseq
          %v440 = vshrl.u32 %v439, 7
          %v441 = vsub.s32 4, %v440
          %v442 = vrot.slane %v417, %v441
          %v443 = vlaneseq
          %v444 = vshrl.u32 %v443, 7
          %v445 = vsub.s32 5, %v444
          %v446 = vrot.slane %v417, %v445
          %v447 = vlaneseq
          %v448 = vshrl.u32 %v447, 7
          %v449 = vsub.s32 6, %v448
          %v450 = vrot.slane %v417, %v449
          %v451 = vlaneseq
          %v452 = vshrl.u32 %v451, 7
          %v453 = vsub.s32 7, %v452
          %v454 = vrot.slane %v417, %v453
          %v455 = vlaneseq
          %v456 = vshrl.u32 %v455, 7
          %v457 = vsub.s32 0, %v456
          %v458 = vrot.slane %v418, %v457
          %v459 = vlaneseq
          %v460 = vshrl.u32 %v459, 7
          %v461 = vsub.s32 1, %v460
          %v462 = vrot.slane %v418, %v461
          %v463 = vlaneseq
          %v464 = vshrl.u32 %v463, 7
          %v465 = vsub.s32 2, %v464
          %v466 = vrot.slane %v418, %v465
          %v467 = vlaneseq
          %v468 = vshrl.u32 %v467, 7
          %v469 = vsub.s32 3, %v468
          %v470 = vrot.slane %v418, %v469
          %v471 = vlaneseq
          %v472 = vshrl.u32 %v471, 7
          %v473 = vsub.s32 4, %v472
          %v474 = vrot.slane %v418, %v473
          %v475 = vlaneseq
          %v476 = vshrl.u32 %v475, 7
          %v477 = vsub.s32 5, %v476
          %v478 = vrot.slane %v418, %v477
          %v479 = vlaneseq
          %v480 = vshrl.u32 %v479, 7
          %v481 = vsub.s32 6, %v480
          %v482 = vrot.slane %v418, %v481
          %v483 = vlaneseq
          %v484 = vshrl.u32 %v483, 7
          %v485 = vsub.s32 7, %v484
          %v486 = vrot.slane %v418, %v485
          %v487 = vlaneseq
          %v488 = vshrl.u32 %v487, 7
          %v489 = vsub.s32 0, %v488
          %v490 = vrot.slane %v419, %v489
          %vm508 = vcmask 64512
          %v510 = vsel %vm508, %v399, 0
          %512 = vmatprep.subr.mxu0 %v401
          %513 = vmatpush1.msra.mxu0 %v400
          %514 = vmatprep.subr.mxu0 0.0
          %515 = vmatpush1.msra.mxu0 0.0
          %516 = vmatprep.subr.mxu0 0.0
          %517 = vmatpush1.msra.mxu0 0.0
          %518 = vmatprep.subr.mxu0 0.0
          %519 = vmatpush1.msra.mxu0 0.0
          %520 = vmatprep.subr.mxu0 0.0
          %521 = vmatpush1.msra.mxu0 0.0
          %522 = vmatprep.subr.mxu0 0.0
          %523 = vmatpush1.msra.mxu0 0.0
          %524 = vmatprep.subr.mxu0 0.0
          %525 = vmatpush1.msra.mxu0 0.0
          %526 = vmatprep.subr.mxu0 0.0
          %527 = vmatpush1.msra.mxu0 0.0
          %528 = vmatprep.subr.mxu0 0.0
          %529 = vmatpush1.msra.mxu0 0.0
          %530 = vmatprep.subr.mxu0 0.0
          %531 = vmatpush1.msra.mxu0 0.0
          %532 = vmatprep.subr.mxu0 0.0
          %533 = vmatpush1.msra.mxu0 0.0
          %534 = vmatprep.subr.mxu0 0.0
          %535 = vmatpush1.msra.mxu0 0.0
          %536 = vmatprep.subr.mxu0 0.0
          %537 = vmatpush1.msra.mxu0 0.0
          %538 = vmatprep.subr.mxu0 0.0
          %539 = vmatpush1.msra.mxu0 0.0
          %540 = vmatprep.subr.mxu0 0.0
          %541 = vmatpush1.msra.mxu0 0.0
          %542 = vmatprep.subr.mxu0 0.0
          %543 = vmatpush1.msra.mxu0 0.0
          %544 = vmatprep.subr.mxu0 0.0
          %545 = vmatpush1.msra.mxu0 0.0
          %546 = vmatprep.subr.mxu0 0.0
          %547 = vmatpush1.msra.mxu0 0.0
          %548 = vmatprep.subr.mxu0 0.0
          %549 = vmatpush1.msra.mxu0 0.0
          %550 = vmatprep.subr.mxu0 0.0
          %551 = vmatpush1.msra.mxu0 0.0
          %552 = vmatprep.subr.mxu0 0.0
          %553 = vmatpush1.msra.mxu0 0.0
          %554 = vmatprep.subr.mxu0 0.0
          %555 = vmatpush1.msra.mxu0 0.0
          %556 = vmatprep.subr.mxu0 0.0
          %557 = vmatpush1.msra.mxu0 0.0
          %558 = vmatprep.subr.mxu0 0.0
          %559 = vmatpush1.msra.mxu0 0.0
          %560 = vmatprep.subr.mxu0 0.0
          %561 = vmatpush1.msra.mxu0 0.0
          %562 = vmatprep.subr.mxu0 0.0
          %563 = vmatpush1.msra.mxu0 0.0
          %564 = vmatprep.subr.mxu0 0.0
          %565 = vmatpush1.msra.mxu0 0.0
          %566 = vmatprep.subr.mxu0 0.0
          %567 = vmatpush1.msra.mxu0 0.0
          %568 = vmatprep.subr.mxu0 0.0
          %569 = vmatpush1.msra.mxu0 0.0
          %570 = vmatprep.subr.mxu0 0.0
          %571 = vmatpush1.msra.mxu0 0.0
          %572 = vmatprep.subr.mxu0 0.0
          %573 = vmatpush1.msra.mxu0 0.0
          %574 = vmatprep.subr.mxu0 0.0
          %575 = vmatpush1.msra.mxu0 0.0
          %576 = vmatprep.mubr.f32.mxu0 0.0
          %577 = vmatmul.mubr.f32.gmra.mrb[0].mxu0 %v510
          %v578 = vpop.f32.mrb[0].mxu0
          %v579 = vadd.f32 %v426, %v578
          %v580 = vpop.f32.mrb[0].mxu0
          %v581 = vadd.f32 %v430, %v580
          %582 = vdwg.mxu0
          %583 = vmatprep.subr.mxu0 %v403
          %584 = vmatpush1.msra.mxu0 %v402
          %585 = vmatprep.subr.mxu0 0.0
          %586 = vmatpush1.msra.mxu0 0.0
          %587 = vmatprep.subr.mxu0 0.0
          %588 = vmatpush1.msra.mxu0 0.0
          %589 = vmatprep.subr.mxu0 0.0
          %590 = vmatpush1.msra.mxu0 0.0
          %591 = vmatprep.subr.mxu0 0.0
          %592 = vmatpush1.msra.mxu0 0.0
          %593 = vmatprep.subr.mxu0 0.0
          %594 = vmatpush1.msra.mxu0 0.0
          %595 = vmatprep.subr.mxu0 0.0
          %596 = vmatpush1.msra.mxu0 0.0
          %597 = vmatprep.subr.mxu0 0.0
          %598 = vmatpush1.msra.mxu0 0.0
          %599 = vmatprep.subr.mxu0 0.0
          %600 = vmatpush1.msra.mxu0 0.0
          %601 = vmatprep.subr.mxu0 0.0
          %602 = vmatpush1.msra.mxu0 0.0
          %603 = vmatprep.subr.mxu0 0.0
          %604 = vmatpush1.msra.mxu0 0.0
          %605 = vmatprep.subr.mxu0 0.0
          %606 = vmatpush1.msra.mxu0 0.0
          %607 = vmatprep.subr.mxu0 0.0
          %608 = vmatpush1.msra.mxu0 0.0
          %609 = vmatprep.subr.mxu0 0.0
          %610 = vmatpush1.msra.mxu0 0.0
          %611 = vmatprep.subr.mxu0 0.0
          %612 = vmatpush1.msra.mxu0 0.0
          %613 = vmatprep.subr.mxu0 0.0
          %614 = vmatpush1.msra.mxu0 0.0
          %615 = vmatprep.subr.mxu0 0.0
          %616 = vmatpush1.msra.mxu0 0.0
          %617 = vmatprep.subr.mxu0 0.0
          %618 = vmatpush1.msra.mxu0 0.0
          %619 = vmatprep.subr.mxu0 0.0
          %620 = vmatpush1.msra.mxu0 0.0
          %621 = vmatprep.subr.mxu0 0.0
          %622 = vmatpush1.msra.mxu0 0.0
          %623 = vmatprep.subr.mxu0 0.0
          %624 = vmatpush1.msra.mxu0 0.0
          %625 = vmatprep.subr.mxu0 0.0
          %626 = vmatpush1.msra.mxu0 0.0
          %627 = vmatprep.subr.mxu0 0.0
          %628 = vmatpush1.msra.mxu0 0.0
          %629 = vmatprep.subr.mxu0 0.0
          %630 = vmatpush1.msra.mxu0 0.0
          %631 = vmatprep.subr.mxu0 0.0
          %632 = vmatpush1.msra.mxu0 0.0
          %633 = vmatprep.subr.mxu0 0.0
          %634 = vmatpush1.msra.mxu0 0.0
          %635 = vmatprep.subr.mxu0 0.0
          %636 = vmatpush1.msra.mxu0 0.0
          %637 = vmatprep.subr.mxu0 0.0
          %638 = vmatpush1.msra.mxu0 0.0
          %639 = vmatprep.subr.mxu0 0.0
          %640 = vmatpush1.msra.mxu0 0.0
          %641 = vmatprep.subr.mxu0 0.0
          %642 = vmatpush1.msra.mxu0 0.0
          %643 = vmatprep.subr.mxu0 0.0
          %644 = vmatpush1.msra.mxu0 0.0
          %645 = vmatprep.subr.mxu0 0.0
          %646 = vmatpush1.msra.mxu0 0.0
          %647 = vmatprep.mubr.f32.mxu0 0.0
          %648 = vmatmul.mubr.f32.gmra.mrb[0].mxu0 %v510
          %v649 = vpop.f32.mrb[0].mxu0
          %v650 = vadd.f32 %v434, %v649
          %v651 = vpop.f32.mrb[0].mxu0
          %v652 = vadd.f32 %v438, %v651
          %653 = vdwg.mxu0
          %654 = vmatprep.subr.mxu0 %v405
          %655 = vmatpush1.msra.mxu0 %v404
          %656 = vmatprep.subr.mxu0 0.0
          %657 = vmatpush1.msra.mxu0 0.0
          %658 = vmatprep.subr.mxu0 0.0
          %659 = vmatpush1.msra.mxu0 0.0
          %660 = vmatprep.subr.mxu0 0.0
          %661 = vmatpush1.msra.mxu0 0.0
          %662 = vmatprep.subr.mxu0 0.0
          %663 = vmatpush1.msra.mxu0 0.0
          %664 = vmatprep.subr.mxu0 0.0
          %665 = vmatpush1.msra.mxu0 0.0
          %666 = vmatprep.subr.mxu0 0.0
          %667 = vmatpush1.msra.mxu0 0.0
          %668 = vmatprep.subr.mxu0 0.0
          %669 = vmatpush1.msra.mxu0 0.0
          %670 = vmatprep.subr.mxu0 0.0
          %671 = vmatpush1.msra.mxu0 0.0
          %672 = vmatprep.subr.mxu0 0.0
          %673 = vmatpush1.msra.mxu0 0.0
          %674 = vmatprep.subr.mxu0 0.0
          %675 = vmatpush1.msra.mxu0 0.0
          %676 = vmatprep.subr.mxu0 0.0
          %677 = vmatpush1.msra.mxu0 0.0
          %678 = vmatprep.subr.mxu0 0.0
          %679 = vmatpush1.msra.mxu0 0.0
          %680 = vmatprep.subr.mxu0 0.0
          %681 = vmatpush1.msra.mxu0 0.0
          %682 = vmatprep.subr.mxu0 0.0
          %683 = vmatpush1.msra.mxu0 0.0
          %684 = vmatprep.subr.mxu0 0.0
          %685 = vmatpush1.msra.mxu0 0.0
          %686 = vmatprep.subr.mxu0 0.0
          %687 = vmatpush1.msra.mxu0 0.0
          %688 = vmatprep.subr.mxu0 0.0
          %689 = vmatpush1.msra.mxu0 0.0
          %690 = vmatprep.subr.mxu0 0.0
          %691 = vmatpush1.msra.mxu0 0.0
          %692 = vmatprep.subr.mxu0 0.0
          %693 = vmatpush1.msra.mxu0 0.0
          %694 = vmatprep.subr.mxu0 0.0
          %695 = vmatpush1.msra.mxu0 0.0
          %696 = vmatprep.subr.mxu0 0.0
          %697 = vmatpush1.msra.mxu0 0.0
          %698 = vmatprep.subr.mxu0 0.0
          %699 = vmatpush1.msra.mxu0 0.0
          %700 = vmatprep.subr.mxu0 0.0
          %701 = vmatpush1.msra.mxu0 0.0
          %702 = vmatprep.subr.mxu0 0.0
          %703 = vmatpush1.msra.mxu0 0.0
          %704 = vmatprep.subr.mxu0 0.0
          %705 = vmatpush1.msra.mxu0 0.0
          %706 = vmatprep.subr.mxu0 0.0
          %707 = vmatpush1.msra.mxu0 0.0
          %708 = vmatprep.subr.mxu0 0.0
          %709 = vmatpush1.msra.mxu0 0.0
          %710 = vmatprep.subr.mxu0 0.0
          %711 = vmatpush1.msra.mxu0 0.0
          %712 = vmatprep.subr.mxu0 0.0
          %713 = vmatpush1.msra.mxu0 0.0
          %714 = vmatprep.subr.mxu0 0.0
          %715 = vmatpush1.msra.mxu0 0.0
          %716 = vmatprep.subr.mxu0 0.0
          %717 = vmatpush1.msra.mxu0 0.0
          %718 = vmatprep.mubr.f32.mxu0 0.0
          %719 = vmatmul.mubr.f32.gmra.mrb[0].mxu0 %v510
          %v720 = vpop.f32.mrb[0].mxu0
          %v721 = vadd.f32 %v442, %v720
          %v722 = vpop.f32.mrb[0].mxu0
          %v723 = vadd.f32 %v446, %v722
          %724 = vdwg.mxu0
          %725 = vmatprep.subr.mxu0 %v407
          %726 = vmatpush1.msra.mxu0 %v406
          %727 = vmatprep.subr.mxu0 0.0
          %728 = vmatpush1.msra.mxu0 0.0
          %729 = vmatprep.subr.mxu0 0.0
          %730 = vmatpush1.msra.mxu0 0.0
          %731 = vmatprep.subr.mxu0 0.0
          %732 = vmatpush1.msra.mxu0 0.0
          %733 = vmatprep.subr.mxu0 0.0
          %734 = vmatpush1.msra.mxu0 0.0
          %735 = vmatprep.subr.mxu0 0.0
          %736 = vmatpush1.msra.mxu0 0.0
          %737 = vmatprep.subr.mxu0 0.0
          %738 = vmatpush1.msra.mxu0 0.0
          %739 = vmatprep.subr.mxu0 0.0
          %740 = vmatpush1.msra.mxu0 0.0
          %741 = vmatprep.subr.mxu0 0.0
          %742 = vmatpush1.msra.mxu0 0.0
          %743 = vmatprep.subr.mxu0 0.0
          %744 = vmatpush1.msra.mxu0 0.0
          %745 = vmatprep.subr.mxu0 0.0
          %746 = vmatpush1.msra.mxu0 0.0
          %747 = vmatprep.subr.mxu0 0.0
          %748 = vmatpush1.msra.mxu0 0.0
          %749 = vmatprep.subr.mxu0 0.0
          %750 = vmatpush1.msra.mxu0 0.0
          %751 = vmatprep.subr.mxu0 0.0
          %752 = vmatpush1.msra.mxu0 0.0
          %753 = vmatprep.subr.mxu0 0.0
          %754 = vmatpush1.msra.mxu0 0.0
          %755 = vmatprep.subr.mxu0 0.0
          %756 = vmatpush1.msra.mxu0 0.0
          %757 = vmatprep.subr.mxu0 0.0
          %758 = vmatpush1.msra.mxu0 0.0
          %759 = vmatprep.subr.mxu0 0.0
          %760 = vmatpush1.msra.mxu0 0.0
          %761 = vmatprep.subr.mxu0 0.0
          %762 = vmatpush1.msra.mxu0 0.0
          %763 = vmatprep.subr.mxu0 0.0
          %764 = vmatpush1.msra.mxu0 0.0
          %765 = vmatprep.subr.mxu0 0.0
          %766 = vmatpush1.msra.mxu0 0.0
          %767 = vmatprep.subr.mxu0 0.0
          %768 = vmatpush1.msra.mxu0 0.0
          %769 = vmatprep.subr.mxu0 0.0
          %770 = vmatpush1.msra.mxu0 0.0
          %771 = vmatprep.subr.mxu0 0.0
          %772 = vmatpush1.msra.mxu0 0.0
          %773 = vmatprep.subr.mxu0 0.0
          %774 = vmatpush1.msra.mxu0 0.0
          %775 = vmatprep.subr.mxu0 0.0
          %776 = vmatpush1.msra.mxu0 0.0
          %777 = vmatprep.subr.mxu0 0.0
          %778 = vmatpush1.msra.mxu0 0.0
          %779 = vmatprep.subr.mxu0 0.0
          %780 = vmatpush1.msra.mxu0 0.0
          %781 = vmatprep.subr.mxu0 0.0
          %782 = vmatpush1.msra.mxu0 0.0
          %783 = vmatprep.subr.mxu0 0.0
          %784 = vmatpush1.msra.mxu0 0.0
          %785 = vmatprep.subr.mxu0 0.0
          %786 = vmatpush1.msra.mxu0 0.0
          %787 = vmatprep.subr.mxu0 0.0
          %788 = vmatpush1.msra.mxu0 0.0
          %789 = vmatprep.mubr.f32.mxu0 0.0
          %790 = vmatmul.mubr.f32.gmra.mrb[0].mxu0 %v510
          %v791 = vpop.f32.mrb[0].mxu0
          %v792 = vadd.f32 %v450, %v791
          %v793 = vpop.f32.mrb[0].mxu0
          %v794 = vadd.f32 %v454, %v793
          %795 = vdwg.mxu0
          %796 = vmatprep.subr.mxu0 %v409
          %797 = vmatpush1.msra.mxu0 %v408
          %798 = vmatprep.subr.mxu0 0.0
          %799 = vmatpush1.msra.mxu0 0.0
          %800 = vmatprep.subr.mxu0 0.0
          %801 = vmatpush1.msra.mxu0 0.0
          %802 = vmatprep.subr.mxu0 0.0
          %803 = vmatpush1.msra.mxu0 0.0
          %804 = vmatprep.subr.mxu0 0.0
          %805 = vmatpush1.msra.mxu0 0.0
          %806 = vmatprep.subr.mxu0 0.0
          %807 = vmatpush1.msra.mxu0 0.0
          %808 = vmatprep.subr.mxu0 0.0
          %809 = vmatpush1.msra.mxu0 0.0
          %810 = vmatprep.subr.mxu0 0.0
          %811 = vmatpush1.msra.mxu0 0.0
          %812 = vmatprep.subr.mxu0 0.0
          %813 = vmatpush1.msra.mxu0 0.0
          %814 = vmatprep.subr.mxu0 0.0
          %815 = vmatpush1.msra.mxu0 0.0
          %816 = vmatprep.subr.mxu0 0.0
          %817 = vmatpush1.msra.mxu0 0.0
          %818 = vmatprep.subr.mxu0 0.0
          %819 = vmatpush1.msra.mxu0 0.0
          %820 = vmatprep.subr.mxu0 0.0
          %821 = vmatpush1.msra.mxu0 0.0
          %822 = vmatprep.subr.mxu0 0.0
          %823 = vmatpush1.msra.mxu0 0.0
          %824 = vmatprep.subr.mxu0 0.0
          %825 = vmatpush1.msra.mxu0 0.0
          %826 = vmatprep.subr.mxu0 0.0
          %827 = vmatpush1.msra.mxu0 0.0
          %828 = vmatprep.subr.mxu0 0.0
          %829 = vmatpush1.msra.mxu0 0.0
          %830 = vmatprep.subr.mxu0 0.0
          %831 = vmatpush1.msra.mxu0 0.0
          %832 = vmatprep.subr.mxu0 0.0
          %833 = vmatpush1.msra.mxu0 0.0
          %834 = vmatprep.subr.mxu0 0.0
          %835 = vmatpush1.msra.mxu0 0.0
          %836 = vmatprep.subr.mxu0 0.0
          %837 = vmatpush1.msra.mxu0 0.0
          %838 = vmatprep.subr.mxu0 0.0
          %839 = vmatpush1.msra.mxu0 0.0
          %840 = vmatprep.subr.mxu0 0.0
          %841 = vmatpush1.msra.mxu0 0.0
          %842 = vmatprep.subr.mxu0 0.0
          %843 = vmatpush1.msra.mxu0 0.0
          %844 = vmatprep.subr.mxu0 0.0
          %845 = vmatpush1.msra.mxu0 0.0
          %846 = vmatprep.subr.mxu0 0.0
          %847 = vmatpush1.msra.mxu0 0.0
          %848 = vmatprep.subr.mxu0 0.0
          %849 = vmatpush1.msra.mxu0 0.0
          %850 = vmatprep.subr.mxu0 0.0
          %851 = vmatpush1.msra.mxu0 0.0
          %852 = vmatprep.subr.mxu0 0.0
          %853 = vmatpush1.msra.mxu0 0.0
          %854 = vmatprep.subr.mxu0 0.0
          %855 = vmatpush1.msra.mxu0 0.0
          %856 = vmatprep.subr.mxu0 0.0
          %857 = vmatpush1.msra.mxu0 0.0
          %858 = vmatprep.subr.mxu0 0.0
          %859 = vmatpush1.msra.mxu0 0.0
          %860 = vmatprep.mubr.f32.mxu0 0.0
          %861 = vmatmul.mubr.f32.gmra.mrb[0].mxu0 %v510
          %v862 = vpop.f32.mrb[0].mxu0
          %v863 = vadd.f32 %v458, %v862
          %v864 = vpop.f32.mrb[0].mxu0
          %v865 = vadd.f32 %v462, %v864
          %866 = vdwg.mxu0
          %867 = vmatprep.subr.mxu0 %v411
          %868 = vmatpush1.msra.mxu0 %v410
          %869 = vmatprep.subr.mxu0 0.0
          %870 = vmatpush1.msra.mxu0 0.0
          %871 = vmatprep.subr.mxu0 0.0
          %872 = vmatpush1.msra.mxu0 0.0
          %873 = vmatprep.subr.mxu0 0.0
          %874 = vmatpush1.msra.mxu0 0.0
          %875 = vmatprep.subr.mxu0 0.0
          %876 = vmatpush1.msra.mxu0 0.0
          %877 = vmatprep.subr.mxu0 0.0
          %878 = vmatpush1.msra.mxu0 0.0
          %879 = vmatprep.subr.mxu0 0.0
          %880 = vmatpush1.msra.mxu0 0.0
          %881 = vmatprep.subr.mxu0 0.0
          %882 = vmatpush1.msra.mxu0 0.0
          %883 = vmatprep.subr.mxu0 0.0
          %884 = vmatpush1.msra.mxu0 0.0
          %885 = vmatprep.subr.mxu0 0.0
          %886 = vmatpush1.msra.mxu0 0.0
          %887 = vmatprep.subr.mxu0 0.0
          %888 = vmatpush1.msra.mxu0 0.0
          %889 = vmatprep.subr.mxu0 0.0
          %890 = vmatpush1.msra.mxu0 0.0
          %891 = vmatprep.subr.mxu0 0.0
          %892 = vmatpush1.msra.mxu0 0.0
          %893 = vmatprep.subr.mxu0 0.0
          %894 = vmatpush1.msra.mxu0 0.0
          %895 = vmatprep.subr.mxu0 0.0
          %896 = vmatpush1.msra.mxu0 0.0
          %897 = vmatprep.subr.mxu0 0.0
          %898 = vmatpush1.msra.mxu0 0.0
          %899 = vmatprep.subr.mxu0 0.0
          %900 = vmatpush1.msra.mxu0 0.0
          %901 = vmatprep.subr.mxu0 0.0
          %902 = vmatpush1.msra.mxu0 0.0
          %903 = vmatprep.subr.mxu0 0.0
          %904 = vmatpush1.msra.mxu0 0.0
          %905 = vmatprep.subr.mxu0 0.0
          %906 = vmatpush1.msra.mxu0 0.0
          %907 = vmatprep.subr.mxu0 0.0
          %908 = vmatpush1.msra.mxu0 0.0
          %909 = vmatprep.subr.mxu0 0.0
          %910 = vmatpush1.msra.mxu0 0.0
          %911 = vmatprep.subr.mxu0 0.0
          %912 = vmatpush1.msra.mxu0 0.0
          %913 = vmatprep.subr.mxu0 0.0
          %914 = vmatpush1.msra.mxu0 0.0
          %915 = vmatprep.subr.mxu0 0.0
          %916 = vmatpush1.msra.mxu0 0.0
          %917 = vmatprep.subr.mxu0 0.0
          %918 = vmatpush1.msra.mxu0 0.0
          %919 = vmatprep.subr.mxu0 0.0
          %920 = vmatpush1.msra.mxu0 0.0
          %921 = vmatprep.subr.mxu0 0.0
          %922 = vmatpush1.msra.mxu0 0.0
          %923 = vmatprep.subr.mxu0 0.0
          %924 = vmatpush1.msra.mxu0 0.0
          %925 = vmatprep.subr.mxu0 0.0
          %926 = vmatpush1.msra.mxu0 0.0
          %927 = vmatprep.subr.mxu0 0.0
          %928 = vmatpush1.msra.mxu0 0.0
          %929 = vmatprep.subr.mxu0 0.0
          %930 = vmatpush1.msra.mxu0 0.0
          %931 = vmatprep.mubr.f32.mxu0 0.0
          %932 = vmatmul.mubr.f32.gmra.mrb[0].mxu0 %v510
          %v933 = vpop.f32.mrb[0].mxu0
          %v934 = vadd.f32 %v466, %v933
          %v935 = vpop.f32.mrb[0].mxu0
          %v936 = vadd.f32 %v470, %v935
          %937 = vdwg.mxu0
          %938 = vmatprep.subr.mxu0 %v413
          %939 = vmatpush1.msra.mxu0 %v412
          %940 = vmatprep.subr.mxu0 0.0
          %941 = vmatpush1.msra.mxu0 0.0
          %942 = vmatprep.subr.mxu0 0.0
          %943 = vmatpush1.msra.mxu0 0.0
          %944 = vmatprep.subr.mxu0 0.0
          %945 = vmatpush1.msra.mxu0 0.0
          %946 = vmatprep.subr.mxu0 0.0
          %947 = vmatpush1.msra.mxu0 0.0
          %948 = vmatprep.subr.mxu0 0.0
          %949 = vmatpush1.msra.mxu0 0.0
          %950 = vmatprep.subr.mxu0 0.0
          %951 = vmatpush1.msra.mxu0 0.0
          %952 = vmatprep.subr.mxu0 0.0
          %953 = vmatpush1.msra.mxu0 0.0
          %954 = vmatprep.subr.mxu0 0.0
          %955 = vmatpush1.msra.mxu0 0.0
          %956 = vmatprep.subr.mxu0 0.0
          %957 = vmatpush1.msra.mxu0 0.0
          %958 = vmatprep.subr.mxu0 0.0
          %959 = vmatpush1.msra.mxu0 0.0
          %960 = vmatprep.subr.mxu0 0.0
          %961 = vmatpush1.msra.mxu0 0.0
          %962 = vmatprep.subr.mxu0 0.0
          %963 = vmatpush1.msra.mxu0 0.0
          %964 = vmatprep.subr.mxu0 0.0
          %965 = vmatpush1.msra.mxu0 0.0
          %966 = vmatprep.subr.mxu0 0.0
          %967 = vmatpush1.msra.mxu0 0.0
          %968 = vmatprep.subr.mxu0 0.0
          %969 = vmatpush1.msra.mxu0 0.0
          %970 = vmatprep.subr.mxu0 0.0
          %971 = vmatpush1.msra.mxu0 0.0
          %972 = vmatprep.subr.mxu0 0.0
          %973 = vmatpush1.msra.mxu0 0.0
          %974 = vmatprep.subr.mxu0 0.0
          %975 = vmatpush1.msra.mxu0 0.0
          %976 = vmatprep.subr.mxu0 0.0
          %977 = vmatpush1.msra.mxu0 0.0
          %978 = vmatprep.subr.mxu0 0.0
          %979 = vmatpush1.msra.mxu0 0.0
          %980 = vmatprep.subr.mxu0 0.0
          %981 = vmatpush1.msra.mxu0 0.0
          %982 = vmatprep.subr.mxu0 0.0
          %983 = vmatpush1.msra.mxu0 0.0
          %984 = vmatprep.subr.mxu0 0.0
          %985 = vmatpush1.msra.mxu0 0.0
          %986 = vmatprep.subr.mxu0 0.0
          %987 = vmatpush1.msra.mxu0 0.0
          %988 = vmatprep.subr.mxu0 0.0
          %989 = vmatpush1.msra.mxu0 0.0
          %990 = vmatprep.subr.mxu0 0.0
          %991 = vmatpush1.msra.mxu0 0.0
          %992 = vmatprep.subr.mxu0 0.0
          %993 = vmatpush1.msra.mxu0 0.0
          %994 = vmatprep.subr.mxu0 0.0
          %995 = vmatpush1.msra.mxu0 0.0
          %996 = vmatprep.subr.mxu0 0.0
          %997 = vmatpush1.msra.mxu0 0.0
          %998 = vmatprep.subr.mxu0 0.0
          %999 = vmatpush1.msra.mxu0 0.0
          %1000 = vmatprep.subr.mxu0 0.0
          %1001 = vmatpush1.msra.mxu0 0.0
          %1002 = vmatprep.mubr.f32.mxu0 0.0
          %1003 = vmatmul.mubr.f32.gmra.mrb[0].mxu0 %v510
          %v1004 = vpop.f32.mrb[0].mxu0
          %v1005 = vadd.f32 %v474, %v1004
          %v1006 = vpop.f32.mrb[0].mxu0
          %v1007 = vadd.f32 %v478, %v1006
          %1008 = vdwg.mxu0
          %1009 = vmatprep.subr.mxu0 %v415
          %1010 = vmatpush1.msra.mxu0 %v414
          %1011 = vmatprep.subr.mxu0 0.0
          %1012 = vmatpush1.msra.mxu0 0.0
          %1013 = vmatprep.subr.mxu0 0.0
          %1014 = vmatpush1.msra.mxu0 0.0
          %1015 = vmatprep.subr.mxu0 0.0
          %1016 = vmatpush1.msra.mxu0 0.0
          %1017 = vmatprep.subr.mxu0 0.0
          %1018 = vmatpush1.msra.mxu0 0.0
          %1019 = vmatprep.subr.mxu0 0.0
          %1020 = vmatpush1.msra.mxu0 0.0
          %1021 = vmatprep.subr.mxu0 0.0
          %1022 = vmatpush1.msra.mxu0 0.0
          %1023 = vmatprep.subr.mxu0 0.0
          %1024 = vmatpush1.msra.mxu0 0.0
          %1025 = vmatprep.subr.mxu0 0.0
          %1026 = vmatpush1.msra.mxu0 0.0
          %1027 = vmatprep.subr.mxu0 0.0
          %1028 = vmatpush1.msra.mxu0 0.0
          %1029 = vmatprep.subr.mxu0 0.0
          %1030 = vmatpush1.msra.mxu0 0.0
          %1031 = vmatprep.subr.mxu0 0.0
          %1032 = vmatpush1.msra.mxu0 0.0
          %1033 = vmatprep.subr.mxu0 0.0
          %1034 = vmatpush1.msra.mxu0 0.0
          %1035 = vmatprep.subr.mxu0 0.0
          %1036 = vmatpush1.msra.mxu0 0.0
          %1037 = vmatprep.subr.mxu0 0.0
          %1038 = vmatpush1.msra.mxu0 0.0
          %1039 = vmatprep.subr.mxu0 0.0
          %1040 = vmatpush1.msra.mxu0 0.0
          %1041 = vmatprep.subr.mxu0 0.0
          %1042 = vmatpush1.msra.mxu0 0.0
          %1043 = vmatprep.subr.mxu0 0.0
          %1044 = vmatpush1.msra.mxu0 0.0
          %1045 = vmatprep.subr.mxu0 0.0
          %1046 = vmatpush1.msra.mxu0 0.0
          %1047 = vmatprep.subr.mxu0 0.0
          %1048 = vmatpush1.msra.mxu0 0.0
          %1049 = vmatprep.subr.mxu0 0.0
          %1050 = vmatpush1.msra.mxu0 0.0
          %1051 = vmatprep.subr.mxu0 0.0
          %1052 = vmatpush1.msra.mxu0 0.0
          %1053 = vmatprep.subr.mxu0 0.0
          %1054 = vmatpush1.msra.mxu0 0.0
          %1055 = vmatprep.subr.mxu0 0.0
          %1056 = vmatpush1.msra.mxu0 0.0
          %1057 = vmatprep.subr.mxu0 0.0
          %1058 = vmatpush1.msra.mxu0 0.0
          %1059 = vmatprep.subr.mxu0 0.0
          %1060 = vmatpush1.msra.mxu0 0.0
          %1061 = vmatprep.subr.mxu0 0.0
          %1062 = vmatpush1.msra.mxu0 0.0
          %1063 = vmatprep.subr.mxu0 0.0
          %1064 = vmatpush1.msra.mxu0 0.0
          %1065 = vmatprep.subr.mxu0 0.0
          %1066 = vmatpush1.msra.mxu0 0.0
          %1067 = vmatprep.subr.mxu0 0.0
          %1068 = vmatpush1.msra.mxu0 0.0
          %1069 = vmatprep.subr.mxu0 0.0
          %1070 = vmatpush1.msra.mxu0 0.0
          %1071 = vmatprep.subr.mxu0 0.0
          %1072 = vmatpush1.msra.mxu0 0.0
          %1073 = vmatprep.mubr.f32.mxu0 0.0
          %1074 = vmatmul.mubr.f32.gmra.mrb[0].mxu0 %v510
          %v1075 = vpop.f32.mrb[0].mxu0
          %v1076 = vadd.f32 %v482, %v1075
          %v1077 = vpop.f32.mrb[0].mxu0
          %v1078 = vadd.f32 %v486, %v1077
          %1079 = vdwg.mxu0
          %1080 = vmatprep.subr.mxu0 0.0
          %1081 = vmatpush1.msra.mxu0 %v416
          %1082 = vmatprep.subr.mxu0 0.0
          %1083 = vmatpush1.msra.mxu0 0.0
          %1084 = vmatprep.subr.mxu0 0.0
          %1085 = vmatpush1.msra.mxu0 0.0
          %1086 = vmatprep.subr.mxu0 0.0
          %1087 = vmatpush1.msra.mxu0 0.0
          %1088 = vmatprep.subr.mxu0 0.0
          %1089 = vmatpush1.msra.mxu0 0.0
          %1090 = vmatprep.subr.mxu0 0.0
          %1091 = vmatpush1.msra.mxu0 0.0
          %1092 = vmatprep.subr.mxu0 0.0
          %1093 = vmatpush1.msra.mxu0 0.0
          %1094 = vmatprep.subr.mxu0 0.0
          %1095 = vmatpush1.msra.mxu0 0.0
          %1096 = vmatprep.subr.mxu0 0.0
          %1097 = vmatpush1.msra.mxu0 0.0
          %1098 = vmatprep.subr.mxu0 0.0
          %1099 = vmatpush1.msra.mxu0 0.0
          %1100 = vmatprep.subr.mxu0 0.0
          %1101 = vmatpush1.msra.mxu0 0.0
          %1102 = vmatprep.subr.mxu0 0.0
          %1103 = vmatpush1.msra.mxu0 0.0
          %1104 = vmatprep.subr.mxu0 0.0
          %1105 = vmatpush1.msra.mxu0 0.0
          %1106 = vmatprep.subr.mxu0 0.0
          %1107 = vmatpush1.msra.mxu0 0.0
          %1108 = vmatprep.subr.mxu0 0.0
          %1109 = vmatpush1.msra.mxu0 0.0
          %1110 = vmatprep.subr.mxu0 0.0
          %1111 = vmatpush1.msra.mxu0 0.0
          %1112 = vmatprep.subr.mxu0 0.0
          %1113 = vmatpush1.msra.mxu0 0.0
          %1114 = vmatprep.subr.mxu0 0.0
          %1115 = vmatpush1.msra.mxu0 0.0
          %1116 = vmatprep.subr.mxu0 0.0
          %1117 = vmatpush1.msra.mxu0 0.0
          %1118 = vmatprep.subr.mxu0 0.0
          %1119 = vmatpush1.msra.mxu0 0.0
          %1120 = vmatprep.subr.mxu0 0.0
          %1121 = vmatpush1.msra.mxu0 0.0
          %1122 = vmatprep.subr.mxu0 0.0
          %1123 = vmatpush1.msra.mxu0 0.0
          %1124 = vmatprep.subr.mxu0 0.0
          %1125 = vmatpush1.msra.mxu0 0.0
          %1126 = vmatprep.subr.mxu0 0.0
          %1127 = vmatpush1.msra.mxu0 0.0
          %1128 = vmatprep.subr.mxu0 0.0
          %1129 = vmatpush1.msra.mxu0 0.0
          %1130 = vmatprep.subr.mxu0 0.0
          %1131 = vmatpush1.msra.mxu0 0.0
          %1132 = vmatprep.subr.mxu0 0.0
          %1133 = vmatpush1.msra.mxu0 0.0
          %1134 = vmatprep.subr.mxu0 0.0
          %1135 = vmatpush1.msra.mxu0 0.0
          %1136 = vmatprep.subr.mxu0 0.0
          %1137 = vmatpush1.msra.mxu0 0.0
          %1138 = vmatprep.subr.mxu0 0.0
          %1139 = vmatpush1.msra.mxu0 0.0
          %1140 = vmatprep.subr.mxu0 0.0
          %1141 = vmatpush1.msra.mxu0 0.0
          %1142 = vmatprep.subr.mxu0 0.0
          %1143 = vmatpush1.msra.mxu0 0.0
          %1144 = vmatprep.mubr.f32.mxu0 0.0
          %1145 = vmatmul.mubr.f32.gmra.mrb[0].mxu0 %v510
          %v1146 = vpop.f32.mrb[0].mxu0
          %v1147 = vadd.f32 %v490, %v1146
          %v1148 = vpop.f32.mrb[0].mxu0
          %1149 = vdwg.mxu0
          %v1150 = vxor.u32 %v579, 2147483648
          %v1151 = vxor.u32 %v581, 2147483648
          %v1152 = vxor.u32 %v650, 2147483648
          %v1153 = vxor.u32 %v652, 2147483648
          %v1154 = vxor.u32 %v721, 2147483648
          %v1155 = vxor.u32 %v723, 2147483648
          %v1156 = vxor.u32 %v792, 2147483648
          %v1157 = vxor.u32 %v794, 2147483648
          %v1158 = vxor.u32 %v863, 2147483648
          %v1159 = vxor.u32 %v865, 2147483648
          %v1160 = vxor.u32 %v934, 2147483648
          %v1161 = vxor.u32 %v936, 2147483648
          %v1162 = vxor.u32 %v1005, 2147483648
          %v1163 = vxor.u32 %v1007, 2147483648
          %v1164 = vxor.u32 %v1076, 2147483648
          %v1165 = vxor.u32 %v1078, 2147483648
          %v1166 = vxor.u32 %v1147, 2147483648
          %v1167 = vmul.f32 %v1150, 1.442695
          %v1168 = vpow.pop %v1167
          %v1169 = vmul.f32 %v1151, 1.442695
          %v1170 = vpow.pop %v1169
          %v1171 = vmul.f32 %v1152, 1.442695
          %v1172 = vpow.pop %v1171
          %v1173 = vmul.f32 %v1153, 1.442695
          %v1174 = vpow.pop %v1173
          %v1175 = vmul.f32 %v1154, 1.442695
          %v1176 = vpow.pop %v1175
          %v1177 = vmul.f32 %v1155, 1.442695
          %v1178 = vpow.pop %v1177
          %v1179 = vmul.f32 %v1156, 1.442695
          %v1180 = vpow.pop %v1179
          %v1181 = vmul.f32 %v1157, 1.442695
          %v1182 = vpow.pop %v1181
          %v1183 = vmul.f32 %v1158, 1.442695
          %v1184 = vpow.pop %v1183
          %v1185 = vmul.f32 %v1159, 1.442695
          %v1186 = vpow.pop %v1185
          %v1187 = vmul.f32 %v1160, 1.442695
          %v1188 = vpow.pop %v1187
          %v1189 = vmul.f32 %v1161, 1.442695
          %v1190 = vpow.pop %v1189
          %v1191 = vmul.f32 %v1162, 1.442695
          %v1192 = vpow.pop %v1191
          %v1193 = vmul.f32 %v1163, 1.442695
          %v1194 = vpow.pop %v1193
          %v1195 = vmul.f32 %v1164, 1.442695
          %v1196 = vpow.pop %v1195
          %v1197 = vmul.f32 %v1165, 1.442695
          %v1198 = vpow.pop %v1197
          %v1199 = vmul.f32 %v1166, 1.442695
          %v1200 = vpow.pop %v1199
          %v1201 = vadd.f32 %v1168, 1.0
          %v1202 = vadd.f32 %v1170, 1.0
          %v1203 = vadd.f32 %v1172, 1.0
          %v1204 = vadd.f32 %v1174, 1.0
          %v1205 = vadd.f32 %v1176, 1.0
          %v1206 = vadd.f32 %v1178, 1.0
          %v1207 = vadd.f32 %v1180, 1.0
          %v1208 = vadd.f32 %v1182, 1.0
          %v1209 = vadd.f32 %v1184, 1.0
          %v1210 = vadd.f32 %v1186, 1.0
          %v1211 = vadd.f32 %v1188, 1.0
          %v1212 = vadd.f32 %v1190, 1.0
          %v1213 = vadd.f32 %v1192, 1.0
          %v1214 = vadd.f32 %v1194, 1.0
          %v1215 = vadd.f32 %v1196, 1.0
          %v1216 = vadd.f32 %v1198, 1.0
          %v1217 = vadd.f32 %v1200, 1.0
          %v1218 = vrcp.pop %v1201
          %v1219 = vmul.f32 1.0, %v1218
          %v1220 = vrcp.pop %v1202
          %v1221 = vmul.f32 1.0, %v1220
          %v1222 = vrcp.pop %v1203
          %v1223 = vmul.f32 1.0, %v1222
          %v1224 = vrcp.pop %v1204
          %v1225 = vmul.f32 1.0, %v1224
          %v1226 = vrcp.pop %v1205
          %v1227 = vmul.f32 1.0, %v1226
          %v1228 = vrcp.pop %v1206
          %v1229 = vmul.f32 1.0, %v1228
          %v1230 = vrcp.pop %v1207
          %v1231 = vmul.f32 1.0, %v1230
          %v1232 = vrcp.pop %v1208
          %v1233 = vmul.f32 1.0, %v1232
          %v1234 = vrcp.pop %v1209
          %v1235 = vmul.f32 1.0, %v1234
          %v1236 = vrcp.pop %v1210
          %v1237 = vmul.f32 1.0, %v1236
          %v1238 = vrcp.pop %v1211
          %v1239 = vmul.f32 1.0, %v1238
          %v1240 = vrcp.pop %v1212
          %v1241 = vmul.f32 1.0, %v1240
          %v1242 = vrcp.pop %v1213
          %v1243 = vmul.f32 1.0, %v1242
          %v1244 = vrcp.pop %v1214
          %v1245 = vmul.f32 1.0, %v1244
          %v1246 = vrcp.pop %v1215
          %v1247 = vmul.f32 1.0, %v1246
          %v1248 = vrcp.pop %v1216
          %v1249 = vmul.f32 1.0, %v1248
          %v1250 = vrcp.pop %v1217
          %v1251 = vmul.f32 1.0, %v1250
          %1252 = vst [vmem:[#allocation2] sm:$0xff] %v1219
          %1253 = vst [vmem:[#allocation2 + $0x8] sm:$0xff] %v1221
          %1254 = vst [vmem:[#allocation2 + $0x10] sm:$0xff] %v1223
          %1255 = vst [vmem:[#allocation2 + $0x18] sm:$0xff] %v1225
          %1256 = vst [vmem:[#allocation2 + $0x20] sm:$0xff] %v1227
          %1257 = vst [vmem:[#allocation2 + $0x28] sm:$0xff] %v1229
          %1258 = vst [vmem:[#allocation2 + $0x30] sm:$0xff] %v1231
          %1259 = vst [vmem:[#allocation2 + $0x38] sm:$0xff] %v1233
          %1260 = vst [vmem:[#allocation2 + $0x40] sm:$0xff] %v1235
          %1261 = vst [vmem:[#allocation2 + $0x48] sm:$0xff] %v1237
          %1262 = vst [vmem:[#allocation2 + $0x50] sm:$0xff] %v1239
          %1263 = vst [vmem:[#allocation2 + $0x58] sm:$0xff] %v1241
          %1264 = vst [vmem:[#allocation2 + $0x60] sm:$0xff] %v1243
          %1265 = vst [vmem:[#allocation2 + $0x68] sm:$0xff] %v1245
          %1266 = vst [vmem:[#allocation2 + $0x70] sm:$0xff] %v1247
          %1267 = vst [vmem:[#allocation2 + $0x78] sm:$0xff] %v1249
          %1268 = vst [vmem:[#allocation2 + $0x80] sm:$0xff] %v1251
          %1269 = vst [vmem:[#allocation3] sm:$0xff] 0.0
          %1270 = vst [vmem:[#allocation3 + $0x8] sm:$0xff] 0.0
          %1271 = vst [vmem:[#allocation3 + $0x10] sm:$0xff] 0.0
          %1272 = vst [vmem:[#allocation3 + $0x18] sm:$0xff] 0.0
          %1273 = vst [vmem:[#allocation3 + $0x20] sm:$0xff] 0.0
          %1274 = vst [vmem:[#allocation3 + $0x28] sm:$0xff] 0.0
          %1275 = vst [vmem:[#allocation3 + $0x30] sm:$0xff] 0.0
          %1276 = vst [vmem:[#allocation3 + $0x38] sm:$0xff] 0.0
          %1277 = vst [vmem:[#allocation3 + $0x40] sm:$0xff] 0.0
          %1278 = vst [vmem:[#allocation3 + $0x48] sm:$0xff] 0.0
          %1279 = vst [vmem:[#allocation3 + $0x50] sm:$0xff] 0.0
          %1280 = vst [vmem:[#allocation3 + $0x58] sm:$0xff] 0.0
          %1281 = vst [vmem:[#allocation3 + $0x60] sm:$0xff] 0.0
          %1282 = vst [vmem:[#allocation3 + $0x68] sm:$0xff] 0.0
          %1283 = vst [vmem:[#allocation3 + $0x70] sm:$0xff] 0.0
          %1284 = vst [vmem:[#allocation3 + $0x78] sm:$0xff] 0.0
          %1285 = vst [vmem:[#allocation3 + $0x80] sm:$0xff] 0.0
        $region76: #{ae_rtm_corr_forward.3} parent=47 // pred_fallthru
          _
        %v1286 = vld [vmem:[#allocation2] sm:$0xff]
        %v1287 = vld [vmem:[#allocation2 + $0x8] sm:$0xff]
        %v1288 = vld [vmem:[#allocation2 + $0x10] sm:$0xff]
        %v1289 = vld [vmem:[#allocation2 + $0x18] sm:$0xff]
        %v1290 = vld [vmem:[#allocation2 + $0x20] sm:$0xff]
        %v1291 = vld [vmem:[#allocation2 + $0x28] sm:$0xff]
        %v1292 = vld [vmem:[#allocation2 + $0x30] sm:$0xff]
        %v1293 = vld [vmem:[#allocation2 + $0x38] sm:$0xff]
        %v1294 = vld [vmem:[#allocation2 + $0x40] sm:$0xff]
        %v1295 = vld [vmem:[#allocation2 + $0x48] sm:$0xff]
        %v1296 = vld [vmem:[#allocation2 + $0x50] sm:$0xff]
        %v1297 = vld [vmem:[#allocation2 + $0x58] sm:$0xff]
        %v1298 = vld [vmem:[#allocation2 + $0x60] sm:$0xff]
        %v1299 = vld [vmem:[#allocation2 + $0x68] sm:$0xff]
        %v1300 = vld [vmem:[#allocation2 + $0x70] sm:$0xff]
        %v1301 = vld [vmem:[#allocation2 + $0x78] sm:$0xff]
        %v1302 = vld [vmem:[#allocation2 + $0x80] sm:$0xff]
        %v1303 = vld [vmem:[%s334] sm:$0xff]
        %v1304 = vld [vmem:[%s334 + $0x8] sm:$0xff]
        %v1305 = vld [vmem:[%s334 + $0x10] sm:$0xff]
        %v1306 = vld [vmem:[%s334 + $0x18] sm:$0xff]
        %v1307 = vld [vmem:[%s334 + $0x20] sm:$0xff]
        %v1308 = vld [vmem:[%s334 + $0x28] sm:$0xff]
        %v1309 = vld [vmem:[%s334 + $0x30] sm:$0xff]
        %v1310 = vld [vmem:[%s334 + $0x38] sm:$0xff]
        %v1311 = vld [vmem:[%s334 + $0x40] sm:$0xff]
        %v1312 = vld [vmem:[%s334 + $0x48] sm:$0xff]
        %v1313 = vld [vmem:[%s334 + $0x50] sm:$0xff]
        %v1314 = vld [vmem:[%s334 + $0x58] sm:$0xff]
        %v1315 = vld [vmem:[%s334 + $0x60] sm:$0xff]
        %v1316 = vld [vmem:[%s334 + $0x68] sm:$0xff]
        %v1317 = vld [vmem:[%s334 + $0x70] sm:$0xff]
        %v1318 = vld [vmem:[%s334 + $0x78] sm:$0xff]
        %v1319 = vld [vmem:[%s334 + $0x80] sm:$0xff]
        %v1320 = vld [vmem:[%s334 + $0x88] sm:$0xff]
        %v1321 = vld [vmem:[%s334 + $0x90] sm:$0xff]
        %v1322 = vld [vmem:[%s334 + $0x98] sm:$0xff]
        %v1323 = vld [vmem:[%s334 + $0xa0] sm:$0xff]
        %v1324 = vld [vmem:[%s334 + $0xa8] sm:$0xff]
        %v1325 = vld [vmem:[%s334 + $0xb0] sm:$0xff]
        %v1326 = vld [vmem:[%s334 + $0xb8] sm:$0xff]
        %v1327 = vld [vmem:[%s334 + $0xc0] sm:$0xff]
        %v1328 = vld [vmem:[%s334 + $0xc8] sm:$0xff]
        %v1329 = vld [vmem:[%s334 + $0xd0] sm:$0xff]
        %v1330 = vld [vmem:[%s334 + $0xd8] sm:$0xff]
        %v1331 = vld [vmem:[%s334 + $0xe0] sm:$0xff]
        %v1332 = vld [vmem:[%s334 + $0xe8] sm:$0xff]
        %v1333 = vld [vmem:[%s334 + $0xf0] sm:$0xff]
        %v1334 = vld [vmem:[%s334 + $0xf8] sm:$0xff]
        %v1335 = vld [vmem:[%s334 + $0x100] sm:$0xff]
        %v1336 = vld [vmem:[%s334 + $0x108] sm:$0xff]
        %v1337 = vld [vmem:[%s334 + $0x110] sm:$0xff]
        %v1338 = vld [vmem:[%s334 + $0x118] sm:$0xff]
        %v1339 = vld [vmem:[%s334 + $0x120] sm:$0xff]
        %v1340 = vld [vmem:[%s334 + $0x128] sm:$0xff]
        %v1341 = vld [vmem:[%s334 + $0x130] sm:$0xff]
        %v1342 = vld [vmem:[%s334 + $0x138] sm:$0xff]
        %v1343 = vld [vmem:[%s334 + $0x140] sm:$0xff]
        %v1344 = vld [vmem:[%s334 + $0x148] sm:$0xff]
        %v1345 = vld [vmem:[%s334 + $0x150] sm:$0xff]
        %v1346 = vld [vmem:[%s334 + $0x158] sm:$0xff]
        %v1347 = vld [vmem:[%s334 + $0x160] sm:$0xff]
        %v1348 = vld [vmem:[%s334 + $0x168] sm:$0xff]
        %v1349 = vld [vmem:[%s334 + $0x170] sm:$0xff]
        %v1350 = vld [vmem:[%s334 + $0x178] sm:$0xff]
        %v1351 = vld [vmem:[%s334 + $0x180] sm:$0xff]
        %v1352 = vld [vmem:[%s334 + $0x188] sm:$0xff]
        %v1353 = vld [vmem:[%s334 + $0x190] sm:$0xff]
        %v1354 = vld [vmem:[%s334 + $0x198] sm:$0xff]
        %v1355 = vld [vmem:[%s334 + $0x1a0] sm:$0xff]
        %v1356 = vld [vmem:[%s334 + $0x1a8] sm:$0xff]
        %v1357 = vld [vmem:[%s334 + $0x1b0] sm:$0xff]
        %v1358 = vld [vmem:[%s334 + $0x1b8] sm:$0xff]
        %v1359 = vld [vmem:[%s334 + $0x1c0] sm:$0xff]
        %v1360 = vld [vmem:[%s334 + $0x1c8] sm:$0xff]
        %v1361 = vld [vmem:[%s334 + $0x1d0] sm:$0xff]
        %v1362 = vld [vmem:[%s334 + $0x1d8] sm:$0xff]
        %v1363 = vld [vmem:[%s334 + $0x1e0] sm:$0xff]
        %v1364 = vld [vmem:[%s334 + $0x1e8] sm:$0xff]
        %v1365 = vld [vmem:[%s334 + $0x1f0] sm:$0xff]
        %v1366 = vld [vmem:[%s334 + $0x1f8] sm:$0xff]
        %v1367 = vld [vmem:[%s334 + $0x200] sm:$0xff]
        %v1368 = vld [vmem:[%s334 + $0x208] sm:$0xff]
        %v1369 = vld [vmem:[%s334 + $0x210] sm:$0xff]
        %v1370 = vld [vmem:[%s334 + $0x218] sm:$0xff]
        %v1371 = vld [vmem:[%s334 + $0x220] sm:$0xff]
        %v1372 = vld [vmem:[%s334 + $0x228] sm:$0xff]
        %v1373 = vld [vmem:[%s334 + $0x230] sm:$0xff]
        %v1374 = vld [vmem:[%s334 + $0x238] sm:$0xff]
        %v1375 = vld [vmem:[%s334 + $0x240] sm:$0xff]
        %v1376 = vld [vmem:[%s334 + $0x248] sm:$0xff]
        %v1377 = vld [vmem:[%s334 + $0x250] sm:$0xff]
        %v1378 = vld [vmem:[%s334 + $0x258] sm:$0xff]
        %v1379 = vld [vmem:[%s334 + $0x260] sm:$0xff]
        %v1380 = vld [vmem:[%s334 + $0x268] sm:$0xff]
        %v1381 = vld [vmem:[%s334 + $0x270] sm:$0xff]
        %v1382 = vld [vmem:[%s334 + $0x278] sm:$0xff]
        %v1383 = vld [vmem:[%s334 + $0x280] sm:$0xff]
        %v1384 = vld [vmem:[%s334 + $0x288] sm:$0xff]
        %v1385 = vld [vmem:[%s334 + $0x290] sm:$0xff]
        %v1386 = vld [vmem:[%s334 + $0x298] sm:$0xff]
        %v1387 = vld [vmem:[%s334 + $0x2a0] sm:$0xff]
        %v1388 = vld [vmem:[%s334 + $0x2a8] sm:$0xff]
        %v1389 = vld [vmem:[%s334 + $0x2b0] sm:$0xff]
        %v1390 = vld [vmem:[%s334 + $0x2b8] sm:$0xff]
        %v1391 = vld [vmem:[%s334 + $0x2c0] sm:$0xff]
        %v1392 = vld [vmem:[%s334 + $0x2c8] sm:$0xff]
        %v1393 = vld [vmem:[%s334 + $0x2d0] sm:$0xff]
        %v1394 = vld [vmem:[%s334 + $0x2d8] sm:$0xff]
        %v1395 = vld [vmem:[%s334 + $0x2e0] sm:$0xff]
        %v1396 = vld [vmem:[%s334 + $0x2e8] sm:$0xff]
        %v1397 = vld [vmem:[%s334 + $0x2f0] sm:$0xff]
        %v1398 = vld [vmem:[%s334 + $0x2f8] sm:$0xff]
        %v1399 = vld [vmem:[%s334 + $0x300] sm:$0xff]
        %v1400 = vld [vmem:[%s334 + $0x308] sm:$0xff]
        %v1401 = vld [vmem:[%s334 + $0x310] sm:$0xff]
        %v1402 = vld [vmem:[%s334 + $0x318] sm:$0xff]
        %v1403 = vld [vmem:[%s334 + $0x320] sm:$0xff]
        %v1404 = vld [vmem:[%s334 + $0x328] sm:$0xff]
        %v1405 = vld [vmem:[%s334 + $0x330] sm:$0xff]
        %v1406 = vld [vmem:[%s334 + $0x338] sm:$0xff]
        %v1407 = vld [vmem:[%s334 + $0x340] sm:$0xff]
        %v1408 = vld [vmem:[%s334 + $0x348] sm:$0xff]
        %v1409 = vld [vmem:[%s334 + $0x350] sm:$0xff]
        %v1410 = vld [vmem:[%s334 + $0x358] sm:$0xff]
        %v1411 = vld [vmem:[%s334 + $0x360] sm:$0xff]
        %v1412 = vld [vmem:[%s334 + $0x368] sm:$0xff]
        %v1413 = vld [vmem:[%s334 + $0x370] sm:$0xff]
        %v1414 = vld [vmem:[%s334 + $0x378] sm:$0xff]
        %v1415 = vld [vmem:[%s334 + $0x380] sm:$0xff]
        %v1416 = vld [vmem:[%s334 + $0x388] sm:$0xff]
        %v1417 = vld [vmem:[%s334 + $0x390] sm:$0xff]
        %v1418 = vld [vmem:[%s334 + $0x398] sm:$0xff]
        %v1419 = vld [vmem:[%s334 + $0x3a0] sm:$0xff]
        %v1420 = vld [vmem:[%s334 + $0x3a8] sm:$0xff]
        %v1421 = vld [vmem:[%s334 + $0x3b0] sm:$0xff]
        %v1422 = vld [vmem:[%s334 + $0x3b8] sm:$0xff]
        %v1423 = vld [vmem:[%s334 + $0x3c0] sm:$0xff]
        %v1424 = vld [vmem:[%s334 + $0x3c8] sm:$0xff]
        %v1425 = vld [vmem:[%s334 + $0x3d0] sm:$0xff]
        %v1426 = vld [vmem:[%s334 + $0x3d8] sm:$0xff]
        %v1427 = vld [vmem:[%s334 + $0x3e0] sm:$0xff]
        %v1428 = vld [vmem:[%s334 + $0x3e8] sm:$0xff]
        %v1429 = vld [vmem:[%s334 + $0x3f0] sm:$0xff]
        %v1430 = vld [vmem:[%s334 + $0x3f8] sm:$0xff]
        %v1431 = vld [vmem:[%s334 + $0x400] sm:$0xff]
        %v1432 = vld [vmem:[%s334 + $0x408] sm:$0xff]
        %v1433 = vld [vmem:[%s334 + $0x410] sm:$0xff]
        %v1434 = vld [vmem:[%s334 + $0x418] sm:$0xff]
        %v1435 = vld [vmem:[%s334 + $0x420] sm:$0xff]
        %v1436 = vld [vmem:[%s334 + $0x428] sm:$0xff]
        %v1437 = vld [vmem:[%s334 + $0x430] sm:$0xff]
        %v1438 = vld [vmem:[%s334 + $0x438] sm:$0xff]
        %v1439 = vld [vmem:[%s334 + $0x440] sm:$0xff]
        %v1440 = vld [vmem:[%s334 + $0x448] sm:$0xff]
        %v1441 = vld [vmem:[%s334 + $0x450] sm:$0xff]
        %v1442 = vld [vmem:[%s334 + $0x458] sm:$0xff]
        %v1443 = vld [vmem:[%s334 + $0x460] sm:$0xff]
        %v1444 = vld [vmem:[%s334 + $0x468] sm:$0xff]
        %v1445 = vld [vmem:[%s334 + $0x470] sm:$0xff]
        %v1446 = vld [vmem:[%s334 + $0x478] sm:$0xff]
        %v1447 = vld [vmem:[%s334 + $0x480] sm:$0xff]
        %v1448 = vld [vmem:[%s334 + $0x488] sm:$0xff]
        %v1449 = vld [vmem:[%s334 + $0x490] sm:$0xff]
        %v1450 = vld [vmem:[%s334 + $0x498] sm:$0xff]
        %v1451 = vld [vmem:[%s334 + $0x4a0] sm:$0xff]
        %v1452 = vld [vmem:[%s334 + $0x4a8] sm:$0xff]
        %v1453 = vld [vmem:[%s334 + $0x4b0] sm:$0xff]
        %v1454 = vld [vmem:[%s334 + $0x4b8] sm:$0xff]
        %v1455 = vld [vmem:[%s334 + $0x4c0] sm:$0xff]
        %v1456 = vld [vmem:[%s334 + $0x4c8] sm:$0xff]
        %v1457 = vld [vmem:[%s334 + $0x4d0] sm:$0xff]
        %v1458 = vld [vmem:[%s334 + $0x4d8] sm:$0xff]
        %v1459 = vld [vmem:[%s334 + $0x4e0] sm:$0xff]
        %v1460 = vld [vmem:[%s334 + $0x4e8] sm:$0xff]
        %v1461 = vld [vmem:[%s334 + $0x4f0] sm:$0xff]
        %v1462 = vld [vmem:[%s334 + $0x4f8] sm:$0xff]
        %v1463 = vld [vmem:[%s334 + $0x500] sm:$0xff]
        %v1464 = vld [vmem:[%s334 + $0x508] sm:$0xff]
        %v1465 = vld [vmem:[%s334 + $0x510] sm:$0xff]
        %v1466 = vld [vmem:[%s334 + $0x518] sm:$0xff]
        %v1467 = vld [vmem:[%s334 + $0x520] sm:$0xff]
        %v1468 = vld [vmem:[%s334 + $0x528] sm:$0xff]
        %v1469 = vld [vmem:[%s334 + $0x530] sm:$0xff]
        %v1470 = vld [vmem:[%s334 + $0x538] sm:$0xff]
        %v1471 = vld [vmem:[%s334 + $0x540] sm:$0xff]
        %v1472 = vld [vmem:[%s334 + $0x548] sm:$0xff]
        %v1473 = vld [vmem:[%s334 + $0x550] sm:$0xff]
        %v1474 = vld [vmem:[%s334 + $0x558] sm:$0xff]
        %v1475 = vld [vmem:[%s334 + $0x560] sm:$0xff]
        %v1476 = vld [vmem:[%s334 + $0x568] sm:$0xff]
        %v1477 = vld [vmem:[%s334 + $0x570] sm:$0xff]
        %v1478 = vld [vmem:[%s334 + $0x578] sm:$0xff]
        %v1479 = vld [vmem:[%s334 + $0x580] sm:$0xff]
        %v1480 = vld [vmem:[%s334 + $0x588] sm:$0xff]
        %v1481 = vld [vmem:[%s334 + $0x590] sm:$0xff]
        %v1482 = vld [vmem:[%s334 + $0x598] sm:$0xff]
        %v1483 = vld [vmem:[%s334 + $0x5a0] sm:$0xff]
        %v1484 = vld [vmem:[%s334 + $0x5a8] sm:$0xff]
        %v1485 = vld [vmem:[%s334 + $0x5b0] sm:$0xff]
        %v1486 = vld [vmem:[%s334 + $0x5b8] sm:$0xff]
        %v1487 = vld [vmem:[%s334 + $0x5c0] sm:$0xff]
        %v1488 = vld [vmem:[%s334 + $0x5c8] sm:$0xff]
        %v1489 = vld [vmem:[%s334 + $0x5d0] sm:$0xff]
        %v1490 = vld [vmem:[%s334 + $0x5d8] sm:$0xff]
        %v1491 = vld [vmem:[%s334 + $0x5e0] sm:$0xff]
        %v1492 = vld [vmem:[%s334 + $0x5e8] sm:$0xff]
        %v1493 = vld [vmem:[%s334 + $0x5f0] sm:$0xff]
        %v1494 = vld [vmem:[%s334 + $0x5f8] sm:$0xff]
        %v1495 = vld [vmem:[%s334 + $0x600] sm:$0xff]
        %v1496 = vld [vmem:[%s334 + $0x608] sm:$0xff]
        %v1497 = vld [vmem:[%s334 + $0x610] sm:$0xff]
        %v1498 = vld [vmem:[%s334 + $0x618] sm:$0xff]
        %v1499 = vld [vmem:[%s334 + $0x620] sm:$0xff]
        %v1500 = vld [vmem:[%s334 + $0x628] sm:$0xff]
        %v1501 = vld [vmem:[%s334 + $0x630] sm:$0xff]
        %v1502 = vld [vmem:[%s334 + $0x638] sm:$0xff]
        %v1503 = vld [vmem:[%s334 + $0x640] sm:$0xff]
        %v1504 = vld [vmem:[%s334 + $0x648] sm:$0xff]
        %v1505 = vld [vmem:[%s334 + $0x650] sm:$0xff]
        %v1506 = vld [vmem:[%s334 + $0x658] sm:$0xff]
        %v1507 = vld [vmem:[%s334 + $0x660] sm:$0xff]
        %v1508 = vld [vmem:[%s334 + $0x668] sm:$0xff]
        %v1509 = vld [vmem:[%s334 + $0x670] sm:$0xff]
        %v1510 = vld [vmem:[%s334 + $0x678] sm:$0xff]
        %v1511 = vld [vmem:[%s334 + $0x680] sm:$0xff]
        %v1512 = vld [vmem:[%s334 + $0x688] sm:$0xff]
        %v1513 = vld [vmem:[%s334 + $0x690] sm:$0xff]
        %v1514 = vld [vmem:[%s334 + $0x698] sm:$0xff]
        %v1515 = vld [vmem:[%s334 + $0x6a0] sm:$0xff]
        %v1516 = vld [vmem:[%s334 + $0x6a8] sm:$0xff]
        %v1517 = vld [vmem:[%s334 + $0x6b0] sm:$0xff]
        %v1518 = vld [vmem:[%s334 + $0x6b8] sm:$0xff]
        %v1519 = vld [vmem:[%s334 + $0x6c0] sm:$0xff]
        %v1520 = vld [vmem:[%s334 + $0x6c8] sm:$0xff]
        %v1521 = vld [vmem:[%s334 + $0x6d0] sm:$0xff]
        %v1522 = vld [vmem:[%s334 + $0x6d8] sm:$0xff]
        %v1523 = vld [vmem:[%s334 + $0x6e0] sm:$0xff]
        %v1524 = vld [vmem:[%s334 + $0x6e8] sm:$0xff]
        %v1525 = vld [vmem:[%s334 + $0x6f0] sm:$0xff]
        %v1526 = vld [vmem:[%s334 + $0x6f8] sm:$0xff]
        %v1527 = vld [vmem:[%s334 + $0x700] sm:$0xff]
        %v1528 = vld [vmem:[%s334 + $0x708] sm:$0xff]
        %v1529 = vld [vmem:[%s334 + $0x710] sm:$0xff]
        %v1530 = vld [vmem:[%s334 + $0x718] sm:$0xff]
        %v1531 = vld [vmem:[%s334 + $0x720] sm:$0xff]
        %v1532 = vld [vmem:[%s334 + $0x728] sm:$0xff]
        %v1533 = vld [vmem:[%s334 + $0x730] sm:$0xff]
        %v1534 = vld [vmem:[%s334 + $0x738] sm:$0xff]
        %v1535 = vld [vmem:[%s334 + $0x740] sm:$0xff]
        %v1536 = vld [vmem:[%s334 + $0x748] sm:$0xff]
        %v1537 = vld [vmem:[%s334 + $0x750] sm:$0xff]
        %v1538 = vld [vmem:[%s334 + $0x758] sm:$0xff]
        %v1539 = vld [vmem:[%s334 + $0x760] sm:$0xff]
        %v1540 = vld [vmem:[%s334 + $0x768] sm:$0xff]
        %v1541 = vld [vmem:[%s334 + $0x770] sm:$0xff]
        %v1542 = vld [vmem:[%s334 + $0x778] sm:$0xff]
        %v1543 = vld [vmem:[%s334 + $0x780] sm:$0xff]
        %v1544 = vld [vmem:[%s334 + $0x788] sm:$0xff]
        %v1545 = vld [vmem:[%s334 + $0x790] sm:$0xff]
        %v1546 = vld [vmem:[%s334 + $0x798] sm:$0xff]
        %v1547 = vld [vmem:[%s334 + $0x7a0] sm:$0xff]
        %v1548 = vld [vmem:[%s334 + $0x7a8] sm:$0xff]
        %v1549 = vld [vmem:[%s334 + $0x7b0] sm:$0xff]
        %v1550 = vld [vmem:[%s334 + $0x7b8] sm:$0xff]
        %v1551 = vld [vmem:[%s334 + $0x7c0] sm:$0xff]
        %v1552 = vld [vmem:[%s334 + $0x7c8] sm:$0xff]
        %v1553 = vld [vmem:[%s334 + $0x7d0] sm:$0xff]
        %v1554 = vld [vmem:[%s334 + $0x7d8] sm:$0xff]
        %v1555 = vld [vmem:[%s334 + $0x7e0] sm:$0xff]
        %v1556 = vld [vmem:[%s334 + $0x7e8] sm:$0xff]
        %v1557 = vld [vmem:[%s334 + $0x7f0] sm:$0xff]
        %v1558 = vld [vmem:[%s334 + $0x7f8] sm:$0xff]
        %v1559 = vld [vmem:[%s334 + $0x800] sm:$0xff]
        %v1560 = vld [vmem:[%s334 + $0x808] sm:$0xff]
        %v1561 = vld [vmem:[%s334 + $0x810] sm:$0xff]
        %v1562 = vld [vmem:[%s334 + $0x818] sm:$0xff]
        %v1563 = vld [vmem:[%s334 + $0x820] sm:$0xff]
        %v1564 = vld [vmem:[%s334 + $0x828] sm:$0xff]
        %v1565 = vld [vmem:[%s334 + $0x830] sm:$0xff]
        %v1566 = vld [vmem:[%s334 + $0x838] sm:$0xff]
        %v1567 = vld [vmem:[%s334 + $0x840] sm:$0xff]
        %v1568 = vld [vmem:[%s334 + $0x848] sm:$0xff]
        %v1569 = vld [vmem:[%s334 + $0x850] sm:$0xff]
        %v1570 = vld [vmem:[%s334 + $0x858] sm:$0xff]
        %v1571 = vld [vmem:[%s334 + $0x860] sm:$0xff]
        %v1572 = vld [vmem:[%s334 + $0x868] sm:$0xff]
        %v1573 = vld [vmem:[%s334 + $0x870] sm:$0xff]
        %v1574 = vld [vmem:[%s334 + $0x878] sm:$0xff]
        %v1575 = vld [vmem:[%s334 + $0x880] sm:$0xff]
        %v1576 = vld [vmem:[%s334 + $0x888] sm:$0xff]
        %v1577 = vld [vmem:[%s334 + $0x890] sm:$0xff]
        %v1578 = vld [vmem:[%s334 + $0x898] sm:$0xff]
        %v1579 = vld [vmem:[%s334 + $0x8a0] sm:$0xff]
        %v1580 = vld [vmem:[%s334 + $0x8a8] sm:$0xff]
        %v1581 = vld [vmem:[%s334 + $0x8b0] sm:$0xff]
        %v1582 = vld [vmem:[%s334 + $0x8b8] sm:$0xff]
        %v1583 = vld [vmem:[%s334 + $0x8c0] sm:$0xff]
        %v1584 = vld [vmem:[%s334 + $0x8c8] sm:$0xff]
        %v1585 = vld [vmem:[%s334 + $0x8d0] sm:$0xff]
        %v1586 = vld [vmem:[%s334 + $0x8d8] sm:$0xff]
        %v1587 = vld [vmem:[%s334 + $0x8e0] sm:$0xff]
        %v1588 = vld [vmem:[%s334 + $0x8e8] sm:$0xff]
        %v1589 = vld [vmem:[%s334 + $0x8f0] sm:$0xff]
        %v1590 = vld [vmem:[%s334 + $0x8f8] sm:$0xff]
        %v1591 = vld [vmem:[%s334 + $0x900] sm:$0xff]
        %v1592 = vld [vmem:[%s334 + $0x908] sm:$0xff]
        %v1593 = vld [vmem:[%s334 + $0x910] sm:$0xff]
        %v1594 = vld [vmem:[%s334 + $0x918] sm:$0xff]
        %v1595 = vld [vmem:[%s334 + $0x920] sm:$0xff]
        %v1596 = vld [vmem:[%s334 + $0x928] sm:$0xff]
        %v1597 = vld [vmem:[%s334 + $0x930] sm:$0xff]
        %v1598 = vld [vmem:[%s334 + $0x938] sm:$0xff]
        %v1599 = vld [vmem:[%s334 + $0x940] sm:$0xff]
        %v1600 = vld [vmem:[%s334 + $0x948] sm:$0xff]
        %v1601 = vld [vmem:[%s334 + $0x950] sm:$0xff]
        %v1602 = vld [vmem:[%s334 + $0x958] sm:$0xff]
        %v1603 = vld [vmem:[%s334 + $0x960] sm:$0xff]
        %v1604 = vld [vmem:[%s334 + $0x968] sm:$0xff]
        %v1605 = vld [vmem:[%s334 + $0x970] sm:$0xff]
        %v1606 = vld [vmem:[%s334 + $0x978] sm:$0xff]
        %v1607 = vld [vmem:[%s334 + $0x980] sm:$0xff]
        %v1608 = vld [vmem:[%s334 + $0x988] sm:$0xff]
        %v1609 = vld [vmem:[%s334 + $0x990] sm:$0xff]
        %v1610 = vld [vmem:[%s334 + $0x998] sm:$0xff]
        %v1611 = vld [vmem:[%s334 + $0x9a0] sm:$0xff]
        %v1612 = vld [vmem:[%s334 + $0x9a8] sm:$0xff]
        %v1613 = vld [vmem:[%s334 + $0x9b0] sm:$0xff]
        %v1614 = vld [vmem:[%s334 + $0x9b8] sm:$0xff]
        %v1615 = vld [vmem:[%s334 + $0x9c0] sm:$0xff]
        %v1616 = vld [vmem:[%s334 + $0x9c8] sm:$0xff]
        %v1617 = vld [vmem:[%s334 + $0x9d0] sm:$0xff]
        %v1618 = vld [vmem:[%s334 + $0x9d8] sm:$0xff]
        %v1619 = vld [vmem:[%s334 + $0x9e0] sm:$0xff]
        %v1620 = vld [vmem:[%s334 + $0x9e8] sm:$0xff]
        %v1621 = vld [vmem:[%s334 + $0x9f0] sm:$0xff]
        %v1622 = vld [vmem:[%s334 + $0x9f8] sm:$0xff]
        %v1623 = vld [vmem:[%s334 + $0xa00] sm:$0xff]
        %v1624 = vld [vmem:[%s334 + $0xa08] sm:$0xff]
        %v1625 = vld [vmem:[%s334 + $0xa10] sm:$0xff]
        %v1626 = vld [vmem:[%s334 + $0xa18] sm:$0xff]
        %v1627 = vld [vmem:[%s334 + $0xa20] sm:$0xff]
        %v1628 = vld [vmem:[%s334 + $0xa28] sm:$0xff]
        %v1629 = vld [vmem:[%s334 + $0xa30] sm:$0xff]
        %v1630 = vld [vmem:[%s334 + $0xa38] sm:$0xff]
        %v1631 = vld [vmem:[%s334 + $0xa40] sm:$0xff]
        %v1632 = vld [vmem:[%s334 + $0xa48] sm:$0xff]
        %v1633 = vld [vmem:[%s334 + $0xa50] sm:$0xff]
        %v1634 = vld [vmem:[%s334 + $0xa58] sm:$0xff]
        %v1635 = vld [vmem:[%s334 + $0xa60] sm:$0xff]
        %v1636 = vld [vmem:[%s334 + $0xa68] sm:$0xff]
        %v1637 = vld [vmem:[%s334 + $0xa70] sm:$0xff]
        %v1638 = vld [vmem:[%s334 + $0xa78] sm:$0xff]
        %v1639 = vld [vmem:[%s334 + $0xa80] sm:$0xff]
        %v1640 = vld [vmem:[%s334 + $0xa88] sm:$0xff]
        %v1641 = vld [vmem:[%s334 + $0xa90] sm:$0xff]
        %v1642 = vld [vmem:[%s334 + $0xa98] sm:$0xff]
        %v1643 = vld [vmem:[%s334 + $0xaa0] sm:$0xff]
        %v1644 = vld [vmem:[%s334 + $0xaa8] sm:$0xff]
        %v1645 = vld [vmem:[%s334 + $0xab0] sm:$0xff]
        %v1646 = vld [vmem:[%s334 + $0xab8] sm:$0xff]
        %v1647 = vld [vmem:[%s334 + $0xac0] sm:$0xff]
        %v1648 = vld [vmem:[%s334 + $0xac8] sm:$0xff]
        %v1649 = vld [vmem:[%s334 + $0xad0] sm:$0xff]
        %v1650 = vld [vmem:[%s334 + $0xad8] sm:$0xff]
        %v1651 = vld [vmem:[%s334 + $0xae0] sm:$0xff]
        %v1652 = vld [vmem:[%s334 + $0xae8] sm:$0xff]
        %v1653 = vld [vmem:[%s334 + $0xaf0] sm:$0xff]
        %v1654 = vld [vmem:[%s334 + $0xaf8] sm:$0xff]
        %v1655 = vld [vmem:[%s334 + $0xb00] sm:$0xff]
        %v1656 = vld [vmem:[%s334 + $0xb08] sm:$0xff]
        %v1657 = vld [vmem:[%s334 + $0xb10] sm:$0xff]
        %v1658 = vld [vmem:[%s334 + $0xb18] sm:$0xff]
        %v1659 = vld [vmem:[%s334 + $0xb20] sm:$0xff]
        %v1660 = vld [vmem:[%s334 + $0xb28] sm:$0xff]
        %v1661 = vld [vmem:[%s334 + $0xb30] sm:$0xff]
        %v1662 = vld [vmem:[%s334 + $0xb38] sm:$0xff]
        %v1663 = vld [vmem:[%s334 + $0xb40] sm:$0xff]
        %v1664 = vld [vmem:[%s334 + $0xb48] sm:$0xff]
        %v1665 = vld [vmem:[%s334 + $0xb50] sm:$0xff]
        %v1666 = vld [vmem:[%s334 + $0xb58] sm:$0xff]
        %v1667 = vld [vmem:[%s334 + $0xb60] sm:$0xff]
        %v1668 = vld [vmem:[%s334 + $0xb68] sm:$0xff]
        %v1669 = vld [vmem:[%s334 + $0xb70] sm:$0xff]
        %v1670 = vld [vmem:[%s334 + $0xb78] sm:$0xff]
        %v1671 = vld [vmem:[%s334 + $0xb80] sm:$0xff]
        %v1672 = vld [vmem:[%s334 + $0xb88] sm:$0xff]
        %v1673 = vld [vmem:[%s334 + $0xb90] sm:$0xff]
        %v1674 = vld [vmem:[%s334 + $0xb98] sm:$0xff]
        %v1675 = vld [vmem:[%s334 + $0xba0] sm:$0xff]
        %v1676 = vld [vmem:[%s334 + $0xba8] sm:$0xff]
        %v1677 = vld [vmem:[%s334 + $0xbb0] sm:$0xff]
        %v1678 = vld [vmem:[%s334 + $0xbb8] sm:$0xff]
        %v1679 = vld [vmem:[%s334 + $0xbc0] sm:$0xff]
        %v1680 = vld [vmem:[%s334 + $0xbc8] sm:$0xff]
        %v1681 = vld [vmem:[%s334 + $0xbd0] sm:$0xff]
        %v1682 = vld [vmem:[%s334 + $0xbd8] sm:$0xff]
        %v1683 = vld [vmem:[%s334 + $0xbe0] sm:$0xff]
        %v1684 = vld [vmem:[%s334 + $0xbe8] sm:$0xff]
        %v1685 = vld [vmem:[%s334 + $0xbf0] sm:$0xff]
        %v1686 = vld [vmem:[%s334 + $0xbf8] sm:$0xff]
        %v1687 = vld [vmem:[%s334 + $0xc00] sm:$0xff]
        %v1688 = vld [vmem:[%s334 + $0xc08] sm:$0xff]
        %v1689 = vld [vmem:[%s334 + $0xc10] sm:$0xff]
        %v1690 = vld [vmem:[%s334 + $0xc18] sm:$0xff]
        %v1691 = vld [vmem:[%s334 + $0xc20] sm:$0xff]
        %v1692 = vld [vmem:[%s334 + $0xc28] sm:$0xff]
        %v1693 = vld [vmem:[%s334 + $0xc30] sm:$0xff]
        %v1694 = vld [vmem:[%s334 + $0xc38] sm:$0xff]
        %v1695 = vld [vmem:[%s334 + $0xc40] sm:$0xff]
        %v1696 = vld [vmem:[%s334 + $0xc48] sm:$0xff]
        %v1697 = vld [vmem:[%s334 + $0xc50] sm:$0xff]
        %v1698 = vld [vmem:[%s334 + $0xc58] sm:$0xff]
        %v1699 = vld [vmem:[%s334 + $0xc60] sm:$0xff]
        %v1700 = vld [vmem:[%s334 + $0xc68] sm:$0xff]
        %v1701 = vld [vmem:[%s334 + $0xc70] sm:$0xff]
        %v1702 = vld [vmem:[%s334 + $0xc78] sm:$0xff]
        %v1703 = vld [vmem:[%s334 + $0xc80] sm:$0xff]
        %v1704 = vld [vmem:[%s334 + $0xc88] sm:$0xff]
        %v1705 = vld [vmem:[%s334 + $0xc90] sm:$0xff]
        %v1706 = vld [vmem:[%s334 + $0xc98] sm:$0xff]
        %v1707 = vld [vmem:[%s334 + $0xca0] sm:$0xff]
        %v1708 = vld [vmem:[%s334 + $0xca8] sm:$0xff]
        %v1709 = vld [vmem:[%s334 + $0xcb0] sm:$0xff]
        %v1710 = vld [vmem:[%s334 + $0xcb8] sm:$0xff]
        %v1711 = vld [vmem:[%s334 + $0xcc0] sm:$0xff]
        %v1712 = vld [vmem:[%s334 + $0xcc8] sm:$0xff]
        %v1713 = vld [vmem:[%s334 + $0xcd0] sm:$0xff]
        %v1714 = vld [vmem:[%s334 + $0xcd8] sm:$0xff]
        %v1715 = vld [vmem:[%s334 + $0xce0] sm:$0xff]
        %v1716 = vld [vmem:[%s334 + $0xce8] sm:$0xff]
        %v1717 = vld [vmem:[%s334 + $0xcf0] sm:$0xff]
        %v1718 = vld [vmem:[%s334 + $0xcf8] sm:$0xff]
        %v1719 = vld [vmem:[%s334 + $0xd00] sm:$0xff]
        %v1720 = vld [vmem:[%s334 + $0xd08] sm:$0xff]
        %v1721 = vld [vmem:[%s334 + $0xd10] sm:$0xff]
        %v1722 = vld [vmem:[%s334 + $0xd18] sm:$0xff]
        %v1723 = vld [vmem:[%s334 + $0xd20] sm:$0xff]
        %v1724 = vld [vmem:[%s334 + $0xd28] sm:$0xff]
        %v1725 = vld [vmem:[%s334 + $0xd30] sm:$0xff]
        %v1726 = vld [vmem:[%s334 + $0xd38] sm:$0xff]
        %v1727 = vld [vmem:[%s334 + $0xd40] sm:$0xff]
        %v1728 = vld [vmem:[%s334 + $0xd48] sm:$0xff]
        %v1729 = vld [vmem:[%s334 + $0xd50] sm:$0xff]
        %v1730 = vld [vmem:[%s334 + $0xd58] sm:$0xff]
        %v1731 = vld [vmem:[%s334 + $0xd60] sm:$0xff]
        %v1732 = vld [vmem:[%s334 + $0xd68] sm:$0xff]
        %v1733 = vld [vmem:[%s334 + $0xd70] sm:$0xff]
        %v1734 = vld [vmem:[%s334 + $0xd78] sm:$0xff]
        %v1735 = vld [vmem:[%s334 + $0xd80] sm:$0xff]
        %v1736 = vld [vmem:[%s334 + $0xd88] sm:$0xff]
        %v1737 = vld [vmem:[%s334 + $0xd90] sm:$0xff]
        %v1738 = vld [vmem:[%s334 + $0xd98] sm:$0xff]
        %v1739 = vld [vmem:[%s334 + $0xda0] sm:$0xff]
        %v1740 = vld [vmem:[%s334 + $0xda8] sm:$0xff]
        %v1741 = vld [vmem:[%s334 + $0xdb0] sm:$0xff]
        %v1742 = vld [vmem:[%s334 + $0xdb8] sm:$0xff]
        %v1743 = vld [vmem:[%s334 + $0xdc0] sm:$0xff]
        %v1744 = vld [vmem:[%s334 + $0xdc8] sm:$0xff]
        %v1745 = vld [vmem:[%s334 + $0xdd0] sm:$0xff]
        %v1746 = vld [vmem:[%s334 + $0xdd8] sm:$0xff]
        %v1747 = vld [vmem:[%s334 + $0xde0] sm:$0xff]
        %v1748 = vld [vmem:[%s334 + $0xde8] sm:$0xff]
        %v1749 = vld [vmem:[%s334 + $0xdf0] sm:$0xff]
        %v1750 = vld [vmem:[%s334 + $0xdf8] sm:$0xff]
        %v1751 = vld [vmem:[%s334 + $0xe00] sm:$0xff]
        %v1752 = vld [vmem:[%s334 + $0xe08] sm:$0xff]
        %v1753 = vld [vmem:[%s334 + $0xe10] sm:$0xff]
        %v1754 = vld [vmem:[%s334 + $0xe18] sm:$0xff]
        %v1755 = vld [vmem:[%s334 + $0xe20] sm:$0xff]
        %v1756 = vld [vmem:[%s334 + $0xe28] sm:$0xff]
        %v1757 = vld [vmem:[%s334 + $0xe30] sm:$0xff]
        %v1758 = vld [vmem:[%s334 + $0xe38] sm:$0xff]
        %v1759 = vld [vmem:[%s334 + $0xe40] sm:$0xff]
        %v1760 = vld [vmem:[%s334 + $0xe48] sm:$0xff]
        %v1761 = vld [vmem:[%s334 + $0xe50] sm:$0xff]
        %v1762 = vld [vmem:[%s334 + $0xe58] sm:$0xff]
        %v1763 = vld [vmem:[%s334 + $0xe60] sm:$0xff]
        %v1764 = vld [vmem:[%s334 + $0xe68] sm:$0xff]
        %v1765 = vld [vmem:[%s334 + $0xe70] sm:$0xff]
        %v1766 = vld [vmem:[%s334 + $0xe78] sm:$0xff]
        %v1767 = vld [vmem:[%s334 + $0xe80] sm:$0xff]
        %v1768 = vld [vmem:[%s334 + $0xe88] sm:$0xff]
        %v1769 = vld [vmem:[%s334 + $0xe90] sm:$0xff]
        %v1770 = vld [vmem:[%s334 + $0xe98] sm:$0xff]
        %v1771 = vld [vmem:[%s334 + $0xea0] sm:$0xff]
        %v1772 = vld [vmem:[%s334 + $0xea8] sm:$0xff]
        %v1773 = vld [vmem:[%s334 + $0xeb0] sm:$0xff]
        %v1774 = vld [vmem:[%s334 + $0xeb8] sm:$0xff]
        %v1775 = vld [vmem:[%s334 + $0xec0] sm:$0xff]
        %v1776 = vld [vmem:[%s334 + $0xec8] sm:$0xff]
        %v1777 = vld [vmem:[%s334 + $0xed0] sm:$0xff]
        %v1778 = vld [vmem:[%s334 + $0xed8] sm:$0xff]
        %v1779 = vld [vmem:[%s334 + $0xee0] sm:$0xff]
        %v1780 = vld [vmem:[%s334 + $0xee8] sm:$0xff]
        %v1781 = vld [vmem:[%s334 + $0xef0] sm:$0xff]
        %v1782 = vld [vmem:[%s334 + $0xef8] sm:$0xff]
        %v1783 = vld [vmem:[%s334 + $0xf00] sm:$0xff]
        %v1784 = vld [vmem:[%s334 + $0xf08] sm:$0xff]
        %v1785 = vld [vmem:[%s334 + $0xf10] sm:$0xff]
        %v1786 = vld [vmem:[%s334 + $0xf18] sm:$0xff]
        %v1787 = vld [vmem:[%s334 + $0xf20] sm:$0xff]
        %v1788 = vld [vmem:[%s334 + $0xf28] sm:$0xff]
        %v1789 = vld [vmem:[%s334 + $0xf30] sm:$0xff]
        %v1790 = vld [vmem:[%s334 + $0xf38] sm:$0xff]
        %v1791 = vld [vmem:[%s334 + $0xf40] sm:$0xff]
        %v1792 = vld [vmem:[%s334 + $0xf48] sm:$0xff]
        %v1793 = vld [vmem:[%s334 + $0xf50] sm:$0xff]
        %v1794 = vld [vmem:[%s334 + $0xf58] sm:$0xff]
        %v1795 = vld [vmem:[%s334 + $0xf60] sm:$0xff]
        %v1796 = vld [vmem:[%s334 + $0xf68] sm:$0xff]
        %v1797 = vld [vmem:[%s334 + $0xf70] sm:$0xff]
        %v1798 = vld [vmem:[%s334 + $0xf78] sm:$0xff]
        %v1799 = vld [vmem:[%s334 + $0xf80] sm:$0xff]
        %v1800 = vld [vmem:[%s334 + $0xf88] sm:$0xff]
        %v1801 = vld [vmem:[%s334 + $0xf90] sm:$0xff]
        %v1802 = vld [vmem:[%s334 + $0xf98] sm:$0xff]
        %v1803 = vld [vmem:[%s334 + $0xfa0] sm:$0xff]
        %v1804 = vld [vmem:[%s334 + $0xfa8] sm:$0xff]
        %v1805 = vld [vmem:[%s334 + $0xfb0] sm:$0xff]
        %v1806 = vld [vmem:[%s334 + $0xfb8] sm:$0xff]
        %v1807 = vld [vmem:[%s334 + $0xfc0] sm:$0xff]
        %v1808 = vld [vmem:[%s334 + $0xfc8] sm:$0xff]
        %v1809 = vld [vmem:[%s334 + $0xfd0] sm:$0xff]
        %v1810 = vld [vmem:[%s334 + $0xfd8] sm:$0xff]
        %v1811 = vld [vmem:[%s334 + $0xfe0] sm:$0xff]
        %v1812 = vld [vmem:[%s334 + $0xfe8] sm:$0xff]
        %v1813 = vld [vmem:[%s334 + $0xff0] sm:$0xff]
        %v1814 = vld [vmem:[%s334 + $0xff8] sm:$0xff]
        %v1815 = vld [vmem:[%s334 + $0x1000] sm:$0xff]
        %v1816 = vld [vmem:[%s334 + $0x1008] sm:$0xff]
        %v1817 = vld [vmem:[%s334 + $0x1010] sm:$0xff]
        %v1818 = vld [vmem:[%s334 + $0x1018] sm:$0xff]
        %v1819 = vld [vmem:[%s334 + $0x1020] sm:$0xff]
        %v1820 = vld [vmem:[%s334 + $0x1028] sm:$0xff]
        %v1821 = vld [vmem:[%s334 + $0x1030] sm:$0xff]
        %v1822 = vld [vmem:[%s334 + $0x1038] sm:$0xff]
        %v1823 = vld [vmem:[%s334 + $0x1040] sm:$0xff]
        %v1824 = vld [vmem:[%s334 + $0x1048] sm:$0xff]
        %v1825 = vld [vmem:[%s334 + $0x1050] sm:$0xff]
        %v1826 = vld [vmem:[%s334 + $0x1058] sm:$0xff]
        %v1827 = vld [vmem:[%s334 + $0x1060] sm:$0xff]
        %v1828 = vld [vmem:[%s334 + $0x1068] sm:$0xff]
        %v1829 = vld [vmem:[%s334 + $0x1070] sm:$0xff]
        %v1830 = vld [vmem:[%s334 + $0x1078] sm:$0xff]
        %v1831 = vld [vmem:[%s334 + $0x1080] sm:$0xff]
        %v1832 = vld [vmem:[%s334 + $0x1088] sm:$0xff]
        %v1833 = vld [vmem:[%s334 + $0x1090] sm:$0xff]
        %v1834 = vld [vmem:[%s334 + $0x1098] sm:$0xff]
        %v1835 = vld [vmem:[%s334 + $0x10a0] sm:$0xff]
        %v1836 = vld [vmem:[%s334 + $0x10a8] sm:$0xff]
        %v1837 = vld [vmem:[%s334 + $0x10b0] sm:$0xff]
        %v1838 = vld [vmem:[%s334 + $0x10b8] sm:$0xff]
        %v1839 = vld [vmem:[%s334 + $0x10c0] sm:$0xff]
        %v1840 = vld [vmem:[%s334 + $0x10c8] sm:$0xff]
        %v1841 = vld [vmem:[%s334 + $0x10d0] sm:$0xff]
        %v1842 = vld [vmem:[%s334 + $0x10d8] sm:$0xff]
        %v1843 = vld [vmem:[%s334 + $0x10e0] sm:$0xff]
        %v1844 = vld [vmem:[%s334 + $0x10e8] sm:$0xff]
        %v1845 = vld [vmem:[%s334 + $0x10f0] sm:$0xff]
        %v1846 = vld [vmem:[%s334 + $0x10f8] sm:$0xff]
        %v1847 = vld [vmem:[%s334 + $0x1100] sm:$0xff]
        %v1848 = vld [vmem:[%s334 + $0x1108] sm:$0xff]
        %v1849 = vld [vmem:[%s334 + $0x1110] sm:$0xff]
        %v1850 = vld [vmem:[%s334 + $0x1118] sm:$0xff]
        %v1851 = vld [vmem:[%s334 + $0x1120] sm:$0xff]
        %v1852 = vld [vmem:[%s334 + $0x1128] sm:$0xff]
        %v1853 = vld [vmem:[%s334 + $0x1130] sm:$0xff]
        %v1854 = vld [vmem:[%s334 + $0x1138] sm:$0xff]
        %v1855 = vld [vmem:[%s334 + $0x1140] sm:$0xff]
        %v1856 = vld [vmem:[%s334 + $0x1148] sm:$0xff]
        %v1857 = vld [vmem:[%s334 + $0x1150] sm:$0xff]
        %v1858 = vld [vmem:[%s334 + $0x1158] sm:$0xff]
        %v1859 = vld [vmem:[%s334 + $0x1160] sm:$0xff]
        %v1860 = vld [vmem:[%s334 + $0x1168] sm:$0xff]
        %v1861 = vld [vmem:[%s334 + $0x1170] sm:$0xff]
        %v1862 = vld [vmem:[%s334 + $0x1178] sm:$0xff]
        %v1863 = vld [vmem:[%s334 + $0x1180] sm:$0xff]
        %v1864 = vld [vmem:[%s334 + $0x1188] sm:$0xff]
        %v1865 = vld [vmem:[%s334 + $0x1190] sm:$0xff]
        %v1866 = vld [vmem:[%s334 + $0x1198] sm:$0xff]
        %v1867 = vld [vmem:[%s334 + $0x11a0] sm:$0xff]
        %v1868 = vld [vmem:[%s334 + $0x11a8] sm:$0xff]
        %v1869 = vld [vmem:[%s334 + $0x11b0] sm:$0xff]
        %v1870 = vld [vmem:[%s334 + $0x11b8] sm:$0xff]
        %v1871 = vld [vmem:[%s334 + $0x11c0] sm:$0xff]
        %v1872 = vld [vmem:[%s334 + $0x11c8] sm:$0xff]
        %v1873 = vld [vmem:[%s334 + $0x11d0] sm:$0xff]
        %v1874 = vld [vmem:[%s334 + $0x11d8] sm:$0xff]
        %v1875 = vld [vmem:[%s334 + $0x11e0] sm:$0xff]
        %v1876 = vld [vmem:[%s334 + $0x11e8] sm:$0xff]
        %v1877 = vld [vmem:[%s334 + $0x11f0] sm:$0xff]
        %v1878 = vld [vmem:[%s334 + $0x11f8] sm:$0xff]
        %v1879 = vld [vmem:[%s334 + $0x1200] sm:$0xff]
        %v1880 = vld [vmem:[%s334 + $0x1208] sm:$0xff]
        %v1881 = vld [vmem:[%s334 + $0x1210] sm:$0xff]
        %v1882 = vld [vmem:[%s334 + $0x1218] sm:$0xff]
        %v1883 = vld [vmem:[%s334 + $0x1220] sm:$0xff]
        %v1884 = vld [vmem:[%s334 + $0x1228] sm:$0xff]
        %v1885 = vld [vmem:[%s334 + $0x1230] sm:$0xff]
        %v1886 = vld [vmem:[%s334 + $0x1238] sm:$0xff]
        %v1887 = vld [vmem:[%s334 + $0x1240] sm:$0xff]
        %v1888 = vld [vmem:[%s334 + $0x1248] sm:$0xff]
        %v1889 = vld [vmem:[%s334 + $0x1250] sm:$0xff]
        %v1890 = vld [vmem:[%s334 + $0x1258] sm:$0xff]
        %v1891 = vld [vmem:[%s334 + $0x1260] sm:$0xff]
        %v1892 = vld [vmem:[%s334 + $0x1268] sm:$0xff]
        %v1893 = vld [vmem:[%s334 + $0x1270] sm:$0xff]
        %v1894 = vld [vmem:[%s334 + $0x1278] sm:$0xff]
        %v1895 = vld [vmem:[%s334 + $0x1280] sm:$0xff]
        %v1896 = vld [vmem:[%s334 + $0x1288] sm:$0xff]
        %v1897 = vld [vmem:[%s334 + $0x1290] sm:$0xff]
        %v1898 = vld [vmem:[%s334 + $0x1298] sm:$0xff]
        %v1899 = vld [vmem:[%s334 + $0x12a0] sm:$0xff]
        %v1900 = vld [vmem:[%s334 + $0x12a8] sm:$0xff]
        %v1901 = vld [vmem:[%s334 + $0x12b0] sm:$0xff]
        %v1902 = vld [vmem:[%s334 + $0x12b8] sm:$0xff]
        %v1903 = vld [vmem:[%s334 + $0x12c0] sm:$0xff]
        %v1904 = vld [vmem:[%s334 + $0x12c8] sm:$0xff]
        %v1905 = vld [vmem:[%s334 + $0x12d0] sm:$0xff]
        %v1906 = vld [vmem:[%s334 + $0x12d8] sm:$0xff]
        %v1907 = vld [vmem:[%s334 + $0x12e0] sm:$0xff]
        %v1908 = vld [vmem:[%s334 + $0x12e8] sm:$0xff]
        %v1909 = vld [vmem:[%s334 + $0x12f0] sm:$0xff]
        %v1910 = vld [vmem:[%s334 + $0x12f8] sm:$0xff]
        %v1911 = vld [vmem:[%s334 + $0x1300] sm:$0xff]
        %v1912 = vld [vmem:[%s334 + $0x1308] sm:$0xff]
        %v1913 = vld [vmem:[%s334 + $0x1310] sm:$0xff]
        %v1914 = vld [vmem:[%s334 + $0x1318] sm:$0xff]
        %v1915 = vld [vmem:[%s334 + $0x1320] sm:$0xff]
        %v1916 = vld [vmem:[%s334 + $0x1328] sm:$0xff]
        %v1917 = vld [vmem:[%s334 + $0x1330] sm:$0xff]
        %v1918 = vld [vmem:[%s334 + $0x1338] sm:$0xff]
        %v1919 = vld [vmem:[%s334 + $0x1340] sm:$0xff]
        %v1920 = vld [vmem:[%s334 + $0x1348] sm:$0xff]
        %v1921 = vld [vmem:[%s334 + $0x1350] sm:$0xff]
        %v1922 = vld [vmem:[%s334 + $0x1358] sm:$0xff]
        %v1923 = vld [vmem:[%s334 + $0x1360] sm:$0xff]
        %v1924 = vld [vmem:[%s334 + $0x1368] sm:$0xff]
        %v1925 = vld [vmem:[%s334 + $0x1370] sm:$0xff]
        %v1926 = vld [vmem:[%s334 + $0x1378] sm:$0xff]
        %v1927 = vld [vmem:[%s334 + $0x1380] sm:$0xff]
        %v1928 = vld [vmem:[%s334 + $0x1388] sm:$0xff]
        %v1929 = vld [vmem:[%s334 + $0x1390] sm:$0xff]
        %v1930 = vld [vmem:[%s334 + $0x1398] sm:$0xff]
        %v1931 = vld [vmem:[%s334 + $0x13a0] sm:$0xff]
        %v1932 = vld [vmem:[%s334 + $0x13a8] sm:$0xff]
        %v1933 = vld [vmem:[%s334 + $0x13b0] sm:$0xff]
        %v1934 = vld [vmem:[%s334 + $0x13b8] sm:$0xff]
        %v1935 = vld [vmem:[%s334 + $0x13c0] sm:$0xff]
        %v1936 = vld [vmem:[%s334 + $0x13c8] sm:$0xff]
        %v1937 = vld [vmem:[%s334 + $0x13d0] sm:$0xff]
        %v1938 = vld [vmem:[%s334 + $0x13d8] sm:$0xff]
        %v1939 = vld [vmem:[%s334 + $0x13e0] sm:$0xff]
        %v1940 = vld [vmem:[%s334 + $0x13e8] sm:$0xff]
        %v1941 = vld [vmem:[%s334 + $0x13f0] sm:$0xff]
        %v1942 = vld [vmem:[%s334 + $0x13f8] sm:$0xff]
        %v1943 = vld [vmem:[%s334 + $0x1400] sm:$0xff]
        %v1944 = vld [vmem:[%s334 + $0x1408] sm:$0xff]
        %v1945 = vld [vmem:[%s334 + $0x1410] sm:$0xff]
        %v1946 = vld [vmem:[%s334 + $0x1418] sm:$0xff]
        %v1947 = vld [vmem:[%s334 + $0x1420] sm:$0xff]
        %v1948 = vld [vmem:[%s334 + $0x1428] sm:$0xff]
        %v1949 = vld [vmem:[%s334 + $0x1430] sm:$0xff]
        %v1950 = vld [vmem:[%s334 + $0x1438] sm:$0xff]
        %v1951 = vld [vmem:[%s334 + $0x1440] sm:$0xff]
        %v1952 = vld [vmem:[%s334 + $0x1448] sm:$0xff]
        %v1953 = vld [vmem:[%s334 + $0x1450] sm:$0xff]
        %v1954 = vld [vmem:[%s334 + $0x1458] sm:$0xff]
        %v1955 = vld [vmem:[%s334 + $0x1460] sm:$0xff]
        %v1956 = vld [vmem:[%s334 + $0x1468] sm:$0xff]
        %v1957 = vld [vmem:[%s334 + $0x1470] sm:$0xff]
        %v1958 = vld [vmem:[%s334 + $0x1478] sm:$0xff]
        %v1959 = vld [vmem:[%s334 + $0x1480] sm:$0xff]
        %v1960 = vld [vmem:[%s334 + $0x1488] sm:$0xff]
        %v1961 = vld [vmem:[%s334 + $0x1490] sm:$0xff]
        %v1962 = vld [vmem:[%s334 + $0x1498] sm:$0xff]
        %v1963 = vld [vmem:[%s334 + $0x14a0] sm:$0xff]
        %v1964 = vld [vmem:[%s334 + $0x14a8] sm:$0xff]
        %v1965 = vld [vmem:[%s334 + $0x14b0] sm:$0xff]
        %v1966 = vld [vmem:[%s334 + $0x14b8] sm:$0xff]
        %v1967 = vld [vmem:[%s334 + $0x14c0] sm:$0xff]
        %v1968 = vld [vmem:[%s334 + $0x14c8] sm:$0xff]
        %v1969 = vld [vmem:[%s334 + $0x14d0] sm:$0xff]
        %v1970 = vld [vmem:[%s334 + $0x14d8] sm:$0xff]
        %v1971 = vld [vmem:[%s334 + $0x14e0] sm:$0xff]
        %v1972 = vld [vmem:[%s334 + $0x14e8] sm:$0xff]
        %v1973 = vld [vmem:[%s334 + $0x14f0] sm:$0xff]
        %v1974 = vld [vmem:[%s334 + $0x14f8] sm:$0xff]
        %v1975 = vld [vmem:[%s334 + $0x1500] sm:$0xff]
        %v1976 = vld [vmem:[%s334 + $0x1508] sm:$0xff]
        %v1977 = vld [vmem:[%s334 + $0x1510] sm:$0xff]
        %v1978 = vld [vmem:[%s334 + $0x1518] sm:$0xff]
        %v1979 = vld [vmem:[%s334 + $0x1520] sm:$0xff]
        %v1980 = vld [vmem:[%s334 + $0x1528] sm:$0xff]
        %v1981 = vld [vmem:[%s334 + $0x1530] sm:$0xff]
        %v1982 = vld [vmem:[%s334 + $0x1538] sm:$0xff]
        %v1983 = vld [vmem:[%s334 + $0x1540] sm:$0xff]
        %v1984 = vld [vmem:[%s334 + $0x1548] sm:$0xff]
        %v1985 = vld [vmem:[%s334 + $0x1550] sm:$0xff]
        %v1986 = vld [vmem:[%s334 + $0x1558] sm:$0xff]
        %v1987 = vld [vmem:[%s334 + $0x1560] sm:$0xff]
        %v1988 = vld [vmem:[%s334 + $0x1568] sm:$0xff]
        %v1989 = vld [vmem:[%s334 + $0x1570] sm:$0xff]
        %v1990 = vld [vmem:[%s334 + $0x1578] sm:$0xff]
        %v1991 = vld [vmem:[%s334 + $0x1580] sm:$0xff]
        %v1992 = vld [vmem:[%s334 + $0x1588] sm:$0xff]
        %v1993 = vld [vmem:[%s334 + $0x1590] sm:$0xff]
        %v1994 = vld [vmem:[%s334 + $0x1598] sm:$0xff]
        %v1995 = vld [vmem:[%s334 + $0x15a0] sm:$0xff]
        %v1996 = vld [vmem:[%s334 + $0x15a8] sm:$0xff]
        %v1997 = vld [vmem:[%s334 + $0x15b0] sm:$0xff]
        %v1998 = vld [vmem:[%s334 + $0x15b8] sm:$0xff]
        %v1999 = vld [vmem:[%s334 + $0x15c0] sm:$0xff]
        %v2000 = vld [vmem:[%s334 + $0x15c8] sm:$0xff]
        %v2001 = vld [vmem:[%s334 + $0x15d0] sm:$0xff]
        %v2002 = vld [vmem:[%s334 + $0x15d8] sm:$0xff]
        %v2003 = vld [vmem:[%s334 + $0x15e0] sm:$0xff]
        %v2004 = vld [vmem:[%s334 + $0x15e8] sm:$0xff]
        %v2005 = vld [vmem:[%s334 + $0x15f0] sm:$0xff]
        %v2006 = vld [vmem:[%s334 + $0x15f8] sm:$0xff]
        %v2007 = vld [vmem:[%s334 + $0x1600] sm:$0xff]
        %v2008 = vld [vmem:[%s334 + $0x1608] sm:$0xff]
        %v2009 = vld [vmem:[%s334 + $0x1610] sm:$0xff]
        %v2010 = vld [vmem:[%s334 + $0x1618] sm:$0xff]
        %v2011 = vld [vmem:[%s334 + $0x1620] sm:$0xff]
        %v2012 = vld [vmem:[%s334 + $0x1628] sm:$0xff]
        %v2013 = vld [vmem:[%s334 + $0x1630] sm:$0xff]
        %v2014 = vld [vmem:[%s334 + $0x1638] sm:$0xff]
        %v2015 = vld [vmem:[%s334 + $0x1640] sm:$0xff]
        %v2016 = vld [vmem:[%s334 + $0x1648] sm:$0xff]
        %v2017 = vld [vmem:[%s334 + $0x1650] sm:$0xff]
        %v2018 = vld [vmem:[%s334 + $0x1658] sm:$0xff]
        %v2019 = vld [vmem:[%s334 + $0x1660] sm:$0xff]
        %v2020 = vld [vmem:[%s334 + $0x1668] sm:$0xff]
        %v2021 = vld [vmem:[%s334 + $0x1670] sm:$0xff]
        %v2022 = vld [vmem:[%s334 + $0x1678] sm:$0xff]
        %v2023 = vld [vmem:[%s334 + $0x1680] sm:$0xff]
        %v2024 = vld [vmem:[%s334 + $0x1688] sm:$0xff]
        %v2025 = vld [vmem:[%s334 + $0x1690] sm:$0xff]
        %v2026 = vld [vmem:[%s334 + $0x1698] sm:$0xff]
        %v2027 = vld [vmem:[%s334 + $0x16a0] sm:$0xff]
        %v2028 = vld [vmem:[%s334 + $0x16a8] sm:$0xff]
        %v2029 = vld [vmem:[%s334 + $0x16b0] sm:$0xff]
        %v2030 = vld [vmem:[%s334 + $0x16b8] sm:$0xff]
        %v2031 = vld [vmem:[%s334 + $0x16c0] sm:$0xff]
        %v2032 = vld [vmem:[%s334 + $0x16c8] sm:$0xff]
        %v2033 = vld [vmem:[%s334 + $0x16d0] sm:$0xff]
        %v2034 = vld [vmem:[%s334 + $0x16d8] sm:$0xff]
        %v2035 = vld [vmem:[%s334 + $0x16e0] sm:$0xff]
        %v2036 = vld [vmem:[%s334 + $0x16e8] sm:$0xff]
        %v2037 = vld [vmem:[%s334 + $0x16f0] sm:$0xff]
        %v2038 = vld [vmem:[%s334 + $0x16f8] sm:$0xff]
        %v2039 = vld [vmem:[%s334 + $0x1700] sm:$0xff]
        %v2040 = vld [vmem:[%s334 + $0x1708] sm:$0xff]
        %v2041 = vld [vmem:[%s334 + $0x1710] sm:$0xff]
        %v2042 = vld [vmem:[%s334 + $0x1718] sm:$0xff]
        %v2043 = vld [vmem:[%s334 + $0x1720] sm:$0xff]
        %v2044 = vld [vmem:[%s334 + $0x1728] sm:$0xff]
        %v2045 = vld [vmem:[%s334 + $0x1730] sm:$0xff]
        %v2046 = vld [vmem:[%s334 + $0x1738] sm:$0xff]
        %v2047 = vld [vmem:[%s334 + $0x1740] sm:$0xff]
        %v2048 = vld [vmem:[%s334 + $0x1748] sm:$0xff]
        %v2049 = vld [vmem:[%s334 + $0x1750] sm:$0xff]
        %v2050 = vld [vmem:[%s334 + $0x1758] sm:$0xff]
        %v2051 = vld [vmem:[%s334 + $0x1760] sm:$0xff]
        %v2052 = vld [vmem:[%s334 + $0x1768] sm:$0xff]
        %v2053 = vld [vmem:[%s334 + $0x1770] sm:$0xff]
        %v2054 = vld [vmem:[%s334 + $0x1778] sm:$0xff]
        %v2055 = vld [vmem:[%s334 + $0x1780] sm:$0xff]
        %v2056 = vld [vmem:[%s334 + $0x1788] sm:$0xff]
        %v2057 = vld [vmem:[%s334 + $0x1790] sm:$0xff]
        %v2058 = vld [vmem:[%s334 + $0x1798] sm:$0xff]
        %v2059 = vld [vmem:[%s334 + $0x17a0] sm:$0xff]
        %v2060 = vld [vmem:[%s334 + $0x17a8] sm:$0xff]
        %v2061 = vld [vmem:[%s334 + $0x17b0] sm:$0xff]
        %v2062 = vld [vmem:[%s334 + $0x17b8] sm:$0xff]
        %v2063 = vld [vmem:[%s334 + $0x17c0] sm:$0xff]
        %v2064 = vld [vmem:[%s334 + $0x17c8] sm:$0xff]
        %v2065 = vld [vmem:[%s334 + $0x17d0] sm:$0xff]
        %v2066 = vld [vmem:[%s334 + $0x17d8] sm:$0xff]
        %v2067 = vld [vmem:[%s334 + $0x17e0] sm:$0xff]
        %v2068 = vld [vmem:[%s334 + $0x17e8] sm:$0xff]
        %v2069 = vld [vmem:[%s334 + $0x17f0] sm:$0xff]
        %v2070 = vld [vmem:[%s334 + $0x17f8] sm:$0xff]
        %v2071 = vld [vmem:[%s334 + $0x1800] sm:$0xff]
        %v2072 = vld [vmem:[%s334 + $0x1808] sm:$0xff]
        %v2073 = vld [vmem:[%s334 + $0x1810] sm:$0xff]
        %v2074 = vld [vmem:[%s334 + $0x1818] sm:$0xff]
        %v2075 = vld [vmem:[%s334 + $0x1820] sm:$0xff]
        %v2076 = vld [vmem:[%s334 + $0x1828] sm:$0xff]
        %v2077 = vld [vmem:[%s334 + $0x1830] sm:$0xff]
        %v2078 = vld [vmem:[%s334 + $0x1838] sm:$0xff]
        %v2079 = vld [vmem:[%s334 + $0x1840] sm:$0xff]
        %v2080 = vld [vmem:[%s334 + $0x1848] sm:$0xff]
        %v2081 = vld [vmem:[%s334 + $0x1850] sm:$0xff]
        %v2082 = vld [vmem:[%s334 + $0x1858] sm:$0xff]
        %v2083 = vld [vmem:[%s334 + $0x1860] sm:$0xff]
        %v2084 = vld [vmem:[%s334 + $0x1868] sm:$0xff]
        %v2085 = vld [vmem:[%s334 + $0x1870] sm:$0xff]
        %v2086 = vld [vmem:[%s334 + $0x1878] sm:$0xff]
        %v2087 = vld [vmem:[%s334 + $0x1880] sm:$0xff]
        %v2088 = vld [vmem:[%s334 + $0x1888] sm:$0xff]
        %v2089 = vld [vmem:[%s334 + $0x1890] sm:$0xff]
        %v2090 = vld [vmem:[%s334 + $0x1898] sm:$0xff]
        %v2091 = vld [vmem:[%s334 + $0x18a0] sm:$0xff]
        %v2092 = vld [vmem:[%s334 + $0x18a8] sm:$0xff]
        %v2093 = vld [vmem:[%s334 + $0x18b0] sm:$0xff]
        %v2094 = vld [vmem:[%s334 + $0x18b8] sm:$0xff]
        %v2095 = vld [vmem:[%s334 + $0x18c0] sm:$0xff]
        %v2096 = vld [vmem:[%s334 + $0x18c8] sm:$0xff]
        %v2097 = vld [vmem:[%s334 + $0x18d0] sm:$0xff]
        %v2098 = vld [vmem:[%s334 + $0x18d8] sm:$0xff]
        %v2099 = vld [vmem:[%s334 + $0x18e0] sm:$0xff]
        %v2100 = vld [vmem:[%s334 + $0x18e8] sm:$0xff]
        %v2101 = vld [vmem:[%s334 + $0x18f0] sm:$0xff]
        %v2102 = vld [vmem:[%s334 + $0x18f8] sm:$0xff]
        %v2103 = vld [vmem:[%s334 + $0x1900] sm:$0xff]
        %v2104 = vld [vmem:[%s334 + $0x1908] sm:$0xff]
        %v2105 = vld [vmem:[%s334 + $0x1910] sm:$0xff]
        %v2106 = vld [vmem:[%s334 + $0x1918] sm:$0xff]
        %v2107 = vld [vmem:[%s334 + $0x1920] sm:$0xff]
        %v2108 = vld [vmem:[%s334 + $0x1928] sm:$0xff]
        %v2109 = vld [vmem:[%s334 + $0x1930] sm:$0xff]
        %v2110 = vld [vmem:[%s334 + $0x1938] sm:$0xff]
        %v2111 = vld [vmem:[%s334 + $0x1940] sm:$0xff]
        %v2112 = vld [vmem:[%s334 + $0x1948] sm:$0xff]
        %v2113 = vld [vmem:[%s334 + $0x1950] sm:$0xff]
        %v2114 = vld [vmem:[%s334 + $0x1958] sm:$0xff]
        %v2115 = vld [vmem:[%s334 + $0x1960] sm:$0xff]
        %v2116 = vld [vmem:[%s334 + $0x1968] sm:$0xff]
        %v2117 = vld [vmem:[%s334 + $0x1970] sm:$0xff]
        %v2118 = vld [vmem:[%s334 + $0x1978] sm:$0xff]
        %v2119 = vld [vmem:[%s334 + $0x1980] sm:$0xff]
        %v2120 = vld [vmem:[%s334 + $0x1988] sm:$0xff]
        %v2121 = vld [vmem:[%s334 + $0x1990] sm:$0xff]
        %v2122 = vld [vmem:[%s334 + $0x1998] sm:$0xff]
        %v2123 = vld [vmem:[%s334 + $0x19a0] sm:$0xff]
        %v2124 = vld [vmem:[%s334 + $0x19a8] sm:$0xff]
        %v2125 = vld [vmem:[%s334 + $0x19b0] sm:$0xff]
        %v2126 = vld [vmem:[%s334 + $0x19b8] sm:$0xff]
        %v2127 = vld [vmem:[%s334 + $0x19c0] sm:$0xff]
        %v2128 = vld [vmem:[%s334 + $0x19c8] sm:$0xff]
        %v2129 = vld [vmem:[%s334 + $0x19d0] sm:$0xff]
        %v2130 = vld [vmem:[%s334 + $0x19d8] sm:$0xff]
        %v2131 = vld [vmem:[%s334 + $0x19e0] sm:$0xff]
        %v2132 = vld [vmem:[%s334 + $0x19e8] sm:$0xff]
        %v2133 = vld [vmem:[%s334 + $0x19f0] sm:$0xff]
        %v2134 = vld [vmem:[%s334 + $0x19f8] sm:$0xff]
        %v2135 = vld [vmem:[%s334 + $0x1a00] sm:$0xff]
        %v2136 = vld [vmem:[%s334 + $0x1a08] sm:$0xff]
        %v2137 = vld [vmem:[%s334 + $0x1a10] sm:$0xff]
        %v2138 = vld [vmem:[%s334 + $0x1a18] sm:$0xff]
        %v2139 = vld [vmem:[%s334 + $0x1a20] sm:$0xff]
        %v2140 = vld [vmem:[%s334 + $0x1a28] sm:$0xff]
        %v2141 = vld [vmem:[%s334 + $0x1a30] sm:$0xff]
        %v2142 = vld [vmem:[%s334 + $0x1a38] sm:$0xff]
        %v2143 = vld [vmem:[%s334 + $0x1a40] sm:$0xff]
        %v2144 = vld [vmem:[%s334 + $0x1a48] sm:$0xff]
        %v2145 = vld [vmem:[%s334 + $0x1a50] sm:$0xff]
        %v2146 = vld [vmem:[%s334 + $0x1a58] sm:$0xff]
        %v2147 = vld [vmem:[%s334 + $0x1a60] sm:$0xff]
        %v2148 = vld [vmem:[%s334 + $0x1a68] sm:$0xff]
        %v2149 = vld [vmem:[%s334 + $0x1a70] sm:$0xff]
        %v2150 = vld [vmem:[%s334 + $0x1a78] sm:$0xff]
        %v2151 = vld [vmem:[%s334 + $0x1a80] sm:$0xff]
        %v2152 = vld [vmem:[%s334 + $0x1a88] sm:$0xff]
        %v2153 = vld [vmem:[%s334 + $0x1a90] sm:$0xff]
        %v2154 = vld [vmem:[%s334 + $0x1a98] sm:$0xff]
        %v2155 = vld [vmem:[%s334 + $0x1aa0] sm:$0xff]
        %v2156 = vld [vmem:[%s334 + $0x1aa8] sm:$0xff]
        %v2157 = vld [vmem:[%s334 + $0x1ab0] sm:$0xff]
        %v2158 = vld [vmem:[%s334 + $0x1ab8] sm:$0xff]
        %v2159 = vld [vmem:[%s334 + $0x1ac0] sm:$0xff]
        %v2160 = vld [vmem:[%s334 + $0x1ac8] sm:$0xff]
        %v2161 = vld [vmem:[%s334 + $0x1ad0] sm:$0xff]
        %v2162 = vld [vmem:[%s334 + $0x1ad8] sm:$0xff]
        %v2163 = vld [vmem:[%s334 + $0x1ae0] sm:$0xff]
        %v2164 = vld [vmem:[%s334 + $0x1ae8] sm:$0xff]
        %v2165 = vld [vmem:[%s334 + $0x1af0] sm:$0xff]
        %v2166 = vld [vmem:[%s334 + $0x1af8] sm:$0xff]
        %v2167 = vld [vmem:[%s334 + $0x1b00] sm:$0xff]
        %v2168 = vld [vmem:[%s334 + $0x1b08] sm:$0xff]
        %v2169 = vld [vmem:[%s334 + $0x1b10] sm:$0xff]
        %v2170 = vld [vmem:[%s334 + $0x1b18] sm:$0xff]
        %v2171 = vld [vmem:[%s334 + $0x1b20] sm:$0xff]
        %v2172 = vld [vmem:[%s334 + $0x1b28] sm:$0xff]
        %v2173 = vld [vmem:[%s334 + $0x1b30] sm:$0xff]
        %v2174 = vld [vmem:[%s334 + $0x1b38] sm:$0xff]
        %v2175 = vld [vmem:[%s334 + $0x1b40] sm:$0xff]
        %v2176 = vld [vmem:[%s334 + $0x1b48] sm:$0xff]
        %v2177 = vld [vmem:[%s334 + $0x1b50] sm:$0xff]
        %v2178 = vld [vmem:[%s334 + $0x1b58] sm:$0xff]
        %v2179 = vld [vmem:[%s334 + $0x1b60] sm:$0xff]
        %v2180 = vld [vmem:[%s334 + $0x1b68] sm:$0xff]
        %v2181 = vld [vmem:[%s334 + $0x1b70] sm:$0xff]
        %v2182 = vld [vmem:[%s334 + $0x1b78] sm:$0xff]
        %v2183 = vld [vmem:[%s334 + $0x1b80] sm:$0xff]
        %v2184 = vld [vmem:[%s334 + $0x1b88] sm:$0xff]
        %v2185 = vld [vmem:[%s334 + $0x1b90] sm:$0xff]
        %v2186 = vld [vmem:[%s334 + $0x1b98] sm:$0xff]
        %v2187 = vld [vmem:[%s334 + $0x1ba0] sm:$0xff]
        %v2188 = vld [vmem:[%s334 + $0x1ba8] sm:$0xff]
        %v2189 = vld [vmem:[%s334 + $0x1bb0] sm:$0xff]
        %v2190 = vld [vmem:[%s334 + $0x1bb8] sm:$0xff]
        %v2191 = vld [vmem:[%s334 + $0x1bc0] sm:$0xff]
        %v2192 = vld [vmem:[%s334 + $0x1bc8] sm:$0xff]
        %v2193 = vld [vmem:[%s334 + $0x1bd0] sm:$0xff]
        %v2194 = vld [vmem:[%s334 + $0x1bd8] sm:$0xff]
        %v2195 = vld [vmem:[%s334 + $0x1be0] sm:$0xff]
        %v2196 = vld [vmem:[%s334 + $0x1be8] sm:$0xff]
        %v2197 = vld [vmem:[%s334 + $0x1bf0] sm:$0xff]
        %v2198 = vld [vmem:[%s334 + $0x1bf8] sm:$0xff]
        %v2199 = vld [vmem:[%s334 + $0x1c00] sm:$0xff]
        %v2200 = vld [vmem:[%s334 + $0x1c08] sm:$0xff]
        %v2201 = vld [vmem:[%s334 + $0x1c10] sm:$0xff]
        %v2202 = vld [vmem:[%s334 + $0x1c18] sm:$0xff]
        %v2203 = vld [vmem:[%s334 + $0x1c20] sm:$0xff]
        %v2204 = vld [vmem:[%s334 + $0x1c28] sm:$0xff]
        %v2205 = vld [vmem:[%s334 + $0x1c30] sm:$0xff]
        %v2206 = vld [vmem:[%s334 + $0x1c38] sm:$0xff]
        %v2207 = vld [vmem:[%s334 + $0x1c40] sm:$0xff]
        %v2208 = vld [vmem:[%s334 + $0x1c48] sm:$0xff]
        %v2209 = vld [vmem:[%s334 + $0x1c50] sm:$0xff]
        %v2210 = vld [vmem:[%s334 + $0x1c58] sm:$0xff]
        %v2211 = vld [vmem:[%s334 + $0x1c60] sm:$0xff]
        %v2212 = vld [vmem:[%s334 + $0x1c68] sm:$0xff]
        %v2213 = vld [vmem:[%s334 + $0x1c70] sm:$0xff]
        %v2214 = vld [vmem:[%s334 + $0x1c78] sm:$0xff]
        %v2215 = vld [vmem:[%s334 + $0x1c80] sm:$0xff]
        %v2216 = vld [vmem:[%s334 + $0x1c88] sm:$0xff]
        %v2217 = vld [vmem:[%s334 + $0x1c90] sm:$0xff]
        %v2218 = vld [vmem:[%s334 + $0x1c98] sm:$0xff]
        %v2219 = vld [vmem:[%s334 + $0x1ca0] sm:$0xff]
        %v2220 = vld [vmem:[%s334 + $0x1ca8] sm:$0xff]
        %v2221 = vld [vmem:[%s334 + $0x1cb0] sm:$0xff]
        %v2222 = vld [vmem:[%s334 + $0x1cb8] sm:$0xff]
        %v2223 = vld [vmem:[%s334 + $0x1cc0] sm:$0xff]
        %v2224 = vld [vmem:[%s334 + $0x1cc8] sm:$0xff]
        %v2225 = vld [vmem:[%s334 + $0x1cd0] sm:$0xff]
        %v2226 = vld [vmem:[%s334 + $0x1cd8] sm:$0xff]
        %v2227 = vld [vmem:[%s334 + $0x1ce0] sm:$0xff]
        %v2228 = vld [vmem:[%s334 + $0x1ce8] sm:$0xff]
        %v2229 = vld [vmem:[%s334 + $0x1cf0] sm:$0xff]
        %v2230 = vld [vmem:[%s334 + $0x1cf8] sm:$0xff]
        %v2231 = vld [vmem:[%s334 + $0x1d00] sm:$0xff]
        %v2232 = vld [vmem:[%s334 + $0x1d08] sm:$0xff]
        %v2233 = vld [vmem:[%s334 + $0x1d10] sm:$0xff]
        %v2234 = vld [vmem:[%s334 + $0x1d18] sm:$0xff]
        %v2235 = vld [vmem:[%s334 + $0x1d20] sm:$0xff]
        %v2236 = vld [vmem:[%s334 + $0x1d28] sm:$0xff]
        %v2237 = vld [vmem:[%s334 + $0x1d30] sm:$0xff]
        %v2238 = vld [vmem:[%s334 + $0x1d38] sm:$0xff]
        %v2239 = vld [vmem:[%s334 + $0x1d40] sm:$0xff]
        %v2240 = vld [vmem:[%s334 + $0x1d48] sm:$0xff]
        %v2241 = vld [vmem:[%s334 + $0x1d50] sm:$0xff]
        %v2242 = vld [vmem:[%s334 + $0x1d58] sm:$0xff]
        %v2243 = vld [vmem:[%s334 + $0x1d60] sm:$0xff]
        %v2244 = vld [vmem:[%s334 + $0x1d68] sm:$0xff]
        %v2245 = vld [vmem:[%s334 + $0x1d70] sm:$0xff]
        %v2246 = vld [vmem:[%s334 + $0x1d78] sm:$0xff]
        %v2247 = vld [vmem:[%s334 + $0x1d80] sm:$0xff]
        %v2248 = vld [vmem:[%s334 + $0x1d88] sm:$0xff]
        %v2249 = vld [vmem:[%s334 + $0x1d90] sm:$0xff]
        %v2250 = vld [vmem:[%s334 + $0x1d98] sm:$0xff]
        %v2251 = vld [vmem:[%s334 + $0x1da0] sm:$0xff]
        %v2252 = vld [vmem:[%s334 + $0x1da8] sm:$0xff]
        %v2253 = vld [vmem:[%s334 + $0x1db0] sm:$0xff]
        %v2254 = vld [vmem:[%s334 + $0x1db8] sm:$0xff]
        %v2255 = vld [vmem:[%s334 + $0x1dc0] sm:$0xff]
        %v2256 = vld [vmem:[%s334 + $0x1dc8] sm:$0xff]
        %v2257 = vld [vmem:[%s334 + $0x1dd0] sm:$0xff]
        %v2258 = vld [vmem:[%s334 + $0x1dd8] sm:$0xff]
        %v2259 = vld [vmem:[%s334 + $0x1de0] sm:$0xff]
        %v2260 = vld [vmem:[%s334 + $0x1de8] sm:$0xff]
        %v2261 = vld [vmem:[%s334 + $0x1df0] sm:$0xff]
        %v2262 = vld [vmem:[%s334 + $0x1df8] sm:$0xff]
        %v2263 = vld [vmem:[%s334 + $0x1e00] sm:$0xff]
        %v2264 = vld [vmem:[%s334 + $0x1e08] sm:$0xff]
        %v2265 = vld [vmem:[%s334 + $0x1e10] sm:$0xff]
        %v2266 = vld [vmem:[%s334 + $0x1e18] sm:$0xff]
        %v2267 = vld [vmem:[%s334 + $0x1e20] sm:$0xff]
        %v2268 = vld [vmem:[%s334 + $0x1e28] sm:$0xff]
        %v2269 = vld [vmem:[%s334 + $0x1e30] sm:$0xff]
        %v2270 = vld [vmem:[%s334 + $0x1e38] sm:$0xff]
        %v2271 = vld [vmem:[%s334 + $0x1e40] sm:$0xff]
        %v2272 = vld [vmem:[%s334 + $0x1e48] sm:$0xff]
        %v2273 = vld [vmem:[%s334 + $0x1e50] sm:$0xff]
        %v2274 = vld [vmem:[%s334 + $0x1e58] sm:$0xff]
        %v2275 = vld [vmem:[%s334 + $0x1e60] sm:$0xff]
        %v2276 = vld [vmem:[%s334 + $0x1e68] sm:$0xff]
        %v2277 = vld [vmem:[%s334 + $0x1e70] sm:$0xff]
        %v2278 = vld [vmem:[%s334 + $0x1e78] sm:$0xff]
        %v2279 = vld [vmem:[%s334 + $0x1e80] sm:$0xff]
        %v2280 = vld [vmem:[%s334 + $0x1e88] sm:$0xff]
        %v2281 = vld [vmem:[%s334 + $0x1e90] sm:$0xff]
        %v2282 = vld [vmem:[%s334 + $0x1e98] sm:$0xff]
        %v2283 = vld [vmem:[%s334 + $0x1ea0] sm:$0xff]
        %v2284 = vld [vmem:[%s334 + $0x1ea8] sm:$0xff]
        %v2285 = vld [vmem:[%s334 + $0x1eb0] sm:$0xff]
        %v2286 = vld [vmem:[%s334 + $0x1eb8] sm:$0xff]
        %v2287 = vld [vmem:[%s334 + $0x1ec0] sm:$0xff]
        %v2288 = vld [vmem:[%s334 + $0x1ec8] sm:$0xff]
        %v2289 = vld [vmem:[%s334 + $0x1ed0] sm:$0xff]
        %v2290 = vld [vmem:[%s334 + $0x1ed8] sm:$0xff]
        %v2291 = vld [vmem:[%s334 + $0x1ee0] sm:$0xff]
        %v2292 = vld [vmem:[%s334 + $0x1ee8] sm:$0xff]
        %v2293 = vld [vmem:[%s334 + $0x1ef0] sm:$0xff]
        %v2294 = vld [vmem:[%s334 + $0x1ef8] sm:$0xff]
        %v2295 = vld [vmem:[%s334 + $0x1f00] sm:$0xff]
        %v2296 = vld [vmem:[%s334 + $0x1f08] sm:$0xff]
        %v2297 = vld [vmem:[%s334 + $0x1f10] sm:$0xff]
        %v2298 = vld [vmem:[%s334 + $0x1f18] sm:$0xff]
        %v2299 = vld [vmem:[%s334 + $0x1f20] sm:$0xff]
        %v2300 = vld [vmem:[%s334 + $0x1f28] sm:$0xff]
        %v2301 = vld [vmem:[%s334 + $0x1f30] sm:$0xff]
        %v2302 = vld [vmem:[%s334 + $0x1f38] sm:$0xff]
        %v2303 = vld [vmem:[%s334 + $0x1f40] sm:$0xff]
        %v2304 = vld [vmem:[%s334 + $0x1f48] sm:$0xff]
        %v2305 = vld [vmem:[%s334 + $0x1f50] sm:$0xff]
        %v2306 = vld [vmem:[%s334 + $0x1f58] sm:$0xff]
        %v2307 = vld [vmem:[%s334 + $0x1f60] sm:$0xff]
        %v2308 = vld [vmem:[%s334 + $0x1f68] sm:$0xff]
        %v2309 = vld [vmem:[%s334 + $0x1f70] sm:$0xff]
        %v2310 = vld [vmem:[%s334 + $0x1f78] sm:$0xff]
        %v2311 = vld [vmem:[%s334 + $0x1f80] sm:$0xff]
        %v2312 = vld [vmem:[%s334 + $0x1f88] sm:$0xff]
        %v2313 = vld [vmem:[%s334 + $0x1f90] sm:$0xff]
        %v2314 = vld [vmem:[%s334 + $0x1f98] sm:$0xff]
        %v2315 = vld [vmem:[%s334 + $0x1fa0] sm:$0xff]
        %v2316 = vld [vmem:[%s334 + $0x1fa8] sm:$0xff]
        %v2317 = vld [vmem:[%s334 + $0x1fb0] sm:$0xff]
        %v2318 = vld [vmem:[%s334 + $0x1fb8] sm:$0xff]
        %v2319 = vld [vmem:[%s334 + $0x1fc0] sm:$0xff]
        %v2320 = vld [vmem:[%s334 + $0x1fc8] sm:$0xff]
        %v2321 = vld [vmem:[%s334 + $0x1fd0] sm:$0xff]
        %v2322 = vld [vmem:[%s334 + $0x1fd8] sm:$0xff]
        %v2323 = vld [vmem:[%s334 + $0x1fe0] sm:$0xff]
        %v2324 = vld [vmem:[%s334 + $0x1fe8] sm:$0xff]
        %v2325 = vld [vmem:[%s334 + $0x1ff0] sm:$0xff]
        %v2326 = vld [vmem:[%s334 + $0x1ff8] sm:$0xff]
        %v2327 = vld [vmem:[%s334 + $0x2000] sm:$0xff]
        %v2328 = vld [vmem:[%s334 + $0x2008] sm:$0xff]
        %v2329 = vld [vmem:[%s334 + $0x2010] sm:$0xff]
        %v2330 = vld [vmem:[%s334 + $0x2018] sm:$0xff]
        %v2331 = vld [vmem:[%s334 + $0x2020] sm:$0xff]
        %v2332 = vld [vmem:[%s334 + $0x2028] sm:$0xff]
        %v2333 = vld [vmem:[%s334 + $0x2030] sm:$0xff]
        %v2334 = vld [vmem:[%s334 + $0x2038] sm:$0xff]
        %v2335 = vld [vmem:[%s334 + $0x2040] sm:$0xff]
        %v2336 = vld [vmem:[%s334 + $0x2048] sm:$0xff]
        %v2337 = vld [vmem:[%s334 + $0x2050] sm:$0xff]
        %v2338 = vld [vmem:[%s334 + $0x2058] sm:$0xff]
        %v2339 = vld [vmem:[%s334 + $0x2060] sm:$0xff]
        %v2340 = vld [vmem:[%s334 + $0x2068] sm:$0xff]
        %v2341 = vld [vmem:[%s334 + $0x2070] sm:$0xff]
        %v2342 = vld [vmem:[%s334 + $0x2078] sm:$0xff]
        %v2343 = vld [vmem:[%s334 + $0x2080] sm:$0xff]
        %v2344 = vld [vmem:[%s334 + $0x2088] sm:$0xff]
        %v2345 = vld [vmem:[%s334 + $0x2090] sm:$0xff]
        %v2346 = vld [vmem:[%s334 + $0x2098] sm:$0xff]
        %v2347 = vld [vmem:[%s334 + $0x20a0] sm:$0xff]
        %v2348 = vld [vmem:[%s334 + $0x20a8] sm:$0xff]
        %v2349 = vld [vmem:[%s334 + $0x20b0] sm:$0xff]
        %v2350 = vld [vmem:[%s334 + $0x20b8] sm:$0xff]
        %v2351 = vld [vmem:[%s334 + $0x20c0] sm:$0xff]
        %v2352 = vld [vmem:[%s334 + $0x20c8] sm:$0xff]
        %v2353 = vld [vmem:[%s334 + $0x20d0] sm:$0xff]
        %v2354 = vld [vmem:[%s334 + $0x20d8] sm:$0xff]
        %v2355 = vld [vmem:[%s334 + $0x20e0] sm:$0xff]
        %v2356 = vld [vmem:[%s334 + $0x20e8] sm:$0xff]
        %v2357 = vld [vmem:[%s334 + $0x20f0] sm:$0xff]
        %v2358 = vld [vmem:[%s334 + $0x20f8] sm:$0xff]
        %v2359 = vld [vmem:[%s334 + $0x2100] sm:$0xff]
        %v2360 = vld [vmem:[%s334 + $0x2108] sm:$0xff]
        %v2361 = vld [vmem:[%s334 + $0x2110] sm:$0xff]
        %v2362 = vld [vmem:[%s334 + $0x2118] sm:$0xff]
        %v2363 = vld [vmem:[%s334 + $0x2120] sm:$0xff]
        %v2364 = vld [vmem:[%s334 + $0x2128] sm:$0xff]
        %v2365 = vld [vmem:[%s334 + $0x2130] sm:$0xff]
        %v2366 = vld [vmem:[%s334 + $0x2138] sm:$0xff]
        %v2367 = vld [vmem:[%s334 + $0x2140] sm:$0xff]
        %v2368 = vld [vmem:[%s334 + $0x2148] sm:$0xff]
        %v2369 = vld [vmem:[%s334 + $0x2150] sm:$0xff]
        %v2370 = vld [vmem:[%s334 + $0x2158] sm:$0xff]
        %v2371 = vld [vmem:[%s334 + $0x2160] sm:$0xff]
        %v2372 = vld [vmem:[%s334 + $0x2168] sm:$0xff]
        %v2373 = vld [vmem:[%s334 + $0x2170] sm:$0xff]
        %v2374 = vld [vmem:[%s334 + $0x2178] sm:$0xff]
        %v2375 = vld [vmem:[%s334 + $0x2180] sm:$0xff]
        %v2376 = vld [vmem:[%s334 + $0x2188] sm:$0xff]
        %v2377 = vld [vmem:[%s334 + $0x2190] sm:$0xff]
        %v2378 = vld [vmem:[%s334 + $0x2198] sm:$0xff]
        %v2379 = vld [vmem:[%s334 + $0x21a0] sm:$0xff]
        %v2380 = vld [vmem:[%s334 + $0x21a8] sm:$0xff]
        %v2381 = vld [vmem:[%s334 + $0x21b0] sm:$0xff]
        %v2382 = vld [vmem:[%s334 + $0x21b8] sm:$0xff]
        %v2383 = vld [vmem:[%s334 + $0x21c0] sm:$0xff]
        %v2384 = vld [vmem:[%s334 + $0x21c8] sm:$0xff]
        %v2385 = vld [vmem:[%s334 + $0x21d0] sm:$0xff]
        %v2386 = vld [vmem:[%s334 + $0x21d8] sm:$0xff]
        %v2387 = vld [vmem:[%s334 + $0x21e0] sm:$0xff]
        %v2388 = vld [vmem:[%s334 + $0x21e8] sm:$0xff]
        %v2389 = vld [vmem:[%s334 + $0x21f0] sm:$0xff]
        %v2390 = vld [vmem:[%s334 + $0x21f8] sm:$0xff]
        %v2391 = vld [vmem:[%s334 + $0x2200] sm:$0xff]
        %v2392 = vld [vmem:[%s334 + $0x2208] sm:$0xff]
        %v2393 = vld [vmem:[%s334 + $0x2210] sm:$0xff]
        %v2394 = vld [vmem:[%s334 + $0x2218] sm:$0xff]
        %v2395 = vld [vmem:[%s334 + $0x2220] sm:$0xff]
        %v2396 = vld [vmem:[%s334 + $0x2228] sm:$0xff]
        %v2397 = vld [vmem:[%s334 + $0x2230] sm:$0xff]
        %v2398 = vld [vmem:[%s334 + $0x2238] sm:$0xff]
        %v2399 = vld [vmem:[%s334 + $0x2240] sm:$0xff]
        %v2400 = vld [vmem:[%s334 + $0x2248] sm:$0xff]
        %v2401 = vld [vmem:[%s334 + $0x2250] sm:$0xff]
        %v2402 = vld [vmem:[%s334 + $0x2258] sm:$0xff]
        %v2403 = vld [vmem:[%s334 + $0x2260] sm:$0xff]
        %v2404 = vld [vmem:[%s334 + $0x2268] sm:$0xff]
        %v2405 = vld [vmem:[%s334 + $0x2270] sm:$0xff]
        %v2406 = vld [vmem:[%s334 + $0x2278] sm:$0xff]
        %v2407 = vld [vmem:[%s334 + $0x2280] sm:$0xff]
        %v2408 = vld [vmem:[%s334 + $0x2288] sm:$0xff]
        %v2409 = vld [vmem:[%s334 + $0x2290] sm:$0xff]
        %v2410 = vld [vmem:[%s334 + $0x2298] sm:$0xff]
        %v2411 = vld [vmem:[%s334 + $0x22a0] sm:$0xff]
        %v2412 = vld [vmem:[%s334 + $0x22a8] sm:$0xff]
        %v2413 = vld [vmem:[%s334 + $0x22b0] sm:$0xff]
        %v2414 = vld [vmem:[%s334 + $0x22b8] sm:$0xff]
        %v2415 = vld [vmem:[%s334 + $0x22c0] sm:$0xff]
        %v2416 = vld [vmem:[%s334 + $0x22c8] sm:$0xff]
        %v2417 = vld [vmem:[%s334 + $0x22d0] sm:$0xff]
        %v2418 = vld [vmem:[%s334 + $0x22d8] sm:$0xff]
        %v2419 = vld [vmem:[%s334 + $0x22e0] sm:$0xff]
        %v2420 = vld [vmem:[%s334 + $0x22e8] sm:$0xff]
        %v2421 = vld [vmem:[%s334 + $0x22f0] sm:$0xff]
        %v2422 = vld [vmem:[%s334 + $0x22f8] sm:$0xff]
        %v2423 = vld [vmem:[%s334 + $0x2300] sm:$0xff]
        %v2424 = vld [vmem:[%s334 + $0x2308] sm:$0xff]
        %v2425 = vld [vmem:[%s334 + $0x2310] sm:$0xff]
        %v2426 = vld [vmem:[%s334 + $0x2318] sm:$0xff]
        %v2427 = vld [vmem:[%s334 + $0x2320] sm:$0xff]
        %v2428 = vld [vmem:[%s334 + $0x2328] sm:$0xff]
        %v2429 = vld [vmem:[%s334 + $0x2330] sm:$0xff]
        %v2430 = vld [vmem:[%s334 + $0x2338] sm:$0xff]
        %v2431 = vld [vmem:[%s334 + $0x2340] sm:$0xff]
        %v2432 = vld [vmem:[%s334 + $0x2348] sm:$0xff]
        %v2433 = vld [vmem:[%s334 + $0x2350] sm:$0xff]
        %v2434 = vld [vmem:[%s334 + $0x2358] sm:$0xff]
        %v2435 = vld [vmem:[%s334 + $0x2360] sm:$0xff]
        %v2436 = vld [vmem:[%s334 + $0x2368] sm:$0xff]
        %v2437 = vld [vmem:[%s334 + $0x2370] sm:$0xff]
        %v2438 = vld [vmem:[%s334 + $0x2378] sm:$0xff]
        %v2439 = vld [vmem:[%s334 + $0x2380] sm:$0xff]
        %v2440 = vld [vmem:[%s334 + $0x2388] sm:$0xff]
        %v2441 = vld [vmem:[%s334 + $0x2390] sm:$0xff]
        %v2442 = vld [vmem:[%s334 + $0x2398] sm:$0xff]
        %v2443 = vld [vmem:[%s334 + $0x23a0] sm:$0xff]
        %v2444 = vld [vmem:[%s334 + $0x23a8] sm:$0xff]
        %v2445 = vld [vmem:[%s334 + $0x23b0] sm:$0xff]
        %v2446 = vld [vmem:[%s334 + $0x23b8] sm:$0xff]
        %v2447 = vld [vmem:[%s334 + $0x23c0] sm:$0xff]
        %v2448 = vld [vmem:[%s334 + $0x23c8] sm:$0xff]
        %v2449 = vld [vmem:[%s334 + $0x23d0] sm:$0xff]
        %v2450 = vld [vmem:[%s334 + $0x23d8] sm:$0xff]
        %v2451 = vld [vmem:[%s334 + $0x23e0] sm:$0xff]
        %v2452 = vld [vmem:[%s334 + $0x23e8] sm:$0xff]
        %v2453 = vld [vmem:[%s334 + $0x23f0] sm:$0xff]
        %v2454 = vld [vmem:[%s334 + $0x23f8] sm:$0xff]
        %v2455 = vld [vmem:[%s334 + $0x2400] sm:$0xff]
        %v2456 = vld [vmem:[%s334 + $0x2408] sm:$0xff]
        %v2457 = vld [vmem:[%s334 + $0x2410] sm:$0xff]
        %v2458 = vld [vmem:[%s334 + $0x2418] sm:$0xff]
        %v2459 = vld [vmem:[%s334 + $0x2420] sm:$0xff]
        %v2460 = vld [vmem:[%s334 + $0x2428] sm:$0xff]
        %v2461 = vld [vmem:[%s334 + $0x2430] sm:$0xff]
        %v2462 = vld [vmem:[%s334 + $0x2438] sm:$0xff]
        %v2463 = vld [vmem:[%s334 + $0x2440] sm:$0xff]
        %v2464 = vld [vmem:[%s334 + $0x2448] sm:$0xff]
        %v2465 = vld [vmem:[%s334 + $0x2450] sm:$0xff]
        %v2466 = vld [vmem:[%s334 + $0x2458] sm:$0xff]
        %v2467 = vld [vmem:[%s334 + $0x2460] sm:$0xff]
        %v2468 = vld [vmem:[%s334 + $0x2468] sm:$0xff]
        %v2469 = vld [vmem:[%s334 + $0x2470] sm:$0xff]
        %v2470 = vld [vmem:[%s334 + $0x2478] sm:$0xff]
        %v2471 = vld [vmem:[%s334 + $0x2480] sm:$0xff]
        %v2472 = vld [vmem:[%s334 + $0x2488] sm:$0xff]
        %v2473 = vld [vmem:[%s334 + $0x2490] sm:$0xff]
        %v2474 = vld [vmem:[%s334 + $0x2498] sm:$0xff]
        %v2475 = vld [vmem:[%s334 + $0x24a0] sm:$0xff]
        %v2476 = vld [vmem:[%s334 + $0x24a8] sm:$0xff]
        %v2477 = vld [vmem:[%s334 + $0x24b0] sm:$0xff]
        %v2478 = vld [vmem:[%s334 + $0x24b8] sm:$0xff]
        %v2479 = vld [vmem:[%s334 + $0x24c0] sm:$0xff]
        %v2480 = vld [vmem:[%s334 + $0x24c8] sm:$0xff]
        %v2481 = vld [vmem:[%s334 + $0x24d0] sm:$0xff]
        %v2482 = vld [vmem:[%s334 + $0x24d8] sm:$0xff]
        %v2483 = vld [vmem:[%s334 + $0x24e0] sm:$0xff]
        %v2484 = vld [vmem:[%s334 + $0x24e8] sm:$0xff]
        %v2485 = vld [vmem:[%s334 + $0x24f0] sm:$0xff]
        %v2486 = vld [vmem:[%s334 + $0x24f8] sm:$0xff]
        %v2487 = vld [vmem:[%s334 + $0x2500] sm:$0xff]
        %v2488 = vld [vmem:[%s334 + $0x2508] sm:$0xff]
        %v2489 = vld [vmem:[%s334 + $0x2510] sm:$0xff]
        %v2490 = vld [vmem:[%s334 + $0x2518] sm:$0xff]
        %v2491 = vld [vmem:[%s334 + $0x2520] sm:$0xff]
        %v2492 = vld [vmem:[%s334 + $0x2528] sm:$0xff]
        %v2493 = vld [vmem:[%s334 + $0x2530] sm:$0xff]
        %v2494 = vld [vmem:[%s334 + $0x2538] sm:$0xff]
        %v2495 = vld [vmem:[%s334 + $0x2540] sm:$0xff]
        %v2496 = vld [vmem:[%s334 + $0x2548] sm:$0xff]
        %v2497 = vld [vmem:[%s334 + $0x2550] sm:$0xff]
        %v2498 = vld [vmem:[%s334 + $0x2558] sm:$0xff]
        %v2499 = vld [vmem:[%s334 + $0x2560] sm:$0xff]
        %v2500 = vld [vmem:[%s334 + $0x2568] sm:$0xff]
        %v2501 = vld [vmem:[%s334 + $0x2570] sm:$0xff]
        %v2502 = vld [vmem:[%s334 + $0x2578] sm:$0xff]
        %v2503 = vld [vmem:[%s334 + $0x2580] sm:$0xff]
        %v2504 = vld [vmem:[%s334 + $0x2588] sm:$0xff]
        %v2505 = vld [vmem:[%s334 + $0x2590] sm:$0xff]
        %v2506 = vld [vmem:[%s334 + $0x2598] sm:$0xff]
        %v2507 = vld [vmem:[%s334 + $0x25a0] sm:$0xff]
        %v2508 = vld [vmem:[%s334 + $0x25a8] sm:$0xff]
        %v2509 = vld [vmem:[%s334 + $0x25b0] sm:$0xff]
        %v2510 = vld [vmem:[%s334 + $0x25b8] sm:$0xff]
        %v2511 = vld [vmem:[%s334 + $0x25c0] sm:$0xff]
        %v2512 = vld [vmem:[%s334 + $0x25c8] sm:$0xff]
        %v2513 = vld [vmem:[%s334 + $0x25d0] sm:$0xff]
        %v2514 = vld [vmem:[%s334 + $0x25d8] sm:$0xff]
        %v2515 = vld [vmem:[%s334 + $0x25e0] sm:$0xff]
        %v2516 = vld [vmem:[%s334 + $0x25e8] sm:$0xff]
        %v2517 = vld [vmem:[%s334 + $0x25f0] sm:$0xff]
        %v2518 = vld [vmem:[%s334 + $0x25f8] sm:$0xff]
        %v2519 = vld [vmem:[%s334 + $0x2600] sm:$0xff]
        %v2520 = vld [vmem:[%s334 + $0x2608] sm:$0xff]
        %v2521 = vld [vmem:[%s334 + $0x2610] sm:$0xff]
        %v2522 = vld [vmem:[%s334 + $0x2618] sm:$0xff]
        %v2523 = vld [vmem:[%s334 + $0x2620] sm:$0xff]
        %v2524 = vld [vmem:[%s334 + $0x2628] sm:$0xff]
        %v2525 = vld [vmem:[%s334 + $0x2630] sm:$0xff]
        %v2526 = vld [vmem:[%s334 + $0x2638] sm:$0xff]
        %v2527 = vld [vmem:[%s334 + $0x2640] sm:$0xff]
        %v2528 = vld [vmem:[%s334 + $0x2648] sm:$0xff]
        %v2529 = vld [vmem:[%s334 + $0x2650] sm:$0xff]
        %v2530 = vld [vmem:[%s334 + $0x2658] sm:$0xff]
        %v2531 = vld [vmem:[%s334 + $0x2660] sm:$0xff]
        %v2532 = vld [vmem:[%s334 + $0x2668] sm:$0xff]
        %v2533 = vld [vmem:[%s334 + $0x2670] sm:$0xff]
        %v2534 = vld [vmem:[%s334 + $0x2678] sm:$0xff]
        %v2535 = vld [vmem:[%s334 + $0x2680] sm:$0xff]
        %v2536 = vld [vmem:[%s334 + $0x2688] sm:$0xff]
        %v2537 = vld [vmem:[%s334 + $0x2690] sm:$0xff]
        %v2538 = vld [vmem:[%s334 + $0x2698] sm:$0xff]
        %v2539 = vld [vmem:[%s334 + $0x26a0] sm:$0xff]
        %v2540 = vld [vmem:[%s334 + $0x26a8] sm:$0xff]
        %v2541 = vld [vmem:[%s334 + $0x26b0] sm:$0xff]
        %v2542 = vld [vmem:[%s334 + $0x26b8] sm:$0xff]
        %v2543 = vld [vmem:[%s334 + $0x26c0] sm:$0xff]
        %v2544 = vld [vmem:[%s334 + $0x26c8] sm:$0xff]
        %v2545 = vld [vmem:[%s334 + $0x26d0] sm:$0xff]
        %v2546 = vld [vmem:[%s334 + $0x26d8] sm:$0xff]
        %v2547 = vld [vmem:[%s334 + $0x26e0] sm:$0xff]
        %v2548 = vld [vmem:[%s334 + $0x26e8] sm:$0xff]
        %v2549 = vld [vmem:[%s334 + $0x26f0] sm:$0xff]
        %v2550 = vld [vmem:[%s334 + $0x26f8] sm:$0xff]
        %v2551 = vld [vmem:[%s334 + $0x2700] sm:$0xff]
        %v2552 = vld [vmem:[%s334 + $0x2708] sm:$0xff]
        %v2553 = vld [vmem:[%s334 + $0x2710] sm:$0xff]
        %v2554 = vld [vmem:[%s334 + $0x2718] sm:$0xff]
        %v2555 = vld [vmem:[%s334 + $0x2720] sm:$0xff]
        %v2556 = vld [vmem:[%s334 + $0x2728] sm:$0xff]
        %v2557 = vld [vmem:[%s334 + $0x2730] sm:$0xff]
        %v2558 = vld [vmem:[%s334 + $0x2738] sm:$0xff]
        %v2559 = vld [vmem:[%s334 + $0x2740] sm:$0xff]
        %v2560 = vld [vmem:[%s334 + $0x2748] sm:$0xff]
        %v2561 = vld [vmem:[%s334 + $0x2750] sm:$0xff]
        %v2562 = vld [vmem:[%s334 + $0x2758] sm:$0xff]
        %v2563 = vld [vmem:[%s334 + $0x2760] sm:$0xff]
        %v2564 = vld [vmem:[%s334 + $0x2768] sm:$0xff]
        %v2565 = vld [vmem:[%s334 + $0x2770] sm:$0xff]
        %v2566 = vld [vmem:[%s334 + $0x2778] sm:$0xff]
        %v2567 = vld [vmem:[%s334 + $0x2780] sm:$0xff]
        %v2568 = vld [vmem:[%s334 + $0x2788] sm:$0xff]
        %v2569 = vld [vmem:[%s334 + $0x2790] sm:$0xff]
        %v2570 = vld [vmem:[%s334 + $0x2798] sm:$0xff]
        %v2571 = vld [vmem:[%s334 + $0x27a0] sm:$0xff]
        %v2572 = vld [vmem:[%s334 + $0x27a8] sm:$0xff]
        %v2573 = vld [vmem:[%s334 + $0x27b0] sm:$0xff]
        %v2574 = vld [vmem:[%s334 + $0x27b8] sm:$0xff]
        %v2575 = vld [vmem:[%s334 + $0x27c0] sm:$0xff]
        %v2576 = vld [vmem:[%s334 + $0x27c8] sm:$0xff]
        %v2577 = vld [vmem:[%s334 + $0x27d0] sm:$0xff]
        %v2578 = vld [vmem:[%s334 + $0x27d8] sm:$0xff]
        %v2579 = vld [vmem:[%s334 + $0x27e0] sm:$0xff]
        %v2580 = vld [vmem:[%s334 + $0x27e8] sm:$0xff]
        %v2581 = vld [vmem:[%s334 + $0x27f0] sm:$0xff]
        %v2582 = vld [vmem:[%s334 + $0x27f8] sm:$0xff]
        %v2583 = vld [vmem:[%s334 + $0x2800] sm:$0xff]
        %v2584 = vld [vmem:[%s334 + $0x2808] sm:$0xff]
        %v2585 = vld [vmem:[%s334 + $0x2810] sm:$0xff]
        %v2586 = vld [vmem:[%s334 + $0x2818] sm:$0xff]
        %v2587 = vld [vmem:[%s334 + $0x2820] sm:$0xff]
        %v2588 = vld [vmem:[%s334 + $0x2828] sm:$0xff]
        %v2589 = vld [vmem:[%s334 + $0x2830] sm:$0xff]
        %v2590 = vld [vmem:[%s334 + $0x2838] sm:$0xff]
        %v2591 = vld [vmem:[%s334 + $0x2840] sm:$0xff]
        %v2592 = vld [vmem:[%s334 + $0x2848] sm:$0xff]
        %v2593 = vld [vmem:[%s334 + $0x2850] sm:$0xff]
        %v2594 = vld [vmem:[%s334 + $0x2858] sm:$0xff]
        %v2595 = vld [vmem:[%s334 + $0x2860] sm:$0xff]
        %v2596 = vld [vmem:[%s334 + $0x2868] sm:$0xff]
        %v2597 = vld [vmem:[%s334 + $0x2870] sm:$0xff]
        %v2598 = vld [vmem:[%s334 + $0x2878] sm:$0xff]
        %v2599 = vld [vmem:[%s334 + $0x2880] sm:$0xff]
        %v2600 = vld [vmem:[%s334 + $0x2888] sm:$0xff]
        %v2601 = vld [vmem:[%s334 + $0x2890] sm:$0xff]
        %v2602 = vld [vmem:[%s334 + $0x2898] sm:$0xff]
        %v2603 = vld [vmem:[%s334 + $0x28a0] sm:$0xff]
        %v2604 = vld [vmem:[%s334 + $0x28a8] sm:$0xff]
        %v2605 = vld [vmem:[%s334 + $0x28b0] sm:$0xff]
        %v2606 = vld [vmem:[%s334 + $0x28b8] sm:$0xff]
        %v2607 = vld [vmem:[%s334 + $0x28c0] sm:$0xff]
        %v2608 = vld [vmem:[%s334 + $0x28c8] sm:$0xff]
        %v2609 = vld [vmem:[%s334 + $0x28d0] sm:$0xff]
        %v2610 = vld [vmem:[%s334 + $0x28d8] sm:$0xff]
        %v2611 = vld [vmem:[%s334 + $0x28e0] sm:$0xff]
        %v2612 = vld [vmem:[%s334 + $0x28e8] sm:$0xff]
        %v2613 = vld [vmem:[%s334 + $0x28f0] sm:$0xff]
        %v2614 = vld [vmem:[%s334 + $0x28f8] sm:$0xff]
        %v2615 = vld [vmem:[%s334 + $0x2900] sm:$0xff]
        %v2616 = vld [vmem:[%s334 + $0x2908] sm:$0xff]
        %v2617 = vld [vmem:[%s334 + $0x2910] sm:$0xff]
        %v2618 = vld [vmem:[%s334 + $0x2918] sm:$0xff]
        %v2619 = vld [vmem:[%s334 + $0x2920] sm:$0xff]
        %v2620 = vld [vmem:[%s334 + $0x2928] sm:$0xff]
        %v2621 = vld [vmem:[%s334 + $0x2930] sm:$0xff]
        %v2622 = vld [vmem:[%s334 + $0x2938] sm:$0xff]
        %v2623 = vld [vmem:[%s334 + $0x2940] sm:$0xff]
        %v2624 = vld [vmem:[%s334 + $0x2948] sm:$0xff]
        %v2625 = vld [vmem:[%s334 + $0x2950] sm:$0xff]
        %v2626 = vld [vmem:[%s334 + $0x2958] sm:$0xff]
        %v2627 = vld [vmem:[%s334 + $0x2960] sm:$0xff]
        %v2628 = vld [vmem:[%s334 + $0x2968] sm:$0xff]
        %v2629 = vld [vmem:[%s334 + $0x2970] sm:$0xff]
        %v2630 = vld [vmem:[%s334 + $0x2978] sm:$0xff]
        %v2631 = vld [vmem:[%s334 + $0x2980] sm:$0xff]
        %v2632 = vld [vmem:[%s334 + $0x2988] sm:$0xff]
        %v2633 = vld [vmem:[%s334 + $0x2990] sm:$0xff]
        %v2634 = vld [vmem:[%s334 + $0x2998] sm:$0xff]
        %v2635 = vld [vmem:[%s334 + $0x29a0] sm:$0xff]
        %v2636 = vld [vmem:[%s334 + $0x29a8] sm:$0xff]
        %v2637 = vld [vmem:[%s334 + $0x29b0] sm:$0xff]
        %v2638 = vld [vmem:[%s334 + $0x29b8] sm:$0xff]
        %v2639 = vld [vmem:[%s334 + $0x29c0] sm:$0xff]
        %v2640 = vld [vmem:[%s334 + $0x29c8] sm:$0xff]
        %v2641 = vld [vmem:[%s334 + $0x29d0] sm:$0xff]
        %v2642 = vld [vmem:[%s334 + $0x29d8] sm:$0xff]
        %v2643 = vld [vmem:[%s334 + $0x29e0] sm:$0xff]
        %v2644 = vld [vmem:[%s334 + $0x29e8] sm:$0xff]
        %v2645 = vld [vmem:[%s334 + $0x29f0] sm:$0xff]
        %v2646 = vld [vmem:[%s334 + $0x29f8] sm:$0xff]
        %v2647 = vld [vmem:[%s334 + $0x2a00] sm:$0xff]
        %v2648 = vld [vmem:[%s334 + $0x2a08] sm:$0xff]
        %v2649 = vld [vmem:[%s334 + $0x2a10] sm:$0xff]
        %v2650 = vld [vmem:[%s334 + $0x2a18] sm:$0xff]
        %v2651 = vld [vmem:[%s334 + $0x2a20] sm:$0xff]
        %v2652 = vld [vmem:[%s334 + $0x2a28] sm:$0xff]
        %v2653 = vld [vmem:[%s334 + $0x2a30] sm:$0xff]
        %v2654 = vld [vmem:[%s334 + $0x2a38] sm:$0xff]
        %v2655 = vld [vmem:[%s334 + $0x2a40] sm:$0xff]
        %v2656 = vld [vmem:[%s334 + $0x2a48] sm:$0xff]
        %v2657 = vld [vmem:[%s334 + $0x2a50] sm:$0xff]
        %v2658 = vld [vmem:[%s334 + $0x2a58] sm:$0xff]
        %v2659 = vld [vmem:[%s334 + $0x2a60] sm:$0xff]
        %v2660 = vld [vmem:[%s334 + $0x2a68] sm:$0xff]
        %v2661 = vld [vmem:[%s334 + $0x2a70] sm:$0xff]
        %v2662 = vld [vmem:[%s334 + $0x2a78] sm:$0xff]
        %v2663 = vld [vmem:[%s334 + $0x2a80] sm:$0xff]
        %v2664 = vld [vmem:[%s334 + $0x2a88] sm:$0xff]
        %v2665 = vld [vmem:[%s334 + $0x2a90] sm:$0xff]
        %v2666 = vld [vmem:[%s334 + $0x2a98] sm:$0xff]
        %v2667 = vld [vmem:[%s334 + $0x2aa0] sm:$0xff]
        %v2668 = vld [vmem:[%s334 + $0x2aa8] sm:$0xff]
        %v2669 = vld [vmem:[%s334 + $0x2ab0] sm:$0xff]
        %v2670 = vld [vmem:[%s334 + $0x2ab8] sm:$0xff]
        %v2671 = vld [vmem:[%s334 + $0x2ac0] sm:$0xff]
        %v2672 = vld [vmem:[%s334 + $0x2ac8] sm:$0xff]
        %v2673 = vld [vmem:[%s334 + $0x2ad0] sm:$0xff]
        %v2674 = vld [vmem:[%s334 + $0x2ad8] sm:$0xff]
        %v2675 = vld [vmem:[%s334 + $0x2ae0] sm:$0xff]
        %v2676 = vld [vmem:[%s334 + $0x2ae8] sm:$0xff]
        %v2677 = vld [vmem:[%s334 + $0x2af0] sm:$0xff]
        %v2678 = vld [vmem:[%s334 + $0x2af8] sm:$0xff]
        %v2679 = vld [vmem:[%s334 + $0x2b00] sm:$0xff]
        %v2680 = vld [vmem:[%s334 + $0x2b08] sm:$0xff]
        %v2681 = vld [vmem:[%s334 + $0x2b10] sm:$0xff]
        %v2682 = vld [vmem:[%s334 + $0x2b18] sm:$0xff]
        %v2683 = vld [vmem:[%s334 + $0x2b20] sm:$0xff]
        %v2684 = vld [vmem:[%s334 + $0x2b28] sm:$0xff]
        %v2685 = vld [vmem:[%s334 + $0x2b30] sm:$0xff]
        %v2686 = vld [vmem:[%s334 + $0x2b38] sm:$0xff]
        %v2687 = vld [vmem:[%s334 + $0x2b40] sm:$0xff]
        %v2688 = vld [vmem:[%s334 + $0x2b48] sm:$0xff]
        %v2689 = vld [vmem:[%s334 + $0x2b50] sm:$0xff]
        %v2690 = vld [vmem:[%s334 + $0x2b58] sm:$0xff]
        %v2691 = vld [vmem:[%s334 + $0x2b60] sm:$0xff]
        %v2692 = vld [vmem:[%s334 + $0x2b68] sm:$0xff]
        %v2693 = vld [vmem:[%s334 + $0x2b70] sm:$0xff]
        %v2694 = vld [vmem:[%s334 + $0x2b78] sm:$0xff]
        %v2695 = vld [vmem:[%s334 + $0x2b80] sm:$0xff]
        %v2696 = vld [vmem:[%s334 + $0x2b88] sm:$0xff]
        %v2697 = vld [vmem:[%s334 + $0x2b90] sm:$0xff]
        %v2698 = vld [vmem:[%s334 + $0x2b98] sm:$0xff]
        %v2699 = vld [vmem:[%s334 + $0x2ba0] sm:$0xff]
        %v2700 = vld [vmem:[%s334 + $0x2ba8] sm:$0xff]
        %v2701 = vld [vmem:[%s334 + $0x2bb0] sm:$0xff]
        %v2702 = vld [vmem:[%s334 + $0x2bb8] sm:$0xff]
        %v2703 = vld [vmem:[%s334 + $0x2bc0] sm:$0xff]
        %v2704 = vld [vmem:[%s334 + $0x2bc8] sm:$0xff]
        %v2705 = vld [vmem:[%s334 + $0x2bd0] sm:$0xff]
        %v2706 = vld [vmem:[%s334 + $0x2bd8] sm:$0xff]
        %v2707 = vld [vmem:[%s334 + $0x2be0] sm:$0xff]
        %v2708 = vld [vmem:[%s334 + $0x2be8] sm:$0xff]
        %v2709 = vld [vmem:[%s334 + $0x2bf0] sm:$0xff]
        %v2710 = vld [vmem:[%s334 + $0x2bf8] sm:$0xff]
        %v2711 = vld [vmem:[%s334 + $0x2c00] sm:$0xff]
        %v2712 = vld [vmem:[%s334 + $0x2c08] sm:$0xff]
        %v2713 = vld [vmem:[%s334 + $0x2c10] sm:$0xff]
        %v2714 = vld [vmem:[%s334 + $0x2c18] sm:$0xff]
        %v2715 = vld [vmem:[%s334 + $0x2c20] sm:$0xff]
        %v2716 = vld [vmem:[%s334 + $0x2c28] sm:$0xff]
        %v2717 = vld [vmem:[%s334 + $0x2c30] sm:$0xff]
        %v2718 = vld [vmem:[%s334 + $0x2c38] sm:$0xff]
        %v2719 = vld [vmem:[%s334 + $0x2c40] sm:$0xff]
        %v2720 = vld [vmem:[%s334 + $0x2c48] sm:$0xff]
        %v2721 = vld [vmem:[%s334 + $0x2c50] sm:$0xff]
        %v2722 = vld [vmem:[%s334 + $0x2c58] sm:$0xff]
        %v2723 = vld [vmem:[%s334 + $0x2c60] sm:$0xff]
        %v2724 = vld [vmem:[%s334 + $0x2c68] sm:$0xff]
        %v2725 = vld [vmem:[%s334 + $0x2c70] sm:$0xff]
        %v2726 = vld [vmem:[%s334 + $0x2c78] sm:$0xff]
        %v2727 = vld [vmem:[%s334 + $0x2c80] sm:$0xff]
        %v2728 = vld [vmem:[%s334 + $0x2c88] sm:$0xff]
        %v2729 = vld [vmem:[%s334 + $0x2c90] sm:$0xff]
        %v2730 = vld [vmem:[%s334 + $0x2c98] sm:$0xff]
        %v2731 = vld [vmem:[%s334 + $0x2ca0] sm:$0xff]
        %v2732 = vld [vmem:[%s334 + $0x2ca8] sm:$0xff]
        %v2733 = vld [vmem:[%s334 + $0x2cb0] sm:$0xff]
        %v2734 = vld [vmem:[%s334 + $0x2cb8] sm:$0xff]
        %v2735 = vld [vmem:[%s334 + $0x2cc0] sm:$0xff]
        %v2736 = vld [vmem:[%s334 + $0x2cc8] sm:$0xff]
        %v2737 = vld [vmem:[%s334 + $0x2cd0] sm:$0xff]
        %v2738 = vld [vmem:[%s334 + $0x2cd8] sm:$0xff]
        %v2739 = vld [vmem:[%s334 + $0x2ce0] sm:$0xff]
        %v2740 = vld [vmem:[%s334 + $0x2ce8] sm:$0xff]
        %v2741 = vld [vmem:[%s334 + $0x2cf0] sm:$0xff]
        %v2742 = vld [vmem:[%s334 + $0x2cf8] sm:$0xff]
        %v2743 = vld [vmem:[%s334 + $0x2d00] sm:$0xff]
        %v2744 = vld [vmem:[%s334 + $0x2d08] sm:$0xff]
        %v2745 = vld [vmem:[%s334 + $0x2d10] sm:$0xff]
        %v2746 = vld [vmem:[%s334 + $0x2d18] sm:$0xff]
        %v2747 = vld [vmem:[%s334 + $0x2d20] sm:$0xff]
        %v2748 = vld [vmem:[%s334 + $0x2d28] sm:$0xff]
        %v2749 = vld [vmem:[%s334 + $0x2d30] sm:$0xff]
        %v2750 = vld [vmem:[%s334 + $0x2d38] sm:$0xff]
        %v2751 = vld [vmem:[%s334 + $0x2d40] sm:$0xff]
        %v2752 = vld [vmem:[%s334 + $0x2d48] sm:$0xff]
        %v2753 = vld [vmem:[%s334 + $0x2d50] sm:$0xff]
        %v2754 = vld [vmem:[%s334 + $0x2d58] sm:$0xff]
        %v2755 = vld [vmem:[%s334 + $0x2d60] sm:$0xff]
        %v2756 = vld [vmem:[%s334 + $0x2d68] sm:$0xff]
        %v2757 = vld [vmem:[%s334 + $0x2d70] sm:$0xff]
        %v2758 = vld [vmem:[%s334 + $0x2d78] sm:$0xff]
        %v2759 = vld [vmem:[%s334 + $0x2d80] sm:$0xff]
        %v2760 = vld [vmem:[%s334 + $0x2d88] sm:$0xff]
        %v2761 = vld [vmem:[%s334 + $0x2d90] sm:$0xff]
        %v2762 = vld [vmem:[%s334 + $0x2d98] sm:$0xff]
        %v2763 = vld [vmem:[%s334 + $0x2da0] sm:$0xff]
        %v2764 = vld [vmem:[%s334 + $0x2da8] sm:$0xff]
        %v2765 = vld [vmem:[%s334 + $0x2db0] sm:$0xff]
        %v2766 = vld [vmem:[%s334 + $0x2db8] sm:$0xff]
        %v2767 = vld [vmem:[%s334 + $0x2dc0] sm:$0xff]
        %v2768 = vld [vmem:[%s334 + $0x2dc8] sm:$0xff]
        %v2769 = vld [vmem:[%s334 + $0x2dd0] sm:$0xff]
        %v2770 = vld [vmem:[%s334 + $0x2dd8] sm:$0xff]
        %v2771 = vld [vmem:[%s334 + $0x2de0] sm:$0xff]
        %v2772 = vld [vmem:[%s334 + $0x2de8] sm:$0xff]
        %v2773 = vld [vmem:[%s334 + $0x2df0] sm:$0xff]
        %v2774 = vld [vmem:[%s334 + $0x2df8] sm:$0xff]
        %v2775 = vld [vmem:[%s334 + $0x2e00] sm:$0xff]
        %v2776 = vld [vmem:[%s334 + $0x2e08] sm:$0xff]
        %v2777 = vld [vmem:[%s334 + $0x2e10] sm:$0xff]
        %v2778 = vld [vmem:[%s334 + $0x2e18] sm:$0xff]
        %v2779 = vld [vmem:[%s334 + $0x2e20] sm:$0xff]
        %v2780 = vld [vmem:[%s334 + $0x2e28] sm:$0xff]
        %v2781 = vld [vmem:[%s334 + $0x2e30] sm:$0xff]
        %v2782 = vld [vmem:[%s334 + $0x2e38] sm:$0xff]
        %v2783 = vld [vmem:[%s334 + $0x2e40] sm:$0xff]
        %v2784 = vld [vmem:[%s334 + $0x2e48] sm:$0xff]
        %v2785 = vld [vmem:[%s334 + $0x2e50] sm:$0xff]
        %v2786 = vld [vmem:[%s334 + $0x2e58] sm:$0xff]
        %v2787 = vld [vmem:[%s334 + $0x2e60] sm:$0xff]
        %v2788 = vld [vmem:[%s334 + $0x2e68] sm:$0xff]
        %v2789 = vld [vmem:[%s334 + $0x2e70] sm:$0xff]
        %v2790 = vld [vmem:[%s334 + $0x2e78] sm:$0xff]
        %v2791 = vld [vmem:[%s334 + $0x2e80] sm:$0xff]
        %v2792 = vld [vmem:[%s334 + $0x2e88] sm:$0xff]
        %v2793 = vld [vmem:[%s334 + $0x2e90] sm:$0xff]
        %v2794 = vld [vmem:[%s334 + $0x2e98] sm:$0xff]
        %v2795 = vld [vmem:[%s334 + $0x2ea0] sm:$0xff]
        %v2796 = vld [vmem:[%s334 + $0x2ea8] sm:$0xff]
        %v2797 = vld [vmem:[%s334 + $0x2eb0] sm:$0xff]
        %v2798 = vld [vmem:[%s334 + $0x2eb8] sm:$0xff]
        %v2799 = vld [vmem:[%s334 + $0x2ec0] sm:$0xff]
        %v2800 = vld [vmem:[%s334 + $0x2ec8] sm:$0xff]
        %v2801 = vld [vmem:[%s334 + $0x2ed0] sm:$0xff]
        %v2802 = vld [vmem:[%s334 + $0x2ed8] sm:$0xff]
        %v2803 = vld [vmem:[%s334 + $0x2ee0] sm:$0xff]
        %v2804 = vld [vmem:[%s334 + $0x2ee8] sm:$0xff]
        %v2805 = vld [vmem:[%s334 + $0x2ef0] sm:$0xff]
        %v2806 = vld [vmem:[%s334 + $0x2ef8] sm:$0xff]
        %v2807 = vld [vmem:[%s334 + $0x2f00] sm:$0xff]
        %v2808 = vld [vmem:[%s334 + $0x2f08] sm:$0xff]
        %v2809 = vld [vmem:[%s334 + $0x2f10] sm:$0xff]
        %v2810 = vld [vmem:[%s334 + $0x2f18] sm:$0xff]
        %v2811 = vld [vmem:[%s334 + $0x2f20] sm:$0xff]
        %v2812 = vld [vmem:[%s334 + $0x2f28] sm:$0xff]
        %v2813 = vld [vmem:[%s334 + $0x2f30] sm:$0xff]
        %v2814 = vld [vmem:[%s334 + $0x2f38] sm:$0xff]
        %v2815 = vld [vmem:[%s334 + $0x2f40] sm:$0xff]
        %v2816 = vld [vmem:[%s334 + $0x2f48] sm:$0xff]
        %v2817 = vld [vmem:[%s334 + $0x2f50] sm:$0xff]
        %v2818 = vld [vmem:[%s334 + $0x2f58] sm:$0xff]
        %v2819 = vld [vmem:[%s334 + $0x2f60] sm:$0xff]
        %v2820 = vld [vmem:[%s334 + $0x2f68] sm:$0xff]
        %v2821 = vld [vmem:[%s334 + $0x2f70] sm:$0xff]
        %v2822 = vld [vmem:[%s334 + $0x2f78] sm:$0xff]
        %v2823 = vld [vmem:[%s334 + $0x2f80] sm:$0xff]
        %v2824 = vld [vmem:[%s334 + $0x2f88] sm:$0xff]
        %v2825 = vld [vmem:[%s334 + $0x2f90] sm:$0xff]
        %v2826 = vld [vmem:[%s334 + $0x2f98] sm:$0xff]
        %v2827 = vld [vmem:[%s334 + $0x2fa0] sm:$0xff]
        %v2828 = vld [vmem:[%s334 + $0x2fa8] sm:$0xff]
        %v2829 = vld [vmem:[%s334 + $0x2fb0] sm:$0xff]
        %v2830 = vld [vmem:[%s334 + $0x2fb8] sm:$0xff]
        %v2831 = vld [vmem:[%s334 + $0x2fc0] sm:$0xff]
        %v2832 = vld [vmem:[%s334 + $0x2fc8] sm:$0xff]
        %v2833 = vld [vmem:[%s334 + $0x2fd0] sm:$0xff]
        %v2834 = vld [vmem:[%s334 + $0x2fd8] sm:$0xff]
        %v2835 = vld [vmem:[%s334 + $0x2fe0] sm:$0xff]
        %v2836 = vld [vmem:[%s334 + $0x2fe8] sm:$0xff]
        %v2837 = vld [vmem:[%s334 + $0x2ff0] sm:$0xff]
        %v2838 = vld [vmem:[%s334 + $0x2ff8] sm:$0xff]
        %v2839 = vld [vmem:[%s334 + $0x3000] sm:$0xff]
        %v2840 = vld [vmem:[%s334 + $0x3008] sm:$0xff]
        %v2841 = vld [vmem:[%s334 + $0x3010] sm:$0xff]
        %v2842 = vld [vmem:[%s334 + $0x3018] sm:$0xff]
        %v2843 = vld [vmem:[%s334 + $0x3020] sm:$0xff]
        %v2844 = vld [vmem:[%s334 + $0x3028] sm:$0xff]
        %v2845 = vld [vmem:[%s334 + $0x3030] sm:$0xff]
        %v2846 = vld [vmem:[%s334 + $0x3038] sm:$0xff]
        %v2847 = vld [vmem:[%s334 + $0x3040] sm:$0xff]
        %v2848 = vld [vmem:[%s334 + $0x3048] sm:$0xff]
        %v2849 = vld [vmem:[%s334 + $0x3050] sm:$0xff]
        %v2850 = vld [vmem:[%s334 + $0x3058] sm:$0xff]
        %v2851 = vld [vmem:[%s334 + $0x3060] sm:$0xff]
        %v2852 = vld [vmem:[%s334 + $0x3068] sm:$0xff]
        %v2853 = vld [vmem:[%s334 + $0x3070] sm:$0xff]
        %v2854 = vld [vmem:[%s334 + $0x3078] sm:$0xff]
        %v2855 = vld [vmem:[%s334 + $0x3080] sm:$0xff]
        %v2856 = vld [vmem:[%s334 + $0x3088] sm:$0xff]
        %v2857 = vld [vmem:[%s334 + $0x3090] sm:$0xff]
        %v2858 = vld [vmem:[%s334 + $0x3098] sm:$0xff]
        %v2859 = vld [vmem:[%s334 + $0x30a0] sm:$0xff]
        %v2860 = vld [vmem:[%s334 + $0x30a8] sm:$0xff]
        %v2861 = vld [vmem:[%s334 + $0x30b0] sm:$0xff]
        %v2862 = vld [vmem:[%s334 + $0x30b8] sm:$0xff]
        %v2863 = vld [vmem:[%s334 + $0x30c0] sm:$0xff]
        %v2864 = vld [vmem:[%s334 + $0x30c8] sm:$0xff]
        %v2865 = vld [vmem:[%s334 + $0x30d0] sm:$0xff]
        %v2866 = vld [vmem:[%s334 + $0x30d8] sm:$0xff]
        %v2867 = vld [vmem:[%s334 + $0x30e0] sm:$0xff]
        %v2868 = vld [vmem:[%s334 + $0x30e8] sm:$0xff]
        %v2869 = vld [vmem:[%s334 + $0x30f0] sm:$0xff]
        %v2870 = vld [vmem:[%s334 + $0x30f8] sm:$0xff]
        %v2871 = vld [vmem:[%s334 + $0x3100] sm:$0xff]
        %v2872 = vld [vmem:[%s334 + $0x3108] sm:$0xff]
        %v2873 = vld [vmem:[%s334 + $0x3110] sm:$0xff]
        %v2874 = vld [vmem:[%s334 + $0x3118] sm:$0xff]
        %v2875 = vld [vmem:[%s334 + $0x3120] sm:$0xff]
        %v2876 = vld [vmem:[%s334 + $0x3128] sm:$0xff]
        %v2877 = vld [vmem:[%s334 + $0x3130] sm:$0xff]
        %v2878 = vld [vmem:[%s334 + $0x3138] sm:$0xff]
        %v2879 = vld [vmem:[%s334 + $0x3140] sm:$0xff]
        %v2880 = vld [vmem:[%s334 + $0x3148] sm:$0xff]
        %v2881 = vld [vmem:[%s334 + $0x3150] sm:$0xff]
        %v2882 = vld [vmem:[%s334 + $0x3158] sm:$0xff]
        %v2883 = vld [vmem:[%s334 + $0x3160] sm:$0xff]
        %v2884 = vld [vmem:[%s334 + $0x3168] sm:$0xff]
        %v2885 = vld [vmem:[%s334 + $0x3170] sm:$0xff]
        %v2886 = vld [vmem:[%s334 + $0x3178] sm:$0xff]
        %v2887 = vld [vmem:[%s334 + $0x3180] sm:$0xff]
        %v2888 = vld [vmem:[%s334 + $0x3188] sm:$0xff]
        %v2889 = vld [vmem:[%s334 + $0x3190] sm:$0xff]
        %v2890 = vld [vmem:[%s334 + $0x3198] sm:$0xff]
        %v2891 = vld [vmem:[%s334 + $0x31a0] sm:$0xff]
        %v2892 = vld [vmem:[%s334 + $0x31a8] sm:$0xff]
        %v2893 = vld [vmem:[%s334 + $0x31b0] sm:$0xff]
        %v2894 = vld [vmem:[%s334 + $0x31b8] sm:$0xff]
        %v2895 = vld [vmem:[%s334 + $0x31c0] sm:$0xff]
        %v2896 = vld [vmem:[%s334 + $0x31c8] sm:$0xff]
        %v2897 = vld [vmem:[%s334 + $0x31d0] sm:$0xff]
        %v2898 = vld [vmem:[%s334 + $0x31d8] sm:$0xff]
        %v2899 = vld [vmem:[%s334 + $0x31e0] sm:$0xff]
        %v2900 = vld [vmem:[%s334 + $0x31e8] sm:$0xff]
        %v2901 = vld [vmem:[%s334 + $0x31f0] sm:$0xff]
        %v2902 = vld [vmem:[%s334 + $0x31f8] sm:$0xff]
        %v2903 = vld [vmem:[%s334 + $0x3200] sm:$0xff]
        %v2904 = vld [vmem:[%s334 + $0x3208] sm:$0xff]
        %v2905 = vld [vmem:[%s334 + $0x3210] sm:$0xff]
        %v2906 = vld [vmem:[%s334 + $0x3218] sm:$0xff]
        %v2907 = vld [vmem:[%s334 + $0x3220] sm:$0xff]
        %v2908 = vld [vmem:[%s334 + $0x3228] sm:$0xff]
        %v2909 = vld [vmem:[%s334 + $0x3230] sm:$0xff]
        %v2910 = vld [vmem:[%s334 + $0x3238] sm:$0xff]
        %v2911 = vld [vmem:[%s334 + $0x3240] sm:$0xff]
        %v2912 = vld [vmem:[%s334 + $0x3248] sm:$0xff]
        %v2913 = vld [vmem:[%s334 + $0x3250] sm:$0xff]
        %v2914 = vld [vmem:[%s334 + $0x3258] sm:$0xff]
        %v2915 = vld [vmem:[%s334 + $0x3260] sm:$0xff]
        %v2916 = vld [vmem:[%s334 + $0x3268] sm:$0xff]
        %v2917 = vld [vmem:[%s334 + $0x3270] sm:$0xff]
        %v2918 = vld [vmem:[%s334 + $0x3278] sm:$0xff]
        %v2919 = vld [vmem:[%s334 + $0x3280] sm:$0xff]
        %v2920 = vld [vmem:[%s334 + $0x3288] sm:$0xff]
        %v2921 = vld [vmem:[%s334 + $0x3290] sm:$0xff]
        %v2922 = vld [vmem:[%s334 + $0x3298] sm:$0xff]
        %v2923 = vld [vmem:[%s334 + $0x32a0] sm:$0xff]
        %v2924 = vld [vmem:[%s334 + $0x32a8] sm:$0xff]
        %v2925 = vld [vmem:[%s334 + $0x32b0] sm:$0xff]
        %v2926 = vld [vmem:[%s334 + $0x32b8] sm:$0xff]
        %v2927 = vld [vmem:[%s334 + $0x32c0] sm:$0xff]
        %v2928 = vld [vmem:[%s334 + $0x32c8] sm:$0xff]
        %v2929 = vld [vmem:[%s334 + $0x32d0] sm:$0xff]
        %v2930 = vld [vmem:[%s334 + $0x32d8] sm:$0xff]
        %v2931 = vld [vmem:[%s334 + $0x32e0] sm:$0xff]
        %v2932 = vld [vmem:[%s334 + $0x32e8] sm:$0xff]
        %v2933 = vld [vmem:[%s334 + $0x32f0] sm:$0xff]
        %v2934 = vld [vmem:[%s334 + $0x32f8] sm:$0xff]
        %v2935 = vld [vmem:[%s343] sm:$0x3f]
        %v2937 = vlaneseq
        %v2938 = vshrl.u32 %v2937, 7
        %v2939 = vsub.s32 0, %v2938
        %v2940 = vrot.slane %v2935, %v2939
        %v2941 = vlaneseq
        %v2942 = vshrl.u32 %v2941, 7
        %v2943 = vsub.s32 1, %v2942
        %v2944 = vrot.slane %v2935, %v2943
        %v2945 = vlaneseq
        %v2946 = vshrl.u32 %v2945, 7
        %v2947 = vsub.s32 2, %v2946
        %v2948 = vrot.slane %v2935, %v2947
        %v2949 = vlaneseq
        %v2950 = vshrl.u32 %v2949, 7
        %v2951 = vsub.s32 3, %v2950
        %v2952 = vrot.slane %v2935, %v2951
        %v2953 = vlaneseq
        %v2954 = vshrl.u32 %v2953, 7
        %v2955 = vsub.s32 4, %v2954
        %v2956 = vrot.slane %v2935, %v2955
        %v2957 = vlaneseq
        %v2958 = vshrl.u32 %v2957, 7
        %v2959 = vsub.s32 5, %v2958
        %v2960 = vrot.slane %v2935, %v2959
        %2967 = vmatprep.subr.mxu0 %v1304
        %2968 = vmatpush1.msra.mxu0 %v1303
        %2969 = vmatprep.subr.mxu0 %v1310
        %2970 = vmatpush1.msra.mxu0 %v1309
        %2971 = vmatprep.subr.mxu0 %v1316
        %2972 = vmatpush1.msra.mxu0 %v1315
        %2973 = vmatprep.subr.mxu0 %v1322
        %2974 = vmatpush1.msra.mxu0 %v1321
        %2975 = vmatprep.subr.mxu0 %v1328
        %2976 = vmatpush1.msra.mxu0 %v1327
        %2977 = vmatprep.subr.mxu0 %v1334
        %2978 = vmatpush1.msra.mxu0 %v1333
        %2979 = vmatprep.subr.mxu0 %v1340
        %2980 = vmatpush1.msra.mxu0 %v1339
        %2981 = vmatprep.subr.mxu0 %v1346
        %2982 = vmatpush1.msra.mxu0 %v1345
        %2983 = vmatprep.subr.mxu0 %v1352
        %2984 = vmatpush1.msra.mxu0 %v1351
        %2985 = vmatprep.subr.mxu0 %v1358
        %2986 = vmatpush1.msra.mxu0 %v1357
        %2987 = vmatprep.subr.mxu0 %v1364
        %2988 = vmatpush1.msra.mxu0 %v1363
        %2989 = vmatprep.subr.mxu0 %v1370
        %2990 = vmatpush1.msra.mxu0 %v1369
        %2991 = vmatprep.subr.mxu0 %v1376
        %2992 = vmatpush1.msra.mxu0 %v1375
        %2993 = vmatprep.subr.mxu0 %v1382
        %2994 = vmatpush1.msra.mxu0 %v1381
        %2995 = vmatprep.subr.mxu0 %v1388
        %2996 = vmatpush1.msra.mxu0 %v1387
        %2997 = vmatprep.subr.mxu0 %v1394
        %2998 = vmatpush1.msra.mxu0 %v1393
        %2999 = vmatprep.subr.mxu0 %v1400
        %3000 = vmatpush1.msra.mxu0 %v1399
        %3001 = vmatprep.subr.mxu0 %v1406
        %3002 = vmatpush1.msra.mxu0 %v1405
        %3003 = vmatprep.subr.mxu0 %v1412
        %3004 = vmatpush1.msra.mxu0 %v1411
        %3005 = vmatprep.subr.mxu0 %v1418
        %3006 = vmatpush1.msra.mxu0 %v1417
        %3007 = vmatprep.subr.mxu0 %v1424
        %3008 = vmatpush1.msra.mxu0 %v1423
        %3009 = vmatprep.subr.mxu0 %v1430
        %3010 = vmatpush1.msra.mxu0 %v1429
        %3011 = vmatprep.subr.mxu0 %v1436
        %3012 = vmatpush1.msra.mxu0 %v1435
        %3013 = vmatprep.subr.mxu0 %v1442
        %3014 = vmatpush1.msra.mxu0 %v1441
        %3015 = vmatprep.subr.mxu0 %v1448
        %3016 = vmatpush1.msra.mxu0 %v1447
        %3017 = vmatprep.subr.mxu0 %v1454
        %3018 = vmatpush1.msra.mxu0 %v1453
        %3019 = vmatprep.subr.mxu0 %v1460
        %3020 = vmatpush1.msra.mxu0 %v1459
        %3021 = vmatprep.subr.mxu0 %v1466
        %3022 = vmatpush1.msra.mxu0 %v1465
        %3023 = vmatprep.subr.mxu0 %v1472
        %3024 = vmatpush1.msra.mxu0 %v1471
        %3025 = vmatprep.subr.mxu0 %v1478
        %3026 = vmatpush1.msra.mxu0 %v1477
        %3027 = vmatprep.subr.mxu0 %v1484
        %3028 = vmatpush1.msra.mxu0 %v1483
        %3029 = vmatprep.subr.mxu0 %v1490
        %3030 = vmatpush1.msra.mxu0 %v1489
        %3031 = vmatprep.mubr.f32.mxu0 %v1287
        %3032 = vmatmul.mubr.f32.gmra.mrb[0].mxu0 %v1286
        %v3033 = vpop.f32.mrb[0].mxu0
        %v3034 = vadd.f32 %v2940, %v3033
        %v3035 = vpop.f32.mrb[0].mxu0
        %v3036 = vadd.f32 %v2944, %v3035
        %3037 = vdwg.mxu0
        %3038 = vmatprep.subr.mxu0 %v1496
        %3039 = vmatpush1.msra.mxu0 %v1495
        %3040 = vmatprep.subr.mxu0 %v1502
        %3041 = vmatpush1.msra.mxu0 %v1501
        %3042 = vmatprep.subr.mxu0 %v1508
        %3043 = vmatpush1.msra.mxu0 %v1507
        %3044 = vmatprep.subr.mxu0 %v1514
        %3045 = vmatpush1.msra.mxu0 %v1513
        %3046 = vmatprep.subr.mxu0 %v1520
        %3047 = vmatpush1.msra.mxu0 %v1519
        %3048 = vmatprep.subr.mxu0 %v1526
        %3049 = vmatpush1.msra.mxu0 %v1525
        %3050 = vmatprep.subr.mxu0 %v1532
        %3051 = vmatpush1.msra.mxu0 %v1531
        %3052 = vmatprep.subr.mxu0 %v1538
        %3053 = vmatpush1.msra.mxu0 %v1537
        %3054 = vmatprep.subr.mxu0 %v1544
        %3055 = vmatpush1.msra.mxu0 %v1543
        %3056 = vmatprep.subr.mxu0 %v1550
        %3057 = vmatpush1.msra.mxu0 %v1549
        %3058 = vmatprep.subr.mxu0 %v1556
        %3059 = vmatpush1.msra.mxu0 %v1555
        %3060 = vmatprep.subr.mxu0 %v1562
        %3061 = vmatpush1.msra.mxu0 %v1561
        %3062 = vmatprep.subr.mxu0 %v1568
        %3063 = vmatpush1.msra.mxu0 %v1567
        %3064 = vmatprep.subr.mxu0 %v1574
        %3065 = vmatpush1.msra.mxu0 %v1573
        %3066 = vmatprep.subr.mxu0 %v1580
        %3067 = vmatpush1.msra.mxu0 %v1579
        %3068 = vmatprep.subr.mxu0 %v1586
        %3069 = vmatpush1.msra.mxu0 %v1585
        %3070 = vmatprep.subr.mxu0 %v1592
        %3071 = vmatpush1.msra.mxu0 %v1591
        %3072 = vmatprep.subr.mxu0 %v1598
        %3073 = vmatpush1.msra.mxu0 %v1597
        %3074 = vmatprep.subr.mxu0 %v1604
        %3075 = vmatpush1.msra.mxu0 %v1603
        %3076 = vmatprep.subr.mxu0 %v1610
        %3077 = vmatpush1.msra.mxu0 %v1609
        %3078 = vmatprep.subr.mxu0 %v1616
        %3079 = vmatpush1.msra.mxu0 %v1615
        %3080 = vmatprep.subr.mxu0 %v1622
        %3081 = vmatpush1.msra.mxu0 %v1621
        %3082 = vmatprep.subr.mxu0 %v1628
        %3083 = vmatpush1.msra.mxu0 %v1627
        %3084 = vmatprep.subr.mxu0 %v1634
        %3085 = vmatpush1.msra.mxu0 %v1633
        %3086 = vmatprep.subr.mxu0 %v1640
        %3087 = vmatpush1.msra.mxu0 %v1639
        %3088 = vmatprep.subr.mxu0 %v1646
        %3089 = vmatpush1.msra.mxu0 %v1645
        %3090 = vmatprep.subr.mxu0 %v1652
        %3091 = vmatpush1.msra.mxu0 %v1651
        %3092 = vmatprep.subr.mxu0 %v1658
        %3093 = vmatpush1.msra.mxu0 %v1657
        %3094 = vmatprep.subr.mxu0 %v1664
        %3095 = vmatpush1.msra.mxu0 %v1663
        %3096 = vmatprep.subr.mxu0 %v1670
        %3097 = vmatpush1.msra.mxu0 %v1669
        %3098 = vmatprep.subr.mxu0 %v1676
        %3099 = vmatpush1.msra.mxu0 %v1675
        %3100 = vmatprep.subr.mxu0 %v1682
        %3101 = vmatpush1.msra.mxu0 %v1681
        %3102 = vmatprep.mubr.f32.mxu0 %v1289
        %3103 = vmatmul.mubr.f32.gmra.mrb[0].mxu0 %v1288
        %v3104 = vpop.f32.mrb[0].mxu0
        %v3105 = vadd.f32 %v3034, %v3104
        %v3106 = vpop.f32.mrb[0].mxu0
        %v3107 = vadd.f32 %v3036, %v3106
        %3108 = vdwg.mxu0
        %3109 = vmatprep.subr.mxu0 %v1688
        %3110 = vmatpush1.msra.mxu0 %v1687
        %3111 = vmatprep.subr.mxu0 %v1694
        %3112 = vmatpush1.msra.mxu0 %v1693
        %3113 = vmatprep.subr.mxu0 %v1700
        %3114 = vmatpush1.msra.mxu0 %v1699
        %3115 = vmatprep.subr.mxu0 %v1706
        %3116 = vmatpush1.msra.mxu0 %v1705
        %3117 = vmatprep.subr.mxu0 %v1712
        %3118 = vmatpush1.msra.mxu0 %v1711
        %3119 = vmatprep.subr.mxu0 %v1718
        %3120 = vmatpush1.msra.mxu0 %v1717
        %3121 = vmatprep.subr.mxu0 %v1724
        %3122 = vmatpush1.msra.mxu0 %v1723
        %3123 = vmatprep.subr.mxu0 %v1730
        %3124 = vmatpush1.msra.mxu0 %v1729
        %3125 = vmatprep.subr.mxu0 %v1736
        %3126 = vmatpush1.msra.mxu0 %v1735
        %3127 = vmatprep.subr.mxu0 %v1742
        %3128 = vmatpush1.msra.mxu0 %v1741
        %3129 = vmatprep.subr.mxu0 %v1748
        %3130 = vmatpush1.msra.mxu0 %v1747
        %3131 = vmatprep.subr.mxu0 %v1754
        %3132 = vmatpush1.msra.mxu0 %v1753
        %3133 = vmatprep.subr.mxu0 %v1760
        %3134 = vmatpush1.msra.mxu0 %v1759
        %3135 = vmatprep.subr.mxu0 %v1766
        %3136 = vmatpush1.msra.mxu0 %v1765
        %3137 = vmatprep.subr.mxu0 %v1772
        %3138 = vmatpush1.msra.mxu0 %v1771
        %3139 = vmatprep.subr.mxu0 %v1778
        %3140 = vmatpush1.msra.mxu0 %v1777
        %3141 = vmatprep.subr.mxu0 %v1784
        %3142 = vmatpush1.msra.mxu0 %v1783
        %3143 = vmatprep.subr.mxu0 %v1790
        %3144 = vmatpush1.msra.mxu0 %v1789
        %3145 = vmatprep.subr.mxu0 %v1796
        %3146 = vmatpush1.msra.mxu0 %v1795
        %3147 = vmatprep.subr.mxu0 %v1802
        %3148 = vmatpush1.msra.mxu0 %v1801
        %3149 = vmatprep.subr.mxu0 %v1808
        %3150 = vmatpush1.msra.mxu0 %v1807
        %3151 = vmatprep.subr.mxu0 %v1814
        %3152 = vmatpush1.msra.mxu0 %v1813
        %3153 = vmatprep.subr.mxu0 %v1820
        %3154 = vmatpush1.msra.mxu0 %v1819
        %3155 = vmatprep.subr.mxu0 %v1826
        %3156 = vmatpush1.msra.mxu0 %v1825
        %3157 = vmatprep.subr.mxu0 %v1832
        %3158 = vmatpush1.msra.mxu0 %v1831
        %3159 = vmatprep.subr.mxu0 %v1838
        %3160 = vmatpush1.msra.mxu0 %v1837
        %3161 = vmatprep.subr.mxu0 %v1844
        %3162 = vmatpush1.msra.mxu0 %v1843
        %3163 = vmatprep.subr.mxu0 %v1850
        %3164 = vmatpush1.msra.mxu0 %v1849
        %3165 = vmatprep.subr.mxu0 %v1856
        %3166 = vmatpush1.msra.mxu0 %v1855
        %3167 = vmatprep.subr.mxu0 %v1862
        %3168 = vmatpush1.msra.mxu0 %v1861
        %3169 = vmatprep.subr.mxu0 %v1868
        %3170 = vmatpush1.msra.mxu0 %v1867
        %3171 = vmatprep.subr.mxu0 %v1874
        %3172 = vmatpush1.msra.mxu0 %v1873
        %3173 = vmatprep.mubr.f32.mxu0 %v1291
        %3174 = vmatmul.mubr.f32.gmra.mrb[0].mxu0 %v1290
        %v3175 = vpop.f32.mrb[0].mxu0
        %v3176 = vadd.f32 %v3105, %v3175
        %v3177 = vpop.f32.mrb[0].mxu0
        %v3178 = vadd.f32 %v3107, %v3177
        %3179 = vdwg.mxu0
        %3180 = vmatprep.subr.mxu0 %v1880
        %3181 = vmatpush1.msra.mxu0 %v1879
        %3182 = vmatprep.subr.mxu0 %v1886
        %3183 = vmatpush1.msra.mxu0 %v1885
        %3184 = vmatprep.subr.mxu0 %v1892
        %3185 = vmatpush1.msra.mxu0 %v1891
        %3186 = vmatprep.subr.mxu0 %v1898
        %3187 = vmatpush1.msra.mxu0 %v1897
        %3188 = vmatprep.subr.mxu0 %v1904
        %3189 = vmatpush1.msra.mxu0 %v1903
        %3190 = vmatprep.subr.mxu0 %v1910
        %3191 = vmatpush1.msra.mxu0 %v1909
        %3192 = vmatprep.subr.mxu0 %v1916
        %3193 = vmatpush1.msra.mxu0 %v1915
        %3194 = vmatprep.subr.mxu0 %v1922
        %3195 = vmatpush1.msra.mxu0 %v1921
        %3196 = vmatprep.subr.mxu0 %v1928
        %3197 = vmatpush1.msra.mxu0 %v1927
        %3198 = vmatprep.subr.mxu0 %v1934
        %3199 = vmatpush1.msra.mxu0 %v1933
        %3200 = vmatprep.subr.mxu0 %v1940
        %3201 = vmatpush1.msra.mxu0 %v1939
        %3202 = vmatprep.subr.mxu0 %v1946
        %3203 = vmatpush1.msra.mxu0 %v1945
        %3204 = vmatprep.subr.mxu0 %v1952
        %3205 = vmatpush1.msra.mxu0 %v1951
        %3206 = vmatprep.subr.mxu0 %v1958
        %3207 = vmatpush1.msra.mxu0 %v1957
        %3208 = vmatprep.subr.mxu0 %v1964
        %3209 = vmatpush1.msra.mxu0 %v1963
        %3210 = vmatprep.subr.mxu0 %v1970
        %3211 = vmatpush1.msra.mxu0 %v1969
        %3212 = vmatprep.subr.mxu0 %v1976
        %3213 = vmatpush1.msra.mxu0 %v1975
        %3214 = vmatprep.subr.mxu0 %v1982
        %3215 = vmatpush1.msra.mxu0 %v1981
        %3216 = vmatprep.subr.mxu0 %v1988
        %3217 = vmatpush1.msra.mxu0 %v1987
        %3218 = vmatprep.subr.mxu0 %v1994
        %3219 = vmatpush1.msra.mxu0 %v1993
        %3220 = vmatprep.subr.mxu0 %v2000
        %3221 = vmatpush1.msra.mxu0 %v1999
        %3222 = vmatprep.subr.mxu0 %v2006
        %3223 = vmatpush1.msra.mxu0 %v2005
        %3224 = vmatprep.subr.mxu0 %v2012
        %3225 = vmatpush1.msra.mxu0 %v2011
        %3226 = vmatprep.subr.mxu0 %v2018
        %3227 = vmatpush1.msra.mxu0 %v2017
        %3228 = vmatprep.subr.mxu0 %v2024
        %3229 = vmatpush1.msra.mxu0 %v2023
        %3230 = vmatprep.subr.mxu0 %v2030
        %3231 = vmatpush1.msra.mxu0 %v2029
        %3232 = vmatprep.subr.mxu0 %v2036
        %3233 = vmatpush1.msra.mxu0 %v2035
        %3234 = vmatprep.subr.mxu0 %v2042
        %3235 = vmatpush1.msra.mxu0 %v2041
        %3236 = vmatprep.subr.mxu0 %v2048
        %3237 = vmatpush1.msra.mxu0 %v2047
        %3238 = vmatprep.subr.mxu0 %v2054
        %3239 = vmatpush1.msra.mxu0 %v2053
        %3240 = vmatprep.subr.mxu0 %v2060
        %3241 = vmatpush1.msra.mxu0 %v2059
        %3242 = vmatprep.subr.mxu0 %v2066
        %3243 = vmatpush1.msra.mxu0 %v2065
        %3244 = vmatprep.mubr.f32.mxu0 %v1293
        %3245 = vmatmul.mubr.f32.gmra.mrb[0].mxu0 %v1292
        %v3246 = vpop.f32.mrb[0].mxu0
        %v3247 = vadd.f32 %v3176, %v3246
        %v3248 = vpop.f32.mrb[0].mxu0
        %v3249 = vadd.f32 %v3178, %v3248
        %3250 = vdwg.mxu0
        %3251 = vmatprep.subr.mxu0 %v2072
        %3252 = vmatpush1.msra.mxu0 %v2071
        %3253 = vmatprep.subr.mxu0 %v2078
        %3254 = vmatpush1.msra.mxu0 %v2077
        %3255 = vmatprep.subr.mxu0 %v2084
        %3256 = vmatpush1.msra.mxu0 %v2083
        %3257 = vmatprep.subr.mxu0 %v2090
        %3258 = vmatpush1.msra.mxu0 %v2089
        %3259 = vmatprep.subr.mxu0 %v2096
        %3260 = vmatpush1.msra.mxu0 %v2095
        %3261 = vmatprep.subr.mxu0 %v2102
        %3262 = vmatpush1.msra.mxu0 %v2101
        %3263 = vmatprep.subr.mxu0 %v2108
        %3264 = vmatpush1.msra.mxu0 %v2107
        %3265 = vmatprep.subr.mxu0 %v2114
        %3266 = vmatpush1.msra.mxu0 %v2113
        %3267 = vmatprep.subr.mxu0 %v2120
        %3268 = vmatpush1.msra.mxu0 %v2119
        %3269 = vmatprep.subr.mxu0 %v2126
        %3270 = vmatpush1.msra.mxu0 %v2125
        %3271 = vmatprep.subr.mxu0 %v2132
        %3272 = vmatpush1.msra.mxu0 %v2131
        %3273 = vmatprep.subr.mxu0 %v2138
        %3274 = vmatpush1.msra.mxu0 %v2137
        %3275 = vmatprep.subr.mxu0 %v2144
        %3276 = vmatpush1.msra.mxu0 %v2143
        %3277 = vmatprep.subr.mxu0 %v2150
        %3278 = vmatpush1.msra.mxu0 %v2149
        %3279 = vmatprep.subr.mxu0 %v2156
        %3280 = vmatpush1.msra.mxu0 %v2155
        %3281 = vmatprep.subr.mxu0 %v2162
        %3282 = vmatpush1.msra.mxu0 %v2161
        %3283 = vmatprep.subr.mxu0 %v2168
        %3284 = vmatpush1.msra.mxu0 %v2167
        %3285 = vmatprep.subr.mxu0 %v2174
        %3286 = vmatpush1.msra.mxu0 %v2173
        %3287 = vmatprep.subr.mxu0 %v2180
        %3288 = vmatpush1.msra.mxu0 %v2179
        %3289 = vmatprep.subr.mxu0 %v2186
        %3290 = vmatpush1.msra.mxu0 %v2185
        %3291 = vmatprep.subr.mxu0 %v2192
        %3292 = vmatpush1.msra.mxu0 %v2191
        %3293 = vmatprep.subr.mxu0 %v2198
        %3294 = vmatpush1.msra.mxu0 %v2197
        %3295 = vmatprep.subr.mxu0 %v2204
        %3296 = vmatpush1.msra.mxu0 %v2203
        %3297 = vmatprep.subr.mxu0 %v2210
        %3298 = vmatpush1.msra.mxu0 %v2209
        %3299 = vmatprep.subr.mxu0 %v2216
        %3300 = vmatpush1.msra.mxu0 %v2215
        %3301 = vmatprep.subr.mxu0 %v2222
        %3302 = vmatpush1.msra.mxu0 %v2221
        %3303 = vmatprep.subr.mxu0 %v2228
        %3304 = vmatpush1.msra.mxu0 %v2227
        %3305 = vmatprep.subr.mxu0 %v2234
        %3306 = vmatpush1.msra.mxu0 %v2233
        %3307 = vmatprep.subr.mxu0 %v2240
        %3308 = vmatpush1.msra.mxu0 %v2239
        %3309 = vmatprep.subr.mxu0 %v2246
        %3310 = vmatpush1.msra.mxu0 %v2245
        %3311 = vmatprep.subr.mxu0 %v2252
        %3312 = vmatpush1.msra.mxu0 %v2251
        %3313 = vmatprep.subr.mxu0 %v2258
        %3314 = vmatpush1.msra.mxu0 %v2257
        %3315 = vmatprep.mubr.f32.mxu0 %v1295
        %3316 = vmatmul.mubr.f32.gmra.mrb[0].mxu0 %v1294
        %v3317 = vpop.f32.mrb[0].mxu0
        %v3318 = vadd.f32 %v3247, %v3317
        %v3319 = vpop.f32.mrb[0].mxu0
        %v3320 = vadd.f32 %v3249, %v3319
        %3321 = vdwg.mxu0
        %3322 = vmatprep.subr.mxu0 %v2264
        %3323 = vmatpush1.msra.mxu0 %v2263
        %3324 = vmatprep.subr.mxu0 %v2270
        %3325 = vmatpush1.msra.mxu0 %v2269
        %3326 = vmatprep.subr.mxu0 %v2276
        %3327 = vmatpush1.msra.mxu0 %v2275
        %3328 = vmatprep.subr.mxu0 %v2282
        %3329 = vmatpush1.msra.mxu0 %v2281
        %3330 = vmatprep.subr.mxu0 %v2288
        %3331 = vmatpush1.msra.mxu0 %v2287
        %3332 = vmatprep.subr.mxu0 %v2294
        %3333 = vmatpush1.msra.mxu0 %v2293
        %3334 = vmatprep.subr.mxu0 %v2300
        %3335 = vmatpush1.msra.mxu0 %v2299
        %3336 = vmatprep.subr.mxu0 %v2306
        %3337 = vmatpush1.msra.mxu0 %v2305
        %3338 = vmatprep.subr.mxu0 %v2312
        %3339 = vmatpush1.msra.mxu0 %v2311
        %3340 = vmatprep.subr.mxu0 %v2318
        %3341 = vmatpush1.msra.mxu0 %v2317
        %3342 = vmatprep.subr.mxu0 %v2324
        %3343 = vmatpush1.msra.mxu0 %v2323
        %3344 = vmatprep.subr.mxu0 %v2330
        %3345 = vmatpush1.msra.mxu0 %v2329
        %3346 = vmatprep.subr.mxu0 %v2336
        %3347 = vmatpush1.msra.mxu0 %v2335
        %3348 = vmatprep.subr.mxu0 %v2342
        %3349 = vmatpush1.msra.mxu0 %v2341
        %3350 = vmatprep.subr.mxu0 %v2348
        %3351 = vmatpush1.msra.mxu0 %v2347
        %3352 = vmatprep.subr.mxu0 %v2354
        %3353 = vmatpush1.msra.mxu0 %v2353
        %3354 = vmatprep.subr.mxu0 %v2360
        %3355 = vmatpush1.msra.mxu0 %v2359
        %3356 = vmatprep.subr.mxu0 %v2366
        %3357 = vmatpush1.msra.mxu0 %v2365
        %3358 = vmatprep.subr.mxu0 %v2372
        %3359 = vmatpush1.msra.mxu0 %v2371
        %3360 = vmatprep.subr.mxu0 %v2378
        %3361 = vmatpush1.msra.mxu0 %v2377
        %3362 = vmatprep.subr.mxu0 %v2384
        %3363 = vmatpush1.msra.mxu0 %v2383
        %3364 = vmatprep.subr.mxu0 %v2390
        %3365 = vmatpush1.msra.mxu0 %v2389
        %3366 = vmatprep.subr.mxu0 %v2396
        %3367 = vmatpush1.msra.mxu0 %v2395
        %3368 = vmatprep.subr.mxu0 %v2402
        %3369 = vmatpush1.msra.mxu0 %v2401
        %3370 = vmatprep.subr.mxu0 %v2408
        %3371 = vmatpush1.msra.mxu0 %v2407
        %3372 = vmatprep.subr.mxu0 %v2414
        %3373 = vmatpush1.msra.mxu0 %v2413
        %3374 = vmatprep.subr.mxu0 %v2420
        %3375 = vmatpush1.msra.mxu0 %v2419
        %3376 = vmatprep.subr.mxu0 %v2426
        %3377 = vmatpush1.msra.mxu0 %v2425
        %3378 = vmatprep.subr.mxu0 %v2432
        %3379 = vmatpush1.msra.mxu0 %v2431
        %3380 = vmatprep.subr.mxu0 %v2438
        %3381 = vmatpush1.msra.mxu0 %v2437
        %3382 = vmatprep.subr.mxu0 %v2444
        %3383 = vmatpush1.msra.mxu0 %v2443
        %3384 = vmatprep.subr.mxu0 %v2450
        %3385 = vmatpush1.msra.mxu0 %v2449
        %3386 = vmatprep.mubr.f32.mxu0 %v1297
        %3387 = vmatmul.mubr.f32.gmra.mrb[0].mxu0 %v1296
        %v3388 = vpop.f32.mrb[0].mxu0
        %v3389 = vadd.f32 %v3318, %v3388
        %v3390 = vpop.f32.mrb[0].mxu0
        %v3391 = vadd.f32 %v3320, %v3390
        %3392 = vdwg.mxu0
        %3393 = vmatprep.subr.mxu0 %v2456
        %3394 = vmatpush1.msra.mxu0 %v2455
        %3395 = vmatprep.subr.mxu0 %v2462
        %3396 = vmatpush1.msra.mxu0 %v2461
        %3397 = vmatprep.subr.mxu0 %v2468
        %3398 = vmatpush1.msra.mxu0 %v2467
        %3399 = vmatprep.subr.mxu0 %v2474
        %3400 = vmatpush1.msra.mxu0 %v2473
        %3401 = vmatprep.subr.mxu0 %v2480
        %3402 = vmatpush1.msra.mxu0 %v2479
        %3403 = vmatprep.subr.mxu0 %v2486
        %3404 = vmatpush1.msra.mxu0 %v2485
        %3405 = vmatprep.subr.mxu0 %v2492
        %3406 = vmatpush1.msra.mxu0 %v2491
        %3407 = vmatprep.subr.mxu0 %v2498
        %3408 = vmatpush1.msra.mxu0 %v2497
        %3409 = vmatprep.subr.mxu0 %v2504
        %3410 = vmatpush1.msra.mxu0 %v2503
        %3411 = vmatprep.subr.mxu0 %v2510
        %3412 = vmatpush1.msra.mxu0 %v2509
        %3413 = vmatprep.subr.mxu0 %v2516
        %3414 = vmatpush1.msra.mxu0 %v2515
        %3415 = vmatprep.subr.mxu0 %v2522
        %3416 = vmatpush1.msra.mxu0 %v2521
        %3417 = vmatprep.subr.mxu0 %v2528
        %3418 = vmatpush1.msra.mxu0 %v2527
        %3419 = vmatprep.subr.mxu0 %v2534
        %3420 = vmatpush1.msra.mxu0 %v2533
        %3421 = vmatprep.subr.mxu0 %v2540
        %3422 = vmatpush1.msra.mxu0 %v2539
        %3423 = vmatprep.subr.mxu0 %v2546
        %3424 = vmatpush1.msra.mxu0 %v2545
        %3425 = vmatprep.subr.mxu0 %v2552
        %3426 = vmatpush1.msra.mxu0 %v2551
        %3427 = vmatprep.subr.mxu0 %v2558
        %3428 = vmatpush1.msra.mxu0 %v2557
        %3429 = vmatprep.subr.mxu0 %v2564
        %3430 = vmatpush1.msra.mxu0 %v2563
        %3431 = vmatprep.subr.mxu0 %v2570
        %3432 = vmatpush1.msra.mxu0 %v2569
        %3433 = vmatprep.subr.mxu0 %v2576
        %3434 = vmatpush1.msra.mxu0 %v2575
        %3435 = vmatprep.subr.mxu0 %v2582
        %3436 = vmatpush1.msra.mxu0 %v2581
        %3437 = vmatprep.subr.mxu0 %v2588
        %3438 = vmatpush1.msra.mxu0 %v2587
        %3439 = vmatprep.subr.mxu0 %v2594
        %3440 = vmatpush1.msra.mxu0 %v2593
        %3441 = vmatprep.subr.mxu0 %v2600
        %3442 = vmatpush1.msra.mxu0 %v2599
        %3443 = vmatprep.subr.mxu0 %v2606
        %3444 = vmatpush1.msra.mxu0 %v2605
        %3445 = vmatprep.subr.mxu0 %v2612
        %3446 = vmatpush1.msra.mxu0 %v2611
        %3447 = vmatprep.subr.mxu0 %v2618
        %3448 = vmatpush1.msra.mxu0 %v2617
        %3449 = vmatprep.subr.mxu0 %v2624
        %3450 = vmatpush1.msra.mxu0 %v2623
        %3451 = vmatprep.subr.mxu0 %v2630
        %3452 = vmatpush1.msra.mxu0 %v2629
        %3453 = vmatprep.subr.mxu0 %v2636
        %3454 = vmatpush1.msra.mxu0 %v2635
        %3455 = vmatprep.subr.mxu0 %v2642
        %3456 = vmatpush1.msra.mxu0 %v2641
        %3457 = vmatprep.mubr.f32.mxu0 %v1299
        %3458 = vmatmul.mubr.f32.gmra.mrb[0].mxu0 %v1298
        %v3459 = vpop.f32.mrb[0].mxu0
        %v3460 = vadd.f32 %v3389, %v3459
        %v3461 = vpop.f32.mrb[0].mxu0
        %v3462 = vadd.f32 %v3391, %v3461
        %3463 = vdwg.mxu0
        %3464 = vmatprep.subr.mxu0 %v2648
        %3465 = vmatpush1.msra.mxu0 %v2647
        %3466 = vmatprep.subr.mxu0 %v2654
        %3467 = vmatpush1.msra.mxu0 %v2653
        %3468 = vmatprep.subr.mxu0 %v2660
        %3469 = vmatpush1.msra.mxu0 %v2659
        %3470 = vmatprep.subr.mxu0 %v2666
        %3471 = vmatpush1.msra.mxu0 %v2665
        %3472 = vmatprep.subr.mxu0 %v2672
        %3473 = vmatpush1.msra.mxu0 %v2671
        %3474 = vmatprep.subr.mxu0 %v2678
        %3475 = vmatpush1.msra.mxu0 %v2677
        %3476 = vmatprep.subr.mxu0 %v2684
        %3477 = vmatpush1.msra.mxu0 %v2683
        %3478 = vmatprep.subr.mxu0 %v2690
        %3479 = vmatpush1.msra.mxu0 %v2689
        %3480 = vmatprep.subr.mxu0 %v2696
        %3481 = vmatpush1.msra.mxu0 %v2695
        %3482 = vmatprep.subr.mxu0 %v2702
        %3483 = vmatpush1.msra.mxu0 %v2701
        %3484 = vmatprep.subr.mxu0 %v2708
        %3485 = vmatpush1.msra.mxu0 %v2707
        %3486 = vmatprep.subr.mxu0 %v2714
        %3487 = vmatpush1.msra.mxu0 %v2713
        %3488 = vmatprep.subr.mxu0 %v2720
        %3489 = vmatpush1.msra.mxu0 %v2719
        %3490 = vmatprep.subr.mxu0 %v2726
        %3491 = vmatpush1.msra.mxu0 %v2725
        %3492 = vmatprep.subr.mxu0 %v2732
        %3493 = vmatpush1.msra.mxu0 %v2731
        %3494 = vmatprep.subr.mxu0 %v2738
        %3495 = vmatpush1.msra.mxu0 %v2737
        %3496 = vmatprep.subr.mxu0 %v2744
        %3497 = vmatpush1.msra.mxu0 %v2743
        %3498 = vmatprep.subr.mxu0 %v2750
        %3499 = vmatpush1.msra.mxu0 %v2749
        %3500 = vmatprep.subr.mxu0 %v2756
        %3501 = vmatpush1.msra.mxu0 %v2755
        %3502 = vmatprep.subr.mxu0 %v2762
        %3503 = vmatpush1.msra.mxu0 %v2761
        %3504 = vmatprep.subr.mxu0 %v2768
        %3505 = vmatpush1.msra.mxu0 %v2767
        %3506 = vmatprep.subr.mxu0 %v2774
        %3507 = vmatpush1.msra.mxu0 %v2773
        %3508 = vmatprep.subr.mxu0 %v2780
        %3509 = vmatpush1.msra.mxu0 %v2779
        %3510 = vmatprep.subr.mxu0 %v2786
        %3511 = vmatpush1.msra.mxu0 %v2785
        %3512 = vmatprep.subr.mxu0 %v2792
        %3513 = vmatpush1.msra.mxu0 %v2791
        %3514 = vmatprep.subr.mxu0 %v2798
        %3515 = vmatpush1.msra.mxu0 %v2797
        %3516 = vmatprep.subr.mxu0 %v2804
        %3517 = vmatpush1.msra.mxu0 %v2803
        %3518 = vmatprep.subr.mxu0 %v2810
        %3519 = vmatpush1.msra.mxu0 %v2809
        %3520 = vmatprep.subr.mxu0 %v2816
        %3521 = vmatpush1.msra.mxu0 %v2815
        %3522 = vmatprep.subr.mxu0 %v2822
        %3523 = vmatpush1.msra.mxu0 %v2821
        %3524 = vmatprep.subr.mxu0 %v2828
        %3525 = vmatpush1.msra.mxu0 %v2827
        %3526 = vmatprep.subr.mxu0 %v2834
        %3527 = vmatpush1.msra.mxu0 %v2833
        %3528 = vmatprep.mubr.f32.mxu0 %v1301
        %3529 = vmatmul.mubr.f32.gmra.mrb[0].mxu0 %v1300
        %v3530 = vpop.f32.mrb[0].mxu0
        %v3531 = vadd.f32 %v3460, %v3530
        %v3532 = vpop.f32.mrb[0].mxu0
        %v3533 = vadd.f32 %v3462, %v3532
        %3534 = vdwg.mxu0
        %3535 = vmatprep.subr.mxu0 %v2840
        %3536 = vmatpush1.msra.mxu0 %v2839
        %3537 = vmatprep.subr.mxu0 %v2846
        %3538 = vmatpush1.msra.mxu0 %v2845
        %3539 = vmatprep.subr.mxu0 %v2852
        %3540 = vmatpush1.msra.mxu0 %v2851
        %3541 = vmatprep.subr.mxu0 %v2858
        %3542 = vmatpush1.msra.mxu0 %v2857
        %3543 = vmatprep.subr.mxu0 %v2864
        %3544 = vmatpush1.msra.mxu0 %v2863
        %3545 = vmatprep.subr.mxu0 %v2870
        %3546 = vmatpush1.msra.mxu0 %v2869
        %3547 = vmatprep.subr.mxu0 %v2876
        %3548 = vmatpush1.msra.mxu0 %v2875
        %3549 = vmatprep.subr.mxu0 %v2882
        %3550 = vmatpush1.msra.mxu0 %v2881
        %3551 = vmatprep.subr.mxu0 %v2888
        %3552 = vmatpush1.msra.mxu0 %v2887
        %3553 = vmatprep.subr.mxu0 %v2894
        %3554 = vmatpush1.msra.mxu0 %v2893
        %3555 = vmatprep.subr.mxu0 %v2900
        %3556 = vmatpush1.msra.mxu0 %v2899
        %3557 = vmatprep.subr.mxu0 %v2906
        %3558 = vmatpush1.msra.mxu0 %v2905
        %3559 = vmatprep.subr.mxu0 %v2912
        %3560 = vmatpush1.msra.mxu0 %v2911
        %3561 = vmatprep.subr.mxu0 %v2918
        %3562 = vmatpush1.msra.mxu0 %v2917
        %3563 = vmatprep.subr.mxu0 %v2924
        %3564 = vmatpush1.msra.mxu0 %v2923
        %3565 = vmatprep.subr.mxu0 %v2930
        %3566 = vmatpush1.msra.mxu0 %v2929
        %3567 = vmatprep.subr.mxu0 0.0
        %3568 = vmatpush1.msra.mxu0 0.0
        %3569 = vmatprep.subr.mxu0 0.0
        %3570 = vmatpush1.msra.mxu0 0.0
        %3571 = vmatprep.subr.mxu0 0.0
        %3572 = vmatpush1.msra.mxu0 0.0
        %3573 = vmatprep.subr.mxu0 0.0
        %3574 = vmatpush1.msra.mxu0 0.0
        %3575 = vmatprep.subr.mxu0 0.0
        %3576 = vmatpush1.msra.mxu0 0.0
        %3577 = vmatprep.subr.mxu0 0.0
        %3578 = vmatpush1.msra.mxu0 0.0
        %3579 = vmatprep.subr.mxu0 0.0
        %3580 = vmatpush1.msra.mxu0 0.0
        %3581 = vmatprep.subr.mxu0 0.0
        %3582 = vmatpush1.msra.mxu0 0.0
        %3583 = vmatprep.subr.mxu0 0.0
        %3584 = vmatpush1.msra.mxu0 0.0
        %3585 = vmatprep.subr.mxu0 0.0
        %3586 = vmatpush1.msra.mxu0 0.0
        %3587 = vmatprep.subr.mxu0 0.0
        %3588 = vmatpush1.msra.mxu0 0.0
        %3589 = vmatprep.subr.mxu0 0.0
        %3590 = vmatpush1.msra.mxu0 0.0
        %3591 = vmatprep.subr.mxu0 0.0
        %3592 = vmatpush1.msra.mxu0 0.0
        %3593 = vmatprep.subr.mxu0 0.0
        %3594 = vmatpush1.msra.mxu0 0.0
        %3595 = vmatprep.subr.mxu0 0.0
        %3596 = vmatpush1.msra.mxu0 0.0
        %3597 = vmatprep.subr.mxu0 0.0
        %3598 = vmatpush1.msra.mxu0 0.0
        %3599 = vmatprep.mubr.f32.mxu0 0.0
        %3600 = vmatmul.mubr.f32.gmra.mrb[0].mxu0 %v1302
        %v3601 = vpop.f32.mrb[0].mxu0
        %v3602 = vadd.f32 %v3531, %v3601
        %v3603 = vpop.f32.mrb[0].mxu0
        %v3604 = vadd.f32 %v3533, %v3603
        %3605 = vdwg.mxu0
        %3606 = vmatprep.subr.mxu0 %v1306
        %3607 = vmatpush1.msra.mxu0 %v1305
        %3608 = vmatprep.subr.mxu0 %v1312
        %3609 = vmatpush1.msra.mxu0 %v1311
        %3610 = vmatprep.subr.mxu0 %v1318
        %3611 = vmatpush1.msra.mxu0 %v1317
        %3612 = vmatprep.subr.mxu0 %v1324
        %3613 = vmatpush1.msra.mxu0 %v1323
        %3614 = vmatprep.subr.mxu0 %v1330
        %3615 = vmatpush1.msra.mxu0 %v1329
        %3616 = vmatprep.subr.mxu0 %v1336
        %3617 = vmatpush1.msra.mxu0 %v1335
        %3618 = vmatprep.subr.mxu0 %v1342
        %3619 = vmatpush1.msra.mxu0 %v1341
        %3620 = vmatprep.subr.mxu0 %v1348
        %3621 = vmatpush1.msra.mxu0 %v1347
        %3622 = vmatprep.subr.mxu0 %v1354
        %3623 = vmatpush1.msra.mxu0 %v1353
        %3624 = vmatprep.subr.mxu0 %v1360
        %3625 = vmatpush1.msra.mxu0 %v1359
        %3626 = vmatprep.subr.mxu0 %v1366
        %3627 = vmatpush1.msra.mxu0 %v1365
        %3628 = vmatprep.subr.mxu0 %v1372
        %3629 = vmatpush1.msra.mxu0 %v1371
        %3630 = vmatprep.subr.mxu0 %v1378
        %3631 = vmatpush1.msra.mxu0 %v1377
        %3632 = vmatprep.subr.mxu0 %v1384
        %3633 = vmatpush1.msra.mxu0 %v1383
        %3634 = vmatprep.subr.mxu0 %v1390
        %3635 = vmatpush1.msra.mxu0 %v1389
        %3636 = vmatprep.subr.mxu0 %v1396
        %3637 = vmatpush1.msra.mxu0 %v1395
        %3638 = vmatprep.subr.mxu0 %v1402
        %3639 = vmatpush1.msra.mxu0 %v1401
        %3640 = vmatprep.subr.mxu0 %v1408
        %3641 = vmatpush1.msra.mxu0 %v1407
        %3642 = vmatprep.subr.mxu0 %v1414
        %3643 = vmatpush1.msra.mxu0 %v1413
        %3644 = vmatprep.subr.mxu0 %v1420
        %3645 = vmatpush1.msra.mxu0 %v1419
        %3646 = vmatprep.subr.mxu0 %v1426
        %3647 = vmatpush1.msra.mxu0 %v1425
        %3648 = vmatprep.subr.mxu0 %v1432
        %3649 = vmatpush1.msra.mxu0 %v1431
        %3650 = vmatprep.subr.mxu0 %v1438
        %3651 = vmatpush1.msra.mxu0 %v1437
        %3652 = vmatprep.subr.mxu0 %v1444
        %3653 = vmatpush1.msra.mxu0 %v1443
        %3654 = vmatprep.subr.mxu0 %v1450
        %3655 = vmatpush1.msra.mxu0 %v1449
        %3656 = vmatprep.subr.mxu0 %v1456
        %3657 = vmatpush1.msra.mxu0 %v1455
        %3658 = vmatprep.subr.mxu0 %v1462
        %3659 = vmatpush1.msra.mxu0 %v1461
        %3660 = vmatprep.subr.mxu0 %v1468
        %3661 = vmatpush1.msra.mxu0 %v1467
        %3662 = vmatprep.subr.mxu0 %v1474
        %3663 = vmatpush1.msra.mxu0 %v1473
        %3664 = vmatprep.subr.mxu0 %v1480
        %3665 = vmatpush1.msra.mxu0 %v1479
        %3666 = vmatprep.subr.mxu0 %v1486
        %3667 = vmatpush1.msra.mxu0 %v1485
        %3668 = vmatprep.subr.mxu0 %v1492
        %3669 = vmatpush1.msra.mxu0 %v1491
        %3670 = vmatprep.mubr.f32.mxu0 %v1287
        %3671 = vmatmul.mubr.f32.gmra.mrb[0].mxu0 %v1286
        %v3672 = vpop.f32.mrb[0].mxu0
        %v3673 = vadd.f32 %v2948, %v3672
        %v3674 = vpop.f32.mrb[0].mxu0
        %v3675 = vadd.f32 %v2952, %v3674
        %3676 = vdwg.mxu0
        %3677 = vmatprep.subr.mxu0 %v1498
        %3678 = vmatpush1.msra.mxu0 %v1497
        %3679 = vmatprep.subr.mxu0 %v1504
        %3680 = vmatpush1.msra.mxu0 %v1503
        %3681 = vmatprep.subr.mxu0 %v1510
        %3682 = vmatpush1.msra.mxu0 %v1509
        %3683 = vmatprep.subr.mxu0 %v1516
        %3684 = vmatpush1.msra.mxu0 %v1515
        %3685 = vmatprep.subr.mxu0 %v1522
        %3686 = vmatpush1.msra.mxu0 %v1521
        %3687 = vmatprep.subr.mxu0 %v1528
        %3688 = vmatpush1.msra.mxu0 %v1527
        %3689 = vmatprep.subr.mxu0 %v1534
        %3690 = vmatpush1.msra.mxu0 %v1533
        %3691 = vmatprep.subr.mxu0 %v1540
        %3692 = vmatpush1.msra.mxu0 %v1539
        %3693 = vmatprep.subr.mxu0 %v1546
        %3694 = vmatpush1.msra.mxu0 %v1545
        %3695 = vmatprep.subr.mxu0 %v1552
        %3696 = vmatpush1.msra.mxu0 %v1551
        %3697 = vmatprep.subr.mxu0 %v1558
        %3698 = vmatpush1.msra.mxu0 %v1557
        %3699 = vmatprep.subr.mxu0 %v1564
        %3700 = vmatpush1.msra.mxu0 %v1563
        %3701 = vmatprep.subr.mxu0 %v1570
        %3702 = vmatpush1.msra.mxu0 %v1569
        %3703 = vmatprep.subr.mxu0 %v1576
        %3704 = vmatpush1.msra.mxu0 %v1575
        %3705 = vmatprep.subr.mxu0 %v1582
        %3706 = vmatpush1.msra.mxu0 %v1581
        %3707 = vmatprep.subr.mxu0 %v1588
        %3708 = vmatpush1.msra.mxu0 %v1587
        %3709 = vmatprep.subr.mxu0 %v1594
        %3710 = vmatpush1.msra.mxu0 %v1593
        %3711 = vmatprep.subr.mxu0 %v1600
        %3712 = vmatpush1.msra.mxu0 %v1599
        %3713 = vmatprep.subr.mxu0 %v1606
        %3714 = vmatpush1.msra.mxu0 %v1605
        %3715 = vmatprep.subr.mxu0 %v1612
        %3716 = vmatpush1.msra.mxu0 %v1611
        %3717 = vmatprep.subr.mxu0 %v1618
        %3718 = vmatpush1.msra.mxu0 %v1617
        %3719 = vmatprep.subr.mxu0 %v1624
        %3720 = vmatpush1.msra.mxu0 %v1623
        %3721 = vmatprep.subr.mxu0 %v1630
        %3722 = vmatpush1.msra.mxu0 %v1629
        %3723 = vmatprep.subr.mxu0 %v1636
        %3724 = vmatpush1.msra.mxu0 %v1635
        %3725 = vmatprep.subr.mxu0 %v1642
        %3726 = vmatpush1.msra.mxu0 %v1641
        %3727 = vmatprep.subr.mxu0 %v1648
        %3728 = vmatpush1.msra.mxu0 %v1647
        %3729 = vmatprep.subr.mxu0 %v1654
        %3730 = vmatpush1.msra.mxu0 %v1653
        %3731 = vmatprep.subr.mxu0 %v1660
        %3732 = vmatpush1.msra.mxu0 %v1659
        %3733 = vmatprep.subr.mxu0 %v1666
        %3734 = vmatpush1.msra.mxu0 %v1665
        %3735 = vmatprep.subr.mxu0 %v1672
        %3736 = vmatpush1.msra.mxu0 %v1671
        %3737 = vmatprep.subr.mxu0 %v1678
        %3738 = vmatpush1.msra.mxu0 %v1677
        %3739 = vmatprep.subr.mxu0 %v1684
        %3740 = vmatpush1.msra.mxu0 %v1683
        %3741 = vmatprep.mubr.f32.mxu0 %v1289
        %3742 = vmatmul.mubr.f32.gmra.mrb[0].mxu0 %v1288
        %v3743 = vpop.f32.mrb[0].mxu0
        %v3744 = vadd.f32 %v3673, %v3743
        %v3745 = vpop.f32.mrb[0].mxu0
        %v3746 = vadd.f32 %v3675, %v3745
        %3747 = vdwg.mxu0
        %3748 = vmatprep.subr.mxu0 %v1690
        %3749 = vmatpush1.msra.mxu0 %v1689
        %3750 = vmatprep.subr.mxu0 %v1696
        %3751 = vmatpush1.msra.mxu0 %v1695
        %3752 = vmatprep.subr.mxu0 %v1702
        %3753 = vmatpush1.msra.mxu0 %v1701
        %3754 = vmatprep.subr.mxu0 %v1708
        %3755 = vmatpush1.msra.mxu0 %v1707
        %3756 = vmatprep.subr.mxu0 %v1714
        %3757 = vmatpush1.msra.mxu0 %v1713
        %3758 = vmatprep.subr.mxu0 %v1720
        %3759 = vmatpush1.msra.mxu0 %v1719
        %3760 = vmatprep.subr.mxu0 %v1726
        %3761 = vmatpush1.msra.mxu0 %v1725
        %3762 = vmatprep.subr.mxu0 %v1732
        %3763 = vmatpush1.msra.mxu0 %v1731
        %3764 = vmatprep.subr.mxu0 %v1738
        %3765 = vmatpush1.msra.mxu0 %v1737
        %3766 = vmatprep.subr.mxu0 %v1744
        %3767 = vmatpush1.msra.mxu0 %v1743
        %3768 = vmatprep.subr.mxu0 %v1750
        %3769 = vmatpush1.msra.mxu0 %v1749
        %3770 = vmatprep.subr.mxu0 %v1756
        %3771 = vmatpush1.msra.mxu0 %v1755
        %3772 = vmatprep.subr.mxu0 %v1762
        %3773 = vmatpush1.msra.mxu0 %v1761
        %3774 = vmatprep.subr.mxu0 %v1768
        %3775 = vmatpush1.msra.mxu0 %v1767
        %3776 = vmatprep.subr.mxu0 %v1774
        %3777 = vmatpush1.msra.mxu0 %v1773
        %3778 = vmatprep.subr.mxu0 %v1780
        %3779 = vmatpush1.msra.mxu0 %v1779
        %3780 = vmatprep.subr.mxu0 %v1786
        %3781 = vmatpush1.msra.mxu0 %v1785
        %3782 = vmatprep.subr.mxu0 %v1792
        %3783 = vmatpush1.msra.mxu0 %v1791
        %3784 = vmatprep.subr.mxu0 %v1798
        %3785 = vmatpush1.msra.mxu0 %v1797
        %3786 = vmatprep.subr.mxu0 %v1804
        %3787 = vmatpush1.msra.mxu0 %v1803
        %3788 = vmatprep.subr.mxu0 %v1810
        %3789 = vmatpush1.msra.mxu0 %v1809
        %3790 = vmatprep.subr.mxu0 %v1816
        %3791 = vmatpush1.msra.mxu0 %v1815
        %3792 = vmatprep.subr.mxu0 %v1822
        %3793 = vmatpush1.msra.mxu0 %v1821
        %3794 = vmatprep.subr.mxu0 %v1828
        %3795 = vmatpush1.msra.mxu0 %v1827
        %3796 = vmatprep.subr.mxu0 %v1834
        %3797 = vmatpush1.msra.mxu0 %v1833
        %3798 = vmatprep.subr.mxu0 %v1840
        %3799 = vmatpush1.msra.mxu0 %v1839
        %3800 = vmatprep.subr.mxu0 %v1846
        %3801 = vmatpush1.msra.mxu0 %v1845
        %3802 = vmatprep.subr.mxu0 %v1852
        %3803 = vmatpush1.msra.mxu0 %v1851
        %3804 = vmatprep.subr.mxu0 %v1858
        %3805 = vmatpush1.msra.mxu0 %v1857
        %3806 = vmatprep.subr.mxu0 %v1864
        %3807 = vmatpush1.msra.mxu0 %v1863
        %3808 = vmatprep.subr.mxu0 %v1870
        %3809 = vmatpush1.msra.mxu0 %v1869
        %3810 = vmatprep.subr.mxu0 %v1876
        %3811 = vmatpush1.msra.mxu0 %v1875
        %3812 = vmatprep.mubr.f32.mxu0 %v1291
        %3813 = vmatmul.mubr.f32.gmra.mrb[0].mxu0 %v1290
        %v3814 = vpop.f32.mrb[0].mxu0
        %v3815 = vadd.f32 %v3744, %v3814
        %v3816 = vpop.f32.mrb[0].mxu0
        %v3817 = vadd.f32 %v3746, %v3816
        %3818 = vdwg.mxu0
        %3819 = vmatprep.subr.mxu0 %v1882
        %3820 = vmatpush1.msra.mxu0 %v1881
        %3821 = vmatprep.subr.mxu0 %v1888
        %3822 = vmatpush1.msra.mxu0 %v1887
        %3823 = vmatprep.subr.mxu0 %v1894
        %3824 = vmatpush1.msra.mxu0 %v1893
        %3825 = vmatprep.subr.mxu0 %v1900
        %3826 = vmatpush1.msra.mxu0 %v1899
        %3827 = vmatprep.subr.mxu0 %v1906
        %3828 = vmatpush1.msra.mxu0 %v1905
        %3829 = vmatprep.subr.mxu0 %v1912
        %3830 = vmatpush1.msra.mxu0 %v1911
        %3831 = vmatprep.subr.mxu0 %v1918
        %3832 = vmatpush1.msra.mxu0 %v1917
        %3833 = vmatprep.subr.mxu0 %v1924
        %3834 = vmatpush1.msra.mxu0 %v1923
        %3835 = vmatprep.subr.mxu0 %v1930
        %3836 = vmatpush1.msra.mxu0 %v1929
        %3837 = vmatprep.subr.mxu0 %v1936
        %3838 = vmatpush1.msra.mxu0 %v1935
        %3839 = vmatprep.subr.mxu0 %v1942
        %3840 = vmatpush1.msra.mxu0 %v1941
        %3841 = vmatprep.subr.mxu0 %v1948
        %3842 = vmatpush1.msra.mxu0 %v1947
        %3843 = vmatprep.subr.mxu0 %v1954
        %3844 = vmatpush1.msra.mxu0 %v1953
        %3845 = vmatprep.subr.mxu0 %v1960
        %3846 = vmatpush1.msra.mxu0 %v1959
        %3847 = vmatprep.subr.mxu0 %v1966
        %3848 = vmatpush1.msra.mxu0 %v1965
        %3849 = vmatprep.subr.mxu0 %v1972
        %3850 = vmatpush1.msra.mxu0 %v1971
        %3851 = vmatprep.subr.mxu0 %v1978
        %3852 = vmatpush1.msra.mxu0 %v1977
        %3853 = vmatprep.subr.mxu0 %v1984
        %3854 = vmatpush1.msra.mxu0 %v1983
        %3855 = vmatprep.subr.mxu0 %v1990
        %3856 = vmatpush1.msra.mxu0 %v1989
        %3857 = vmatprep.subr.mxu0 %v1996
        %3858 = vmatpush1.msra.mxu0 %v1995
        %3859 = vmatprep.subr.mxu0 %v2002
        %3860 = vmatpush1.msra.mxu0 %v2001
        %3861 = vmatprep.subr.mxu0 %v2008
        %3862 = vmatpush1.msra.mxu0 %v2007
        %3863 = vmatprep.subr.mxu0 %v2014
        %3864 = vmatpush1.msra.mxu0 %v2013
        %3865 = vmatprep.subr.mxu0 %v2020
        %3866 = vmatpush1.msra.mxu0 %v2019
        %3867 = vmatprep.subr.mxu0 %v2026
        %3868 = vmatpush1.msra.mxu0 %v2025
        %3869 = vmatprep.subr.mxu0 %v2032
        %3870 = vmatpush1.msra.mxu0 %v2031
        %3871 = vmatprep.subr.mxu0 %v2038
        %3872 = vmatpush1.msra.mxu0 %v2037
        %3873 = vmatprep.subr.mxu0 %v2044
        %3874 = vmatpush1.msra.mxu0 %v2043
        %3875 = vmatprep.subr.mxu0 %v2050
        %3876 = vmatpush1.msra.mxu0 %v2049
        %3877 = vmatprep.subr.mxu0 %v2056
        %3878 = vmatpush1.msra.mxu0 %v2055
        %3879 = vmatprep.subr.mxu0 %v2062
        %3880 = vmatpush1.msra.mxu0 %v2061
        %3881 = vmatprep.subr.mxu0 %v2068
        %3882 = vmatpush1.msra.mxu0 %v2067
        %3883 = vmatprep.mubr.f32.mxu0 %v1293
        %3884 = vmatmul.mubr.f32.gmra.mrb[0].mxu0 %v1292
        %v3885 = vpop.f32.mrb[0].mxu0
        %v3886 = vadd.f32 %v3815, %v3885
        %v3887 = vpop.f32.mrb[0].mxu0
        %v3888 = vadd.f32 %v3817, %v3887
        %3889 = vdwg.mxu0
        %3890 = vmatprep.subr.mxu0 %v2074
        %3891 = vmatpush1.msra.mxu0 %v2073
        %3892 = vmatprep.subr.mxu0 %v2080
        %3893 = vmatpush1.msra.mxu0 %v2079
        %3894 = vmatprep.subr.mxu0 %v2086
        %3895 = vmatpush1.msra.mxu0 %v2085
        %3896 = vmatprep.subr.mxu0 %v2092
        %3897 = vmatpush1.msra.mxu0 %v2091
        %3898 = vmatprep.subr.mxu0 %v2098
        %3899 = vmatpush1.msra.mxu0 %v2097
        %3900 = vmatprep.subr.mxu0 %v2104
        %3901 = vmatpush1.msra.mxu0 %v2103
        %3902 = vmatprep.subr.mxu0 %v2110
        %3903 = vmatpush1.msra.mxu0 %v2109
        %3904 = vmatprep.subr.mxu0 %v2116
        %3905 = vmatpush1.msra.mxu0 %v2115
        %3906 = vmatprep.subr.mxu0 %v2122
        %3907 = vmatpush1.msra.mxu0 %v2121
        %3908 = vmatprep.subr.mxu0 %v2128
        %3909 = vmatpush1.msra.mxu0 %v2127
        %3910 = vmatprep.subr.mxu0 %v2134
        %3911 = vmatpush1.msra.mxu0 %v2133
        %3912 = vmatprep.subr.mxu0 %v2140
        %3913 = vmatpush1.msra.mxu0 %v2139
        %3914 = vmatprep.subr.mxu0 %v2146
        %3915 = vmatpush1.msra.mxu0 %v2145
        %3916 = vmatprep.subr.mxu0 %v2152
        %3917 = vmatpush1.msra.mxu0 %v2151
        %3918 = vmatprep.subr.mxu0 %v2158
        %3919 = vmatpush1.msra.mxu0 %v2157
        %3920 = vmatprep.subr.mxu0 %v2164
        %3921 = vmatpush1.msra.mxu0 %v2163
        %3922 = vmatprep.subr.mxu0 %v2170
        %3923 = vmatpush1.msra.mxu0 %v2169
        %3924 = vmatprep.subr.mxu0 %v2176
        %3925 = vmatpush1.msra.mxu0 %v2175
        %3926 = vmatprep.subr.mxu0 %v2182
        %3927 = vmatpush1.msra.mxu0 %v2181
        %3928 = vmatprep.subr.mxu0 %v2188
        %3929 = vmatpush1.msra.mxu0 %v2187
        %3930 = vmatprep.subr.mxu0 %v2194
        %3931 = vmatpush1.msra.mxu0 %v2193
        %3932 = vmatprep.subr.mxu0 %v2200
        %3933 = vmatpush1.msra.mxu0 %v2199
        %3934 = vmatprep.subr.mxu0 %v2206
        %3935 = vmatpush1.msra.mxu0 %v2205
        %3936 = vmatprep.subr.mxu0 %v2212
        %3937 = vmatpush1.msra.mxu0 %v2211
        %3938 = vmatprep.subr.mxu0 %v2218
        %3939 = vmatpush1.msra.mxu0 %v2217
        %3940 = vmatprep.subr.mxu0 %v2224
        %3941 = vmatpush1.msra.mxu0 %v2223
        %3942 = vmatprep.subr.mxu0 %v2230
        %3943 = vmatpush1.msra.mxu0 %v2229
        %3944 = vmatprep.subr.mxu0 %v2236
        %3945 = vmatpush1.msra.mxu0 %v2235
        %3946 = vmatprep.subr.mxu0 %v2242
        %3947 = vmatpush1.msra.mxu0 %v2241
        %3948 = vmatprep.subr.mxu0 %v2248
        %3949 = vmatpush1.msra.mxu0 %v2247
        %3950 = vmatprep.subr.mxu0 %v2254
        %3951 = vmatpush1.msra.mxu0 %v2253
        %3952 = vmatprep.subr.mxu0 %v2260
        %3953 = vmatpush1.msra.mxu0 %v2259
        %3954 = vmatprep.mubr.f32.mxu0 %v1295
        %3955 = vmatmul.mubr.f32.gmra.mrb[0].mxu0 %v1294
        %v3956 = vpop.f32.mrb[0].mxu0
        %v3957 = vadd.f32 %v3886, %v3956
        %v3958 = vpop.f32.mrb[0].mxu0
        %v3959 = vadd.f32 %v3888, %v3958
        %3960 = vdwg.mxu0
        %3961 = vmatprep.subr.mxu0 %v2266
        %3962 = vmatpush1.msra.mxu0 %v2265
        %3963 = vmatprep.subr.mxu0 %v2272
        %3964 = vmatpush1.msra.mxu0 %v2271
        %3965 = vmatprep.subr.mxu0 %v2278
        %3966 = vmatpush1.msra.mxu0 %v2277
        %3967 = vmatprep.subr.mxu0 %v2284
        %3968 = vmatpush1.msra.mxu0 %v2283
        %3969 = vmatprep.subr.mxu0 %v2290
        %3970 = vmatpush1.msra.mxu0 %v2289
        %3971 = vmatprep.subr.mxu0 %v2296
        %3972 = vmatpush1.msra.mxu0 %v2295
        %3973 = vmatprep.subr.mxu0 %v2302
        %3974 = vmatpush1.msra.mxu0 %v2301
        %3975 = vmatprep.subr.mxu0 %v2308
        %3976 = vmatpush1.msra.mxu0 %v2307
        %3977 = vmatprep.subr.mxu0 %v2314
        %3978 = vmatpush1.msra.mxu0 %v2313
        %3979 = vmatprep.subr.mxu0 %v2320
        %3980 = vmatpush1.msra.mxu0 %v2319
        %3981 = vmatprep.subr.mxu0 %v2326
        %3982 = vmatpush1.msra.mxu0 %v2325
        %3983 = vmatprep.subr.mxu0 %v2332
        %3984 = vmatpush1.msra.mxu0 %v2331
        %3985 = vmatprep.subr.mxu0 %v2338
        %3986 = vmatpush1.msra.mxu0 %v2337
        %3987 = vmatprep.subr.mxu0 %v2344
        %3988 = vmatpush1.msra.mxu0 %v2343
        %3989 = vmatprep.subr.mxu0 %v2350
        %3990 = vmatpush1.msra.mxu0 %v2349
        %3991 = vmatprep.subr.mxu0 %v2356
        %3992 = vmatpush1.msra.mxu0 %v2355
        %3993 = vmatprep.subr.mxu0 %v2362
        %3994 = vmatpush1.msra.mxu0 %v2361
        %3995 = vmatprep.subr.mxu0 %v2368
        %3996 = vmatpush1.msra.mxu0 %v2367
        %3997 = vmatprep.subr.mxu0 %v2374
        %3998 = vmatpush1.msra.mxu0 %v2373
        %3999 = vmatprep.subr.mxu0 %v2380
        %4000 = vmatpush1.msra.mxu0 %v2379
        %4001 = vmatprep.subr.mxu0 %v2386
        %4002 = vmatpush1.msra.mxu0 %v2385
        %4003 = vmatprep.subr.mxu0 %v2392
        %4004 = vmatpush1.msra.mxu0 %v2391
        %4005 = vmatprep.subr.mxu0 %v2398
        %4006 = vmatpush1.msra.mxu0 %v2397
        %4007 = vmatprep.subr.mxu0 %v2404
        %4008 = vmatpush1.msra.mxu0 %v2403
        %4009 = vmatprep.subr.mxu0 %v2410
        %4010 = vmatpush1.msra.mxu0 %v2409
        %4011 = vmatprep.subr.mxu0 %v2416
        %4012 = vmatpush1.msra.mxu0 %v2415
        %4013 = vmatprep.subr.mxu0 %v2422
        %4014 = vmatpush1.msra.mxu0 %v2421
        %4015 = vmatprep.subr.mxu0 %v2428
        %4016 = vmatpush1.msra.mxu0 %v2427
        %4017 = vmatprep.subr.mxu0 %v2434
        %4018 = vmatpush1.msra.mxu0 %v2433
        %4019 = vmatprep.subr.mxu0 %v2440
        %4020 = vmatpush1.msra.mxu0 %v2439
        %4021 = vmatprep.subr.mxu0 %v2446
        %4022 = vmatpush1.msra.mxu0 %v2445
        %4023 = vmatprep.subr.mxu0 %v2452
        %4024 = vmatpush1.msra.mxu0 %v2451
        %4025 = vmatprep.mubr.f32.mxu0 %v1297
        %4026 = vmatmul.mubr.f32.gmra.mrb[0].mxu0 %v1296
        %v4027 = vpop.f32.mrb[0].mxu0
        %v4028 = vadd.f32 %v3957, %v4027
        %v4029 = vpop.f32.mrb[0].mxu0
        %v4030 = vadd.f32 %v3959, %v4029
        %4031 = vdwg.mxu0
        %4032 = vmatprep.subr.mxu0 %v2458
        %4033 = vmatpush1.msra.mxu0 %v2457
        %4034 = vmatprep.subr.mxu0 %v2464
        %4035 = vmatpush1.msra.mxu0 %v2463
        %4036 = vmatprep.subr.mxu0 %v2470
        %4037 = vmatpush1.msra.mxu0 %v2469
        %4038 = vmatprep.subr.mxu0 %v2476
        %4039 = vmatpush1.msra.mxu0 %v2475
        %4040 = vmatprep.subr.mxu0 %v2482
        %4041 = vmatpush1.msra.mxu0 %v2481
        %4042 = vmatprep.subr.mxu0 %v2488
        %4043 = vmatpush1.msra.mxu0 %v2487
        %4044 = vmatprep.subr.mxu0 %v2494
        %4045 = vmatpush1.msra.mxu0 %v2493
        %4046 = vmatprep.subr.mxu0 %v2500
        %4047 = vmatpush1.msra.mxu0 %v2499
        %4048 = vmatprep.subr.mxu0 %v2506
        %4049 = vmatpush1.msra.mxu0 %v2505
        %4050 = vmatprep.subr.mxu0 %v2512
        %4051 = vmatpush1.msra.mxu0 %v2511
        %4052 = vmatprep.subr.mxu0 %v2518
        %4053 = vmatpush1.msra.mxu0 %v2517
        %4054 = vmatprep.subr.mxu0 %v2524
        %4055 = vmatpush1.msra.mxu0 %v2523
        %4056 = vmatprep.subr.mxu0 %v2530
        %4057 = vmatpush1.msra.mxu0 %v2529
        %4058 = vmatprep.subr.mxu0 %v2536
        %4059 = vmatpush1.msra.mxu0 %v2535
        %4060 = vmatprep.subr.mxu0 %v2542
        %4061 = vmatpush1.msra.mxu0 %v2541
        %4062 = vmatprep.subr.mxu0 %v2548
        %4063 = vmatpush1.msra.mxu0 %v2547
        %4064 = vmatprep.subr.mxu0 %v2554
        %4065 = vmatpush1.msra.mxu0 %v2553
        %4066 = vmatprep.subr.mxu0 %v2560
        %4067 = vmatpush1.msra.mxu0 %v2559
        %4068 = vmatprep.subr.mxu0 %v2566
        %4069 = vmatpush1.msra.mxu0 %v2565
        %4070 = vmatprep.subr.mxu0 %v2572
        %4071 = vmatpush1.msra.mxu0 %v2571
        %4072 = vmatprep.subr.mxu0 %v2578
        %4073 = vmatpush1.msra.mxu0 %v2577
        %4074 = vmatprep.subr.mxu0 %v2584
        %4075 = vmatpush1.msra.mxu0 %v2583
        %4076 = vmatprep.subr.mxu0 %v2590
        %4077 = vmatpush1.msra.mxu0 %v2589
        %4078 = vmatprep.subr.mxu0 %v2596
        %4079 = vmatpush1.msra.mxu0 %v2595
        %4080 = vmatprep.subr.mxu0 %v2602
        %4081 = vmatpush1.msra.mxu0 %v2601
        %4082 = vmatprep.subr.mxu0 %v2608
        %4083 = vmatpush1.msra.mxu0 %v2607
        %4084 = vmatprep.subr.mxu0 %v2614
        %4085 = vmatpush1.msra.mxu0 %v2613
        %4086 = vmatprep.subr.mxu0 %v2620
        %4087 = vmatpush1.msra.mxu0 %v2619
        %4088 = vmatprep.subr.mxu0 %v2626
        %4089 = vmatpush1.msra.mxu0 %v2625
        %4090 = vmatprep.subr.mxu0 %v2632
        %4091 = vmatpush1.msra.mxu0 %v2631
        %4092 = vmatprep.subr.mxu0 %v2638
        %4093 = vmatpush1.msra.mxu0 %v2637
        %4094 = vmatprep.subr.mxu0 %v2644
        %4095 = vmatpush1.msra.mxu0 %v2643
        %4096 = vmatprep.mubr.f32.mxu0 %v1299
        %4097 = vmatmul.mubr.f32.gmra.mrb[0].mxu0 %v1298
        %v4098 = vpop.f32.mrb[0].mxu0
        %v4099 = vadd.f32 %v4028, %v4098
        %v4100 = vpop.f32.mrb[0].mxu0
        %v4101 = vadd.f32 %v4030, %v4100
        %4102 = vdwg.mxu0
        %4103 = vmatprep.subr.mxu0 %v2650
        %4104 = vmatpush1.msra.mxu0 %v2649
        %4105 = vmatprep.subr.mxu0 %v2656
        %4106 = vmatpush1.msra.mxu0 %v2655
        %4107 = vmatprep.subr.mxu0 %v2662
        %4108 = vmatpush1.msra.mxu0 %v2661
        %4109 = vmatprep.subr.mxu0 %v2668
        %4110 = vmatpush1.msra.mxu0 %v2667
        %4111 = vmatprep.subr.mxu0 %v2674
        %4112 = vmatpush1.msra.mxu0 %v2673
        %4113 = vmatprep.subr.mxu0 %v2680
        %4114 = vmatpush1.msra.mxu0 %v2679
        %4115 = vmatprep.subr.mxu0 %v2686
        %4116 = vmatpush1.msra.mxu0 %v2685
        %4117 = vmatprep.subr.mxu0 %v2692
        %4118 = vmatpush1.msra.mxu0 %v2691
        %4119 = vmatprep.subr.mxu0 %v2698
        %4120 = vmatpush1.msra.mxu0 %v2697
        %4121 = vmatprep.subr.mxu0 %v2704
        %4122 = vmatpush1.msra.mxu0 %v2703
        %4123 = vmatprep.subr.mxu0 %v2710
        %4124 = vmatpush1.msra.mxu0 %v2709
        %4125 = vmatprep.subr.mxu0 %v2716
        %4126 = vmatpush1.msra.mxu0 %v2715
        %4127 = vmatprep.subr.mxu0 %v2722
        %4128 = vmatpush1.msra.mxu0 %v2721
        %4129 = vmatprep.subr.mxu0 %v2728
        %4130 = vmatpush1.msra.mxu0 %v2727
        %4131 = vmatprep.subr.mxu0 %v2734
        %4132 = vmatpush1.msra.mxu0 %v2733
        %4133 = vmatprep.subr.mxu0 %v2740
        %4134 = vmatpush1.msra.mxu0 %v2739
        %4135 = vmatprep.subr.mxu0 %v2746
        %4136 = vmatpush1.msra.mxu0 %v2745
        %4137 = vmatprep.subr.mxu0 %v2752
        %4138 = vmatpush1.msra.mxu0 %v2751
        %4139 = vmatprep.subr.mxu0 %v2758
        %4140 = vmatpush1.msra.mxu0 %v2757
        %4141 = vmatprep.subr.mxu0 %v2764
        %4142 = vmatpush1.msra.mxu0 %v2763
        %4143 = vmatprep.subr.mxu0 %v2770
        %4144 = vmatpush1.msra.mxu0 %v2769
        %4145 = vmatprep.subr.mxu0 %v2776
        %4146 = vmatpush1.msra.mxu0 %v2775
        %4147 = vmatprep.subr.mxu0 %v2782
        %4148 = vmatpush1.msra.mxu0 %v2781
        %4149 = vmatprep.subr.mxu0 %v2788
        %4150 = vmatpush1.msra.mxu0 %v2787
        %4151 = vmatprep.subr.mxu0 %v2794
        %4152 = vmatpush1.msra.mxu0 %v2793
        %4153 = vmatprep.subr.mxu0 %v2800
        %4154 = vmatpush1.msra.mxu0 %v2799
        %4155 = vmatprep.subr.mxu0 %v2806
        %4156 = vmatpush1.msra.mxu0 %v2805
        %4157 = vmatprep.subr.mxu0 %v2812
        %4158 = vmatpush1.msra.mxu0 %v2811
        %4159 = vmatprep.subr.mxu0 %v2818
        %4160 = vmatpush1.msra.mxu0 %v2817
        %4161 = vmatprep.subr.mxu0 %v2824
        %4162 = vmatpush1.msra.mxu0 %v2823
        %4163 = vmatprep.subr.mxu0 %v2830
        %4164 = vmatpush1.msra.mxu0 %v2829
        %4165 = vmatprep.subr.mxu0 %v2836
        %4166 = vmatpush1.msra.mxu0 %v2835
        %4167 = vmatprep.mubr.f32.mxu0 %v1301
        %4168 = vmatmul.mubr.f32.gmra.mrb[0].mxu0 %v1300
        %v4169 = vpop.f32.mrb[0].mxu0
        %v4170 = vadd.f32 %v4099, %v4169
        %v4171 = vpop.f32.mrb[0].mxu0
        %v4172 = vadd.f32 %v4101, %v4171
        %4173 = vdwg.mxu0
        %4174 = vmatprep.subr.mxu0 %v2842
        %4175 = vmatpush1.msra.mxu0 %v2841
        %4176 = vmatprep.subr.mxu0 %v2848
        %4177 = vmatpush1.msra.mxu0 %v2847
        %4178 = vmatprep.subr.mxu0 %v2854
        %4179 = vmatpush1.msra.mxu0 %v2853
        %4180 = vmatprep.subr.mxu0 %v2860
        %4181 = vmatpush1.msra.mxu0 %v2859
        %4182 = vmatprep.subr.mxu0 %v2866
        %4183 = vmatpush1.msra.mxu0 %v2865
        %4184 = vmatprep.subr.mxu0 %v2872
        %4185 = vmatpush1.msra.mxu0 %v2871
        %4186 = vmatprep.subr.mxu0 %v2878
        %4187 = vmatpush1.msra.mxu0 %v2877
        %4188 = vmatprep.subr.mxu0 %v2884
        %4189 = vmatpush1.msra.mxu0 %v2883
        %4190 = vmatprep.subr.mxu0 %v2890
        %4191 = vmatpush1.msra.mxu0 %v2889
        %4192 = vmatprep.subr.mxu0 %v2896
        %4193 = vmatpush1.msra.mxu0 %v2895
        %4194 = vmatprep.subr.mxu0 %v2902
        %4195 = vmatpush1.msra.mxu0 %v2901
        %4196 = vmatprep.subr.mxu0 %v2908
        %4197 = vmatpush1.msra.mxu0 %v2907
        %4198 = vmatprep.subr.mxu0 %v2914
        %4199 = vmatpush1.msra.mxu0 %v2913
        %4200 = vmatprep.subr.mxu0 %v2920
        %4201 = vmatpush1.msra.mxu0 %v2919
        %4202 = vmatprep.subr.mxu0 %v2926
        %4203 = vmatpush1.msra.mxu0 %v2925
        %4204 = vmatprep.subr.mxu0 %v2932
        %4205 = vmatpush1.msra.mxu0 %v2931
        %4206 = vmatprep.subr.mxu0 0.0
        %4207 = vmatpush1.msra.mxu0 0.0
        %4208 = vmatprep.subr.mxu0 0.0
        %4209 = vmatpush1.msra.mxu0 0.0
        %4210 = vmatprep.subr.mxu0 0.0
        %4211 = vmatpush1.msra.mxu0 0.0
        %4212 = vmatprep.subr.mxu0 0.0
        %4213 = vmatpush1.msra.mxu0 0.0
        %4214 = vmatprep.subr.mxu0 0.0
        %4215 = vmatpush1.msra.mxu0 0.0
        %4216 = vmatprep.subr.mxu0 0.0
        %4217 = vmatpush1.msra.mxu0 0.0
        %4218 = vmatprep.subr.mxu0 0.0
        %4219 = vmatpush1.msra.mxu0 0.0
        %4220 = vmatprep.subr.mxu0 0.0
        %4221 = vmatpush1.msra.mxu0 0.0
        %4222 = vmatprep.subr.mxu0 0.0
        %4223 = vmatpush1.msra.mxu0 0.0
        %4224 = vmatprep.subr.mxu0 0.0
        %4225 = vmatpush1.msra.mxu0 0.0
        %4226 = vmatprep.subr.mxu0 0.0
        %4227 = vmatpush1.msra.mxu0 0.0
        %4228 = vmatprep.subr.mxu0 0.0
        %4229 = vmatpush1.msra.mxu0 0.0
        %4230 = vmatprep.subr.mxu0 0.0
        %4231 = vmatpush1.msra.mxu0 0.0
        %4232 = vmatprep.subr.mxu0 0.0
        %4233 = vmatpush1.msra.mxu0 0.0
        %4234 = vmatprep.subr.mxu0 0.0
        %4235 = vmatpush1.msra.mxu0 0.0
        %4236 = vmatprep.subr.mxu0 0.0
        %4237 = vmatpush1.msra.mxu0 0.0
        %4238 = vmatprep.mubr.f32.mxu0 0.0
        %4239 = vmatmul.mubr.f32.gmra.mrb[0].mxu0 %v1302
        %v4240 = vpop.f32.mrb[0].mxu0
        %v4241 = vadd.f32 %v4170, %v4240
        %v4242 = vpop.f32.mrb[0].mxu0
        %v4243 = vadd.f32 %v4172, %v4242
        %4244 = vdwg.mxu0
        %4245 = vmatprep.subr.mxu0 %v1308
        %4246 = vmatpush1.msra.mxu0 %v1307
        %4247 = vmatprep.subr.mxu0 %v1314
        %4248 = vmatpush1.msra.mxu0 %v1313
        %4249 = vmatprep.subr.mxu0 %v1320
        %4250 = vmatpush1.msra.mxu0 %v1319
        %4251 = vmatprep.subr.mxu0 %v1326
        %4252 = vmatpush1.msra.mxu0 %v1325
        %4253 = vmatprep.subr.mxu0 %v1332
        %4254 = vmatpush1.msra.mxu0 %v1331
        %4255 = vmatprep.subr.mxu0 %v1338
        %4256 = vmatpush1.msra.mxu0 %v1337
        %4257 = vmatprep.subr.mxu0 %v1344
        %4258 = vmatpush1.msra.mxu0 %v1343
        %4259 = vmatprep.subr.mxu0 %v1350
        %4260 = vmatpush1.msra.mxu0 %v1349
        %4261 = vmatprep.subr.mxu0 %v1356
        %4262 = vmatpush1.msra.mxu0 %v1355
        %4263 = vmatprep.subr.mxu0 %v1362
        %4264 = vmatpush1.msra.mxu0 %v1361
        %4265 = vmatprep.subr.mxu0 %v1368
        %4266 = vmatpush1.msra.mxu0 %v1367
        %4267 = vmatprep.subr.mxu0 %v1374
        %4268 = vmatpush1.msra.mxu0 %v1373
        %4269 = vmatprep.subr.mxu0 %v1380
        %4270 = vmatpush1.msra.mxu0 %v1379
        %4271 = vmatprep.subr.mxu0 %v1386
        %4272 = vmatpush1.msra.mxu0 %v1385
        %4273 = vmatprep.subr.mxu0 %v1392
        %4274 = vmatpush1.msra.mxu0 %v1391
        %4275 = vmatprep.subr.mxu0 %v1398
        %4276 = vmatpush1.msra.mxu0 %v1397
        %4277 = vmatprep.subr.mxu0 %v1404
        %4278 = vmatpush1.msra.mxu0 %v1403
        %4279 = vmatprep.subr.mxu0 %v1410
        %4280 = vmatpush1.msra.mxu0 %v1409
        %4281 = vmatprep.subr.mxu0 %v1416
        %4282 = vmatpush1.msra.mxu0 %v1415
        %4283 = vmatprep.subr.mxu0 %v1422
        %4284 = vmatpush1.msra.mxu0 %v1421
        %4285 = vmatprep.subr.mxu0 %v1428
        %4286 = vmatpush1.msra.mxu0 %v1427
        %4287 = vmatprep.subr.mxu0 %v1434
        %4288 = vmatpush1.msra.mxu0 %v1433
        %4289 = vmatprep.subr.mxu0 %v1440
        %4290 = vmatpush1.msra.mxu0 %v1439
        %4291 = vmatprep.subr.mxu0 %v1446
        %4292 = vmatpush1.msra.mxu0 %v1445
        %4293 = vmatprep.subr.mxu0 %v1452
        %4294 = vmatpush1.msra.mxu0 %v1451
        %4295 = vmatprep.subr.mxu0 %v1458
        %4296 = vmatpush1.msra.mxu0 %v1457
        %4297 = vmatprep.subr.mxu0 %v1464
        %4298 = vmatpush1.msra.mxu0 %v1463
        %4299 = vmatprep.subr.mxu0 %v1470
        %4300 = vmatpush1.msra.mxu0 %v1469
        %4301 = vmatprep.subr.mxu0 %v1476
        %4302 = vmatpush1.msra.mxu0 %v1475
        %4303 = vmatprep.subr.mxu0 %v1482
        %4304 = vmatpush1.msra.mxu0 %v1481
        %4305 = vmatprep.subr.mxu0 %v1488
        %4306 = vmatpush1.msra.mxu0 %v1487
        %4307 = vmatprep.subr.mxu0 %v1494
        %4308 = vmatpush1.msra.mxu0 %v1493
        %4309 = vmatprep.mubr.f32.mxu0 %v1287
        %4310 = vmatmul.mubr.f32.gmra.mrb[0].mxu0 %v1286
        %v4311 = vpop.f32.mrb[0].mxu0
        %v4312 = vadd.f32 %v2956, %v4311
        %v4313 = vpop.f32.mrb[0].mxu0
        %v4314 = vadd.f32 %v2960, %v4313
        %4315 = vdwg.mxu0
        %4316 = vmatprep.subr.mxu0 %v1500
        %4317 = vmatpush1.msra.mxu0 %v1499
        %4318 = vmatprep.subr.mxu0 %v1506
        %4319 = vmatpush1.msra.mxu0 %v1505
        %4320 = vmatprep.subr.mxu0 %v1512
        %4321 = vmatpush1.msra.mxu0 %v1511
        %4322 = vmatprep.subr.mxu0 %v1518
        %4323 = vmatpush1.msra.mxu0 %v1517
        %4324 = vmatprep.subr.mxu0 %v1524
        %4325 = vmatpush1.msra.mxu0 %v1523
        %4326 = vmatprep.subr.mxu0 %v1530
        %4327 = vmatpush1.msra.mxu0 %v1529
        %4328 = vmatprep.subr.mxu0 %v1536
        %4329 = vmatpush1.msra.mxu0 %v1535
        %4330 = vmatprep.subr.mxu0 %v1542
        %4331 = vmatpush1.msra.mxu0 %v1541
        %4332 = vmatprep.subr.mxu0 %v1548
        %4333 = vmatpush1.msra.mxu0 %v1547
        %4334 = vmatprep.subr.mxu0 %v1554
        %4335 = vmatpush1.msra.mxu0 %v1553
        %4336 = vmatprep.subr.mxu0 %v1560
        %4337 = vmatpush1.msra.mxu0 %v1559
        %4338 = vmatprep.subr.mxu0 %v1566
        %4339 = vmatpush1.msra.mxu0 %v1565
        %4340 = vmatprep.subr.mxu0 %v1572
        %4341 = vmatpush1.msra.mxu0 %v1571
        %4342 = vmatprep.subr.mxu0 %v1578
        %4343 = vmatpush1.msra.mxu0 %v1577
        %4344 = vmatprep.subr.mxu0 %v1584
        %4345 = vmatpush1.msra.mxu0 %v1583
        %4346 = vmatprep.subr.mxu0 %v1590
        %4347 = vmatpush1.msra.mxu0 %v1589
        %4348 = vmatprep.subr.mxu0 %v1596
        %4349 = vmatpush1.msra.mxu0 %v1595
        %4350 = vmatprep.subr.mxu0 %v1602
        %4351 = vmatpush1.msra.mxu0 %v1601
        %4352 = vmatprep.subr.mxu0 %v1608
        %4353 = vmatpush1.msra.mxu0 %v1607
        %4354 = vmatprep.subr.mxu0 %v1614
        %4355 = vmatpush1.msra.mxu0 %v1613
        %4356 = vmatprep.subr.mxu0 %v1620
        %4357 = vmatpush1.msra.mxu0 %v1619
        %4358 = vmatprep.subr.mxu0 %v1626
        %4359 = vmatpush1.msra.mxu0 %v1625
        %4360 = vmatprep.subr.mxu0 %v1632
        %4361 = vmatpush1.msra.mxu0 %v1631
        %4362 = vmatprep.subr.mxu0 %v1638
        %4363 = vmatpush1.msra.mxu0 %v1637
        %4364 = vmatprep.subr.mxu0 %v1644
        %4365 = vmatpush1.msra.mxu0 %v1643
        %4366 = vmatprep.subr.mxu0 %v1650
        %4367 = vmatpush1.msra.mxu0 %v1649
        %4368 = vmatprep.subr.mxu0 %v1656
        %4369 = vmatpush1.msra.mxu0 %v1655
        %4370 = vmatprep.subr.mxu0 %v1662
        %4371 = vmatpush1.msra.mxu0 %v1661
        %4372 = vmatprep.subr.mxu0 %v1668
        %4373 = vmatpush1.msra.mxu0 %v1667
        %4374 = vmatprep.subr.mxu0 %v1674
        %4375 = vmatpush1.msra.mxu0 %v1673
        %4376 = vmatprep.subr.mxu0 %v1680
        %4377 = vmatpush1.msra.mxu0 %v1679
        %4378 = vmatprep.subr.mxu0 %v1686
        %4379 = vmatpush1.msra.mxu0 %v1685
        %4380 = vmatprep.mubr.f32.mxu0 %v1289
        %4381 = vmatmul.mubr.f32.gmra.mrb[0].mxu0 %v1288
        %v4382 = vpop.f32.mrb[0].mxu0
        %v4383 = vadd.f32 %v4312, %v4382
        %v4384 = vpop.f32.mrb[0].mxu0
        %v4385 = vadd.f32 %v4314, %v4384
        %4386 = vdwg.mxu0
        %4387 = vmatprep.subr.mxu0 %v1692
        %4388 = vmatpush1.msra.mxu0 %v1691
        %4389 = vmatprep.subr.mxu0 %v1698
        %4390 = vmatpush1.msra.mxu0 %v1697
        %4391 = vmatprep.subr.mxu0 %v1704
        %4392 = vmatpush1.msra.mxu0 %v1703
        %4393 = vmatprep.subr.mxu0 %v1710
        %4394 = vmatpush1.msra.mxu0 %v1709
        %4395 = vmatprep.subr.mxu0 %v1716
        %4396 = vmatpush1.msra.mxu0 %v1715
        %4397 = vmatprep.subr.mxu0 %v1722
        %4398 = vmatpush1.msra.mxu0 %v1721
        %4399 = vmatprep.subr.mxu0 %v1728
        %4400 = vmatpush1.msra.mxu0 %v1727
        %4401 = vmatprep.subr.mxu0 %v1734
        %4402 = vmatpush1.msra.mxu0 %v1733
        %4403 = vmatprep.subr.mxu0 %v1740
        %4404 = vmatpush1.msra.mxu0 %v1739
        %4405 = vmatprep.subr.mxu0 %v1746
        %4406 = vmatpush1.msra.mxu0 %v1745
        %4407 = vmatprep.subr.mxu0 %v1752
        %4408 = vmatpush1.msra.mxu0 %v1751
        %4409 = vmatprep.subr.mxu0 %v1758
        %4410 = vmatpush1.msra.mxu0 %v1757
        %4411 = vmatprep.subr.mxu0 %v1764
        %4412 = vmatpush1.msra.mxu0 %v1763
        %4413 = vmatprep.subr.mxu0 %v1770
        %4414 = vmatpush1.msra.mxu0 %v1769
        %4415 = vmatprep.subr.mxu0 %v1776
        %4416 = vmatpush1.msra.mxu0 %v1775
        %4417 = vmatprep.subr.mxu0 %v1782
        %4418 = vmatpush1.msra.mxu0 %v1781
        %4419 = vmatprep.subr.mxu0 %v1788
        %4420 = vmatpush1.msra.mxu0 %v1787
        %4421 = vmatprep.subr.mxu0 %v1794
        %4422 = vmatpush1.msra.mxu0 %v1793
        %4423 = vmatprep.subr.mxu0 %v1800
        %4424 = vmatpush1.msra.mxu0 %v1799
        %4425 = vmatprep.subr.mxu0 %v1806
        %4426 = vmatpush1.msra.mxu0 %v1805
        %4427 = vmatprep.subr.mxu0 %v1812
        %4428 = vmatpush1.msra.mxu0 %v1811
        %4429 = vmatprep.subr.mxu0 %v1818
        %4430 = vmatpush1.msra.mxu0 %v1817
        %4431 = vmatprep.subr.mxu0 %v1824
        %4432 = vmatpush1.msra.mxu0 %v1823
        %4433 = vmatprep.subr.mxu0 %v1830
        %4434 = vmatpush1.msra.mxu0 %v1829
        %4435 = vmatprep.subr.mxu0 %v1836
        %4436 = vmatpush1.msra.mxu0 %v1835
        %4437 = vmatprep.subr.mxu0 %v1842
        %4438 = vmatpush1.msra.mxu0 %v1841
        %4439 = vmatprep.subr.mxu0 %v1848
        %4440 = vmatpush1.msra.mxu0 %v1847
        %4441 = vmatprep.subr.mxu0 %v1854
        %4442 = vmatpush1.msra.mxu0 %v1853
        %4443 = vmatprep.subr.mxu0 %v1860
        %4444 = vmatpush1.msra.mxu0 %v1859
        %4445 = vmatprep.subr.mxu0 %v1866
        %4446 = vmatpush1.msra.mxu0 %v1865
        %4447 = vmatprep.subr.mxu0 %v1872
        %4448 = vmatpush1.msra.mxu0 %v1871
        %4449 = vmatprep.subr.mxu0 %v1878
        %4450 = vmatpush1.msra.mxu0 %v1877
        %4451 = vmatprep.mubr.f32.mxu0 %v1291
        %4452 = vmatmul.mubr.f32.gmra.mrb[0].mxu0 %v1290
        %v4453 = vpop.f32.mrb[0].mxu0
        %v4454 = vadd.f32 %v4383, %v4453
        %v4455 = vpop.f32.mrb[0].mxu0
        %v4456 = vadd.f32 %v4385, %v4455
        %4457 = vdwg.mxu0
        %4458 = vmatprep.subr.mxu0 %v1884
        %4459 = vmatpush1.msra.mxu0 %v1883
        %4460 = vmatprep.subr.mxu0 %v1890
        %4461 = vmatpush1.msra.mxu0 %v1889
        %4462 = vmatprep.subr.mxu0 %v1896
        %4463 = vmatpush1.msra.mxu0 %v1895
        %4464 = vmatprep.subr.mxu0 %v1902
        %4465 = vmatpush1.msra.mxu0 %v1901
        %4466 = vmatprep.subr.mxu0 %v1908
        %4467 = vmatpush1.msra.mxu0 %v1907
        %4468 = vmatprep.subr.mxu0 %v1914
        %4469 = vmatpush1.msra.mxu0 %v1913
        %4470 = vmatprep.subr.mxu0 %v1920
        %4471 = vmatpush1.msra.mxu0 %v1919
        %4472 = vmatprep.subr.mxu0 %v1926
        %4473 = vmatpush1.msra.mxu0 %v1925
        %4474 = vmatprep.subr.mxu0 %v1932
        %4475 = vmatpush1.msra.mxu0 %v1931
        %4476 = vmatprep.subr.mxu0 %v1938
        %4477 = vmatpush1.msra.mxu0 %v1937
        %4478 = vmatprep.subr.mxu0 %v1944
        %4479 = vmatpush1.msra.mxu0 %v1943
        %4480 = vmatprep.subr.mxu0 %v1950
        %4481 = vmatpush1.msra.mxu0 %v1949
        %4482 = vmatprep.subr.mxu0 %v1956
        %4483 = vmatpush1.msra.mxu0 %v1955
        %4484 = vmatprep.subr.mxu0 %v1962
        %4485 = vmatpush1.msra.mxu0 %v1961
        %4486 = vmatprep.subr.mxu0 %v1968
        %4487 = vmatpush1.msra.mxu0 %v1967
        %4488 = vmatprep.subr.mxu0 %v1974
        %4489 = vmatpush1.msra.mxu0 %v1973
        %4490 = vmatprep.subr.mxu0 %v1980
        %4491 = vmatpush1.msra.mxu0 %v1979
        %4492 = vmatprep.subr.mxu0 %v1986
        %4493 = vmatpush1.msra.mxu0 %v1985
        %4494 = vmatprep.subr.mxu0 %v1992
        %4495 = vmatpush1.msra.mxu0 %v1991
        %4496 = vmatprep.subr.mxu0 %v1998
        %4497 = vmatpush1.msra.mxu0 %v1997
        %4498 = vmatprep.subr.mxu0 %v2004
        %4499 = vmatpush1.msra.mxu0 %v2003
        %4500 = vmatprep.subr.mxu0 %v2010
        %4501 = vmatpush1.msra.mxu0 %v2009
        %4502 = vmatprep.subr.mxu0 %v2016
        %4503 = vmatpush1.msra.mxu0 %v2015
        %4504 = vmatprep.subr.mxu0 %v2022
        %4505 = vmatpush1.msra.mxu0 %v2021
        %4506 = vmatprep.subr.mxu0 %v2028
        %4507 = vmatpush1.msra.mxu0 %v2027
        %4508 = vmatprep.subr.mxu0 %v2034
        %4509 = vmatpush1.msra.mxu0 %v2033
        %4510 = vmatprep.subr.mxu0 %v2040
        %4511 = vmatpush1.msra.mxu0 %v2039
        %4512 = vmatprep.subr.mxu0 %v2046
        %4513 = vmatpush1.msra.mxu0 %v2045
        %4514 = vmatprep.subr.mxu0 %v2052
        %4515 = vmatpush1.msra.mxu0 %v2051
        %4516 = vmatprep.subr.mxu0 %v2058
        %4517 = vmatpush1.msra.mxu0 %v2057
        %4518 = vmatprep.subr.mxu0 %v2064
        %4519 = vmatpush1.msra.mxu0 %v2063
        %4520 = vmatprep.subr.mxu0 %v2070
        %4521 = vmatpush1.msra.mxu0 %v2069
        %4522 = vmatprep.mubr.f32.mxu0 %v1293
        %4523 = vmatmul.mubr.f32.gmra.mrb[0].mxu0 %v1292
        %v4524 = vpop.f32.mrb[0].mxu0
        %v4525 = vadd.f32 %v4454, %v4524
        %v4526 = vpop.f32.mrb[0].mxu0
        %v4527 = vadd.f32 %v4456, %v4526
        %4528 = vdwg.mxu0
        %4529 = vmatprep.subr.mxu0 %v2076
        %4530 = vmatpush1.msra.mxu0 %v2075
        %4531 = vmatprep.subr.mxu0 %v2082
        %4532 = vmatpush1.msra.mxu0 %v2081
        %4533 = vmatprep.subr.mxu0 %v2088
        %4534 = vmatpush1.msra.mxu0 %v2087
        %4535 = vmatprep.subr.mxu0 %v2094
        %4536 = vmatpush1.msra.mxu0 %v2093
        %4537 = vmatprep.subr.mxu0 %v2100
        %4538 = vmatpush1.msra.mxu0 %v2099
        %4539 = vmatprep.subr.mxu0 %v2106
        %4540 = vmatpush1.msra.mxu0 %v2105
        %4541 = vmatprep.subr.mxu0 %v2112
        %4542 = vmatpush1.msra.mxu0 %v2111
        %4543 = vmatprep.subr.mxu0 %v2118
        %4544 = vmatpush1.msra.mxu0 %v2117
        %4545 = vmatprep.subr.mxu0 %v2124
        %4546 = vmatpush1.msra.mxu0 %v2123
        %4547 = vmatprep.subr.mxu0 %v2130
        %4548 = vmatpush1.msra.mxu0 %v2129
        %4549 = vmatprep.subr.mxu0 %v2136
        %4550 = vmatpush1.msra.mxu0 %v2135
        %4551 = vmatprep.subr.mxu0 %v2142
        %4552 = vmatpush1.msra.mxu0 %v2141
        %4553 = vmatprep.subr.mxu0 %v2148
        %4554 = vmatpush1.msra.mxu0 %v2147
        %4555 = vmatprep.subr.mxu0 %v2154
        %4556 = vmatpush1.msra.mxu0 %v2153
        %4557 = vmatprep.subr.mxu0 %v2160
        %4558 = vmatpush1.msra.mxu0 %v2159
        %4559 = vmatprep.subr.mxu0 %v2166
        %4560 = vmatpush1.msra.mxu0 %v2165
        %4561 = vmatprep.subr.mxu0 %v2172
        %4562 = vmatpush1.msra.mxu0 %v2171
        %4563 = vmatprep.subr.mxu0 %v2178
        %4564 = vmatpush1.msra.mxu0 %v2177
        %4565 = vmatprep.subr.mxu0 %v2184
        %4566 = vmatpush1.msra.mxu0 %v2183
        %4567 = vmatprep.subr.mxu0 %v2190
        %4568 = vmatpush1.msra.mxu0 %v2189
        %4569 = vmatprep.subr.mxu0 %v2196
        %4570 = vmatpush1.msra.mxu0 %v2195
        %4571 = vmatprep.subr.mxu0 %v2202
        %4572 = vmatpush1.msra.mxu0 %v2201
        %4573 = vmatprep.subr.mxu0 %v2208
        %4574 = vmatpush1.msra.mxu0 %v2207
        %4575 = vmatprep.subr.mxu0 %v2214
        %4576 = vmatpush1.msra.mxu0 %v2213
        %4577 = vmatprep.subr.mxu0 %v2220
        %4578 = vmatpush1.msra.mxu0 %v2219
        %4579 = vmatprep.subr.mxu0 %v2226
        %4580 = vmatpush1.msra.mxu0 %v2225
        %4581 = vmatprep.subr.mxu0 %v2232
        %4582 = vmatpush1.msra.mxu0 %v2231
        %4583 = vmatprep.subr.mxu0 %v2238
        %4584 = vmatpush1.msra.mxu0 %v2237
        %4585 = vmatprep.subr.mxu0 %v2244
        %4586 = vmatpush1.msra.mxu0 %v2243
        %4587 = vmatprep.subr.mxu0 %v2250
        %4588 = vmatpush1.msra.mxu0 %v2249
        %4589 = vmatprep.subr.mxu0 %v2256
        %4590 = vmatpush1.msra.mxu0 %v2255
        %4591 = vmatprep.subr.mxu0 %v2262
        %4592 = vmatpush1.msra.mxu0 %v2261
        %4593 = vmatprep.mubr.f32.mxu0 %v1295
        %4594 = vmatmul.mubr.f32.gmra.mrb[0].mxu0 %v1294
        %v4595 = vpop.f32.mrb[0].mxu0
        %v4596 = vadd.f32 %v4525, %v4595
        %v4597 = vpop.f32.mrb[0].mxu0
        %v4598 = vadd.f32 %v4527, %v4597
        %4599 = vdwg.mxu0
        %4600 = vmatprep.subr.mxu0 %v2268
        %4601 = vmatpush1.msra.mxu0 %v2267
        %4602 = vmatprep.subr.mxu0 %v2274
        %4603 = vmatpush1.msra.mxu0 %v2273
        %4604 = vmatprep.subr.mxu0 %v2280
        %4605 = vmatpush1.msra.mxu0 %v2279
        %4606 = vmatprep.subr.mxu0 %v2286
        %4607 = vmatpush1.msra.mxu0 %v2285
        %4608 = vmatprep.subr.mxu0 %v2292
        %4609 = vmatpush1.msra.mxu0 %v2291
        %4610 = vmatprep.subr.mxu0 %v2298
        %4611 = vmatpush1.msra.mxu0 %v2297
        %4612 = vmatprep.subr.mxu0 %v2304
        %4613 = vmatpush1.msra.mxu0 %v2303
        %4614 = vmatprep.subr.mxu0 %v2310
        %4615 = vmatpush1.msra.mxu0 %v2309
        %4616 = vmatprep.subr.mxu0 %v2316
        %4617 = vmatpush1.msra.mxu0 %v2315
        %4618 = vmatprep.subr.mxu0 %v2322
        %4619 = vmatpush1.msra.mxu0 %v2321
        %4620 = vmatprep.subr.mxu0 %v2328
        %4621 = vmatpush1.msra.mxu0 %v2327
        %4622 = vmatprep.subr.mxu0 %v2334
        %4623 = vmatpush1.msra.mxu0 %v2333
        %4624 = vmatprep.subr.mxu0 %v2340
        %4625 = vmatpush1.msra.mxu0 %v2339
        %4626 = vmatprep.subr.mxu0 %v2346
        %4627 = vmatpush1.msra.mxu0 %v2345
        %4628 = vmatprep.subr.mxu0 %v2352
        %4629 = vmatpush1.msra.mxu0 %v2351
        %4630 = vmatprep.subr.mxu0 %v2358
        %4631 = vmatpush1.msra.mxu0 %v2357
        %4632 = vmatprep.subr.mxu0 %v2364
        %4633 = vmatpush1.msra.mxu0 %v2363
        %4634 = vmatprep.subr.mxu0 %v2370
        %4635 = vmatpush1.msra.mxu0 %v2369
        %4636 = vmatprep.subr.mxu0 %v2376
        %4637 = vmatpush1.msra.mxu0 %v2375
        %4638 = vmatprep.subr.mxu0 %v2382
        %4639 = vmatpush1.msra.mxu0 %v2381
        %4640 = vmatprep.subr.mxu0 %v2388
        %4641 = vmatpush1.msra.mxu0 %v2387
        %4642 = vmatprep.subr.mxu0 %v2394
        %4643 = vmatpush1.msra.mxu0 %v2393
        %4644 = vmatprep.subr.mxu0 %v2400
        %4645 = vmatpush1.msra.mxu0 %v2399
        %4646 = vmatprep.subr.mxu0 %v2406
        %4647 = vmatpush1.msra.mxu0 %v2405
        %4648 = vmatprep.subr.mxu0 %v2412
        %4649 = vmatpush1.msra.mxu0 %v2411
        %4650 = vmatprep.subr.mxu0 %v2418
        %4651 = vmatpush1.msra.mxu0 %v2417
        %4652 = vmatprep.subr.mxu0 %v2424
        %4653 = vmatpush1.msra.mxu0 %v2423
        %4654 = vmatprep.subr.mxu0 %v2430
        %4655 = vmatpush1.msra.mxu0 %v2429
        %4656 = vmatprep.subr.mxu0 %v2436
        %4657 = vmatpush1.msra.mxu0 %v2435
        %4658 = vmatprep.subr.mxu0 %v2442
        %4659 = vmatpush1.msra.mxu0 %v2441
        %4660 = vmatprep.subr.mxu0 %v2448
        %4661 = vmatpush1.msra.mxu0 %v2447
        %4662 = vmatprep.subr.mxu0 %v2454
        %4663 = vmatpush1.msra.mxu0 %v2453
        %4664 = vmatprep.mubr.f32.mxu0 %v1297
        %4665 = vmatmul.mubr.f32.gmra.mrb[0].mxu0 %v1296
        %v4666 = vpop.f32.mrb[0].mxu0
        %v4667 = vadd.f32 %v4596, %v4666
        %v4668 = vpop.f32.mrb[0].mxu0
        %v4669 = vadd.f32 %v4598, %v4668
        %4670 = vdwg.mxu0
        %4671 = vmatprep.subr.mxu0 %v2460
        %4672 = vmatpush1.msra.mxu0 %v2459
        %4673 = vmatprep.subr.mxu0 %v2466
        %4674 = vmatpush1.msra.mxu0 %v2465
        %4675 = vmatprep.subr.mxu0 %v2472
        %4676 = vmatpush1.msra.mxu0 %v2471
        %4677 = vmatprep.subr.mxu0 %v2478
        %4678 = vmatpush1.msra.mxu0 %v2477
        %4679 = vmatprep.subr.mxu0 %v2484
        %4680 = vmatpush1.msra.mxu0 %v2483
        %4681 = vmatprep.subr.mxu0 %v2490
        %4682 = vmatpush1.msra.mxu0 %v2489
        %4683 = vmatprep.subr.mxu0 %v2496
        %4684 = vmatpush1.msra.mxu0 %v2495
        %4685 = vmatprep.subr.mxu0 %v2502
        %4686 = vmatpush1.msra.mxu0 %v2501
        %4687 = vmatprep.subr.mxu0 %v2508
        %4688 = vmatpush1.msra.mxu0 %v2507
        %4689 = vmatprep.subr.mxu0 %v2514
        %4690 = vmatpush1.msra.mxu0 %v2513
        %4691 = vmatprep.subr.mxu0 %v2520
        %4692 = vmatpush1.msra.mxu0 %v2519
        %4693 = vmatprep.subr.mxu0 %v2526
        %4694 = vmatpush1.msra.mxu0 %v2525
        %4695 = vmatprep.subr.mxu0 %v2532
        %4696 = vmatpush1.msra.mxu0 %v2531
        %4697 = vmatprep.subr.mxu0 %v2538
        %4698 = vmatpush1.msra.mxu0 %v2537
        %4699 = vmatprep.subr.mxu0 %v2544
        %4700 = vmatpush1.msra.mxu0 %v2543
        %4701 = vmatprep.subr.mxu0 %v2550
        %4702 = vmatpush1.msra.mxu0 %v2549
        %4703 = vmatprep.subr.mxu0 %v2556
        %4704 = vmatpush1.msra.mxu0 %v2555
        %4705 = vmatprep.subr.mxu0 %v2562
        %4706 = vmatpush1.msra.mxu0 %v2561
        %4707 = vmatprep.subr.mxu0 %v2568
        %4708 = vmatpush1.msra.mxu0 %v2567
        %4709 = vmatprep.subr.mxu0 %v2574
        %4710 = vmatpush1.msra.mxu0 %v2573
        %4711 = vmatprep.subr.mxu0 %v2580
        %4712 = vmatpush1.msra.mxu0 %v2579
        %4713 = vmatprep.subr.mxu0 %v2586
        %4714 = vmatpush1.msra.mxu0 %v2585
        %4715 = vmatprep.subr.mxu0 %v2592
        %4716 = vmatpush1.msra.mxu0 %v2591
        %4717 = vmatprep.subr.mxu0 %v2598
        %4718 = vmatpush1.msra.mxu0 %v2597
        %4719 = vmatprep.subr.mxu0 %v2604
        %4720 = vmatpush1.msra.mxu0 %v2603
        %4721 = vmatprep.subr.mxu0 %v2610
        %4722 = vmatpush1.msra.mxu0 %v2609
        %4723 = vmatprep.subr.mxu0 %v2616
        %4724 = vmatpush1.msra.mxu0 %v2615
        %4725 = vmatprep.subr.mxu0 %v2622
        %4726 = vmatpush1.msra.mxu0 %v2621
        %4727 = vmatprep.subr.mxu0 %v2628
        %4728 = vmatpush1.msra.mxu0 %v2627
        %4729 = vmatprep.subr.mxu0 %v2634
        %4730 = vmatpush1.msra.mxu0 %v2633
        %4731 = vmatprep.subr.mxu0 %v2640
        %4732 = vmatpush1.msra.mxu0 %v2639
        %4733 = vmatprep.subr.mxu0 %v2646
        %4734 = vmatpush1.msra.mxu0 %v2645
        %4735 = vmatprep.mubr.f32.mxu0 %v1299
        %4736 = vmatmul.mubr.f32.gmra.mrb[0].mxu0 %v1298
        %v4737 = vpop.f32.mrb[0].mxu0
        %v4738 = vadd.f32 %v4667, %v4737
        %v4739 = vpop.f32.mrb[0].mxu0
        %v4740 = vadd.f32 %v4669, %v4739
        %4741 = vdwg.mxu0
        %4742 = vmatprep.subr.mxu0 %v2652
        %4743 = vmatpush1.msra.mxu0 %v2651
        %4744 = vmatprep.subr.mxu0 %v2658
        %4745 = vmatpush1.msra.mxu0 %v2657
        %4746 = vmatprep.subr.mxu0 %v2664
        %4747 = vmatpush1.msra.mxu0 %v2663
        %4748 = vmatprep.subr.mxu0 %v2670
        %4749 = vmatpush1.msra.mxu0 %v2669
        %4750 = vmatprep.subr.mxu0 %v2676
        %4751 = vmatpush1.msra.mxu0 %v2675
        %4752 = vmatprep.subr.mxu0 %v2682
        %4753 = vmatpush1.msra.mxu0 %v2681
        %4754 = vmatprep.subr.mxu0 %v2688
        %4755 = vmatpush1.msra.mxu0 %v2687
        %4756 = vmatprep.subr.mxu0 %v2694
        %4757 = vmatpush1.msra.mxu0 %v2693
        %4758 = vmatprep.subr.mxu0 %v2700
        %4759 = vmatpush1.msra.mxu0 %v2699
        %4760 = vmatprep.subr.mxu0 %v2706
        %4761 = vmatpush1.msra.mxu0 %v2705
        %4762 = vmatprep.subr.mxu0 %v2712
        %4763 = vmatpush1.msra.mxu0 %v2711
        %4764 = vmatprep.subr.mxu0 %v2718
        %4765 = vmatpush1.msra.mxu0 %v2717
        %4766 = vmatprep.subr.mxu0 %v2724
        %4767 = vmatpush1.msra.mxu0 %v2723
        %4768 = vmatprep.subr.mxu0 %v2730
        %4769 = vmatpush1.msra.mxu0 %v2729
        %4770 = vmatprep.subr.mxu0 %v2736
        %4771 = vmatpush1.msra.mxu0 %v2735
        %4772 = vmatprep.subr.mxu0 %v2742
        %4773 = vmatpush1.msra.mxu0 %v2741
        %4774 = vmatprep.subr.mxu0 %v2748
        %4775 = vmatpush1.msra.mxu0 %v2747
        %4776 = vmatprep.subr.mxu0 %v2754
        %4777 = vmatpush1.msra.mxu0 %v2753
        %4778 = vmatprep.subr.mxu0 %v2760
        %4779 = vmatpush1.msra.mxu0 %v2759
        %4780 = vmatprep.subr.mxu0 %v2766
        %4781 = vmatpush1.msra.mxu0 %v2765
        %4782 = vmatprep.subr.mxu0 %v2772
        %4783 = vmatpush1.msra.mxu0 %v2771
        %4784 = vmatprep.subr.mxu0 %v2778
        %4785 = vmatpush1.msra.mxu0 %v2777
        %4786 = vmatprep.subr.mxu0 %v2784
        %4787 = vmatpush1.msra.mxu0 %v2783
        %4788 = vmatprep.subr.mxu0 %v2790
        %4789 = vmatpush1.msra.mxu0 %v2789
        %4790 = vmatprep.subr.mxu0 %v2796
        %4791 = vmatpush1.msra.mxu0 %v2795
        %4792 = vmatprep.subr.mxu0 %v2802
        %4793 = vmatpush1.msra.mxu0 %v2801
        %4794 = vmatprep.subr.mxu0 %v2808
        %4795 = vmatpush1.msra.mxu0 %v2807
        %4796 = vmatprep.subr.mxu0 %v2814
        %4797 = vmatpush1.msra.mxu0 %v2813
        %4798 = vmatprep.subr.mxu0 %v2820
        %4799 = vmatpush1.msra.mxu0 %v2819
        %4800 = vmatprep.subr.mxu0 %v2826
        %4801 = vmatpush1.msra.mxu0 %v2825
        %4802 = vmatprep.subr.mxu0 %v2832
        %4803 = vmatpush1.msra.mxu0 %v2831
        %4804 = vmatprep.subr.mxu0 %v2838
        %4805 = vmatpush1.msra.mxu0 %v2837
        %4806 = vmatprep.mubr.f32.mxu0 %v1301
        %4807 = vmatmul.mubr.f32.gmra.mrb[0].mxu0 %v1300
        %v4808 = vpop.f32.mrb[0].mxu0
        %v4809 = vadd.f32 %v4738, %v4808
        %v4810 = vpop.f32.mrb[0].mxu0
        %v4811 = vadd.f32 %v4740, %v4810
        %4812 = vdwg.mxu0
        %4813 = vmatprep.subr.mxu0 %v2844
        %4814 = vmatpush1.msra.mxu0 %v2843
        %4815 = vmatprep.subr.mxu0 %v2850
        %4816 = vmatpush1.msra.mxu0 %v2849
        %4817 = vmatprep.subr.mxu0 %v2856
        %4818 = vmatpush1.msra.mxu0 %v2855
        %4819 = vmatprep.subr.mxu0 %v2862
        %4820 = vmatpush1.msra.mxu0 %v2861
        %4821 = vmatprep.subr.mxu0 %v2868
        %4822 = vmatpush1.msra.mxu0 %v2867
        %4823 = vmatprep.subr.mxu0 %v2874
        %4824 = vmatpush1.msra.mxu0 %v2873
        %4825 = vmatprep.subr.mxu0 %v2880
        %4826 = vmatpush1.msra.mxu0 %v2879
        %4827 = vmatprep.subr.mxu0 %v2886
        %4828 = vmatpush1.msra.mxu0 %v2885
        %4829 = vmatprep.subr.mxu0 %v2892
        %4830 = vmatpush1.msra.mxu0 %v2891
        %4831 = vmatprep.subr.mxu0 %v2898
        %4832 = vmatpush1.msra.mxu0 %v2897
        %4833 = vmatprep.subr.mxu0 %v2904
        %4834 = vmatpush1.msra.mxu0 %v2903
        %4835 = vmatprep.subr.mxu0 %v2910
        %4836 = vmatpush1.msra.mxu0 %v2909
        %4837 = vmatprep.subr.mxu0 %v2916
        %4838 = vmatpush1.msra.mxu0 %v2915
        %4839 = vmatprep.subr.mxu0 %v2922
        %4840 = vmatpush1.msra.mxu0 %v2921
        %4841 = vmatprep.subr.mxu0 %v2928
        %4842 = vmatpush1.msra.mxu0 %v2927
        %4843 = vmatprep.subr.mxu0 %v2934
        %4844 = vmatpush1.msra.mxu0 %v2933
        %4845 = vmatprep.subr.mxu0 0.0
        %4846 = vmatpush1.msra.mxu0 0.0
        %4847 = vmatprep.subr.mxu0 0.0
        %4848 = vmatpush1.msra.mxu0 0.0
        %4849 = vmatprep.subr.mxu0 0.0
        %4850 = vmatpush1.msra.mxu0 0.0
        %4851 = vmatprep.subr.mxu0 0.0
        %4852 = vmatpush1.msra.mxu0 0.0
        %4853 = vmatprep.subr.mxu0 0.0
        %4854 = vmatpush1.msra.mxu0 0.0
        %4855 = vmatprep.subr.mxu0 0.0
        %4856 = vmatpush1.msra.mxu0 0.0
        %4857 = vmatprep.subr.mxu0 0.0
        %4858 = vmatpush1.msra.mxu0 0.0
        %4859 = vmatprep.subr.mxu0 0.0
        %4860 = vmatpush1.msra.mxu0 0.0
        %4861 = vmatprep.subr.mxu0 0.0
        %4862 = vmatpush1.msra.mxu0 0.0
        %4863 = vmatprep.subr.mxu0 0.0
        %4864 = vmatpush1.msra.mxu0 0.0
        %4865 = vmatprep.subr.mxu0 0.0
        %4866 = vmatpush1.msra.mxu0 0.0
        %4867 = vmatprep.subr.mxu0 0.0
        %4868 = vmatpush1.msra.mxu0 0.0
        %4869 = vmatprep.subr.mxu0 0.0
        %4870 = vmatpush1.msra.mxu0 0.0
        %4871 = vmatprep.subr.mxu0 0.0
        %4872 = vmatpush1.msra.mxu0 0.0
        %4873 = vmatprep.subr.mxu0 0.0
        %4874 = vmatpush1.msra.mxu0 0.0
        %4875 = vmatprep.subr.mxu0 0.0
        %4876 = vmatpush1.msra.mxu0 0.0
        %4877 = vmatprep.mubr.f32.mxu0 0.0
        %4878 = vmatmul.mubr.f32.gmra.mrb[0].mxu0 %v1302
        %v4879 = vpop.f32.mrb[0].mxu0
        %v4880 = vadd.f32 %v4809, %v4879
        %v4881 = vpop.f32.mrb[0].mxu0
        %v4882 = vadd.f32 %v4811, %v4881
        %4883 = vdwg.mxu0
        %v4884 = vmax.f32 %v3602, 0.0
        %v4885 = vmax.f32 %v3604, 0.0
        %v4886 = vmax.f32 %v4241, 0.0
        %v4887 = vmax.f32 %v4243, 0.0
        %v4888 = vmax.f32 %v4880, 0.0
        %v4889 = vmax.f32 %v4882, 0.0
        %v4890 = vld [vmem:[#allocation3] sm:$0xff]
        %v4891 = vld [vmem:[#allocation3 + $0x8] sm:$0xff]
        %v4892 = vld [vmem:[#allocation3 + $0x10] sm:$0xff]
        %v4893 = vld [vmem:[#allocation3 + $0x18] sm:$0xff]
        %v4894 = vld [vmem:[#allocation3 + $0x20] sm:$0xff]
        %v4895 = vld [vmem:[#allocation3 + $0x28] sm:$0xff]
        %v4896 = vld [vmem:[#allocation3 + $0x30] sm:$0xff]
        %v4897 = vld [vmem:[#allocation3 + $0x38] sm:$0xff]
        %v4898 = vld [vmem:[#allocation3 + $0x40] sm:$0xff]
        %v4899 = vld [vmem:[#allocation3 + $0x48] sm:$0xff]
        %v4900 = vld [vmem:[#allocation3 + $0x50] sm:$0xff]
        %v4901 = vld [vmem:[#allocation3 + $0x58] sm:$0xff]
        %v4902 = vld [vmem:[#allocation3 + $0x60] sm:$0xff]
        %v4903 = vld [vmem:[#allocation3 + $0x68] sm:$0xff]
        %v4904 = vld [vmem:[#allocation3 + $0x70] sm:$0xff]
        %v4905 = vld [vmem:[#allocation3 + $0x78] sm:$0xff]
        %v4906 = vld [vmem:[#allocation3 + $0x80] sm:$0xff]
        %v4907 = vld [vmem:[%s352] sm:$0xff]
        %v4908 = vld [vmem:[%s352 + $0x8] sm:$0xff]
        %v4909 = vld [vmem:[%s352 + $0x10] sm:$0xff]
        %v4910 = vld [vmem:[%s352 + $0x18] sm:$0xff]
        %v4911 = vld [vmem:[%s352 + $0x20] sm:$0xff]
        %v4912 = vld [vmem:[%s352 + $0x28] sm:$0xff]
        %v4913 = vld [vmem:[%s352 + $0x30] sm:$0xff]
        %v4914 = vld [vmem:[%s352 + $0x38] sm:$0xff]
        %v4915 = vld [vmem:[%s352 + $0x40] sm:$0xff]
        %v4916 = vld [vmem:[%s352 + $0x48] sm:$0xff]
        %v4917 = vld [vmem:[%s352 + $0x50] sm:$0xff]
        %v4918 = vld [vmem:[%s352 + $0x58] sm:$0xff]
        %v4919 = vld [vmem:[%s352 + $0x60] sm:$0xff]
        %v4920 = vld [vmem:[%s352 + $0x68] sm:$0xff]
        %v4921 = vld [vmem:[%s352 + $0x70] sm:$0xff]
        %v4922 = vld [vmem:[%s352 + $0x78] sm:$0xff]
        %v4923 = vld [vmem:[%s352 + $0x80] sm:$0xff]
        %v4924 = vld [vmem:[%s352 + $0x88] sm:$0xff]
        %v4925 = vld [vmem:[%s352 + $0x90] sm:$0xff]
        %v4926 = vld [vmem:[%s352 + $0x98] sm:$0xff]
        %v4927 = vld [vmem:[%s352 + $0xa0] sm:$0xff]
        %v4928 = vld [vmem:[%s352 + $0xa8] sm:$0xff]
        %v4929 = vld [vmem:[%s352 + $0xb0] sm:$0xff]
        %v4930 = vld [vmem:[%s352 + $0xb8] sm:$0xff]
        %v4931 = vld [vmem:[%s352 + $0xc0] sm:$0xff]
        %v4932 = vld [vmem:[%s352 + $0xc8] sm:$0xff]
        %v4933 = vld [vmem:[%s352 + $0xd0] sm:$0xff]
        %v4934 = vld [vmem:[%s352 + $0xd8] sm:$0xff]
        %v4935 = vld [vmem:[%s352 + $0xe0] sm:$0xff]
        %v4936 = vld [vmem:[%s352 + $0xe8] sm:$0xff]
        %v4937 = vld [vmem:[%s352 + $0xf0] sm:$0xff]
        %v4938 = vld [vmem:[%s352 + $0xf8] sm:$0xff]
        %v4939 = vld [vmem:[%s352 + $0x100] sm:$0xff]
        %v4940 = vld [vmem:[%s352 + $0x108] sm:$0xff]
        %v4941 = vld [vmem:[%s352 + $0x110] sm:$0xff]
        %v4942 = vld [vmem:[%s352 + $0x118] sm:$0xff]
        %v4943 = vld [vmem:[%s352 + $0x120] sm:$0xff]
        %v4944 = vld [vmem:[%s352 + $0x128] sm:$0xff]
        %v4945 = vld [vmem:[%s352 + $0x130] sm:$0xff]
        %v4946 = vld [vmem:[%s352 + $0x138] sm:$0xff]
        %v4947 = vld [vmem:[%s352 + $0x140] sm:$0xff]
        %v4948 = vld [vmem:[%s352 + $0x148] sm:$0xff]
        %v4949 = vld [vmem:[%s352 + $0x150] sm:$0xff]
        %v4950 = vld [vmem:[%s352 + $0x158] sm:$0xff]
        %v4951 = vld [vmem:[%s352 + $0x160] sm:$0xff]
        %v4952 = vld [vmem:[%s352 + $0x168] sm:$0xff]
        %v4953 = vld [vmem:[%s352 + $0x170] sm:$0xff]
        %v4954 = vld [vmem:[%s352 + $0x178] sm:$0xff]
        %v4955 = vld [vmem:[%s352 + $0x180] sm:$0xff]
        %v4956 = vld [vmem:[%s352 + $0x188] sm:$0xff]
        %v4957 = vld [vmem:[%s352 + $0x190] sm:$0xff]
        %v4958 = vld [vmem:[%s352 + $0x198] sm:$0xff]
        %v4959 = vld [vmem:[%s352 + $0x1a0] sm:$0xff]
        %v4960 = vld [vmem:[%s352 + $0x1a8] sm:$0xff]
        %v4961 = vld [vmem:[%s352 + $0x1b0] sm:$0xff]
        %v4962 = vld [vmem:[%s352 + $0x1b8] sm:$0xff]
        %v4963 = vld [vmem:[%s352 + $0x1c0] sm:$0xff]
        %v4964 = vld [vmem:[%s352 + $0x1c8] sm:$0xff]
        %v4965 = vld [vmem:[%s352 + $0x1d0] sm:$0xff]
        %v4966 = vld [vmem:[%s352 + $0x1d8] sm:$0xff]
        %v4967 = vld [vmem:[%s352 + $0x1e0] sm:$0xff]
        %v4968 = vld [vmem:[%s352 + $0x1e8] sm:$0xff]
        %v4969 = vld [vmem:[%s352 + $0x1f0] sm:$0xff]
        %v4970 = vld [vmem:[%s352 + $0x1f8] sm:$0xff]
        %v4971 = vld [vmem:[%s352 + $0x200] sm:$0xff]
        %v4972 = vld [vmem:[%s352 + $0x208] sm:$0xff]
        %v4973 = vld [vmem:[%s352 + $0x210] sm:$0xff]
        %v4974 = vld [vmem:[%s352 + $0x218] sm:$0xff]
        %v4975 = vld [vmem:[%s352 + $0x220] sm:$0xff]
        %v4976 = vld [vmem:[%s352 + $0x228] sm:$0xff]
        %v4977 = vld [vmem:[%s352 + $0x230] sm:$0xff]
        %v4978 = vld [vmem:[%s352 + $0x238] sm:$0xff]
        %v4979 = vld [vmem:[%s352 + $0x240] sm:$0xff]
        %v4980 = vld [vmem:[%s352 + $0x248] sm:$0xff]
        %v4981 = vld [vmem:[%s352 + $0x250] sm:$0xff]
        %v4982 = vld [vmem:[%s352 + $0x258] sm:$0xff]
        %v4983 = vld [vmem:[%s352 + $0x260] sm:$0xff]
        %v4984 = vld [vmem:[%s352 + $0x268] sm:$0xff]
        %v4985 = vld [vmem:[%s352 + $0x270] sm:$0xff]
        %v4986 = vld [vmem:[%s352 + $0x278] sm:$0xff]
        %v4987 = vld [vmem:[%s352 + $0x280] sm:$0xff]
        %v4988 = vld [vmem:[%s352 + $0x288] sm:$0xff]
        %v4989 = vld [vmem:[%s352 + $0x290] sm:$0xff]
        %v4990 = vld [vmem:[%s352 + $0x298] sm:$0xff]
        %v4991 = vld [vmem:[%s352 + $0x2a0] sm:$0xff]
        %v4992 = vld [vmem:[%s352 + $0x2a8] sm:$0xff]
        %v4993 = vld [vmem:[%s352 + $0x2b0] sm:$0xff]
        %v4994 = vld [vmem:[%s352 + $0x2b8] sm:$0xff]
        %v4995 = vld [vmem:[%s352 + $0x2c0] sm:$0xff]
        %v4996 = vld [vmem:[%s352 + $0x2c8] sm:$0xff]
        %v4997 = vld [vmem:[%s352 + $0x2d0] sm:$0xff]
        %v4998 = vld [vmem:[%s352 + $0x2d8] sm:$0xff]
        %v4999 = vld [vmem:[%s352 + $0x2e0] sm:$0xff]
        %v5000 = vld [vmem:[%s352 + $0x2e8] sm:$0xff]
        %v5001 = vld [vmem:[%s352 + $0x2f0] sm:$0xff]
        %v5002 = vld [vmem:[%s352 + $0x2f8] sm:$0xff]
        %v5003 = vld [vmem:[%s352 + $0x300] sm:$0xff]
        %v5004 = vld [vmem:[%s352 + $0x308] sm:$0xff]
        %v5005 = vld [vmem:[%s352 + $0x310] sm:$0xff]
        %v5006 = vld [vmem:[%s352 + $0x318] sm:$0xff]
        %v5007 = vld [vmem:[%s352 + $0x320] sm:$0xff]
        %v5008 = vld [vmem:[%s352 + $0x328] sm:$0xff]
        %v5009 = vld [vmem:[%s352 + $0x330] sm:$0xff]
        %v5010 = vld [vmem:[%s352 + $0x338] sm:$0xff]
        %v5011 = vld [vmem:[%s352 + $0x340] sm:$0xff]
        %v5012 = vld [vmem:[%s352 + $0x348] sm:$0xff]
        %v5013 = vld [vmem:[%s352 + $0x350] sm:$0xff]
        %v5014 = vld [vmem:[%s352 + $0x358] sm:$0xff]
        %v5015 = vld [vmem:[%s352 + $0x360] sm:$0xff]
        %v5016 = vld [vmem:[%s352 + $0x368] sm:$0xff]
        %v5017 = vld [vmem:[%s352 + $0x370] sm:$0xff]
        %v5018 = vld [vmem:[%s352 + $0x378] sm:$0xff]
        %v5019 = vld [vmem:[%s352 + $0x380] sm:$0xff]
        %v5020 = vld [vmem:[%s352 + $0x388] sm:$0xff]
        %v5021 = vld [vmem:[%s352 + $0x390] sm:$0xff]
        %v5022 = vld [vmem:[%s352 + $0x398] sm:$0xff]
        %v5023 = vld [vmem:[%s352 + $0x3a0] sm:$0xff]
        %v5024 = vld [vmem:[%s352 + $0x3a8] sm:$0xff]
        %v5025 = vld [vmem:[%s352 + $0x3b0] sm:$0xff]
        %v5026 = vld [vmem:[%s352 + $0x3b8] sm:$0xff]
        %v5027 = vld [vmem:[%s352 + $0x3c0] sm:$0xff]
        %v5028 = vld [vmem:[%s352 + $0x3c8] sm:$0xff]
        %v5029 = vld [vmem:[%s352 + $0x3d0] sm:$0xff]
        %v5030 = vld [vmem:[%s352 + $0x3d8] sm:$0xff]
        %v5031 = vld [vmem:[%s352 + $0x3e0] sm:$0xff]
        %v5032 = vld [vmem:[%s352 + $0x3e8] sm:$0xff]
        %v5033 = vld [vmem:[%s352 + $0x3f0] sm:$0xff]
        %v5034 = vld [vmem:[%s352 + $0x3f8] sm:$0xff]
        %v5035 = vld [vmem:[%s352 + $0x400] sm:$0xff]
        %v5036 = vld [vmem:[%s352 + $0x408] sm:$0xff]
        %v5037 = vld [vmem:[%s352 + $0x410] sm:$0xff]
        %v5038 = vld [vmem:[%s352 + $0x418] sm:$0xff]
        %v5039 = vld [vmem:[%s352 + $0x420] sm:$0xff]
        %v5040 = vld [vmem:[%s352 + $0x428] sm:$0xff]
        %v5041 = vld [vmem:[%s352 + $0x430] sm:$0xff]
        %v5042 = vld [vmem:[%s352 + $0x438] sm:$0xff]
        %v5043 = vld [vmem:[%s352 + $0x440] sm:$0xff]
        %v5044 = vld [vmem:[%s352 + $0x448] sm:$0xff]
        %v5045 = vld [vmem:[%s352 + $0x450] sm:$0xff]
        %v5046 = vld [vmem:[%s352 + $0x458] sm:$0xff]
        %v5047 = vld [vmem:[%s352 + $0x460] sm:$0xff]
        %v5048 = vld [vmem:[%s352 + $0x468] sm:$0xff]
        %v5049 = vld [vmem:[%s352 + $0x470] sm:$0xff]
        %v5050 = vld [vmem:[%s352 + $0x478] sm:$0xff]
        %v5051 = vld [vmem:[%s352 + $0x480] sm:$0xff]
        %v5052 = vld [vmem:[%s352 + $0x488] sm:$0xff]
        %v5053 = vld [vmem:[%s352 + $0x490] sm:$0xff]
        %v5054 = vld [vmem:[%s352 + $0x498] sm:$0xff]
        %v5055 = vld [vmem:[%s352 + $0x4a0] sm:$0xff]
        %v5056 = vld [vmem:[%s352 + $0x4a8] sm:$0xff]
        %v5057 = vld [vmem:[%s352 + $0x4b0] sm:$0xff]
        %v5058 = vld [vmem:[%s352 + $0x4b8] sm:$0xff]
        %v5059 = vld [vmem:[%s352 + $0x4c0] sm:$0xff]
        %v5060 = vld [vmem:[%s352 + $0x4c8] sm:$0xff]
        %v5061 = vld [vmem:[%s352 + $0x4d0] sm:$0xff]
        %v5062 = vld [vmem:[%s352 + $0x4d8] sm:$0xff]
        %v5063 = vld [vmem:[%s352 + $0x4e0] sm:$0xff]
        %v5064 = vld [vmem:[%s352 + $0x4e8] sm:$0xff]
        %v5065 = vld [vmem:[%s352 + $0x4f0] sm:$0xff]
        %v5066 = vld [vmem:[%s352 + $0x4f8] sm:$0xff]
        %v5067 = vld [vmem:[%s352 + $0x500] sm:$0xff]
        %v5068 = vld [vmem:[%s352 + $0x508] sm:$0xff]
        %v5069 = vld [vmem:[%s352 + $0x510] sm:$0xff]
        %v5070 = vld [vmem:[%s352 + $0x518] sm:$0xff]
        %v5071 = vld [vmem:[%s352 + $0x520] sm:$0xff]
        %v5072 = vld [vmem:[%s352 + $0x528] sm:$0xff]
        %v5073 = vld [vmem:[%s352 + $0x530] sm:$0xff]
        %v5074 = vld [vmem:[%s352 + $0x538] sm:$0xff]
        %v5075 = vld [vmem:[%s352 + $0x540] sm:$0xff]
        %v5076 = vld [vmem:[%s352 + $0x548] sm:$0xff]
        %v5077 = vld [vmem:[%s352 + $0x550] sm:$0xff]
        %v5078 = vld [vmem:[%s352 + $0x558] sm:$0xff]
        %v5079 = vld [vmem:[%s352 + $0x560] sm:$0xff]
        %v5080 = vld [vmem:[%s352 + $0x568] sm:$0xff]
        %v5081 = vld [vmem:[%s352 + $0x570] sm:$0xff]
        %v5082 = vld [vmem:[%s352 + $0x578] sm:$0xff]
        %v5083 = vld [vmem:[%s352 + $0x580] sm:$0xff]
        %v5084 = vld [vmem:[%s352 + $0x588] sm:$0xff]
        %v5085 = vld [vmem:[%s352 + $0x590] sm:$0xff]
        %v5086 = vld [vmem:[%s352 + $0x598] sm:$0xff]
        %v5087 = vld [vmem:[%s352 + $0x5a0] sm:$0xff]
        %v5088 = vld [vmem:[%s352 + $0x5a8] sm:$0xff]
        %v5089 = vld [vmem:[%s352 + $0x5b0] sm:$0xff]
        %v5090 = vld [vmem:[%s352 + $0x5b8] sm:$0xff]
        %v5091 = vld [vmem:[%s352 + $0x5c0] sm:$0xff]
        %v5092 = vld [vmem:[%s352 + $0x5c8] sm:$0xff]
        %v5093 = vld [vmem:[%s352 + $0x5d0] sm:$0xff]
        %v5094 = vld [vmem:[%s352 + $0x5d8] sm:$0xff]
        %v5095 = vld [vmem:[%s352 + $0x5e0] sm:$0xff]
        %v5096 = vld [vmem:[%s352 + $0x5e8] sm:$0xff]
        %v5097 = vld [vmem:[%s352 + $0x5f0] sm:$0xff]
        %v5098 = vld [vmem:[%s352 + $0x5f8] sm:$0xff]
        %v5099 = vld [vmem:[%s352 + $0x600] sm:$0xff]
        %v5100 = vld [vmem:[%s352 + $0x608] sm:$0xff]
        %v5101 = vld [vmem:[%s352 + $0x610] sm:$0xff]
        %v5102 = vld [vmem:[%s352 + $0x618] sm:$0xff]
        %v5103 = vld [vmem:[%s352 + $0x620] sm:$0xff]
        %v5104 = vld [vmem:[%s352 + $0x628] sm:$0xff]
        %v5105 = vld [vmem:[%s352 + $0x630] sm:$0xff]
        %v5106 = vld [vmem:[%s352 + $0x638] sm:$0xff]
        %v5107 = vld [vmem:[%s352 + $0x640] sm:$0xff]
        %v5108 = vld [vmem:[%s352 + $0x648] sm:$0xff]
        %v5109 = vld [vmem:[%s352 + $0x650] sm:$0xff]
        %v5110 = vld [vmem:[%s352 + $0x658] sm:$0xff]
        %v5111 = vld [vmem:[%s352 + $0x660] sm:$0xff]
        %v5112 = vld [vmem:[%s352 + $0x668] sm:$0xff]
        %v5113 = vld [vmem:[%s352 + $0x670] sm:$0xff]
        %v5114 = vld [vmem:[%s352 + $0x678] sm:$0xff]
        %v5115 = vld [vmem:[%s352 + $0x680] sm:$0xff]
        %v5116 = vld [vmem:[%s352 + $0x688] sm:$0xff]
        %v5117 = vld [vmem:[%s352 + $0x690] sm:$0xff]
        %v5118 = vld [vmem:[%s352 + $0x698] sm:$0xff]
        %v5119 = vld [vmem:[%s352 + $0x6a0] sm:$0xff]
        %v5120 = vld [vmem:[%s352 + $0x6a8] sm:$0xff]
        %v5121 = vld [vmem:[%s352 + $0x6b0] sm:$0xff]
        %v5122 = vld [vmem:[%s352 + $0x6b8] sm:$0xff]
        %v5123 = vld [vmem:[%s352 + $0x6c0] sm:$0xff]
        %v5124 = vld [vmem:[%s352 + $0x6c8] sm:$0xff]
        %v5125 = vld [vmem:[%s352 + $0x6d0] sm:$0xff]
        %v5126 = vld [vmem:[%s352 + $0x6d8] sm:$0xff]
        %v5127 = vld [vmem:[%s352 + $0x6e0] sm:$0xff]
        %v5128 = vld [vmem:[%s352 + $0x6e8] sm:$0xff]
        %v5129 = vld [vmem:[%s352 + $0x6f0] sm:$0xff]
        %v5130 = vld [vmem:[%s352 + $0x6f8] sm:$0xff]
        %v5131 = vld [vmem:[%s352 + $0x700] sm:$0xff]
        %v5132 = vld [vmem:[%s352 + $0x708] sm:$0xff]
        %v5133 = vld [vmem:[%s352 + $0x710] sm:$0xff]
        %v5134 = vld [vmem:[%s352 + $0x718] sm:$0xff]
        %v5135 = vld [vmem:[%s352 + $0x720] sm:$0xff]
        %v5136 = vld [vmem:[%s352 + $0x728] sm:$0xff]
        %v5137 = vld [vmem:[%s352 + $0x730] sm:$0xff]
        %v5138 = vld [vmem:[%s352 + $0x738] sm:$0xff]
        %v5139 = vld [vmem:[%s352 + $0x740] sm:$0xff]
        %v5140 = vld [vmem:[%s352 + $0x748] sm:$0xff]
        %v5141 = vld [vmem:[%s352 + $0x750] sm:$0xff]
        %v5142 = vld [vmem:[%s352 + $0x758] sm:$0xff]
        %v5143 = vld [vmem:[%s352 + $0x760] sm:$0xff]
        %v5144 = vld [vmem:[%s352 + $0x768] sm:$0xff]
        %v5145 = vld [vmem:[%s352 + $0x770] sm:$0xff]
        %v5146 = vld [vmem:[%s352 + $0x778] sm:$0xff]
        %v5147 = vld [vmem:[%s352 + $0x780] sm:$0xff]
        %v5148 = vld [vmem:[%s352 + $0x788] sm:$0xff]
        %v5149 = vld [vmem:[%s352 + $0x790] sm:$0xff]
        %v5150 = vld [vmem:[%s352 + $0x798] sm:$0xff]
        %v5151 = vld [vmem:[%s352 + $0x7a0] sm:$0xff]
        %v5152 = vld [vmem:[%s352 + $0x7a8] sm:$0xff]
        %v5153 = vld [vmem:[%s352 + $0x7b0] sm:$0xff]
        %v5154 = vld [vmem:[%s352 + $0x7b8] sm:$0xff]
        %v5155 = vld [vmem:[%s352 + $0x7c0] sm:$0xff]
        %v5156 = vld [vmem:[%s352 + $0x7c8] sm:$0xff]
        %v5157 = vld [vmem:[%s352 + $0x7d0] sm:$0xff]
        %v5158 = vld [vmem:[%s352 + $0x7d8] sm:$0xff]
        %v5159 = vld [vmem:[%s352 + $0x7e0] sm:$0xff]
        %v5160 = vld [vmem:[%s352 + $0x7e8] sm:$0xff]
        %v5161 = vld [vmem:[%s352 + $0x7f0] sm:$0xff]
        %v5162 = vld [vmem:[%s352 + $0x7f8] sm:$0xff]
        %v5163 = vld [vmem:[%s352 + $0x800] sm:$0xff]
        %v5164 = vld [vmem:[%s352 + $0x808] sm:$0xff]
        %v5165 = vld [vmem:[%s352 + $0x810] sm:$0xff]
        %v5166 = vld [vmem:[%s352 + $0x818] sm:$0xff]
        %v5167 = vld [vmem:[%s352 + $0x820] sm:$0xff]
        %v5168 = vld [vmem:[%s352 + $0x828] sm:$0xff]
        %v5169 = vld [vmem:[%s352 + $0x830] sm:$0xff]
        %v5170 = vld [vmem:[%s352 + $0x838] sm:$0xff]
        %v5171 = vld [vmem:[%s352 + $0x840] sm:$0xff]
        %v5172 = vld [vmem:[%s352 + $0x848] sm:$0xff]
        %v5173 = vld [vmem:[%s352 + $0x850] sm:$0xff]
        %v5174 = vld [vmem:[%s352 + $0x858] sm:$0xff]
        %v5175 = vld [vmem:[%s352 + $0x860] sm:$0xff]
        %v5176 = vld [vmem:[%s352 + $0x868] sm:$0xff]
        %v5177 = vld [vmem:[%s352 + $0x870] sm:$0xff]
        %v5178 = vld [vmem:[%s352 + $0x878] sm:$0xff]
        %v5179 = vld [vmem:[%s352 + $0x880] sm:$0xff]
        %v5180 = vld [vmem:[%s352 + $0x888] sm:$0xff]
        %v5181 = vld [vmem:[%s352 + $0x890] sm:$0xff]
        %v5182 = vld [vmem:[%s352 + $0x898] sm:$0xff]
        %v5183 = vld [vmem:[%s352 + $0x8a0] sm:$0xff]
        %v5184 = vld [vmem:[%s352 + $0x8a8] sm:$0xff]
        %v5185 = vld [vmem:[%s352 + $0x8b0] sm:$0xff]
        %v5186 = vld [vmem:[%s352 + $0x8b8] sm:$0xff]
        %v5187 = vld [vmem:[%s352 + $0x8c0] sm:$0xff]
        %v5188 = vld [vmem:[%s352 + $0x8c8] sm:$0xff]
        %v5189 = vld [vmem:[%s352 + $0x8d0] sm:$0xff]
        %v5190 = vld [vmem:[%s352 + $0x8d8] sm:$0xff]
        %v5191 = vld [vmem:[%s352 + $0x8e0] sm:$0xff]
        %v5192 = vld [vmem:[%s352 + $0x8e8] sm:$0xff]
        %v5193 = vld [vmem:[%s352 + $0x8f0] sm:$0xff]
        %v5194 = vld [vmem:[%s352 + $0x8f8] sm:$0xff]
        %v5195 = vld [vmem:[%s352 + $0x900] sm:$0xff]
        %v5196 = vld [vmem:[%s352 + $0x908] sm:$0xff]
        %v5197 = vld [vmem:[%s352 + $0x910] sm:$0xff]
        %v5198 = vld [vmem:[%s352 + $0x918] sm:$0xff]
        %v5199 = vld [vmem:[%s352 + $0x920] sm:$0xff]
        %v5200 = vld [vmem:[%s352 + $0x928] sm:$0xff]
        %v5201 = vld [vmem:[%s352 + $0x930] sm:$0xff]
        %v5202 = vld [vmem:[%s352 + $0x938] sm:$0xff]
        %v5203 = vld [vmem:[%s352 + $0x940] sm:$0xff]
        %v5204 = vld [vmem:[%s352 + $0x948] sm:$0xff]
        %v5205 = vld [vmem:[%s352 + $0x950] sm:$0xff]
        %v5206 = vld [vmem:[%s352 + $0x958] sm:$0xff]
        %v5207 = vld [vmem:[%s352 + $0x960] sm:$0xff]
        %v5208 = vld [vmem:[%s352 + $0x968] sm:$0xff]
        %v5209 = vld [vmem:[%s352 + $0x970] sm:$0xff]
        %v5210 = vld [vmem:[%s352 + $0x978] sm:$0xff]
        %v5211 = vld [vmem:[%s352 + $0x980] sm:$0xff]
        %v5212 = vld [vmem:[%s352 + $0x988] sm:$0xff]
        %v5213 = vld [vmem:[%s352 + $0x990] sm:$0xff]
        %v5214 = vld [vmem:[%s352 + $0x998] sm:$0xff]
        %v5215 = vld [vmem:[%s352 + $0x9a0] sm:$0xff]
        %v5216 = vld [vmem:[%s352 + $0x9a8] sm:$0xff]
        %v5217 = vld [vmem:[%s352 + $0x9b0] sm:$0xff]
        %v5218 = vld [vmem:[%s352 + $0x9b8] sm:$0xff]
        %v5219 = vld [vmem:[%s352 + $0x9c0] sm:$0xff]
        %v5220 = vld [vmem:[%s352 + $0x9c8] sm:$0xff]
        %v5221 = vld [vmem:[%s352 + $0x9d0] sm:$0xff]
        %v5222 = vld [vmem:[%s352 + $0x9d8] sm:$0xff]
        %v5223 = vld [vmem:[%s352 + $0x9e0] sm:$0xff]
        %v5224 = vld [vmem:[%s352 + $0x9e8] sm:$0xff]
        %v5225 = vld [vmem:[%s352 + $0x9f0] sm:$0xff]
        %v5226 = vld [vmem:[%s352 + $0x9f8] sm:$0xff]
        %v5227 = vld [vmem:[%s352 + $0xa00] sm:$0xff]
        %v5228 = vld [vmem:[%s352 + $0xa08] sm:$0xff]
        %v5229 = vld [vmem:[%s352 + $0xa10] sm:$0xff]
        %v5230 = vld [vmem:[%s352 + $0xa18] sm:$0xff]
        %v5231 = vld [vmem:[%s352 + $0xa20] sm:$0xff]
        %v5232 = vld [vmem:[%s352 + $0xa28] sm:$0xff]
        %v5233 = vld [vmem:[%s352 + $0xa30] sm:$0xff]
        %v5234 = vld [vmem:[%s352 + $0xa38] sm:$0xff]
        %v5235 = vld [vmem:[%s352 + $0xa40] sm:$0xff]
        %v5236 = vld [vmem:[%s352 + $0xa48] sm:$0xff]
        %v5237 = vld [vmem:[%s352 + $0xa50] sm:$0xff]
        %v5238 = vld [vmem:[%s352 + $0xa58] sm:$0xff]
        %v5239 = vld [vmem:[%s352 + $0xa60] sm:$0xff]
        %v5240 = vld [vmem:[%s352 + $0xa68] sm:$0xff]
        %v5241 = vld [vmem:[%s352 + $0xa70] sm:$0xff]
        %v5242 = vld [vmem:[%s352 + $0xa78] sm:$0xff]
        %v5243 = vld [vmem:[%s352 + $0xa80] sm:$0xff]
        %v5244 = vld [vmem:[%s352 + $0xa88] sm:$0xff]
        %v5245 = vld [vmem:[%s352 + $0xa90] sm:$0xff]
        %v5246 = vld [vmem:[%s352 + $0xa98] sm:$0xff]
        %v5247 = vld [vmem:[%s352 + $0xaa0] sm:$0xff]
        %v5248 = vld [vmem:[%s352 + $0xaa8] sm:$0xff]
        %v5249 = vld [vmem:[%s352 + $0xab0] sm:$0xff]
        %v5250 = vld [vmem:[%s352 + $0xab8] sm:$0xff]
        %v5251 = vld [vmem:[%s352 + $0xac0] sm:$0xff]
        %v5252 = vld [vmem:[%s352 + $0xac8] sm:$0xff]
        %v5253 = vld [vmem:[%s352 + $0xad0] sm:$0xff]
        %v5254 = vld [vmem:[%s352 + $0xad8] sm:$0xff]
        %v5255 = vld [vmem:[%s352 + $0xae0] sm:$0xff]
        %v5256 = vld [vmem:[%s352 + $0xae8] sm:$0xff]
        %v5257 = vld [vmem:[%s352 + $0xaf0] sm:$0xff]
        %v5258 = vld [vmem:[%s352 + $0xaf8] sm:$0xff]
        %v5259 = vld [vmem:[%s352 + $0xb00] sm:$0xff]
        %v5260 = vld [vmem:[%s352 + $0xb08] sm:$0xff]
        %v5261 = vld [vmem:[%s352 + $0xb10] sm:$0xff]
        %v5262 = vld [vmem:[%s352 + $0xb18] sm:$0xff]
        %v5263 = vld [vmem:[%s352 + $0xb20] sm:$0xff]
        %v5264 = vld [vmem:[%s352 + $0xb28] sm:$0xff]
        %v5265 = vld [vmem:[%s352 + $0xb30] sm:$0xff]
        %v5266 = vld [vmem:[%s352 + $0xb38] sm:$0xff]
        %v5267 = vld [vmem:[%s352 + $0xb40] sm:$0xff]
        %v5268 = vld [vmem:[%s352 + $0xb48] sm:$0xff]
        %v5269 = vld [vmem:[%s352 + $0xb50] sm:$0xff]
        %v5270 = vld [vmem:[%s352 + $0xb58] sm:$0xff]
        %v5271 = vld [vmem:[%s352 + $0xb60] sm:$0xff]
        %v5272 = vld [vmem:[%s352 + $0xb68] sm:$0xff]
        %v5273 = vld [vmem:[%s352 + $0xb70] sm:$0xff]
        %v5274 = vld [vmem:[%s352 + $0xb78] sm:$0xff]
        %v5275 = vld [vmem:[%s352 + $0xb80] sm:$0xff]
        %v5276 = vld [vmem:[%s352 + $0xb88] sm:$0xff]
        %v5277 = vld [vmem:[%s352 + $0xb90] sm:$0xff]
        %v5278 = vld [vmem:[%s352 + $0xb98] sm:$0xff]
        %v5279 = vld [vmem:[%s352 + $0xba0] sm:$0xff]
        %v5280 = vld [vmem:[%s352 + $0xba8] sm:$0xff]
        %v5281 = vld [vmem:[%s352 + $0xbb0] sm:$0xff]
        %v5282 = vld [vmem:[%s352 + $0xbb8] sm:$0xff]
        %v5283 = vld [vmem:[%s352 + $0xbc0] sm:$0xff]
        %v5284 = vld [vmem:[%s352 + $0xbc8] sm:$0xff]
        %v5285 = vld [vmem:[%s352 + $0xbd0] sm:$0xff]
        %v5286 = vld [vmem:[%s352 + $0xbd8] sm:$0xff]
        %v5287 = vld [vmem:[%s352 + $0xbe0] sm:$0xff]
        %v5288 = vld [vmem:[%s352 + $0xbe8] sm:$0xff]
        %v5289 = vld [vmem:[%s352 + $0xbf0] sm:$0xff]
        %v5290 = vld [vmem:[%s352 + $0xbf8] sm:$0xff]
        %v5291 = vld [vmem:[%s352 + $0xc00] sm:$0xff]
        %v5292 = vld [vmem:[%s352 + $0xc08] sm:$0xff]
        %v5293 = vld [vmem:[%s352 + $0xc10] sm:$0xff]
        %v5294 = vld [vmem:[%s352 + $0xc18] sm:$0xff]
        %v5295 = vld [vmem:[%s352 + $0xc20] sm:$0xff]
        %v5296 = vld [vmem:[%s352 + $0xc28] sm:$0xff]
        %v5297 = vld [vmem:[%s352 + $0xc30] sm:$0xff]
        %v5298 = vld [vmem:[%s352 + $0xc38] sm:$0xff]
        %v5299 = vld [vmem:[%s352 + $0xc40] sm:$0xff]
        %v5300 = vld [vmem:[%s352 + $0xc48] sm:$0xff]
        %v5301 = vld [vmem:[%s352 + $0xc50] sm:$0xff]
        %v5302 = vld [vmem:[%s352 + $0xc58] sm:$0xff]
        %v5303 = vld [vmem:[%s352 + $0xc60] sm:$0xff]
        %v5304 = vld [vmem:[%s352 + $0xc68] sm:$0xff]
        %v5305 = vld [vmem:[%s352 + $0xc70] sm:$0xff]
        %v5306 = vld [vmem:[%s352 + $0xc78] sm:$0xff]
        %v5307 = vld [vmem:[%s352 + $0xc80] sm:$0xff]
        %v5308 = vld [vmem:[%s352 + $0xc88] sm:$0xff]
        %v5309 = vld [vmem:[%s352 + $0xc90] sm:$0xff]
        %v5310 = vld [vmem:[%s352 + $0xc98] sm:$0xff]
        %v5311 = vld [vmem:[%s352 + $0xca0] sm:$0xff]
        %v5312 = vld [vmem:[%s352 + $0xca8] sm:$0xff]
        %v5313 = vld [vmem:[%s352 + $0xcb0] sm:$0xff]
        %v5314 = vld [vmem:[%s352 + $0xcb8] sm:$0xff]
        %v5315 = vld [vmem:[%s352 + $0xcc0] sm:$0xff]
        %v5316 = vld [vmem:[%s352 + $0xcc8] sm:$0xff]
        %v5317 = vld [vmem:[%s352 + $0xcd0] sm:$0xff]
        %v5318 = vld [vmem:[%s352 + $0xcd8] sm:$0xff]
        %v5319 = vld [vmem:[%s352 + $0xce0] sm:$0xff]
        %v5320 = vld [vmem:[%s352 + $0xce8] sm:$0xff]
        %v5321 = vld [vmem:[%s352 + $0xcf0] sm:$0xff]
        %v5322 = vld [vmem:[%s352 + $0xcf8] sm:$0xff]
        %v5323 = vld [vmem:[%s352 + $0xd00] sm:$0xff]
        %v5324 = vld [vmem:[%s352 + $0xd08] sm:$0xff]
        %v5325 = vld [vmem:[%s352 + $0xd10] sm:$0xff]
        %v5326 = vld [vmem:[%s352 + $0xd18] sm:$0xff]
        %v5327 = vld [vmem:[%s352 + $0xd20] sm:$0xff]
        %v5328 = vld [vmem:[%s352 + $0xd28] sm:$0xff]
        %v5329 = vld [vmem:[%s352 + $0xd30] sm:$0xff]
        %v5330 = vld [vmem:[%s352 + $0xd38] sm:$0xff]
        %v5331 = vld [vmem:[%s352 + $0xd40] sm:$0xff]
        %v5332 = vld [vmem:[%s352 + $0xd48] sm:$0xff]
        %v5333 = vld [vmem:[%s352 + $0xd50] sm:$0xff]
        %v5334 = vld [vmem:[%s352 + $0xd58] sm:$0xff]
        %v5335 = vld [vmem:[%s352 + $0xd60] sm:$0xff]
        %v5336 = vld [vmem:[%s352 + $0xd68] sm:$0xff]
        %v5337 = vld [vmem:[%s352 + $0xd70] sm:$0xff]
        %v5338 = vld [vmem:[%s352 + $0xd78] sm:$0xff]
        %v5339 = vld [vmem:[%s352 + $0xd80] sm:$0xff]
        %v5340 = vld [vmem:[%s352 + $0xd88] sm:$0xff]
        %v5341 = vld [vmem:[%s352 + $0xd90] sm:$0xff]
        %v5342 = vld [vmem:[%s352 + $0xd98] sm:$0xff]
        %v5343 = vld [vmem:[%s352 + $0xda0] sm:$0xff]
        %v5344 = vld [vmem:[%s352 + $0xda8] sm:$0xff]
        %v5345 = vld [vmem:[%s352 + $0xdb0] sm:$0xff]
        %v5346 = vld [vmem:[%s352 + $0xdb8] sm:$0xff]
        %v5347 = vld [vmem:[%s352 + $0xdc0] sm:$0xff]
        %v5348 = vld [vmem:[%s352 + $0xdc8] sm:$0xff]
        %v5349 = vld [vmem:[%s352 + $0xdd0] sm:$0xff]
        %v5350 = vld [vmem:[%s352 + $0xdd8] sm:$0xff]
        %v5351 = vld [vmem:[%s352 + $0xde0] sm:$0xff]
        %v5352 = vld [vmem:[%s352 + $0xde8] sm:$0xff]
        %v5353 = vld [vmem:[%s352 + $0xdf0] sm:$0xff]
        %v5354 = vld [vmem:[%s352 + $0xdf8] sm:$0xff]
        %v5355 = vld [vmem:[%s352 + $0xe00] sm:$0xff]
        %v5356 = vld [vmem:[%s352 + $0xe08] sm:$0xff]
        %v5357 = vld [vmem:[%s352 + $0xe10] sm:$0xff]
        %v5358 = vld [vmem:[%s352 + $0xe18] sm:$0xff]
        %v5359 = vld [vmem:[%s352 + $0xe20] sm:$0xff]
        %v5360 = vld [vmem:[%s352 + $0xe28] sm:$0xff]
        %v5361 = vld [vmem:[%s352 + $0xe30] sm:$0xff]
        %v5362 = vld [vmem:[%s352 + $0xe38] sm:$0xff]
        %v5363 = vld [vmem:[%s352 + $0xe40] sm:$0xff]
        %v5364 = vld [vmem:[%s352 + $0xe48] sm:$0xff]
        %v5365 = vld [vmem:[%s352 + $0xe50] sm:$0xff]
        %v5366 = vld [vmem:[%s352 + $0xe58] sm:$0xff]
        %v5367 = vld [vmem:[%s352 + $0xe60] sm:$0xff]
        %v5368 = vld [vmem:[%s352 + $0xe68] sm:$0xff]
        %v5369 = vld [vmem:[%s352 + $0xe70] sm:$0xff]
        %v5370 = vld [vmem:[%s352 + $0xe78] sm:$0xff]
        %v5371 = vld [vmem:[%s352 + $0xe80] sm:$0xff]
        %v5372 = vld [vmem:[%s352 + $0xe88] sm:$0xff]
        %v5373 = vld [vmem:[%s352 + $0xe90] sm:$0xff]
        %v5374 = vld [vmem:[%s352 + $0xe98] sm:$0xff]
        %v5375 = vld [vmem:[%s352 + $0xea0] sm:$0xff]
        %v5376 = vld [vmem:[%s352 + $0xea8] sm:$0xff]
        %v5377 = vld [vmem:[%s352 + $0xeb0] sm:$0xff]
        %v5378 = vld [vmem:[%s352 + $0xeb8] sm:$0xff]
        %v5379 = vld [vmem:[%s352 + $0xec0] sm:$0xff]
        %v5380 = vld [vmem:[%s352 + $0xec8] sm:$0xff]
        %v5381 = vld [vmem:[%s352 + $0xed0] sm:$0xff]
        %v5382 = vld [vmem:[%s352 + $0xed8] sm:$0xff]
        %v5383 = vld [vmem:[%s352 + $0xee0] sm:$0xff]
        %v5384 = vld [vmem:[%s352 + $0xee8] sm:$0xff]
        %v5385 = vld [vmem:[%s352 + $0xef0] sm:$0xff]
        %v5386 = vld [vmem:[%s352 + $0xef8] sm:$0xff]
        %v5387 = vld [vmem:[%s352 + $0xf00] sm:$0xff]
        %v5388 = vld [vmem:[%s352 + $0xf08] sm:$0xff]
        %v5389 = vld [vmem:[%s352 + $0xf10] sm:$0xff]
        %v5390 = vld [vmem:[%s352 + $0xf18] sm:$0xff]
        %v5391 = vld [vmem:[%s352 + $0xf20] sm:$0xff]
        %v5392 = vld [vmem:[%s352 + $0xf28] sm:$0xff]
        %v5393 = vld [vmem:[%s352 + $0xf30] sm:$0xff]
        %v5394 = vld [vmem:[%s352 + $0xf38] sm:$0xff]
        %v5395 = vld [vmem:[%s352 + $0xf40] sm:$0xff]
        %v5396 = vld [vmem:[%s352 + $0xf48] sm:$0xff]
        %v5397 = vld [vmem:[%s352 + $0xf50] sm:$0xff]
        %v5398 = vld [vmem:[%s352 + $0xf58] sm:$0xff]
        %v5399 = vld [vmem:[%s352 + $0xf60] sm:$0xff]
        %v5400 = vld [vmem:[%s352 + $0xf68] sm:$0xff]
        %v5401 = vld [vmem:[%s352 + $0xf70] sm:$0xff]
        %v5402 = vld [vmem:[%s352 + $0xf78] sm:$0xff]
        %v5403 = vld [vmem:[%s352 + $0xf80] sm:$0xff]
        %v5404 = vld [vmem:[%s352 + $0xf88] sm:$0xff]
        %v5405 = vld [vmem:[%s352 + $0xf90] sm:$0xff]
        %v5406 = vld [vmem:[%s352 + $0xf98] sm:$0xff]
        %v5407 = vld [vmem:[%s352 + $0xfa0] sm:$0xff]
        %v5408 = vld [vmem:[%s352 + $0xfa8] sm:$0xff]
        %v5409 = vld [vmem:[%s352 + $0xfb0] sm:$0xff]
        %v5410 = vld [vmem:[%s352 + $0xfb8] sm:$0xff]
        %v5411 = vld [vmem:[%s352 + $0xfc0] sm:$0xff]
        %v5412 = vld [vmem:[%s352 + $0xfc8] sm:$0xff]
        %v5413 = vld [vmem:[%s352 + $0xfd0] sm:$0xff]
        %v5414 = vld [vmem:[%s352 + $0xfd8] sm:$0xff]
        %v5415 = vld [vmem:[%s352 + $0xfe0] sm:$0xff]
        %v5416 = vld [vmem:[%s352 + $0xfe8] sm:$0xff]
        %v5417 = vld [vmem:[%s352 + $0xff0] sm:$0xff]
        %v5418 = vld [vmem:[%s352 + $0xff8] sm:$0xff]
        %v5419 = vld [vmem:[%s352 + $0x1000] sm:$0xff]
        %v5420 = vld [vmem:[%s352 + $0x1008] sm:$0xff]
        %v5421 = vld [vmem:[%s352 + $0x1010] sm:$0xff]
        %v5422 = vld [vmem:[%s352 + $0x1018] sm:$0xff]
        %v5423 = vld [vmem:[%s352 + $0x1020] sm:$0xff]
        %v5424 = vld [vmem:[%s352 + $0x1028] sm:$0xff]
        %v5425 = vld [vmem:[%s352 + $0x1030] sm:$0xff]
        %v5426 = vld [vmem:[%s352 + $0x1038] sm:$0xff]
        %v5427 = vld [vmem:[%s352 + $0x1040] sm:$0xff]
        %v5428 = vld [vmem:[%s352 + $0x1048] sm:$0xff]
        %v5429 = vld [vmem:[%s352 + $0x1050] sm:$0xff]
        %v5430 = vld [vmem:[%s352 + $0x1058] sm:$0xff]
        %v5431 = vld [vmem:[%s352 + $0x1060] sm:$0xff]
        %v5432 = vld [vmem:[%s352 + $0x1068] sm:$0xff]
        %v5433 = vld [vmem:[%s352 + $0x1070] sm:$0xff]
        %v5434 = vld [vmem:[%s352 + $0x1078] sm:$0xff]
        %v5435 = vld [vmem:[%s352 + $0x1080] sm:$0xff]
        %v5436 = vld [vmem:[%s352 + $0x1088] sm:$0xff]
        %v5437 = vld [vmem:[%s352 + $0x1090] sm:$0xff]
        %v5438 = vld [vmem:[%s352 + $0x1098] sm:$0xff]
        %v5439 = vld [vmem:[%s352 + $0x10a0] sm:$0xff]
        %v5440 = vld [vmem:[%s352 + $0x10a8] sm:$0xff]
        %v5441 = vld [vmem:[%s352 + $0x10b0] sm:$0xff]
        %v5442 = vld [vmem:[%s352 + $0x10b8] sm:$0xff]
        %v5443 = vld [vmem:[%s352 + $0x10c0] sm:$0xff]
        %v5444 = vld [vmem:[%s352 + $0x10c8] sm:$0xff]
        %v5445 = vld [vmem:[%s352 + $0x10d0] sm:$0xff]
        %v5446 = vld [vmem:[%s352 + $0x10d8] sm:$0xff]
        %v5447 = vld [vmem:[%s352 + $0x10e0] sm:$0xff]
        %v5448 = vld [vmem:[%s352 + $0x10e8] sm:$0xff]
        %v5449 = vld [vmem:[%s352 + $0x10f0] sm:$0xff]
        %v5450 = vld [vmem:[%s352 + $0x10f8] sm:$0xff]
        %v5451 = vld [vmem:[%s352 + $0x1100] sm:$0xff]
        %v5452 = vld [vmem:[%s352 + $0x1108] sm:$0xff]
        %v5453 = vld [vmem:[%s352 + $0x1110] sm:$0xff]
        %v5454 = vld [vmem:[%s352 + $0x1118] sm:$0xff]
        %v5455 = vld [vmem:[%s352 + $0x1120] sm:$0xff]
        %v5456 = vld [vmem:[%s352 + $0x1128] sm:$0xff]
        %v5457 = vld [vmem:[%s352 + $0x1130] sm:$0xff]
        %v5458 = vld [vmem:[%s352 + $0x1138] sm:$0xff]
        %v5459 = vld [vmem:[%s352 + $0x1140] sm:$0xff]
        %v5460 = vld [vmem:[%s352 + $0x1148] sm:$0xff]
        %v5461 = vld [vmem:[%s352 + $0x1150] sm:$0xff]
        %v5462 = vld [vmem:[%s352 + $0x1158] sm:$0xff]
        %v5463 = vld [vmem:[%s352 + $0x1160] sm:$0xff]
        %v5464 = vld [vmem:[%s352 + $0x1168] sm:$0xff]
        %v5465 = vld [vmem:[%s352 + $0x1170] sm:$0xff]
        %v5466 = vld [vmem:[%s352 + $0x1178] sm:$0xff]
        %v5467 = vld [vmem:[%s352 + $0x1180] sm:$0xff]
        %v5468 = vld [vmem:[%s352 + $0x1188] sm:$0xff]
        %v5469 = vld [vmem:[%s352 + $0x1190] sm:$0xff]
        %v5470 = vld [vmem:[%s352 + $0x1198] sm:$0xff]
        %v5471 = vld [vmem:[%s352 + $0x11a0] sm:$0xff]
        %v5472 = vld [vmem:[%s352 + $0x11a8] sm:$0xff]
        %v5473 = vld [vmem:[%s352 + $0x11b0] sm:$0xff]
        %v5474 = vld [vmem:[%s352 + $0x11b8] sm:$0xff]
        %v5475 = vld [vmem:[%s352 + $0x11c0] sm:$0xff]
        %v5476 = vld [vmem:[%s352 + $0x11c8] sm:$0xff]
        %v5477 = vld [vmem:[%s352 + $0x11d0] sm:$0xff]
        %v5478 = vld [vmem:[%s352 + $0x11d8] sm:$0xff]
        %v5479 = vld [vmem:[%s352 + $0x11e0] sm:$0xff]
        %v5480 = vld [vmem:[%s352 + $0x11e8] sm:$0xff]
        %v5481 = vld [vmem:[%s352 + $0x11f0] sm:$0xff]
        %v5482 = vld [vmem:[%s352 + $0x11f8] sm:$0xff]
        %v5483 = vld [vmem:[%s352 + $0x1200] sm:$0xff]
        %v5484 = vld [vmem:[%s352 + $0x1208] sm:$0xff]
        %v5485 = vld [vmem:[%s352 + $0x1210] sm:$0xff]
        %v5486 = vld [vmem:[%s352 + $0x1218] sm:$0xff]
        %v5487 = vld [vmem:[%s352 + $0x1220] sm:$0xff]
        %v5488 = vld [vmem:[%s352 + $0x1228] sm:$0xff]
        %v5489 = vld [vmem:[%s352 + $0x1230] sm:$0xff]
        %v5490 = vld [vmem:[%s352 + $0x1238] sm:$0xff]
        %v5491 = vld [vmem:[%s352 + $0x1240] sm:$0xff]
        %v5492 = vld [vmem:[%s352 + $0x1248] sm:$0xff]
        %v5493 = vld [vmem:[%s352 + $0x1250] sm:$0xff]
        %v5494 = vld [vmem:[%s352 + $0x1258] sm:$0xff]
        %v5495 = vld [vmem:[%s352 + $0x1260] sm:$0xff]
        %v5496 = vld [vmem:[%s352 + $0x1268] sm:$0xff]
        %v5497 = vld [vmem:[%s352 + $0x1270] sm:$0xff]
        %v5498 = vld [vmem:[%s352 + $0x1278] sm:$0xff]
        %v5499 = vld [vmem:[%s352 + $0x1280] sm:$0xff]
        %v5500 = vld [vmem:[%s352 + $0x1288] sm:$0xff]
        %v5501 = vld [vmem:[%s352 + $0x1290] sm:$0xff]
        %v5502 = vld [vmem:[%s352 + $0x1298] sm:$0xff]
        %v5503 = vld [vmem:[%s352 + $0x12a0] sm:$0xff]
        %v5504 = vld [vmem:[%s352 + $0x12a8] sm:$0xff]
        %v5505 = vld [vmem:[%s352 + $0x12b0] sm:$0xff]
        %v5506 = vld [vmem:[%s352 + $0x12b8] sm:$0xff]
        %v5507 = vld [vmem:[%s352 + $0x12c0] sm:$0xff]
        %v5508 = vld [vmem:[%s352 + $0x12c8] sm:$0xff]
        %v5509 = vld [vmem:[%s352 + $0x12d0] sm:$0xff]
        %v5510 = vld [vmem:[%s352 + $0x12d8] sm:$0xff]
        %v5511 = vld [vmem:[%s352 + $0x12e0] sm:$0xff]
        %v5512 = vld [vmem:[%s352 + $0x12e8] sm:$0xff]
        %v5513 = vld [vmem:[%s352 + $0x12f0] sm:$0xff]
        %v5514 = vld [vmem:[%s352 + $0x12f8] sm:$0xff]
        %v5515 = vld [vmem:[%s352 + $0x1300] sm:$0xff]
        %v5516 = vld [vmem:[%s352 + $0x1308] sm:$0xff]
        %v5517 = vld [vmem:[%s352 + $0x1310] sm:$0xff]
        %v5518 = vld [vmem:[%s352 + $0x1318] sm:$0xff]
        %v5519 = vld [vmem:[%s352 + $0x1320] sm:$0xff]
        %v5520 = vld [vmem:[%s352 + $0x1328] sm:$0xff]
        %v5521 = vld [vmem:[%s352 + $0x1330] sm:$0xff]
        %v5522 = vld [vmem:[%s352 + $0x1338] sm:$0xff]
        %v5523 = vld [vmem:[%s352 + $0x1340] sm:$0xff]
        %v5524 = vld [vmem:[%s352 + $0x1348] sm:$0xff]
        %v5525 = vld [vmem:[%s352 + $0x1350] sm:$0xff]
        %v5526 = vld [vmem:[%s352 + $0x1358] sm:$0xff]
        %v5527 = vld [vmem:[%s352 + $0x1360] sm:$0xff]
        %v5528 = vld [vmem:[%s352 + $0x1368] sm:$0xff]
        %v5529 = vld [vmem:[%s352 + $0x1370] sm:$0xff]
        %v5530 = vld [vmem:[%s352 + $0x1378] sm:$0xff]
        %v5531 = vld [vmem:[%s352 + $0x1380] sm:$0xff]
        %v5532 = vld [vmem:[%s352 + $0x1388] sm:$0xff]
        %v5533 = vld [vmem:[%s352 + $0x1390] sm:$0xff]
        %v5534 = vld [vmem:[%s352 + $0x1398] sm:$0xff]
        %v5535 = vld [vmem:[%s352 + $0x13a0] sm:$0xff]
        %v5536 = vld [vmem:[%s352 + $0x13a8] sm:$0xff]
        %v5537 = vld [vmem:[%s352 + $0x13b0] sm:$0xff]
        %v5538 = vld [vmem:[%s352 + $0x13b8] sm:$0xff]
        %v5539 = vld [vmem:[%s352 + $0x13c0] sm:$0xff]
        %v5540 = vld [vmem:[%s352 + $0x13c8] sm:$0xff]
        %v5541 = vld [vmem:[%s352 + $0x13d0] sm:$0xff]
        %v5542 = vld [vmem:[%s352 + $0x13d8] sm:$0xff]
        %v5543 = vld [vmem:[%s352 + $0x13e0] sm:$0xff]
        %v5544 = vld [vmem:[%s352 + $0x13e8] sm:$0xff]
        %v5545 = vld [vmem:[%s352 + $0x13f0] sm:$0xff]
        %v5546 = vld [vmem:[%s352 + $0x13f8] sm:$0xff]
        %v5547 = vld [vmem:[%s352 + $0x1400] sm:$0xff]
        %v5548 = vld [vmem:[%s352 + $0x1408] sm:$0xff]
        %v5549 = vld [vmem:[%s352 + $0x1410] sm:$0xff]
        %v5550 = vld [vmem:[%s352 + $0x1418] sm:$0xff]
        %v5551 = vld [vmem:[%s352 + $0x1420] sm:$0xff]
        %v5552 = vld [vmem:[%s352 + $0x1428] sm:$0xff]
        %v5553 = vld [vmem:[%s352 + $0x1430] sm:$0xff]
        %v5554 = vld [vmem:[%s352 + $0x1438] sm:$0xff]
        %v5555 = vld [vmem:[%s352 + $0x1440] sm:$0xff]
        %v5556 = vld [vmem:[%s352 + $0x1448] sm:$0xff]
        %v5557 = vld [vmem:[%s352 + $0x1450] sm:$0xff]
        %v5558 = vld [vmem:[%s352 + $0x1458] sm:$0xff]
        %v5559 = vld [vmem:[%s352 + $0x1460] sm:$0xff]
        %v5560 = vld [vmem:[%s352 + $0x1468] sm:$0xff]
        %v5561 = vld [vmem:[%s352 + $0x1470] sm:$0xff]
        %v5562 = vld [vmem:[%s352 + $0x1478] sm:$0xff]
        %v5563 = vld [vmem:[%s352 + $0x1480] sm:$0xff]
        %v5564 = vld [vmem:[%s352 + $0x1488] sm:$0xff]
        %v5565 = vld [vmem:[%s352 + $0x1490] sm:$0xff]
        %v5566 = vld [vmem:[%s352 + $0x1498] sm:$0xff]
        %v5567 = vld [vmem:[%s352 + $0x14a0] sm:$0xff]
        %v5568 = vld [vmem:[%s352 + $0x14a8] sm:$0xff]
        %v5569 = vld [vmem:[%s352 + $0x14b0] sm:$0xff]
        %v5570 = vld [vmem:[%s352 + $0x14b8] sm:$0xff]
        %v5571 = vld [vmem:[%s352 + $0x14c0] sm:$0xff]
        %v5572 = vld [vmem:[%s352 + $0x14c8] sm:$0xff]
        %v5573 = vld [vmem:[%s352 + $0x14d0] sm:$0xff]
        %v5574 = vld [vmem:[%s352 + $0x14d8] sm:$0xff]
        %v5575 = vld [vmem:[%s352 + $0x14e0] sm:$0xff]
        %v5576 = vld [vmem:[%s352 + $0x14e8] sm:$0xff]
        %v5577 = vld [vmem:[%s352 + $0x14f0] sm:$0xff]
        %v5578 = vld [vmem:[%s352 + $0x14f8] sm:$0xff]
        %v5579 = vld [vmem:[%s352 + $0x1500] sm:$0xff]
        %v5580 = vld [vmem:[%s352 + $0x1508] sm:$0xff]
        %v5581 = vld [vmem:[%s352 + $0x1510] sm:$0xff]
        %v5582 = vld [vmem:[%s352 + $0x1518] sm:$0xff]
        %v5583 = vld [vmem:[%s352 + $0x1520] sm:$0xff]
        %v5584 = vld [vmem:[%s352 + $0x1528] sm:$0xff]
        %v5585 = vld [vmem:[%s352 + $0x1530] sm:$0xff]
        %v5586 = vld [vmem:[%s352 + $0x1538] sm:$0xff]
        %v5587 = vld [vmem:[%s352 + $0x1540] sm:$0xff]
        %v5588 = vld [vmem:[%s352 + $0x1548] sm:$0xff]
        %v5589 = vld [vmem:[%s352 + $0x1550] sm:$0xff]
        %v5590 = vld [vmem:[%s352 + $0x1558] sm:$0xff]
        %v5591 = vld [vmem:[%s352 + $0x1560] sm:$0xff]
        %v5592 = vld [vmem:[%s352 + $0x1568] sm:$0xff]
        %v5593 = vld [vmem:[%s352 + $0x1570] sm:$0xff]
        %v5594 = vld [vmem:[%s352 + $0x1578] sm:$0xff]
        %v5595 = vld [vmem:[%s352 + $0x1580] sm:$0xff]
        %v5596 = vld [vmem:[%s352 + $0x1588] sm:$0xff]
        %v5597 = vld [vmem:[%s352 + $0x1590] sm:$0xff]
        %v5598 = vld [vmem:[%s352 + $0x1598] sm:$0xff]
        %v5599 = vld [vmem:[%s352 + $0x15a0] sm:$0xff]
        %v5600 = vld [vmem:[%s352 + $0x15a8] sm:$0xff]
        %v5601 = vld [vmem:[%s352 + $0x15b0] sm:$0xff]
        %v5602 = vld [vmem:[%s352 + $0x15b8] sm:$0xff]
        %v5603 = vld [vmem:[%s352 + $0x15c0] sm:$0xff]
        %v5604 = vld [vmem:[%s352 + $0x15c8] sm:$0xff]
        %v5605 = vld [vmem:[%s352 + $0x15d0] sm:$0xff]
        %v5606 = vld [vmem:[%s352 + $0x15d8] sm:$0xff]
        %v5607 = vld [vmem:[%s352 + $0x15e0] sm:$0xff]
        %v5608 = vld [vmem:[%s352 + $0x15e8] sm:$0xff]
        %v5609 = vld [vmem:[%s352 + $0x15f0] sm:$0xff]
        %v5610 = vld [vmem:[%s352 + $0x15f8] sm:$0xff]
        %v5611 = vld [vmem:[%s352 + $0x1600] sm:$0xff]
        %v5612 = vld [vmem:[%s352 + $0x1608] sm:$0xff]
        %v5613 = vld [vmem:[%s352 + $0x1610] sm:$0xff]
        %v5614 = vld [vmem:[%s352 + $0x1618] sm:$0xff]
        %v5615 = vld [vmem:[%s352 + $0x1620] sm:$0xff]
        %v5616 = vld [vmem:[%s352 + $0x1628] sm:$0xff]
        %v5617 = vld [vmem:[%s352 + $0x1630] sm:$0xff]
        %v5618 = vld [vmem:[%s352 + $0x1638] sm:$0xff]
        %v5619 = vld [vmem:[%s352 + $0x1640] sm:$0xff]
        %v5620 = vld [vmem:[%s352 + $0x1648] sm:$0xff]
        %v5621 = vld [vmem:[%s352 + $0x1650] sm:$0xff]
        %v5622 = vld [vmem:[%s352 + $0x1658] sm:$0xff]
        %v5623 = vld [vmem:[%s352 + $0x1660] sm:$0xff]
        %v5624 = vld [vmem:[%s352 + $0x1668] sm:$0xff]
        %v5625 = vld [vmem:[%s352 + $0x1670] sm:$0xff]
        %v5626 = vld [vmem:[%s352 + $0x1678] sm:$0xff]
        %v5627 = vld [vmem:[%s352 + $0x1680] sm:$0xff]
        %v5628 = vld [vmem:[%s352 + $0x1688] sm:$0xff]
        %v5629 = vld [vmem:[%s352 + $0x1690] sm:$0xff]
        %v5630 = vld [vmem:[%s352 + $0x1698] sm:$0xff]
        %v5631 = vld [vmem:[%s352 + $0x16a0] sm:$0xff]
        %v5632 = vld [vmem:[%s352 + $0x16a8] sm:$0xff]
        %v5633 = vld [vmem:[%s352 + $0x16b0] sm:$0xff]
        %v5634 = vld [vmem:[%s352 + $0x16b8] sm:$0xff]
        %v5635 = vld [vmem:[%s352 + $0x16c0] sm:$0xff]
        %v5636 = vld [vmem:[%s352 + $0x16c8] sm:$0xff]
        %v5637 = vld [vmem:[%s352 + $0x16d0] sm:$0xff]
        %v5638 = vld [vmem:[%s352 + $0x16d8] sm:$0xff]
        %v5639 = vld [vmem:[%s352 + $0x16e0] sm:$0xff]
        %v5640 = vld [vmem:[%s352 + $0x16e8] sm:$0xff]
        %v5641 = vld [vmem:[%s352 + $0x16f0] sm:$0xff]
        %v5642 = vld [vmem:[%s352 + $0x16f8] sm:$0xff]
        %v5643 = vld [vmem:[%s352 + $0x1700] sm:$0xff]
        %v5644 = vld [vmem:[%s352 + $0x1708] sm:$0xff]
        %v5645 = vld [vmem:[%s352 + $0x1710] sm:$0xff]
        %v5646 = vld [vmem:[%s352 + $0x1718] sm:$0xff]
        %v5647 = vld [vmem:[%s352 + $0x1720] sm:$0xff]
        %v5648 = vld [vmem:[%s352 + $0x1728] sm:$0xff]
        %v5649 = vld [vmem:[%s352 + $0x1730] sm:$0xff]
        %v5650 = vld [vmem:[%s352 + $0x1738] sm:$0xff]
        %v5651 = vld [vmem:[%s352 + $0x1740] sm:$0xff]
        %v5652 = vld [vmem:[%s352 + $0x1748] sm:$0xff]
        %v5653 = vld [vmem:[%s352 + $0x1750] sm:$0xff]
        %v5654 = vld [vmem:[%s352 + $0x1758] sm:$0xff]
        %v5655 = vld [vmem:[%s352 + $0x1760] sm:$0xff]
        %v5656 = vld [vmem:[%s352 + $0x1768] sm:$0xff]
        %v5657 = vld [vmem:[%s352 + $0x1770] sm:$0xff]
        %v5658 = vld [vmem:[%s352 + $0x1778] sm:$0xff]
        %v5659 = vld [vmem:[%s352 + $0x1780] sm:$0xff]
        %v5660 = vld [vmem:[%s352 + $0x1788] sm:$0xff]
        %v5661 = vld [vmem:[%s352 + $0x1790] sm:$0xff]
        %v5662 = vld [vmem:[%s352 + $0x1798] sm:$0xff]
        %v5663 = vld [vmem:[%s352 + $0x17a0] sm:$0xff]
        %v5664 = vld [vmem:[%s352 + $0x17a8] sm:$0xff]
        %v5665 = vld [vmem:[%s352 + $0x17b0] sm:$0xff]
        %v5666 = vld [vmem:[%s352 + $0x17b8] sm:$0xff]
        %v5667 = vld [vmem:[%s352 + $0x17c0] sm:$0xff]
        %v5668 = vld [vmem:[%s352 + $0x17c8] sm:$0xff]
        %v5669 = vld [vmem:[%s352 + $0x17d0] sm:$0xff]
        %v5670 = vld [vmem:[%s352 + $0x17d8] sm:$0xff]
        %v5671 = vld [vmem:[%s352 + $0x17e0] sm:$0xff]
        %v5672 = vld [vmem:[%s352 + $0x17e8] sm:$0xff]
        %v5673 = vld [vmem:[%s352 + $0x17f0] sm:$0xff]
        %v5674 = vld [vmem:[%s352 + $0x17f8] sm:$0xff]
        %v5675 = vld [vmem:[%s352 + $0x1800] sm:$0xff]
        %v5676 = vld [vmem:[%s352 + $0x1808] sm:$0xff]
        %v5677 = vld [vmem:[%s352 + $0x1810] sm:$0xff]
        %v5678 = vld [vmem:[%s352 + $0x1818] sm:$0xff]
        %v5679 = vld [vmem:[%s352 + $0x1820] sm:$0xff]
        %v5680 = vld [vmem:[%s352 + $0x1828] sm:$0xff]
        %v5681 = vld [vmem:[%s352 + $0x1830] sm:$0xff]
        %v5682 = vld [vmem:[%s352 + $0x1838] sm:$0xff]
        %v5683 = vld [vmem:[%s352 + $0x1840] sm:$0xff]
        %v5684 = vld [vmem:[%s352 + $0x1848] sm:$0xff]
        %v5685 = vld [vmem:[%s352 + $0x1850] sm:$0xff]
        %v5686 = vld [vmem:[%s352 + $0x1858] sm:$0xff]
        %v5687 = vld [vmem:[%s352 + $0x1860] sm:$0xff]
        %v5688 = vld [vmem:[%s352 + $0x1868] sm:$0xff]
        %v5689 = vld [vmem:[%s352 + $0x1870] sm:$0xff]
        %v5690 = vld [vmem:[%s352 + $0x1878] sm:$0xff]
        %v5691 = vld [vmem:[%s352 + $0x1880] sm:$0xff]
        %v5692 = vld [vmem:[%s352 + $0x1888] sm:$0xff]
        %v5693 = vld [vmem:[%s352 + $0x1890] sm:$0xff]
        %v5694 = vld [vmem:[%s352 + $0x1898] sm:$0xff]
        %v5695 = vld [vmem:[%s352 + $0x18a0] sm:$0xff]
        %v5696 = vld [vmem:[%s352 + $0x18a8] sm:$0xff]
        %v5697 = vld [vmem:[%s352 + $0x18b0] sm:$0xff]
        %v5698 = vld [vmem:[%s352 + $0x18b8] sm:$0xff]
        %v5699 = vld [vmem:[%s352 + $0x18c0] sm:$0xff]
        %v5700 = vld [vmem:[%s352 + $0x18c8] sm:$0xff]
        %v5701 = vld [vmem:[%s352 + $0x18d0] sm:$0xff]
        %v5702 = vld [vmem:[%s352 + $0x18d8] sm:$0xff]
        %v5703 = vld [vmem:[%s352 + $0x18e0] sm:$0xff]
        %v5704 = vld [vmem:[%s352 + $0x18e8] sm:$0xff]
        %v5705 = vld [vmem:[%s352 + $0x18f0] sm:$0xff]
        %v5706 = vld [vmem:[%s352 + $0x18f8] sm:$0xff]
        %v5707 = vld [vmem:[%s352 + $0x1900] sm:$0xff]
        %v5708 = vld [vmem:[%s352 + $0x1908] sm:$0xff]
        %v5709 = vld [vmem:[%s352 + $0x1910] sm:$0xff]
        %v5710 = vld [vmem:[%s352 + $0x1918] sm:$0xff]
        %v5711 = vld [vmem:[%s352 + $0x1920] sm:$0xff]
        %v5712 = vld [vmem:[%s352 + $0x1928] sm:$0xff]
        %v5713 = vld [vmem:[%s352 + $0x1930] sm:$0xff]
        %v5714 = vld [vmem:[%s352 + $0x1938] sm:$0xff]
        %v5715 = vld [vmem:[%s352 + $0x1940] sm:$0xff]
        %v5716 = vld [vmem:[%s352 + $0x1948] sm:$0xff]
        %v5717 = vld [vmem:[%s352 + $0x1950] sm:$0xff]
        %v5718 = vld [vmem:[%s352 + $0x1958] sm:$0xff]
        %v5719 = vld [vmem:[%s352 + $0x1960] sm:$0xff]
        %v5720 = vld [vmem:[%s352 + $0x1968] sm:$0xff]
        %v5721 = vld [vmem:[%s352 + $0x1970] sm:$0xff]
        %v5722 = vld [vmem:[%s352 + $0x1978] sm:$0xff]
        %v5723 = vld [vmem:[%s352 + $0x1980] sm:$0xff]
        %v5724 = vld [vmem:[%s352 + $0x1988] sm:$0xff]
        %v5725 = vld [vmem:[%s352 + $0x1990] sm:$0xff]
        %v5726 = vld [vmem:[%s352 + $0x1998] sm:$0xff]
        %v5727 = vld [vmem:[%s352 + $0x19a0] sm:$0xff]
        %v5728 = vld [vmem:[%s352 + $0x19a8] sm:$0xff]
        %v5729 = vld [vmem:[%s352 + $0x19b0] sm:$0xff]
        %v5730 = vld [vmem:[%s352 + $0x19b8] sm:$0xff]
        %v5731 = vld [vmem:[%s352 + $0x19c0] sm:$0xff]
        %v5732 = vld [vmem:[%s352 + $0x19c8] sm:$0xff]
        %v5733 = vld [vmem:[%s352 + $0x19d0] sm:$0xff]
        %v5734 = vld [vmem:[%s352 + $0x19d8] sm:$0xff]
        %v5735 = vld [vmem:[%s352 + $0x19e0] sm:$0xff]
        %v5736 = vld [vmem:[%s352 + $0x19e8] sm:$0xff]
        %v5737 = vld [vmem:[%s352 + $0x19f0] sm:$0xff]
        %v5738 = vld [vmem:[%s352 + $0x19f8] sm:$0xff]
        %v5739 = vld [vmem:[%s352 + $0x1a00] sm:$0xff]
        %v5740 = vld [vmem:[%s352 + $0x1a08] sm:$0xff]
        %v5741 = vld [vmem:[%s352 + $0x1a10] sm:$0xff]
        %v5742 = vld [vmem:[%s352 + $0x1a18] sm:$0xff]
        %v5743 = vld [vmem:[%s352 + $0x1a20] sm:$0xff]
        %v5744 = vld [vmem:[%s352 + $0x1a28] sm:$0xff]
        %v5745 = vld [vmem:[%s352 + $0x1a30] sm:$0xff]
        %v5746 = vld [vmem:[%s352 + $0x1a38] sm:$0xff]
        %v5747 = vld [vmem:[%s352 + $0x1a40] sm:$0xff]
        %v5748 = vld [vmem:[%s352 + $0x1a48] sm:$0xff]
        %v5749 = vld [vmem:[%s352 + $0x1a50] sm:$0xff]
        %v5750 = vld [vmem:[%s352 + $0x1a58] sm:$0xff]
        %v5751 = vld [vmem:[%s352 + $0x1a60] sm:$0xff]
        %v5752 = vld [vmem:[%s352 + $0x1a68] sm:$0xff]
        %v5753 = vld [vmem:[%s352 + $0x1a70] sm:$0xff]
        %v5754 = vld [vmem:[%s352 + $0x1a78] sm:$0xff]
        %v5755 = vld [vmem:[%s352 + $0x1a80] sm:$0xff]
        %v5756 = vld [vmem:[%s352 + $0x1a88] sm:$0xff]
        %v5757 = vld [vmem:[%s352 + $0x1a90] sm:$0xff]
        %v5758 = vld [vmem:[%s352 + $0x1a98] sm:$0xff]
        %v5759 = vld [vmem:[%s352 + $0x1aa0] sm:$0xff]
        %v5760 = vld [vmem:[%s352 + $0x1aa8] sm:$0xff]
        %v5761 = vld [vmem:[%s352 + $0x1ab0] sm:$0xff]
        %v5762 = vld [vmem:[%s352 + $0x1ab8] sm:$0xff]
        %v5763 = vld [vmem:[%s352 + $0x1ac0] sm:$0xff]
        %v5764 = vld [vmem:[%s352 + $0x1ac8] sm:$0xff]
        %v5765 = vld [vmem:[%s352 + $0x1ad0] sm:$0xff]
        %v5766 = vld [vmem:[%s352 + $0x1ad8] sm:$0xff]
        %v5767 = vld [vmem:[%s352 + $0x1ae0] sm:$0xff]
        %v5768 = vld [vmem:[%s352 + $0x1ae8] sm:$0xff]
        %v5769 = vld [vmem:[%s352 + $0x1af0] sm:$0xff]
        %v5770 = vld [vmem:[%s352 + $0x1af8] sm:$0xff]
        %v5771 = vld [vmem:[%s352 + $0x1b00] sm:$0xff]
        %v5772 = vld [vmem:[%s352 + $0x1b08] sm:$0xff]
        %v5773 = vld [vmem:[%s352 + $0x1b10] sm:$0xff]
        %v5774 = vld [vmem:[%s352 + $0x1b18] sm:$0xff]
        %v5775 = vld [vmem:[%s352 + $0x1b20] sm:$0xff]
        %v5776 = vld [vmem:[%s352 + $0x1b28] sm:$0xff]
        %v5777 = vld [vmem:[%s352 + $0x1b30] sm:$0xff]
        %v5778 = vld [vmem:[%s352 + $0x1b38] sm:$0xff]
        %v5779 = vld [vmem:[%s352 + $0x1b40] sm:$0xff]
        %v5780 = vld [vmem:[%s352 + $0x1b48] sm:$0xff]
        %v5781 = vld [vmem:[%s352 + $0x1b50] sm:$0xff]
        %v5782 = vld [vmem:[%s352 + $0x1b58] sm:$0xff]
        %v5783 = vld [vmem:[%s352 + $0x1b60] sm:$0xff]
        %v5784 = vld [vmem:[%s352 + $0x1b68] sm:$0xff]
        %v5785 = vld [vmem:[%s352 + $0x1b70] sm:$0xff]
        %v5786 = vld [vmem:[%s352 + $0x1b78] sm:$0xff]
        %v5787 = vld [vmem:[%s352 + $0x1b80] sm:$0xff]
        %v5788 = vld [vmem:[%s352 + $0x1b88] sm:$0xff]
        %v5789 = vld [vmem:[%s352 + $0x1b90] sm:$0xff]
        %v5790 = vld [vmem:[%s352 + $0x1b98] sm:$0xff]
        %v5791 = vld [vmem:[%s352 + $0x1ba0] sm:$0xff]
        %v5792 = vld [vmem:[%s352 + $0x1ba8] sm:$0xff]
        %v5793 = vld [vmem:[%s352 + $0x1bb0] sm:$0xff]
        %v5794 = vld [vmem:[%s352 + $0x1bb8] sm:$0xff]
        %v5795 = vld [vmem:[%s352 + $0x1bc0] sm:$0xff]
        %v5796 = vld [vmem:[%s352 + $0x1bc8] sm:$0xff]
        %v5797 = vld [vmem:[%s352 + $0x1bd0] sm:$0xff]
        %v5798 = vld [vmem:[%s352 + $0x1bd8] sm:$0xff]
        %v5799 = vld [vmem:[%s352 + $0x1be0] sm:$0xff]
        %v5800 = vld [vmem:[%s352 + $0x1be8] sm:$0xff]
        %v5801 = vld [vmem:[%s352 + $0x1bf0] sm:$0xff]
        %v5802 = vld [vmem:[%s352 + $0x1bf8] sm:$0xff]
        %v5803 = vld [vmem:[%s352 + $0x1c00] sm:$0xff]
        %v5804 = vld [vmem:[%s352 + $0x1c08] sm:$0xff]
        %v5805 = vld [vmem:[%s352 + $0x1c10] sm:$0xff]
        %v5806 = vld [vmem:[%s352 + $0x1c18] sm:$0xff]
        %v5807 = vld [vmem:[%s352 + $0x1c20] sm:$0xff]
        %v5808 = vld [vmem:[%s352 + $0x1c28] sm:$0xff]
        %v5809 = vld [vmem:[%s352 + $0x1c30] sm:$0xff]
        %v5810 = vld [vmem:[%s352 + $0x1c38] sm:$0xff]
        %v5811 = vld [vmem:[%s352 + $0x1c40] sm:$0xff]
        %v5812 = vld [vmem:[%s352 + $0x1c48] sm:$0xff]
        %v5813 = vld [vmem:[%s352 + $0x1c50] sm:$0xff]
        %v5814 = vld [vmem:[%s352 + $0x1c58] sm:$0xff]
        %v5815 = vld [vmem:[%s352 + $0x1c60] sm:$0xff]
        %v5816 = vld [vmem:[%s352 + $0x1c68] sm:$0xff]
        %v5817 = vld [vmem:[%s352 + $0x1c70] sm:$0xff]
        %v5818 = vld [vmem:[%s352 + $0x1c78] sm:$0xff]
        %v5819 = vld [vmem:[%s352 + $0x1c80] sm:$0xff]
        %v5820 = vld [vmem:[%s352 + $0x1c88] sm:$0xff]
        %v5821 = vld [vmem:[%s352 + $0x1c90] sm:$0xff]
        %v5822 = vld [vmem:[%s352 + $0x1c98] sm:$0xff]
        %v5823 = vld [vmem:[%s352 + $0x1ca0] sm:$0xff]
        %v5824 = vld [vmem:[%s352 + $0x1ca8] sm:$0xff]
        %v5825 = vld [vmem:[%s352 + $0x1cb0] sm:$0xff]
        %v5826 = vld [vmem:[%s352 + $0x1cb8] sm:$0xff]
        %v5827 = vld [vmem:[%s352 + $0x1cc0] sm:$0xff]
        %v5828 = vld [vmem:[%s352 + $0x1cc8] sm:$0xff]
        %v5829 = vld [vmem:[%s352 + $0x1cd0] sm:$0xff]
        %v5830 = vld [vmem:[%s352 + $0x1cd8] sm:$0xff]
        %v5831 = vld [vmem:[%s352 + $0x1ce0] sm:$0xff]
        %v5832 = vld [vmem:[%s352 + $0x1ce8] sm:$0xff]
        %v5833 = vld [vmem:[%s352 + $0x1cf0] sm:$0xff]
        %v5834 = vld [vmem:[%s352 + $0x1cf8] sm:$0xff]
        %v5835 = vld [vmem:[%s352 + $0x1d00] sm:$0xff]
        %v5836 = vld [vmem:[%s352 + $0x1d08] sm:$0xff]
        %v5837 = vld [vmem:[%s352 + $0x1d10] sm:$0xff]
        %v5838 = vld [vmem:[%s352 + $0x1d18] sm:$0xff]
        %v5839 = vld [vmem:[%s352 + $0x1d20] sm:$0xff]
        %v5840 = vld [vmem:[%s352 + $0x1d28] sm:$0xff]
        %v5841 = vld [vmem:[%s352 + $0x1d30] sm:$0xff]
        %v5842 = vld [vmem:[%s352 + $0x1d38] sm:$0xff]
        %v5843 = vld [vmem:[%s352 + $0x1d40] sm:$0xff]
        %v5844 = vld [vmem:[%s352 + $0x1d48] sm:$0xff]
        %v5845 = vld [vmem:[%s352 + $0x1d50] sm:$0xff]
        %v5846 = vld [vmem:[%s352 + $0x1d58] sm:$0xff]
        %v5847 = vld [vmem:[%s352 + $0x1d60] sm:$0xff]
        %v5848 = vld [vmem:[%s352 + $0x1d68] sm:$0xff]
        %v5849 = vld [vmem:[%s352 + $0x1d70] sm:$0xff]
        %v5850 = vld [vmem:[%s352 + $0x1d78] sm:$0xff]
        %v5851 = vld [vmem:[%s352 + $0x1d80] sm:$0xff]
        %v5852 = vld [vmem:[%s352 + $0x1d88] sm:$0xff]
        %v5853 = vld [vmem:[%s352 + $0x1d90] sm:$0xff]
        %v5854 = vld [vmem:[%s352 + $0x1d98] sm:$0xff]
        %v5855 = vld [vmem:[%s352 + $0x1da0] sm:$0xff]
        %v5856 = vld [vmem:[%s352 + $0x1da8] sm:$0xff]
        %v5857 = vld [vmem:[%s352 + $0x1db0] sm:$0xff]
        %v5858 = vld [vmem:[%s352 + $0x1db8] sm:$0xff]
        %v5859 = vld [vmem:[%s352 + $0x1dc0] sm:$0xff]
        %v5860 = vld [vmem:[%s352 + $0x1dc8] sm:$0xff]
        %v5861 = vld [vmem:[%s352 + $0x1dd0] sm:$0xff]
        %v5862 = vld [vmem:[%s352 + $0x1dd8] sm:$0xff]
        %v5863 = vld [vmem:[%s352 + $0x1de0] sm:$0xff]
        %v5864 = vld [vmem:[%s352 + $0x1de8] sm:$0xff]
        %v5865 = vld [vmem:[%s352 + $0x1df0] sm:$0xff]
        %v5866 = vld [vmem:[%s352 + $0x1df8] sm:$0xff]
        %v5867 = vld [vmem:[%s352 + $0x1e00] sm:$0xff]
        %v5868 = vld [vmem:[%s352 + $0x1e08] sm:$0xff]
        %v5869 = vld [vmem:[%s352 + $0x1e10] sm:$0xff]
        %v5870 = vld [vmem:[%s352 + $0x1e18] sm:$0xff]
        %v5871 = vld [vmem:[%s352 + $0x1e20] sm:$0xff]
        %v5872 = vld [vmem:[%s352 + $0x1e28] sm:$0xff]
        %v5873 = vld [vmem:[%s352 + $0x1e30] sm:$0xff]
        %v5874 = vld [vmem:[%s352 + $0x1e38] sm:$0xff]
        %v5875 = vld [vmem:[%s352 + $0x1e40] sm:$0xff]
        %v5876 = vld [vmem:[%s352 + $0x1e48] sm:$0xff]
        %v5877 = vld [vmem:[%s352 + $0x1e50] sm:$0xff]
        %v5878 = vld [vmem:[%s352 + $0x1e58] sm:$0xff]
        %v5879 = vld [vmem:[%s352 + $0x1e60] sm:$0xff]
        %v5880 = vld [vmem:[%s352 + $0x1e68] sm:$0xff]
        %v5881 = vld [vmem:[%s352 + $0x1e70] sm:$0xff]
        %v5882 = vld [vmem:[%s352 + $0x1e78] sm:$0xff]
        %v5883 = vld [vmem:[%s352 + $0x1e80] sm:$0xff]
        %v5884 = vld [vmem:[%s352 + $0x1e88] sm:$0xff]
        %v5885 = vld [vmem:[%s352 + $0x1e90] sm:$0xff]
        %v5886 = vld [vmem:[%s352 + $0x1e98] sm:$0xff]
        %v5887 = vld [vmem:[%s352 + $0x1ea0] sm:$0xff]
        %v5888 = vld [vmem:[%s352 + $0x1ea8] sm:$0xff]
        %v5889 = vld [vmem:[%s352 + $0x1eb0] sm:$0xff]
        %v5890 = vld [vmem:[%s352 + $0x1eb8] sm:$0xff]
        %v5891 = vld [vmem:[%s352 + $0x1ec0] sm:$0xff]
        %v5892 = vld [vmem:[%s352 + $0x1ec8] sm:$0xff]
        %v5893 = vld [vmem:[%s352 + $0x1ed0] sm:$0xff]
        %v5894 = vld [vmem:[%s352 + $0x1ed8] sm:$0xff]
        %v5895 = vld [vmem:[%s352 + $0x1ee0] sm:$0xff]
        %v5896 = vld [vmem:[%s352 + $0x1ee8] sm:$0xff]
        %v5897 = vld [vmem:[%s352 + $0x1ef0] sm:$0xff]
        %v5898 = vld [vmem:[%s352 + $0x1ef8] sm:$0xff]
        %v5899 = vld [vmem:[%s352 + $0x1f00] sm:$0xff]
        %v5900 = vld [vmem:[%s352 + $0x1f08] sm:$0xff]
        %v5901 = vld [vmem:[%s352 + $0x1f10] sm:$0xff]
        %v5902 = vld [vmem:[%s352 + $0x1f18] sm:$0xff]
        %v5903 = vld [vmem:[%s352 + $0x1f20] sm:$0xff]
        %v5904 = vld [vmem:[%s352 + $0x1f28] sm:$0xff]
        %v5905 = vld [vmem:[%s352 + $0x1f30] sm:$0xff]
        %v5906 = vld [vmem:[%s352 + $0x1f38] sm:$0xff]
        %v5907 = vld [vmem:[%s352 + $0x1f40] sm:$0xff]
        %v5908 = vld [vmem:[%s352 + $0x1f48] sm:$0xff]
        %v5909 = vld [vmem:[%s352 + $0x1f50] sm:$0xff]
        %v5910 = vld [vmem:[%s352 + $0x1f58] sm:$0xff]
        %v5911 = vld [vmem:[%s352 + $0x1f60] sm:$0xff]
        %v5912 = vld [vmem:[%s352 + $0x1f68] sm:$0xff]
        %v5913 = vld [vmem:[%s352 + $0x1f70] sm:$0xff]
        %v5914 = vld [vmem:[%s352 + $0x1f78] sm:$0xff]
        %v5915 = vld [vmem:[%s352 + $0x1f80] sm:$0xff]
        %v5916 = vld [vmem:[%s352 + $0x1f88] sm:$0xff]
        %v5917 = vld [vmem:[%s352 + $0x1f90] sm:$0xff]
        %v5918 = vld [vmem:[%s352 + $0x1f98] sm:$0xff]
        %v5919 = vld [vmem:[%s352 + $0x1fa0] sm:$0xff]
        %v5920 = vld [vmem:[%s352 + $0x1fa8] sm:$0xff]
        %v5921 = vld [vmem:[%s352 + $0x1fb0] sm:$0xff]
        %v5922 = vld [vmem:[%s352 + $0x1fb8] sm:$0xff]
        %v5923 = vld [vmem:[%s352 + $0x1fc0] sm:$0xff]
        %v5924 = vld [vmem:[%s352 + $0x1fc8] sm:$0xff]
        %v5925 = vld [vmem:[%s352 + $0x1fd0] sm:$0xff]
        %v5926 = vld [vmem:[%s352 + $0x1fd8] sm:$0xff]
        %v5927 = vld [vmem:[%s352 + $0x1fe0] sm:$0xff]
        %v5928 = vld [vmem:[%s352 + $0x1fe8] sm:$0xff]
        %v5929 = vld [vmem:[%s352 + $0x1ff0] sm:$0xff]
        %v5930 = vld [vmem:[%s352 + $0x1ff8] sm:$0xff]
        %v5931 = vld [vmem:[%s352 + $0x2000] sm:$0xff]
        %v5932 = vld [vmem:[%s352 + $0x2008] sm:$0xff]
        %v5933 = vld [vmem:[%s352 + $0x2010] sm:$0xff]
        %v5934 = vld [vmem:[%s352 + $0x2018] sm:$0xff]
        %v5935 = vld [vmem:[%s352 + $0x2020] sm:$0xff]
        %v5936 = vld [vmem:[%s352 + $0x2028] sm:$0xff]
        %v5937 = vld [vmem:[%s352 + $0x2030] sm:$0xff]
        %v5938 = vld [vmem:[%s352 + $0x2038] sm:$0xff]
        %v5939 = vld [vmem:[%s352 + $0x2040] sm:$0xff]
        %v5940 = vld [vmem:[%s352 + $0x2048] sm:$0xff]
        %v5941 = vld [vmem:[%s352 + $0x2050] sm:$0xff]
        %v5942 = vld [vmem:[%s352 + $0x2058] sm:$0xff]
        %v5943 = vld [vmem:[%s352 + $0x2060] sm:$0xff]
        %v5944 = vld [vmem:[%s352 + $0x2068] sm:$0xff]
        %v5945 = vld [vmem:[%s352 + $0x2070] sm:$0xff]
        %v5946 = vld [vmem:[%s352 + $0x2078] sm:$0xff]
        %v5947 = vld [vmem:[%s352 + $0x2080] sm:$0xff]
        %v5948 = vld [vmem:[%s352 + $0x2088] sm:$0xff]
        %v5949 = vld [vmem:[%s352 + $0x2090] sm:$0xff]
        %v5950 = vld [vmem:[%s352 + $0x2098] sm:$0xff]
        %v5951 = vld [vmem:[%s352 + $0x20a0] sm:$0xff]
        %v5952 = vld [vmem:[%s352 + $0x20a8] sm:$0xff]
        %v5953 = vld [vmem:[%s352 + $0x20b0] sm:$0xff]
        %v5954 = vld [vmem:[%s352 + $0x20b8] sm:$0xff]
        %v5955 = vld [vmem:[%s352 + $0x20c0] sm:$0xff]
        %v5956 = vld [vmem:[%s352 + $0x20c8] sm:$0xff]
        %v5957 = vld [vmem:[%s352 + $0x20d0] sm:$0xff]
        %v5958 = vld [vmem:[%s352 + $0x20d8] sm:$0xff]
        %v5959 = vld [vmem:[%s352 + $0x20e0] sm:$0xff]
        %v5960 = vld [vmem:[%s352 + $0x20e8] sm:$0xff]
        %v5961 = vld [vmem:[%s352 + $0x20f0] sm:$0xff]
        %v5962 = vld [vmem:[%s352 + $0x20f8] sm:$0xff]
        %v5963 = vld [vmem:[%s352 + $0x2100] sm:$0xff]
        %v5964 = vld [vmem:[%s352 + $0x2108] sm:$0xff]
        %v5965 = vld [vmem:[%s352 + $0x2110] sm:$0xff]
        %v5966 = vld [vmem:[%s352 + $0x2118] sm:$0xff]
        %v5967 = vld [vmem:[%s352 + $0x2120] sm:$0xff]
        %v5968 = vld [vmem:[%s352 + $0x2128] sm:$0xff]
        %v5969 = vld [vmem:[%s352 + $0x2130] sm:$0xff]
        %v5970 = vld [vmem:[%s352 + $0x2138] sm:$0xff]
        %v5971 = vld [vmem:[%s352 + $0x2140] sm:$0xff]
        %v5972 = vld [vmem:[%s352 + $0x2148] sm:$0xff]
        %v5973 = vld [vmem:[%s352 + $0x2150] sm:$0xff]
        %v5974 = vld [vmem:[%s352 + $0x2158] sm:$0xff]
        %v5975 = vld [vmem:[%s352 + $0x2160] sm:$0xff]
        %v5976 = vld [vmem:[%s352 + $0x2168] sm:$0xff]
        %v5977 = vld [vmem:[%s352 + $0x2170] sm:$0xff]
        %v5978 = vld [vmem:[%s352 + $0x2178] sm:$0xff]
        %v5979 = vld [vmem:[%s352 + $0x2180] sm:$0xff]
        %v5980 = vld [vmem:[%s352 + $0x2188] sm:$0xff]
        %v5981 = vld [vmem:[%s352 + $0x2190] sm:$0xff]
        %v5982 = vld [vmem:[%s352 + $0x2198] sm:$0xff]
        %v5983 = vld [vmem:[%s352 + $0x21a0] sm:$0xff]
        %v5984 = vld [vmem:[%s352 + $0x21a8] sm:$0xff]
        %v5985 = vld [vmem:[%s352 + $0x21b0] sm:$0xff]
        %v5986 = vld [vmem:[%s352 + $0x21b8] sm:$0xff]
        %v5987 = vld [vmem:[%s352 + $0x21c0] sm:$0xff]
        %v5988 = vld [vmem:[%s352 + $0x21c8] sm:$0xff]
        %v5989 = vld [vmem:[%s352 + $0x21d0] sm:$0xff]
        %v5990 = vld [vmem:[%s352 + $0x21d8] sm:$0xff]
        %v5991 = vld [vmem:[%s352 + $0x21e0] sm:$0xff]
        %v5992 = vld [vmem:[%s352 + $0x21e8] sm:$0xff]
        %v5993 = vld [vmem:[%s352 + $0x21f0] sm:$0xff]
        %v5994 = vld [vmem:[%s352 + $0x21f8] sm:$0xff]
        %v5995 = vld [vmem:[%s352 + $0x2200] sm:$0xff]
        %v5996 = vld [vmem:[%s352 + $0x2208] sm:$0xff]
        %v5997 = vld [vmem:[%s352 + $0x2210] sm:$0xff]
        %v5998 = vld [vmem:[%s352 + $0x2218] sm:$0xff]
        %v5999 = vld [vmem:[%s352 + $0x2220] sm:$0xff]
        %v6000 = vld [vmem:[%s352 + $0x2228] sm:$0xff]
        %v6001 = vld [vmem:[%s352 + $0x2230] sm:$0xff]
        %v6002 = vld [vmem:[%s352 + $0x2238] sm:$0xff]
        %v6003 = vld [vmem:[%s352 + $0x2240] sm:$0xff]
        %v6004 = vld [vmem:[%s352 + $0x2248] sm:$0xff]
        %v6005 = vld [vmem:[%s352 + $0x2250] sm:$0xff]
        %v6006 = vld [vmem:[%s352 + $0x2258] sm:$0xff]
        %v6007 = vld [vmem:[%s352 + $0x2260] sm:$0xff]
        %v6008 = vld [vmem:[%s352 + $0x2268] sm:$0xff]
        %v6009 = vld [vmem:[%s352 + $0x2270] sm:$0xff]
        %v6010 = vld [vmem:[%s352 + $0x2278] sm:$0xff]
        %v6011 = vld [vmem:[%s352 + $0x2280] sm:$0xff]
        %v6012 = vld [vmem:[%s352 + $0x2288] sm:$0xff]
        %v6013 = vld [vmem:[%s352 + $0x2290] sm:$0xff]
        %v6014 = vld [vmem:[%s352 + $0x2298] sm:$0xff]
        %v6015 = vld [vmem:[%s352 + $0x22a0] sm:$0xff]
        %v6016 = vld [vmem:[%s352 + $0x22a8] sm:$0xff]
        %v6017 = vld [vmem:[%s352 + $0x22b0] sm:$0xff]
        %v6018 = vld [vmem:[%s352 + $0x22b8] sm:$0xff]
        %v6019 = vld [vmem:[%s352 + $0x22c0] sm:$0xff]
        %v6020 = vld [vmem:[%s352 + $0x22c8] sm:$0xff]
        %v6021 = vld [vmem:[%s352 + $0x22d0] sm:$0xff]
        %v6022 = vld [vmem:[%s352 + $0x22d8] sm:$0xff]
        %v6023 = vld [vmem:[%s352 + $0x22e0] sm:$0xff]
        %v6024 = vld [vmem:[%s352 + $0x22e8] sm:$0xff]
        %v6025 = vld [vmem:[%s352 + $0x22f0] sm:$0xff]
        %v6026 = vld [vmem:[%s352 + $0x22f8] sm:$0xff]
        %v6027 = vld [vmem:[%s352 + $0x2300] sm:$0xff]
        %v6028 = vld [vmem:[%s352 + $0x2308] sm:$0xff]
        %v6029 = vld [vmem:[%s352 + $0x2310] sm:$0xff]
        %v6030 = vld [vmem:[%s352 + $0x2318] sm:$0xff]
        %v6031 = vld [vmem:[%s352 + $0x2320] sm:$0xff]
        %v6032 = vld [vmem:[%s352 + $0x2328] sm:$0xff]
        %v6033 = vld [vmem:[%s352 + $0x2330] sm:$0xff]
        %v6034 = vld [vmem:[%s352 + $0x2338] sm:$0xff]
        %v6035 = vld [vmem:[%s352 + $0x2340] sm:$0xff]
        %v6036 = vld [vmem:[%s352 + $0x2348] sm:$0xff]
        %v6037 = vld [vmem:[%s352 + $0x2350] sm:$0xff]
        %v6038 = vld [vmem:[%s352 + $0x2358] sm:$0xff]
        %v6039 = vld [vmem:[%s352 + $0x2360] sm:$0xff]
        %v6040 = vld [vmem:[%s352 + $0x2368] sm:$0xff]
        %v6041 = vld [vmem:[%s352 + $0x2370] sm:$0xff]
        %v6042 = vld [vmem:[%s352 + $0x2378] sm:$0xff]
        %v6043 = vld [vmem:[%s352 + $0x2380] sm:$0xff]
        %v6044 = vld [vmem:[%s352 + $0x2388] sm:$0xff]
        %v6045 = vld [vmem:[%s352 + $0x2390] sm:$0xff]
        %v6046 = vld [vmem:[%s352 + $0x2398] sm:$0xff]
        %v6047 = vld [vmem:[%s352 + $0x23a0] sm:$0xff]
        %v6048 = vld [vmem:[%s352 + $0x23a8] sm:$0xff]
        %v6049 = vld [vmem:[%s352 + $0x23b0] sm:$0xff]
        %v6050 = vld [vmem:[%s352 + $0x23b8] sm:$0xff]
        %v6051 = vld [vmem:[%s352 + $0x23c0] sm:$0xff]
        %v6052 = vld [vmem:[%s352 + $0x23c8] sm:$0xff]
        %v6053 = vld [vmem:[%s352 + $0x23d0] sm:$0xff]
        %v6054 = vld [vmem:[%s352 + $0x23d8] sm:$0xff]
        %v6055 = vld [vmem:[%s352 + $0x23e0] sm:$0xff]
        %v6056 = vld [vmem:[%s352 + $0x23e8] sm:$0xff]
        %v6057 = vld [vmem:[%s352 + $0x23f0] sm:$0xff]
        %v6058 = vld [vmem:[%s352 + $0x23f8] sm:$0xff]
        %v6059 = vld [vmem:[%s352 + $0x2400] sm:$0xff]
        %v6060 = vld [vmem:[%s352 + $0x2408] sm:$0xff]
        %v6061 = vld [vmem:[%s352 + $0x2410] sm:$0xff]
        %v6062 = vld [vmem:[%s352 + $0x2418] sm:$0xff]
        %v6063 = vld [vmem:[%s352 + $0x2420] sm:$0xff]
        %v6064 = vld [vmem:[%s352 + $0x2428] sm:$0xff]
        %v6065 = vld [vmem:[%s352 + $0x2430] sm:$0xff]
        %v6066 = vld [vmem:[%s352 + $0x2438] sm:$0xff]
        %v6067 = vld [vmem:[%s352 + $0x2440] sm:$0xff]
        %v6068 = vld [vmem:[%s352 + $0x2448] sm:$0xff]
        %v6069 = vld [vmem:[%s352 + $0x2450] sm:$0xff]
        %v6070 = vld [vmem:[%s352 + $0x2458] sm:$0xff]
        %v6071 = vld [vmem:[%s352 + $0x2460] sm:$0xff]
        %v6072 = vld [vmem:[%s352 + $0x2468] sm:$0xff]
        %v6073 = vld [vmem:[%s352 + $0x2470] sm:$0xff]
        %v6074 = vld [vmem:[%s352 + $0x2478] sm:$0xff]
        %v6075 = vld [vmem:[%s352 + $0x2480] sm:$0xff]
        %v6076 = vld [vmem:[%s352 + $0x2488] sm:$0xff]
        %v6077 = vld [vmem:[%s352 + $0x2490] sm:$0xff]
        %v6078 = vld [vmem:[%s352 + $0x2498] sm:$0xff]
        %v6079 = vld [vmem:[%s352 + $0x24a0] sm:$0xff]
        %v6080 = vld [vmem:[%s352 + $0x24a8] sm:$0xff]
        %v6081 = vld [vmem:[%s352 + $0x24b0] sm:$0xff]
        %v6082 = vld [vmem:[%s352 + $0x24b8] sm:$0xff]
        %v6083 = vld [vmem:[%s352 + $0x24c0] sm:$0xff]
        %v6084 = vld [vmem:[%s352 + $0x24c8] sm:$0xff]
        %v6085 = vld [vmem:[%s352 + $0x24d0] sm:$0xff]
        %v6086 = vld [vmem:[%s352 + $0x24d8] sm:$0xff]
        %v6087 = vld [vmem:[%s352 + $0x24e0] sm:$0xff]
        %v6088 = vld [vmem:[%s352 + $0x24e8] sm:$0xff]
        %v6089 = vld [vmem:[%s352 + $0x24f0] sm:$0xff]
        %v6090 = vld [vmem:[%s352 + $0x24f8] sm:$0xff]
        %v6091 = vld [vmem:[%s352 + $0x2500] sm:$0xff]
        %v6092 = vld [vmem:[%s352 + $0x2508] sm:$0xff]
        %v6093 = vld [vmem:[%s352 + $0x2510] sm:$0xff]
        %v6094 = vld [vmem:[%s352 + $0x2518] sm:$0xff]
        %v6095 = vld [vmem:[%s352 + $0x2520] sm:$0xff]
        %v6096 = vld [vmem:[%s352 + $0x2528] sm:$0xff]
        %v6097 = vld [vmem:[%s352 + $0x2530] sm:$0xff]
        %v6098 = vld [vmem:[%s352 + $0x2538] sm:$0xff]
        %v6099 = vld [vmem:[%s352 + $0x2540] sm:$0xff]
        %v6100 = vld [vmem:[%s352 + $0x2548] sm:$0xff]
        %v6101 = vld [vmem:[%s352 + $0x2550] sm:$0xff]
        %v6102 = vld [vmem:[%s352 + $0x2558] sm:$0xff]
        %v6103 = vld [vmem:[%s352 + $0x2560] sm:$0xff]
        %v6104 = vld [vmem:[%s352 + $0x2568] sm:$0xff]
        %v6105 = vld [vmem:[%s352 + $0x2570] sm:$0xff]
        %v6106 = vld [vmem:[%s352 + $0x2578] sm:$0xff]
        %v6107 = vld [vmem:[%s352 + $0x2580] sm:$0xff]
        %v6108 = vld [vmem:[%s352 + $0x2588] sm:$0xff]
        %v6109 = vld [vmem:[%s352 + $0x2590] sm:$0xff]
        %v6110 = vld [vmem:[%s352 + $0x2598] sm:$0xff]
        %v6111 = vld [vmem:[%s352 + $0x25a0] sm:$0xff]
        %v6112 = vld [vmem:[%s352 + $0x25a8] sm:$0xff]
        %v6113 = vld [vmem:[%s352 + $0x25b0] sm:$0xff]
        %v6114 = vld [vmem:[%s352 + $0x25b8] sm:$0xff]
        %v6115 = vld [vmem:[%s352 + $0x25c0] sm:$0xff]
        %v6116 = vld [vmem:[%s352 + $0x25c8] sm:$0xff]
        %v6117 = vld [vmem:[%s352 + $0x25d0] sm:$0xff]
        %v6118 = vld [vmem:[%s352 + $0x25d8] sm:$0xff]
        %v6119 = vld [vmem:[%s352 + $0x25e0] sm:$0xff]
        %v6120 = vld [vmem:[%s352 + $0x25e8] sm:$0xff]
        %v6121 = vld [vmem:[%s352 + $0x25f0] sm:$0xff]
        %v6122 = vld [vmem:[%s352 + $0x25f8] sm:$0xff]
        %v6123 = vld [vmem:[%s352 + $0x2600] sm:$0xff]
        %v6124 = vld [vmem:[%s352 + $0x2608] sm:$0xff]
        %v6125 = vld [vmem:[%s352 + $0x2610] sm:$0xff]
        %v6126 = vld [vmem:[%s352 + $0x2618] sm:$0xff]
        %v6127 = vld [vmem:[%s352 + $0x2620] sm:$0xff]
        %v6128 = vld [vmem:[%s352 + $0x2628] sm:$0xff]
        %v6129 = vld [vmem:[%s352 + $0x2630] sm:$0xff]
        %v6130 = vld [vmem:[%s352 + $0x2638] sm:$0xff]
        %v6131 = vld [vmem:[%s352 + $0x2640] sm:$0xff]
        %v6132 = vld [vmem:[%s352 + $0x2648] sm:$0xff]
        %v6133 = vld [vmem:[%s352 + $0x2650] sm:$0xff]
        %v6134 = vld [vmem:[%s352 + $0x2658] sm:$0xff]
        %v6135 = vld [vmem:[%s352 + $0x2660] sm:$0xff]
        %v6136 = vld [vmem:[%s352 + $0x2668] sm:$0xff]
        %v6137 = vld [vmem:[%s352 + $0x2670] sm:$0xff]
        %v6138 = vld [vmem:[%s352 + $0x2678] sm:$0xff]
        %v6139 = vld [vmem:[%s352 + $0x2680] sm:$0xff]
        %v6140 = vld [vmem:[%s352 + $0x2688] sm:$0xff]
        %v6141 = vld [vmem:[%s352 + $0x2690] sm:$0xff]
        %v6142 = vld [vmem:[%s352 + $0x2698] sm:$0xff]
        %v6143 = vld [vmem:[%s352 + $0x26a0] sm:$0xff]
        %v6144 = vld [vmem:[%s352 + $0x26a8] sm:$0xff]
        %v6145 = vld [vmem:[%s352 + $0x26b0] sm:$0xff]
        %v6146 = vld [vmem:[%s352 + $0x26b8] sm:$0xff]
        %v6147 = vld [vmem:[%s352 + $0x26c0] sm:$0xff]
        %v6148 = vld [vmem:[%s352 + $0x26c8] sm:$0xff]
        %v6149 = vld [vmem:[%s352 + $0x26d0] sm:$0xff]
        %v6150 = vld [vmem:[%s352 + $0x26d8] sm:$0xff]
        %v6151 = vld [vmem:[%s352 + $0x26e0] sm:$0xff]
        %v6152 = vld [vmem:[%s352 + $0x26e8] sm:$0xff]
        %v6153 = vld [vmem:[%s352 + $0x26f0] sm:$0xff]
        %v6154 = vld [vmem:[%s352 + $0x26f8] sm:$0xff]
        %v6155 = vld [vmem:[%s352 + $0x2700] sm:$0xff]
        %v6156 = vld [vmem:[%s352 + $0x2708] sm:$0xff]
        %v6157 = vld [vmem:[%s352 + $0x2710] sm:$0xff]
        %v6158 = vld [vmem:[%s352 + $0x2718] sm:$0xff]
        %v6159 = vld [vmem:[%s352 + $0x2720] sm:$0xff]
        %v6160 = vld [vmem:[%s352 + $0x2728] sm:$0xff]
        %v6161 = vld [vmem:[%s352 + $0x2730] sm:$0xff]
        %v6162 = vld [vmem:[%s352 + $0x2738] sm:$0xff]
        %v6163 = vld [vmem:[%s352 + $0x2740] sm:$0xff]
        %v6164 = vld [vmem:[%s352 + $0x2748] sm:$0xff]
        %v6165 = vld [vmem:[%s352 + $0x2750] sm:$0xff]
        %v6166 = vld [vmem:[%s352 + $0x2758] sm:$0xff]
        %v6167 = vld [vmem:[%s352 + $0x2760] sm:$0xff]
        %v6168 = vld [vmem:[%s352 + $0x2768] sm:$0xff]
        %v6169 = vld [vmem:[%s352 + $0x2770] sm:$0xff]
        %v6170 = vld [vmem:[%s352 + $0x2778] sm:$0xff]
        %v6171 = vld [vmem:[%s352 + $0x2780] sm:$0xff]
        %v6172 = vld [vmem:[%s352 + $0x2788] sm:$0xff]
        %v6173 = vld [vmem:[%s352 + $0x2790] sm:$0xff]
        %v6174 = vld [vmem:[%s352 + $0x2798] sm:$0xff]
        %v6175 = vld [vmem:[%s352 + $0x27a0] sm:$0xff]
        %v6176 = vld [vmem:[%s352 + $0x27a8] sm:$0xff]
        %v6177 = vld [vmem:[%s352 + $0x27b0] sm:$0xff]
        %v6178 = vld [vmem:[%s352 + $0x27b8] sm:$0xff]
        %v6179 = vld [vmem:[%s352 + $0x27c0] sm:$0xff]
        %v6180 = vld [vmem:[%s352 + $0x27c8] sm:$0xff]
        %v6181 = vld [vmem:[%s352 + $0x27d0] sm:$0xff]
        %v6182 = vld [vmem:[%s352 + $0x27d8] sm:$0xff]
        %v6183 = vld [vmem:[%s352 + $0x27e0] sm:$0xff]
        %v6184 = vld [vmem:[%s352 + $0x27e8] sm:$0xff]
        %v6185 = vld [vmem:[%s352 + $0x27f0] sm:$0xff]
        %v6186 = vld [vmem:[%s352 + $0x27f8] sm:$0xff]
        %v6187 = vld [vmem:[%s352 + $0x2800] sm:$0xff]
        %v6188 = vld [vmem:[%s352 + $0x2808] sm:$0xff]
        %v6189 = vld [vmem:[%s352 + $0x2810] sm:$0xff]
        %v6190 = vld [vmem:[%s352 + $0x2818] sm:$0xff]
        %v6191 = vld [vmem:[%s352 + $0x2820] sm:$0xff]
        %v6192 = vld [vmem:[%s352 + $0x2828] sm:$0xff]
        %v6193 = vld [vmem:[%s352 + $0x2830] sm:$0xff]
        %v6194 = vld [vmem:[%s352 + $0x2838] sm:$0xff]
        %v6195 = vld [vmem:[%s352 + $0x2840] sm:$0xff]
        %v6196 = vld [vmem:[%s352 + $0x2848] sm:$0xff]
        %v6197 = vld [vmem:[%s352 + $0x2850] sm:$0xff]
        %v6198 = vld [vmem:[%s352 + $0x2858] sm:$0xff]
        %v6199 = vld [vmem:[%s352 + $0x2860] sm:$0xff]
        %v6200 = vld [vmem:[%s352 + $0x2868] sm:$0xff]
        %v6201 = vld [vmem:[%s352 + $0x2870] sm:$0xff]
        %v6202 = vld [vmem:[%s352 + $0x2878] sm:$0xff]
        %v6203 = vld [vmem:[%s352 + $0x2880] sm:$0xff]
        %v6204 = vld [vmem:[%s352 + $0x2888] sm:$0xff]
        %v6205 = vld [vmem:[%s352 + $0x2890] sm:$0xff]
        %v6206 = vld [vmem:[%s352 + $0x2898] sm:$0xff]
        %v6207 = vld [vmem:[%s352 + $0x28a0] sm:$0xff]
        %v6208 = vld [vmem:[%s352 + $0x28a8] sm:$0xff]
        %v6209 = vld [vmem:[%s352 + $0x28b0] sm:$0xff]
        %v6210 = vld [vmem:[%s352 + $0x28b8] sm:$0xff]
        %v6211 = vld [vmem:[%s352 + $0x28c0] sm:$0xff]
        %v6212 = vld [vmem:[%s352 + $0x28c8] sm:$0xff]
        %v6213 = vld [vmem:[%s352 + $0x28d0] sm:$0xff]
        %v6214 = vld [vmem:[%s352 + $0x28d8] sm:$0xff]
        %v6215 = vld [vmem:[%s352 + $0x28e0] sm:$0xff]
        %v6216 = vld [vmem:[%s352 + $0x28e8] sm:$0xff]
        %v6217 = vld [vmem:[%s352 + $0x28f0] sm:$0xff]
        %v6218 = vld [vmem:[%s352 + $0x28f8] sm:$0xff]
        %v6219 = vld [vmem:[%s352 + $0x2900] sm:$0xff]
        %v6220 = vld [vmem:[%s352 + $0x2908] sm:$0xff]
        %v6221 = vld [vmem:[%s352 + $0x2910] sm:$0xff]
        %v6222 = vld [vmem:[%s352 + $0x2918] sm:$0xff]
        %v6223 = vld [vmem:[%s352 + $0x2920] sm:$0xff]
        %v6224 = vld [vmem:[%s352 + $0x2928] sm:$0xff]
        %v6225 = vld [vmem:[%s352 + $0x2930] sm:$0xff]
        %v6226 = vld [vmem:[%s352 + $0x2938] sm:$0xff]
        %v6227 = vld [vmem:[%s352 + $0x2940] sm:$0xff]
        %v6228 = vld [vmem:[%s352 + $0x2948] sm:$0xff]
        %v6229 = vld [vmem:[%s352 + $0x2950] sm:$0xff]
        %v6230 = vld [vmem:[%s352 + $0x2958] sm:$0xff]
        %v6231 = vld [vmem:[%s352 + $0x2960] sm:$0xff]
        %v6232 = vld [vmem:[%s352 + $0x2968] sm:$0xff]
        %v6233 = vld [vmem:[%s352 + $0x2970] sm:$0xff]
        %v6234 = vld [vmem:[%s352 + $0x2978] sm:$0xff]
        %v6235 = vld [vmem:[%s352 + $0x2980] sm:$0xff]
        %v6236 = vld [vmem:[%s352 + $0x2988] sm:$0xff]
        %v6237 = vld [vmem:[%s352 + $0x2990] sm:$0xff]
        %v6238 = vld [vmem:[%s352 + $0x2998] sm:$0xff]
        %v6239 = vld [vmem:[%s352 + $0x29a0] sm:$0xff]
        %v6240 = vld [vmem:[%s352 + $0x29a8] sm:$0xff]
        %v6241 = vld [vmem:[%s352 + $0x29b0] sm:$0xff]
        %v6242 = vld [vmem:[%s352 + $0x29b8] sm:$0xff]
        %v6243 = vld [vmem:[%s352 + $0x29c0] sm:$0xff]
        %v6244 = vld [vmem:[%s352 + $0x29c8] sm:$0xff]
        %v6245 = vld [vmem:[%s352 + $0x29d0] sm:$0xff]
        %v6246 = vld [vmem:[%s352 + $0x29d8] sm:$0xff]
        %v6247 = vld [vmem:[%s352 + $0x29e0] sm:$0xff]
        %v6248 = vld [vmem:[%s352 + $0x29e8] sm:$0xff]
        %v6249 = vld [vmem:[%s352 + $0x29f0] sm:$0xff]
        %v6250 = vld [vmem:[%s352 + $0x29f8] sm:$0xff]
        %v6251 = vld [vmem:[%s352 + $0x2a00] sm:$0xff]
        %v6252 = vld [vmem:[%s352 + $0x2a08] sm:$0xff]
        %v6253 = vld [vmem:[%s352 + $0x2a10] sm:$0xff]
        %v6254 = vld [vmem:[%s352 + $0x2a18] sm:$0xff]
        %v6255 = vld [vmem:[%s352 + $0x2a20] sm:$0xff]
        %v6256 = vld [vmem:[%s352 + $0x2a28] sm:$0xff]
        %v6257 = vld [vmem:[%s352 + $0x2a30] sm:$0xff]
        %v6258 = vld [vmem:[%s352 + $0x2a38] sm:$0xff]
        %v6259 = vld [vmem:[%s352 + $0x2a40] sm:$0xff]
        %v6260 = vld [vmem:[%s352 + $0x2a48] sm:$0xff]
        %v6261 = vld [vmem:[%s352 + $0x2a50] sm:$0xff]
        %v6262 = vld [vmem:[%s352 + $0x2a58] sm:$0xff]
        %v6263 = vld [vmem:[%s352 + $0x2a60] sm:$0xff]
        %v6264 = vld [vmem:[%s352 + $0x2a68] sm:$0xff]
        %v6265 = vld [vmem:[%s352 + $0x2a70] sm:$0xff]
        %v6266 = vld [vmem:[%s352 + $0x2a78] sm:$0xff]
        %v6267 = vld [vmem:[%s352 + $0x2a80] sm:$0xff]
        %v6268 = vld [vmem:[%s352 + $0x2a88] sm:$0xff]
        %v6269 = vld [vmem:[%s352 + $0x2a90] sm:$0xff]
        %v6270 = vld [vmem:[%s352 + $0x2a98] sm:$0xff]
        %v6271 = vld [vmem:[%s352 + $0x2aa0] sm:$0xff]
        %v6272 = vld [vmem:[%s352 + $0x2aa8] sm:$0xff]
        %v6273 = vld [vmem:[%s352 + $0x2ab0] sm:$0xff]
        %v6274 = vld [vmem:[%s352 + $0x2ab8] sm:$0xff]
        %v6275 = vld [vmem:[%s352 + $0x2ac0] sm:$0xff]
        %v6276 = vld [vmem:[%s352 + $0x2ac8] sm:$0xff]
        %v6277 = vld [vmem:[%s352 + $0x2ad0] sm:$0xff]
        %v6278 = vld [vmem:[%s352 + $0x2ad8] sm:$0xff]
        %v6279 = vld [vmem:[%s352 + $0x2ae0] sm:$0xff]
        %v6280 = vld [vmem:[%s352 + $0x2ae8] sm:$0xff]
        %v6281 = vld [vmem:[%s352 + $0x2af0] sm:$0xff]
        %v6282 = vld [vmem:[%s352 + $0x2af8] sm:$0xff]
        %v6283 = vld [vmem:[%s352 + $0x2b00] sm:$0xff]
        %v6284 = vld [vmem:[%s352 + $0x2b08] sm:$0xff]
        %v6285 = vld [vmem:[%s352 + $0x2b10] sm:$0xff]
        %v6286 = vld [vmem:[%s352 + $0x2b18] sm:$0xff]
        %v6287 = vld [vmem:[%s352 + $0x2b20] sm:$0xff]
        %v6288 = vld [vmem:[%s352 + $0x2b28] sm:$0xff]
        %v6289 = vld [vmem:[%s352 + $0x2b30] sm:$0xff]
        %v6290 = vld [vmem:[%s352 + $0x2b38] sm:$0xff]
        %v6291 = vld [vmem:[%s352 + $0x2b40] sm:$0xff]
        %v6292 = vld [vmem:[%s352 + $0x2b48] sm:$0xff]
        %v6293 = vld [vmem:[%s352 + $0x2b50] sm:$0xff]
        %v6294 = vld [vmem:[%s352 + $0x2b58] sm:$0xff]
        %v6295 = vld [vmem:[%s352 + $0x2b60] sm:$0xff]
        %v6296 = vld [vmem:[%s352 + $0x2b68] sm:$0xff]
        %v6297 = vld [vmem:[%s352 + $0x2b70] sm:$0xff]
        %v6298 = vld [vmem:[%s352 + $0x2b78] sm:$0xff]
        %v6299 = vld [vmem:[%s352 + $0x2b80] sm:$0xff]
        %v6300 = vld [vmem:[%s352 + $0x2b88] sm:$0xff]
        %v6301 = vld [vmem:[%s352 + $0x2b90] sm:$0xff]
        %v6302 = vld [vmem:[%s352 + $0x2b98] sm:$0xff]
        %v6303 = vld [vmem:[%s352 + $0x2ba0] sm:$0xff]
        %v6304 = vld [vmem:[%s352 + $0x2ba8] sm:$0xff]
        %v6305 = vld [vmem:[%s352 + $0x2bb0] sm:$0xff]
        %v6306 = vld [vmem:[%s352 + $0x2bb8] sm:$0xff]
        %v6307 = vld [vmem:[%s352 + $0x2bc0] sm:$0xff]
        %v6308 = vld [vmem:[%s352 + $0x2bc8] sm:$0xff]
        %v6309 = vld [vmem:[%s352 + $0x2bd0] sm:$0xff]
        %v6310 = vld [vmem:[%s352 + $0x2bd8] sm:$0xff]
        %v6311 = vld [vmem:[%s352 + $0x2be0] sm:$0xff]
        %v6312 = vld [vmem:[%s352 + $0x2be8] sm:$0xff]
        %v6313 = vld [vmem:[%s352 + $0x2bf0] sm:$0xff]
        %v6314 = vld [vmem:[%s352 + $0x2bf8] sm:$0xff]
        %v6315 = vld [vmem:[%s352 + $0x2c00] sm:$0xff]
        %v6316 = vld [vmem:[%s352 + $0x2c08] sm:$0xff]
        %v6317 = vld [vmem:[%s352 + $0x2c10] sm:$0xff]
        %v6318 = vld [vmem:[%s352 + $0x2c18] sm:$0xff]
        %v6319 = vld [vmem:[%s352 + $0x2c20] sm:$0xff]
        %v6320 = vld [vmem:[%s352 + $0x2c28] sm:$0xff]
        %v6321 = vld [vmem:[%s352 + $0x2c30] sm:$0xff]
        %v6322 = vld [vmem:[%s352 + $0x2c38] sm:$0xff]
        %v6323 = vld [vmem:[%s352 + $0x2c40] sm:$0xff]
        %v6324 = vld [vmem:[%s352 + $0x2c48] sm:$0xff]
        %v6325 = vld [vmem:[%s352 + $0x2c50] sm:$0xff]
        %v6326 = vld [vmem:[%s352 + $0x2c58] sm:$0xff]
        %v6327 = vld [vmem:[%s352 + $0x2c60] sm:$0xff]
        %v6328 = vld [vmem:[%s352 + $0x2c68] sm:$0xff]
        %v6329 = vld [vmem:[%s352 + $0x2c70] sm:$0xff]
        %v6330 = vld [vmem:[%s352 + $0x2c78] sm:$0xff]
        %v6331 = vld [vmem:[%s352 + $0x2c80] sm:$0xff]
        %v6332 = vld [vmem:[%s352 + $0x2c88] sm:$0xff]
        %v6333 = vld [vmem:[%s352 + $0x2c90] sm:$0xff]
        %v6334 = vld [vmem:[%s352 + $0x2c98] sm:$0xff]
        %v6335 = vld [vmem:[%s352 + $0x2ca0] sm:$0xff]
        %v6336 = vld [vmem:[%s352 + $0x2ca8] sm:$0xff]
        %v6337 = vld [vmem:[%s352 + $0x2cb0] sm:$0xff]
        %v6338 = vld [vmem:[%s352 + $0x2cb8] sm:$0xff]
        %v6339 = vld [vmem:[%s352 + $0x2cc0] sm:$0xff]
        %v6340 = vld [vmem:[%s352 + $0x2cc8] sm:$0xff]
        %v6341 = vld [vmem:[%s352 + $0x2cd0] sm:$0xff]
        %v6342 = vld [vmem:[%s352 + $0x2cd8] sm:$0xff]
        %v6343 = vld [vmem:[%s352 + $0x2ce0] sm:$0xff]
        %v6344 = vld [vmem:[%s352 + $0x2ce8] sm:$0xff]
        %v6345 = vld [vmem:[%s352 + $0x2cf0] sm:$0xff]
        %v6346 = vld [vmem:[%s352 + $0x2cf8] sm:$0xff]
        %v6347 = vld [vmem:[%s352 + $0x2d00] sm:$0xff]
        %v6348 = vld [vmem:[%s352 + $0x2d08] sm:$0xff]
        %v6349 = vld [vmem:[%s352 + $0x2d10] sm:$0xff]
        %v6350 = vld [vmem:[%s352 + $0x2d18] sm:$0xff]
        %v6351 = vld [vmem:[%s352 + $0x2d20] sm:$0xff]
        %v6352 = vld [vmem:[%s352 + $0x2d28] sm:$0xff]
        %v6353 = vld [vmem:[%s352 + $0x2d30] sm:$0xff]
        %v6354 = vld [vmem:[%s352 + $0x2d38] sm:$0xff]
        %v6355 = vld [vmem:[%s352 + $0x2d40] sm:$0xff]
        %v6356 = vld [vmem:[%s352 + $0x2d48] sm:$0xff]
        %v6357 = vld [vmem:[%s352 + $0x2d50] sm:$0xff]
        %v6358 = vld [vmem:[%s352 + $0x2d58] sm:$0xff]
        %v6359 = vld [vmem:[%s352 + $0x2d60] sm:$0xff]
        %v6360 = vld [vmem:[%s352 + $0x2d68] sm:$0xff]
        %v6361 = vld [vmem:[%s352 + $0x2d70] sm:$0xff]
        %v6362 = vld [vmem:[%s352 + $0x2d78] sm:$0xff]
        %v6363 = vld [vmem:[%s352 + $0x2d80] sm:$0xff]
        %v6364 = vld [vmem:[%s352 + $0x2d88] sm:$0xff]
        %v6365 = vld [vmem:[%s352 + $0x2d90] sm:$0xff]
        %v6366 = vld [vmem:[%s352 + $0x2d98] sm:$0xff]
        %v6367 = vld [vmem:[%s352 + $0x2da0] sm:$0xff]
        %v6368 = vld [vmem:[%s352 + $0x2da8] sm:$0xff]
        %v6369 = vld [vmem:[%s352 + $0x2db0] sm:$0xff]
        %v6370 = vld [vmem:[%s352 + $0x2db8] sm:$0xff]
        %v6371 = vld [vmem:[%s352 + $0x2dc0] sm:$0xff]
        %v6372 = vld [vmem:[%s352 + $0x2dc8] sm:$0xff]
        %v6373 = vld [vmem:[%s352 + $0x2dd0] sm:$0xff]
        %v6374 = vld [vmem:[%s352 + $0x2dd8] sm:$0xff]
        %v6375 = vld [vmem:[%s352 + $0x2de0] sm:$0xff]
        %v6376 = vld [vmem:[%s352 + $0x2de8] sm:$0xff]
        %v6377 = vld [vmem:[%s352 + $0x2df0] sm:$0xff]
        %v6378 = vld [vmem:[%s352 + $0x2df8] sm:$0xff]
        %v6379 = vld [vmem:[%s352 + $0x2e00] sm:$0xff]
        %v6380 = vld [vmem:[%s352 + $0x2e08] sm:$0xff]
        %v6381 = vld [vmem:[%s352 + $0x2e10] sm:$0xff]
        %v6382 = vld [vmem:[%s352 + $0x2e18] sm:$0xff]
        %v6383 = vld [vmem:[%s352 + $0x2e20] sm:$0xff]
        %v6384 = vld [vmem:[%s352 + $0x2e28] sm:$0xff]
        %v6385 = vld [vmem:[%s352 + $0x2e30] sm:$0xff]
        %v6386 = vld [vmem:[%s352 + $0x2e38] sm:$0xff]
        %v6387 = vld [vmem:[%s352 + $0x2e40] sm:$0xff]
        %v6388 = vld [vmem:[%s352 + $0x2e48] sm:$0xff]
        %v6389 = vld [vmem:[%s352 + $0x2e50] sm:$0xff]
        %v6390 = vld [vmem:[%s352 + $0x2e58] sm:$0xff]
        %v6391 = vld [vmem:[%s352 + $0x2e60] sm:$0xff]
        %v6392 = vld [vmem:[%s352 + $0x2e68] sm:$0xff]
        %v6393 = vld [vmem:[%s352 + $0x2e70] sm:$0xff]
        %v6394 = vld [vmem:[%s352 + $0x2e78] sm:$0xff]
        %v6395 = vld [vmem:[%s352 + $0x2e80] sm:$0xff]
        %v6396 = vld [vmem:[%s352 + $0x2e88] sm:$0xff]
        %v6397 = vld [vmem:[%s352 + $0x2e90] sm:$0xff]
        %v6398 = vld [vmem:[%s352 + $0x2e98] sm:$0xff]
        %v6399 = vld [vmem:[%s352 + $0x2ea0] sm:$0xff]
        %v6400 = vld [vmem:[%s352 + $0x2ea8] sm:$0xff]
        %v6401 = vld [vmem:[%s352 + $0x2eb0] sm:$0xff]
        %v6402 = vld [vmem:[%s352 + $0x2eb8] sm:$0xff]
        %v6403 = vld [vmem:[%s352 + $0x2ec0] sm:$0xff]
        %v6404 = vld [vmem:[%s352 + $0x2ec8] sm:$0xff]
        %v6405 = vld [vmem:[%s352 + $0x2ed0] sm:$0xff]
        %v6406 = vld [vmem:[%s352 + $0x2ed8] sm:$0xff]
        %v6407 = vld [vmem:[%s352 + $0x2ee0] sm:$0xff]
        %v6408 = vld [vmem:[%s352 + $0x2ee8] sm:$0xff]
        %v6409 = vld [vmem:[%s352 + $0x2ef0] sm:$0xff]
        %v6410 = vld [vmem:[%s352 + $0x2ef8] sm:$0xff]
        %v6411 = vld [vmem:[%s352 + $0x2f00] sm:$0xff]
        %v6412 = vld [vmem:[%s352 + $0x2f08] sm:$0xff]
        %v6413 = vld [vmem:[%s352 + $0x2f10] sm:$0xff]
        %v6414 = vld [vmem:[%s352 + $0x2f18] sm:$0xff]
        %v6415 = vld [vmem:[%s352 + $0x2f20] sm:$0xff]
        %v6416 = vld [vmem:[%s352 + $0x2f28] sm:$0xff]
        %v6417 = vld [vmem:[%s352 + $0x2f30] sm:$0xff]
        %v6418 = vld [vmem:[%s352 + $0x2f38] sm:$0xff]
        %v6419 = vld [vmem:[%s352 + $0x2f40] sm:$0xff]
        %v6420 = vld [vmem:[%s352 + $0x2f48] sm:$0xff]
        %v6421 = vld [vmem:[%s352 + $0x2f50] sm:$0xff]
        %v6422 = vld [vmem:[%s352 + $0x2f58] sm:$0xff]
        %v6423 = vld [vmem:[%s352 + $0x2f60] sm:$0xff]
        %v6424 = vld [vmem:[%s352 + $0x2f68] sm:$0xff]
        %v6425 = vld [vmem:[%s352 + $0x2f70] sm:$0xff]
        %v6426 = vld [vmem:[%s352 + $0x2f78] sm:$0xff]
        %v6427 = vld [vmem:[%s352 + $0x2f80] sm:$0xff]
        %v6428 = vld [vmem:[%s352 + $0x2f88] sm:$0xff]
        %v6429 = vld [vmem:[%s352 + $0x2f90] sm:$0xff]
        %v6430 = vld [vmem:[%s352 + $0x2f98] sm:$0xff]
        %v6431 = vld [vmem:[%s352 + $0x2fa0] sm:$0xff]
        %v6432 = vld [vmem:[%s352 + $0x2fa8] sm:$0xff]
        %v6433 = vld [vmem:[%s352 + $0x2fb0] sm:$0xff]
        %v6434 = vld [vmem:[%s352 + $0x2fb8] sm:$0xff]
        %v6435 = vld [vmem:[%s352 + $0x2fc0] sm:$0xff]
        %v6436 = vld [vmem:[%s352 + $0x2fc8] sm:$0xff]
        %v6437 = vld [vmem:[%s352 + $0x2fd0] sm:$0xff]
        %v6438 = vld [vmem:[%s352 + $0x2fd8] sm:$0xff]
        %v6439 = vld [vmem:[%s352 + $0x2fe0] sm:$0xff]
        %v6440 = vld [vmem:[%s352 + $0x2fe8] sm:$0xff]
        %v6441 = vld [vmem:[%s352 + $0x2ff0] sm:$0xff]
        %v6442 = vld [vmem:[%s352 + $0x2ff8] sm:$0xff]
        %v6443 = vld [vmem:[%s352 + $0x3000] sm:$0xff]
        %v6444 = vld [vmem:[%s352 + $0x3008] sm:$0xff]
        %v6445 = vld [vmem:[%s352 + $0x3010] sm:$0xff]
        %v6446 = vld [vmem:[%s352 + $0x3018] sm:$0xff]
        %v6447 = vld [vmem:[%s352 + $0x3020] sm:$0xff]
        %v6448 = vld [vmem:[%s352 + $0x3028] sm:$0xff]
        %v6449 = vld [vmem:[%s352 + $0x3030] sm:$0xff]
        %v6450 = vld [vmem:[%s352 + $0x3038] sm:$0xff]
        %v6451 = vld [vmem:[%s352 + $0x3040] sm:$0xff]
        %v6452 = vld [vmem:[%s352 + $0x3048] sm:$0xff]
        %v6453 = vld [vmem:[%s352 + $0x3050] sm:$0xff]
        %v6454 = vld [vmem:[%s352 + $0x3058] sm:$0xff]
        %v6455 = vld [vmem:[%s352 + $0x3060] sm:$0xff]
        %v6456 = vld [vmem:[%s352 + $0x3068] sm:$0xff]
        %v6457 = vld [vmem:[%s352 + $0x3070] sm:$0xff]
        %v6458 = vld [vmem:[%s352 + $0x3078] sm:$0xff]
        %v6459 = vld [vmem:[%s352 + $0x3080] sm:$0xff]
        %v6460 = vld [vmem:[%s352 + $0x3088] sm:$0xff]
        %v6461 = vld [vmem:[%s352 + $0x3090] sm:$0xff]
        %v6462 = vld [vmem:[%s352 + $0x3098] sm:$0xff]
        %v6463 = vld [vmem:[%s352 + $0x30a0] sm:$0xff]
        %v6464 = vld [vmem:[%s352 + $0x30a8] sm:$0xff]
        %v6465 = vld [vmem:[%s352 + $0x30b0] sm:$0xff]
        %v6466 = vld [vmem:[%s352 + $0x30b8] sm:$0xff]
        %v6467 = vld [vmem:[%s352 + $0x30c0] sm:$0xff]
        %v6468 = vld [vmem:[%s352 + $0x30c8] sm:$0xff]
        %v6469 = vld [vmem:[%s352 + $0x30d0] sm:$0xff]
        %v6470 = vld [vmem:[%s352 + $0x30d8] sm:$0xff]
        %v6471 = vld [vmem:[%s352 + $0x30e0] sm:$0xff]
        %v6472 = vld [vmem:[%s352 + $0x30e8] sm:$0xff]
        %v6473 = vld [vmem:[%s352 + $0x30f0] sm:$0xff]
        %v6474 = vld [vmem:[%s352 + $0x30f8] sm:$0xff]
        %v6475 = vld [vmem:[%s352 + $0x3100] sm:$0xff]
        %v6476 = vld [vmem:[%s352 + $0x3108] sm:$0xff]
        %v6477 = vld [vmem:[%s352 + $0x3110] sm:$0xff]
        %v6478 = vld [vmem:[%s352 + $0x3118] sm:$0xff]
        %v6479 = vld [vmem:[%s352 + $0x3120] sm:$0xff]
        %v6480 = vld [vmem:[%s352 + $0x3128] sm:$0xff]
        %v6481 = vld [vmem:[%s352 + $0x3130] sm:$0xff]
        %v6482 = vld [vmem:[%s352 + $0x3138] sm:$0xff]
        %v6483 = vld [vmem:[%s352 + $0x3140] sm:$0xff]
        %v6484 = vld [vmem:[%s352 + $0x3148] sm:$0xff]
        %v6485 = vld [vmem:[%s352 + $0x3150] sm:$0xff]
        %v6486 = vld [vmem:[%s352 + $0x3158] sm:$0xff]
        %v6487 = vld [vmem:[%s352 + $0x3160] sm:$0xff]
        %v6488 = vld [vmem:[%s352 + $0x3168] sm:$0xff]
        %v6489 = vld [vmem:[%s352 + $0x3170] sm:$0xff]
        %v6490 = vld [vmem:[%s352 + $0x3178] sm:$0xff]
        %v6491 = vld [vmem:[%s352 + $0x3180] sm:$0xff]
        %v6492 = vld [vmem:[%s352 + $0x3188] sm:$0xff]
        %v6493 = vld [vmem:[%s352 + $0x3190] sm:$0xff]
        %v6494 = vld [vmem:[%s352 + $0x3198] sm:$0xff]
        %v6495 = vld [vmem:[%s352 + $0x31a0] sm:$0xff]
        %v6496 = vld [vmem:[%s352 + $0x31a8] sm:$0xff]
        %v6497 = vld [vmem:[%s352 + $0x31b0] sm:$0xff]
        %v6498 = vld [vmem:[%s352 + $0x31b8] sm:$0xff]
        %v6499 = vld [vmem:[%s352 + $0x31c0] sm:$0xff]
        %v6500 = vld [vmem:[%s352 + $0x31c8] sm:$0xff]
        %v6501 = vld [vmem:[%s352 + $0x31d0] sm:$0xff]
        %v6502 = vld [vmem:[%s352 + $0x31d8] sm:$0xff]
        %v6503 = vld [vmem:[%s352 + $0x31e0] sm:$0xff]
        %v6504 = vld [vmem:[%s352 + $0x31e8] sm:$0xff]
        %v6505 = vld [vmem:[%s352 + $0x31f0] sm:$0xff]
        %v6506 = vld [vmem:[%s352 + $0x31f8] sm:$0xff]
        %v6507 = vld [vmem:[%s352 + $0x3200] sm:$0xff]
        %v6508 = vld [vmem:[%s352 + $0x3208] sm:$0xff]
        %v6509 = vld [vmem:[%s352 + $0x3210] sm:$0xff]
        %v6510 = vld [vmem:[%s352 + $0x3218] sm:$0xff]
        %v6511 = vld [vmem:[%s352 + $0x3220] sm:$0xff]
        %v6512 = vld [vmem:[%s352 + $0x3228] sm:$0xff]
        %v6513 = vld [vmem:[%s352 + $0x3230] sm:$0xff]
        %v6514 = vld [vmem:[%s352 + $0x3238] sm:$0xff]
        %v6515 = vld [vmem:[%s352 + $0x3240] sm:$0xff]
        %v6516 = vld [vmem:[%s352 + $0x3248] sm:$0xff]
        %v6517 = vld [vmem:[%s352 + $0x3250] sm:$0xff]
        %v6518 = vld [vmem:[%s352 + $0x3258] sm:$0xff]
        %v6519 = vld [vmem:[%s352 + $0x3260] sm:$0xff]
        %v6520 = vld [vmem:[%s352 + $0x3268] sm:$0xff]
        %v6521 = vld [vmem:[%s352 + $0x3270] sm:$0xff]
        %v6522 = vld [vmem:[%s352 + $0x3278] sm:$0xff]
        %v6523 = vld [vmem:[%s352 + $0x3280] sm:$0xff]
        %v6524 = vld [vmem:[%s352 + $0x3288] sm:$0xff]
        %v6525 = vld [vmem:[%s352 + $0x3290] sm:$0xff]
        %v6526 = vld [vmem:[%s352 + $0x3298] sm:$0xff]
        %v6527 = vld [vmem:[%s352 + $0x32a0] sm:$0xff]
        %v6528 = vld [vmem:[%s352 + $0x32a8] sm:$0xff]
        %v6529 = vld [vmem:[%s352 + $0x32b0] sm:$0xff]
        %v6530 = vld [vmem:[%s352 + $0x32b8] sm:$0xff]
        %v6531 = vld [vmem:[%s352 + $0x32c0] sm:$0xff]
        %v6532 = vld [vmem:[%s352 + $0x32c8] sm:$0xff]
        %v6533 = vld [vmem:[%s352 + $0x32d0] sm:$0xff]
        %v6534 = vld [vmem:[%s352 + $0x32d8] sm:$0xff]
        %v6535 = vld [vmem:[%s352 + $0x32e0] sm:$0xff]
        %v6536 = vld [vmem:[%s352 + $0x32e8] sm:$0xff]
        %v6537 = vld [vmem:[%s352 + $0x32f0] sm:$0xff]
        %v6538 = vld [vmem:[%s352 + $0x32f8] sm:$0xff]
        %6539 = vmatprep.subr.mxu0 %v4908
        %6540 = vmatpush1.msra.mxu0 %v4907
        %6541 = vmatprep.subr.mxu0 %v4925
        %6542 = vmatpush1.msra.mxu0 %v4924
        %6543 = vmatprep.subr.mxu0 %v4942
        %6544 = vmatpush1.msra.mxu0 %v4941
        %6545 = vmatprep.subr.mxu0 %v4959
        %6546 = vmatpush1.msra.mxu0 %v4958
        %6547 = vmatprep.subr.mxu0 %v4976
        %6548 = vmatpush1.msra.mxu0 %v4975
        %6549 = vmatprep.subr.mxu0 %v4993
        %6550 = vmatpush1.msra.mxu0 %v4992
        %6551 = vmatprep.subr.mxu0 %v5010
        %6552 = vmatpush1.msra.mxu0 %v5009
        %6553 = vmatprep.subr.mxu0 %v5027
        %6554 = vmatpush1.msra.mxu0 %v5026
        %6555 = vmatprep.subr.mxu0 %v5044
        %6556 = vmatpush1.msra.mxu0 %v5043
        %6557 = vmatprep.subr.mxu0 %v5061
        %6558 = vmatpush1.msra.mxu0 %v5060
        %6559 = vmatprep.subr.mxu0 %v5078
        %6560 = vmatpush1.msra.mxu0 %v5077
        %6561 = vmatprep.subr.mxu0 %v5095
        %6562 = vmatpush1.msra.mxu0 %v5094
        %6563 = vmatprep.subr.mxu0 %v5112
        %6564 = vmatpush1.msra.mxu0 %v5111
        %6565 = vmatprep.subr.mxu0 %v5129
        %6566 = vmatpush1.msra.mxu0 %v5128
        %6567 = vmatprep.subr.mxu0 %v5146
        %6568 = vmatpush1.msra.mxu0 %v5145
        %6569 = vmatprep.subr.mxu0 %v5163
        %6570 = vmatpush1.msra.mxu0 %v5162
        %6571 = vmatprep.subr.mxu0 %v5180
        %6572 = vmatpush1.msra.mxu0 %v5179
        %6573 = vmatprep.subr.mxu0 %v5197
        %6574 = vmatpush1.msra.mxu0 %v5196
        %6575 = vmatprep.subr.mxu0 %v5214
        %6576 = vmatpush1.msra.mxu0 %v5213
        %6577 = vmatprep.subr.mxu0 %v5231
        %6578 = vmatpush1.msra.mxu0 %v5230
        %6579 = vmatprep.subr.mxu0 %v5248
        %6580 = vmatpush1.msra.mxu0 %v5247
        %6581 = vmatprep.subr.mxu0 %v5265
        %6582 = vmatpush1.msra.mxu0 %v5264
        %6583 = vmatprep.subr.mxu0 %v5282
        %6584 = vmatpush1.msra.mxu0 %v5281
        %6585 = vmatprep.subr.mxu0 %v5299
        %6586 = vmatpush1.msra.mxu0 %v5298
        %6587 = vmatprep.subr.mxu0 %v5316
        %6588 = vmatpush1.msra.mxu0 %v5315
        %6589 = vmatprep.subr.mxu0 %v5333
        %6590 = vmatpush1.msra.mxu0 %v5332
        %6591 = vmatprep.subr.mxu0 %v5350
        %6592 = vmatpush1.msra.mxu0 %v5349
        %6593 = vmatprep.subr.mxu0 %v5367
        %6594 = vmatpush1.msra.mxu0 %v5366
        %6595 = vmatprep.subr.mxu0 %v5384
        %6596 = vmatpush1.msra.mxu0 %v5383
        %6597 = vmatprep.subr.mxu0 %v5401
        %6598 = vmatpush1.msra.mxu0 %v5400
        %6599 = vmatprep.subr.mxu0 %v5418
        %6600 = vmatpush1.msra.mxu0 %v5417
        %6601 = vmatprep.subr.mxu0 %v5435
        %6602 = vmatpush1.msra.mxu0 %v5434
        %6603 = vmatprep.mubr.f32.mxu0 %v4885
        %6604 = vmatmul.mubr.f32.gmra.mrb[0].mxu0 %v4884
        %v6605 = vpop.f32.mrb[0].mxu0
        %v6606 = vadd.f32 0.0, %v6605
        %v6607 = vpop.f32.mrb[0].mxu0
        %v6608 = vadd.f32 0.0, %v6607
        %6609 = vdwg.mxu0
        %6610 = vmatprep.subr.mxu0 %v5452
        %6611 = vmatpush1.msra.mxu0 %v5451
        %6612 = vmatprep.subr.mxu0 %v5469
        %6613 = vmatpush1.msra.mxu0 %v5468
        %6614 = vmatprep.subr.mxu0 %v5486
        %6615 = vmatpush1.msra.mxu0 %v5485
        %6616 = vmatprep.subr.mxu0 %v5503
        %6617 = vmatpush1.msra.mxu0 %v5502
        %6618 = vmatprep.subr.mxu0 %v5520
        %6619 = vmatpush1.msra.mxu0 %v5519
        %6620 = vmatprep.subr.mxu0 %v5537
        %6621 = vmatpush1.msra.mxu0 %v5536
        %6622 = vmatprep.subr.mxu0 %v5554
        %6623 = vmatpush1.msra.mxu0 %v5553
        %6624 = vmatprep.subr.mxu0 %v5571
        %6625 = vmatpush1.msra.mxu0 %v5570
        %6626 = vmatprep.subr.mxu0 %v5588
        %6627 = vmatpush1.msra.mxu0 %v5587
        %6628 = vmatprep.subr.mxu0 %v5605
        %6629 = vmatpush1.msra.mxu0 %v5604
        %6630 = vmatprep.subr.mxu0 %v5622
        %6631 = vmatpush1.msra.mxu0 %v5621
        %6632 = vmatprep.subr.mxu0 %v5639
        %6633 = vmatpush1.msra.mxu0 %v5638
        %6634 = vmatprep.subr.mxu0 %v5656
        %6635 = vmatpush1.msra.mxu0 %v5655
        %6636 = vmatprep.subr.mxu0 %v5673
        %6637 = vmatpush1.msra.mxu0 %v5672
        %6638 = vmatprep.subr.mxu0 %v5690
        %6639 = vmatpush1.msra.mxu0 %v5689
        %6640 = vmatprep.subr.mxu0 %v5707
        %6641 = vmatpush1.msra.mxu0 %v5706
        %6642 = vmatprep.subr.mxu0 %v5724
        %6643 = vmatpush1.msra.mxu0 %v5723
        %6644 = vmatprep.subr.mxu0 %v5741
        %6645 = vmatpush1.msra.mxu0 %v5740
        %6646 = vmatprep.subr.mxu0 %v5758
        %6647 = vmatpush1.msra.mxu0 %v5757
        %6648 = vmatprep.subr.mxu0 %v5775
        %6649 = vmatpush1.msra.mxu0 %v5774
        %6650 = vmatprep.subr.mxu0 %v5792
        %6651 = vmatpush1.msra.mxu0 %v5791
        %6652 = vmatprep.subr.mxu0 %v5809
        %6653 = vmatpush1.msra.mxu0 %v5808
        %6654 = vmatprep.subr.mxu0 %v5826
        %6655 = vmatpush1.msra.mxu0 %v5825
        %6656 = vmatprep.subr.mxu0 %v5843
        %6657 = vmatpush1.msra.mxu0 %v5842
        %6658 = vmatprep.subr.mxu0 %v5860
        %6659 = vmatpush1.msra.mxu0 %v5859
        %6660 = vmatprep.subr.mxu0 %v5877
        %6661 = vmatpush1.msra.mxu0 %v5876
        %6662 = vmatprep.subr.mxu0 %v5894
        %6663 = vmatpush1.msra.mxu0 %v5893
        %6664 = vmatprep.subr.mxu0 %v5911
        %6665 = vmatpush1.msra.mxu0 %v5910
        %6666 = vmatprep.subr.mxu0 %v5928
        %6667 = vmatpush1.msra.mxu0 %v5927
        %6668 = vmatprep.subr.mxu0 %v5945
        %6669 = vmatpush1.msra.mxu0 %v5944
        %6670 = vmatprep.subr.mxu0 %v5962
        %6671 = vmatpush1.msra.mxu0 %v5961
        %6672 = vmatprep.subr.mxu0 %v5979
        %6673 = vmatpush1.msra.mxu0 %v5978
        %6674 = vmatprep.mubr.f32.mxu0 %v4887
        %6675 = vmatmul.mubr.f32.gmra.mrb[0].mxu0 %v4886
        %v6676 = vpop.f32.mrb[0].mxu0
        %v6677 = vadd.f32 %v6606, %v6676
        %v6678 = vpop.f32.mrb[0].mxu0
        %v6679 = vadd.f32 %v6608, %v6678
        %6680 = vdwg.mxu0
        %6681 = vmatprep.subr.mxu0 %v5996
        %6682 = vmatpush1.msra.mxu0 %v5995
        %6683 = vmatprep.subr.mxu0 %v6013
        %6684 = vmatpush1.msra.mxu0 %v6012
        %6685 = vmatprep.subr.mxu0 %v6030
        %6686 = vmatpush1.msra.mxu0 %v6029
        %6687 = vmatprep.subr.mxu0 %v6047
        %6688 = vmatpush1.msra.mxu0 %v6046
        %6689 = vmatprep.subr.mxu0 %v6064
        %6690 = vmatpush1.msra.mxu0 %v6063
        %6691 = vmatprep.subr.mxu0 %v6081
        %6692 = vmatpush1.msra.mxu0 %v6080
        %6693 = vmatprep.subr.mxu0 %v6098
        %6694 = vmatpush1.msra.mxu0 %v6097
        %6695 = vmatprep.subr.mxu0 %v6115
        %6696 = vmatpush1.msra.mxu0 %v6114
        %6697 = vmatprep.subr.mxu0 %v6132
        %6698 = vmatpush1.msra.mxu0 %v6131
        %6699 = vmatprep.subr.mxu0 %v6149
        %6700 = vmatpush1.msra.mxu0 %v6148
        %6701 = vmatprep.subr.mxu0 %v6166
        %6702 = vmatpush1.msra.mxu0 %v6165
        %6703 = vmatprep.subr.mxu0 %v6183
        %6704 = vmatpush1.msra.mxu0 %v6182
        %6705 = vmatprep.subr.mxu0 %v6200
        %6706 = vmatpush1.msra.mxu0 %v6199
        %6707 = vmatprep.subr.mxu0 %v6217
        %6708 = vmatpush1.msra.mxu0 %v6216
        %6709 = vmatprep.subr.mxu0 %v6234
        %6710 = vmatpush1.msra.mxu0 %v6233
        %6711 = vmatprep.subr.mxu0 %v6251
        %6712 = vmatpush1.msra.mxu0 %v6250
        %6713 = vmatprep.subr.mxu0 %v6268
        %6714 = vmatpush1.msra.mxu0 %v6267
        %6715 = vmatprep.subr.mxu0 %v6285
        %6716 = vmatpush1.msra.mxu0 %v6284
        %6717 = vmatprep.subr.mxu0 %v6302
        %6718 = vmatpush1.msra.mxu0 %v6301
        %6719 = vmatprep.subr.mxu0 %v6319
        %6720 = vmatpush1.msra.mxu0 %v6318
        %6721 = vmatprep.subr.mxu0 %v6336
        %6722 = vmatpush1.msra.mxu0 %v6335
        %6723 = vmatprep.subr.mxu0 %v6353
        %6724 = vmatpush1.msra.mxu0 %v6352
        %6725 = vmatprep.subr.mxu0 %v6370
        %6726 = vmatpush1.msra.mxu0 %v6369
        %6727 = vmatprep.subr.mxu0 %v6387
        %6728 = vmatpush1.msra.mxu0 %v6386
        %6729 = vmatprep.subr.mxu0 %v6404
        %6730 = vmatpush1.msra.mxu0 %v6403
        %6731 = vmatprep.subr.mxu0 %v6421
        %6732 = vmatpush1.msra.mxu0 %v6420
        %6733 = vmatprep.subr.mxu0 %v6438
        %6734 = vmatpush1.msra.mxu0 %v6437
        %6735 = vmatprep.subr.mxu0 %v6455
        %6736 = vmatpush1.msra.mxu0 %v6454
        %6737 = vmatprep.subr.mxu0 %v6472
        %6738 = vmatpush1.msra.mxu0 %v6471
        %6739 = vmatprep.subr.mxu0 %v6489
        %6740 = vmatpush1.msra.mxu0 %v6488
        %6741 = vmatprep.subr.mxu0 %v6506
        %6742 = vmatpush1.msra.mxu0 %v6505
        %6743 = vmatprep.subr.mxu0 %v6523
        %6744 = vmatpush1.msra.mxu0 %v6522
        %6745 = vmatprep.mubr.f32.mxu0 %v4889
        %6746 = vmatmul.mubr.f32.gmra.mrb[0].mxu0 %v4888
        %v6747 = vpop.f32.mrb[0].mxu0
        %v6748 = vadd.f32 %v6677, %v6747
        %v6749 = vpop.f32.mrb[0].mxu0
        %v6750 = vadd.f32 %v6679, %v6749
        %6751 = vdwg.mxu0
        %6752 = vmatprep.subr.mxu0 %v4910
        %6753 = vmatpush1.msra.mxu0 %v4909
        %6754 = vmatprep.subr.mxu0 %v4927
        %6755 = vmatpush1.msra.mxu0 %v4926
        %6756 = vmatprep.subr.mxu0 %v4944
        %6757 = vmatpush1.msra.mxu0 %v4943
        %6758 = vmatprep.subr.mxu0 %v4961
        %6759 = vmatpush1.msra.mxu0 %v4960
        %6760 = vmatprep.subr.mxu0 %v4978
        %6761 = vmatpush1.msra.mxu0 %v4977
        %6762 = vmatprep.subr.mxu0 %v4995
        %6763 = vmatpush1.msra.mxu0 %v4994
        %6764 = vmatprep.subr.mxu0 %v5012
        %6765 = vmatpush1.msra.mxu0 %v5011
        %6766 = vmatprep.subr.mxu0 %v5029
        %6767 = vmatpush1.msra.mxu0 %v5028
        %6768 = vmatprep.subr.mxu0 %v5046
        %6769 = vmatpush1.msra.mxu0 %v5045
        %6770 = vmatprep.subr.mxu0 %v5063
        %6771 = vmatpush1.msra.mxu0 %v5062
        %6772 = vmatprep.subr.mxu0 %v5080
        %6773 = vmatpush1.msra.mxu0 %v5079
        %6774 = vmatprep.subr.mxu0 %v5097
        %6775 = vmatpush1.msra.mxu0 %v5096
        %6776 = vmatprep.subr.mxu0 %v5114
        %6777 = vmatpush1.msra.mxu0 %v5113
        %6778 = vmatprep.subr.mxu0 %v5131
        %6779 = vmatpush1.msra.mxu0 %v5130
        %6780 = vmatprep.subr.mxu0 %v5148
        %6781 = vmatpush1.msra.mxu0 %v5147
        %6782 = vmatprep.subr.mxu0 %v5165
        %6783 = vmatpush1.msra.mxu0 %v5164
        %6784 = vmatprep.subr.mxu0 %v5182
        %6785 = vmatpush1.msra.mxu0 %v5181
        %6786 = vmatprep.subr.mxu0 %v5199
        %6787 = vmatpush1.msra.mxu0 %v5198
        %6788 = vmatprep.subr.mxu0 %v5216
        %6789 = vmatpush1.msra.mxu0 %v5215
        %6790 = vmatprep.subr.mxu0 %v5233
        %6791 = vmatpush1.msra.mxu0 %v5232
        %6792 = vmatprep.subr.mxu0 %v5250
        %6793 = vmatpush1.msra.mxu0 %v5249
        %6794 = vmatprep.subr.mxu0 %v5267
        %6795 = vmatpush1.msra.mxu0 %v5266
        %6796 = vmatprep.subr.mxu0 %v5284
        %6797 = vmatpush1.msra.mxu0 %v5283
        %6798 = vmatprep.subr.mxu0 %v5301
        %6799 = vmatpush1.msra.mxu0 %v5300
        %6800 = vmatprep.subr.mxu0 %v5318
        %6801 = vmatpush1.msra.mxu0 %v5317
        %6802 = vmatprep.subr.mxu0 %v5335
        %6803 = vmatpush1.msra.mxu0 %v5334
        %6804 = vmatprep.subr.mxu0 %v5352
        %6805 = vmatpush1.msra.mxu0 %v5351
        %6806 = vmatprep.subr.mxu0 %v5369
        %6807 = vmatpush1.msra.mxu0 %v5368
        %6808 = vmatprep.subr.mxu0 %v5386
        %6809 = vmatpush1.msra.mxu0 %v5385
        %6810 = vmatprep.subr.mxu0 %v5403
        %6811 = vmatpush1.msra.mxu0 %v5402
        %6812 = vmatprep.subr.mxu0 %v5420
        %6813 = vmatpush1.msra.mxu0 %v5419
        %6814 = vmatprep.subr.mxu0 %v5437
        %6815 = vmatpush1.msra.mxu0 %v5436
        %6816 = vmatprep.mubr.f32.mxu0 %v4885
        %6817 = vmatmul.mubr.f32.gmra.mrb[0].mxu0 %v4884
        %v6818 = vpop.f32.mrb[0].mxu0
        %v6819 = vadd.f32 0.0, %v6818
        %v6820 = vpop.f32.mrb[0].mxu0
        %v6821 = vadd.f32 0.0, %v6820
        %6822 = vdwg.mxu0
        %6823 = vmatprep.subr.mxu0 %v5454
        %6824 = vmatpush1.msra.mxu0 %v5453
        %6825 = vmatprep.subr.mxu0 %v5471
        %6826 = vmatpush1.msra.mxu0 %v5470
        %6827 = vmatprep.subr.mxu0 %v5488
        %6828 = vmatpush1.msra.mxu0 %v5487
        %6829 = vmatprep.subr.mxu0 %v5505
        %6830 = vmatpush1.msra.mxu0 %v5504
        %6831 = vmatprep.subr.mxu0 %v5522
        %6832 = vmatpush1.msra.mxu0 %v5521
        %6833 = vmatprep.subr.mxu0 %v5539
        %6834 = vmatpush1.msra.mxu0 %v5538
        %6835 = vmatprep.subr.mxu0 %v5556
        %6836 = vmatpush1.msra.mxu0 %v5555
        %6837 = vmatprep.subr.mxu0 %v5573
        %6838 = vmatpush1.msra.mxu0 %v5572
        %6839 = vmatprep.subr.mxu0 %v5590
        %6840 = vmatpush1.msra.mxu0 %v5589
        %6841 = vmatprep.subr.mxu0 %v5607
        %6842 = vmatpush1.msra.mxu0 %v5606
        %6843 = vmatprep.subr.mxu0 %v5624
        %6844 = vmatpush1.msra.mxu0 %v5623
        %6845 = vmatprep.subr.mxu0 %v5641
        %6846 = vmatpush1.msra.mxu0 %v5640
        %6847 = vmatprep.subr.mxu0 %v5658
        %6848 = vmatpush1.msra.mxu0 %v5657
        %6849 = vmatprep.subr.mxu0 %v5675
        %6850 = vmatpush1.msra.mxu0 %v5674
        %6851 = vmatprep.subr.mxu0 %v5692
        %6852 = vmatpush1.msra.mxu0 %v5691
        %6853 = vmatprep.subr.mxu0 %v5709
        %6854 = vmatpush1.msra.mxu0 %v5708
        %6855 = vmatprep.subr.mxu0 %v5726
        %6856 = vmatpush1.msra.mxu0 %v5725
        %6857 = vmatprep.subr.mxu0 %v5743
        %6858 = vmatpush1.msra.mxu0 %v5742
        %6859 = vmatprep.subr.mxu0 %v5760
        %6860 = vmatpush1.msra.mxu0 %v5759
        %6861 = vmatprep.subr.mxu0 %v5777
        %6862 = vmatpush1.msra.mxu0 %v5776
        %6863 = vmatprep.subr.mxu0 %v5794
        %6864 = vmatpush1.msra.mxu0 %v5793
        %6865 = vmatprep.subr.mxu0 %v5811
        %6866 = vmatpush1.msra.mxu0 %v5810
        %6867 = vmatprep.subr.mxu0 %v5828
        %6868 = vmatpush1.msra.mxu0 %v5827
        %6869 = vmatprep.subr.mxu0 %v5845
        %6870 = vmatpush1.msra.mxu0 %v5844
        %6871 = vmatprep.subr.mxu0 %v5862
        %6872 = vmatpush1.msra.mxu0 %v5861
        %6873 = vmatprep.subr.mxu0 %v5879
        %6874 = vmatpush1.msra.mxu0 %v5878
        %6875 = vmatprep.subr.mxu0 %v5896
        %6876 = vmatpush1.msra.mxu0 %v5895
        %6877 = vmatprep.subr.mxu0 %v5913
        %6878 = vmatpush1.msra.mxu0 %v5912
        %6879 = vmatprep.subr.mxu0 %v5930
        %6880 = vmatpush1.msra.mxu0 %v5929
        %6881 = vmatprep.subr.mxu0 %v5947
        %6882 = vmatpush1.msra.mxu0 %v5946
        %6883 = vmatprep.subr.mxu0 %v5964
        %6884 = vmatpush1.msra.mxu0 %v5963
        %6885 = vmatprep.subr.mxu0 %v5981
        %6886 = vmatpush1.msra.mxu0 %v5980
        %6887 = vmatprep.mubr.f32.mxu0 %v4887
        %6888 = vmatmul.mubr.f32.gmra.mrb[0].mxu0 %v4886
        %v6889 = vpop.f32.mrb[0].mxu0
        %v6890 = vadd.f32 %v6819, %v6889
        %v6891 = vpop.f32.mrb[0].mxu0
        %v6892 = vadd.f32 %v6821, %v6891
        %6893 = vdwg.mxu0
        %6894 = vmatprep.subr.mxu0 %v5998
        %6895 = vmatpush1.msra.mxu0 %v5997
        %6896 = vmatprep.subr.mxu0 %v6015
        %6897 = vmatpush1.msra.mxu0 %v6014
        %6898 = vmatprep.subr.mxu0 %v6032
        %6899 = vmatpush1.msra.mxu0 %v6031
        %6900 = vmatprep.subr.mxu0 %v6049
        %6901 = vmatpush1.msra.mxu0 %v6048
        %6902 = vmatprep.subr.mxu0 %v6066
        %6903 = vmatpush1.msra.mxu0 %v6065
        %6904 = vmatprep.subr.mxu0 %v6083
        %6905 = vmatpush1.msra.mxu0 %v6082
        %6906 = vmatprep.subr.mxu0 %v6100
        %6907 = vmatpush1.msra.mxu0 %v6099
        %6908 = vmatprep.subr.mxu0 %v6117
        %6909 = vmatpush1.msra.mxu0 %v6116
        %6910 = vmatprep.subr.mxu0 %v6134
        %6911 = vmatpush1.msra.mxu0 %v6133
        %6912 = vmatprep.subr.mxu0 %v6151
        %6913 = vmatpush1.msra.mxu0 %v6150
        %6914 = vmatprep.subr.mxu0 %v6168
        %6915 = vmatpush1.msra.mxu0 %v6167
        %6916 = vmatprep.subr.mxu0 %v6185
        %6917 = vmatpush1.msra.mxu0 %v6184
        %6918 = vmatprep.subr.mxu0 %v6202
        %6919 = vmatpush1.msra.mxu0 %v6201
        %6920 = vmatprep.subr.mxu0 %v6219
        %6921 = vmatpush1.msra.mxu0 %v6218
        %6922 = vmatprep.subr.mxu0 %v6236
        %6923 = vmatpush1.msra.mxu0 %v6235
        %6924 = vmatprep.subr.mxu0 %v6253
        %6925 = vmatpush1.msra.mxu0 %v6252
        %6926 = vmatprep.subr.mxu0 %v6270
        %6927 = vmatpush1.msra.mxu0 %v6269
        %6928 = vmatprep.subr.mxu0 %v6287
        %6929 = vmatpush1.msra.mxu0 %v6286
        %6930 = vmatprep.subr.mxu0 %v6304
        %6931 = vmatpush1.msra.mxu0 %v6303
        %6932 = vmatprep.subr.mxu0 %v6321
        %6933 = vmatpush1.msra.mxu0 %v6320
        %6934 = vmatprep.subr.mxu0 %v6338
        %6935 = vmatpush1.msra.mxu0 %v6337
        %6936 = vmatprep.subr.mxu0 %v6355
        %6937 = vmatpush1.msra.mxu0 %v6354
        %6938 = vmatprep.subr.mxu0 %v6372
        %6939 = vmatpush1.msra.mxu0 %v6371
        %6940 = vmatprep.subr.mxu0 %v6389
        %6941 = vmatpush1.msra.mxu0 %v6388
        %6942 = vmatprep.subr.mxu0 %v6406
        %6943 = vmatpush1.msra.mxu0 %v6405
        %6944 = vmatprep.subr.mxu0 %v6423
        %6945 = vmatpush1.msra.mxu0 %v6422
        %6946 = vmatprep.subr.mxu0 %v6440
        %6947 = vmatpush1.msra.mxu0 %v6439
        %6948 = vmatprep.subr.mxu0 %v6457
        %6949 = vmatpush1.msra.mxu0 %v6456
        %6950 = vmatprep.subr.mxu0 %v6474
        %6951 = vmatpush1.msra.mxu0 %v6473
        %6952 = vmatprep.subr.mxu0 %v6491
        %6953 = vmatpush1.msra.mxu0 %v6490
        %6954 = vmatprep.subr.mxu0 %v6508
        %6955 = vmatpush1.msra.mxu0 %v6507
        %6956 = vmatprep.subr.mxu0 %v6525
        %6957 = vmatpush1.msra.mxu0 %v6524
        %6958 = vmatprep.mubr.f32.mxu0 %v4889
        %6959 = vmatmul.mubr.f32.gmra.mrb[0].mxu0 %v4888
        %v6960 = vpop.f32.mrb[0].mxu0
        %v6961 = vadd.f32 %v6890, %v6960
        %v6962 = vpop.f32.mrb[0].mxu0
        %v6963 = vadd.f32 %v6892, %v6962
        %6964 = vdwg.mxu0
        %6965 = vmatprep.subr.mxu0 %v4912
        %6966 = vmatpush1.msra.mxu0 %v4911
        %6967 = vmatprep.subr.mxu0 %v4929
        %6968 = vmatpush1.msra.mxu0 %v4928
        %6969 = vmatprep.subr.mxu0 %v4946
        %6970 = vmatpush1.msra.mxu0 %v4945
        %6971 = vmatprep.subr.mxu0 %v4963
        %6972 = vmatpush1.msra.mxu0 %v4962
        %6973 = vmatprep.subr.mxu0 %v4980
        %6974 = vmatpush1.msra.mxu0 %v4979
        %6975 = vmatprep.subr.mxu0 %v4997
        %6976 = vmatpush1.msra.mxu0 %v4996
        %6977 = vmatprep.subr.mxu0 %v5014
        %6978 = vmatpush1.msra.mxu0 %v5013
        %6979 = vmatprep.subr.mxu0 %v5031
        %6980 = vmatpush1.msra.mxu0 %v5030
        %6981 = vmatprep.subr.mxu0 %v5048
        %6982 = vmatpush1.msra.mxu0 %v5047
        %6983 = vmatprep.subr.mxu0 %v5065
        %6984 = vmatpush1.msra.mxu0 %v5064
        %6985 = vmatprep.subr.mxu0 %v5082
        %6986 = vmatpush1.msra.mxu0 %v5081
        %6987 = vmatprep.subr.mxu0 %v5099
        %6988 = vmatpush1.msra.mxu0 %v5098
        %6989 = vmatprep.subr.mxu0 %v5116
        %6990 = vmatpush1.msra.mxu0 %v5115
        %6991 = vmatprep.subr.mxu0 %v5133
        %6992 = vmatpush1.msra.mxu0 %v5132
        %6993 = vmatprep.subr.mxu0 %v5150
        %6994 = vmatpush1.msra.mxu0 %v5149
        %6995 = vmatprep.subr.mxu0 %v5167
        %6996 = vmatpush1.msra.mxu0 %v5166
        %6997 = vmatprep.subr.mxu0 %v5184
        %6998 = vmatpush1.msra.mxu0 %v5183
        %6999 = vmatprep.subr.mxu0 %v5201
        %7000 = vmatpush1.msra.mxu0 %v5200
        %7001 = vmatprep.subr.mxu0 %v5218
        %7002 = vmatpush1.msra.mxu0 %v5217
        %7003 = vmatprep.subr.mxu0 %v5235
        %7004 = vmatpush1.msra.mxu0 %v5234
        %7005 = vmatprep.subr.mxu0 %v5252
        %7006 = vmatpush1.msra.mxu0 %v5251
        %7007 = vmatprep.subr.mxu0 %v5269
        %7008 = vmatpush1.msra.mxu0 %v5268
        %7009 = vmatprep.subr.mxu0 %v5286
        %7010 = vmatpush1.msra.mxu0 %v5285
        %7011 = vmatprep.subr.mxu0 %v5303
        %7012 = vmatpush1.msra.mxu0 %v5302
        %7013 = vmatprep.subr.mxu0 %v5320
        %7014 = vmatpush1.msra.mxu0 %v5319
        %7015 = vmatprep.subr.mxu0 %v5337
        %7016 = vmatpush1.msra.mxu0 %v5336
        %7017 = vmatprep.subr.mxu0 %v5354
        %7018 = vmatpush1.msra.mxu0 %v5353
        %7019 = vmatprep.subr.mxu0 %v5371
        %7020 = vmatpush1.msra.mxu0 %v5370
        %7021 = vmatprep.subr.mxu0 %v5388
        %7022 = vmatpush1.msra.mxu0 %v5387
        %7023 = vmatprep.subr.mxu0 %v5405
        %7024 = vmatpush1.msra.mxu0 %v5404
        %7025 = vmatprep.subr.mxu0 %v5422
        %7026 = vmatpush1.msra.mxu0 %v5421
        %7027 = vmatprep.subr.mxu0 %v5439
        %7028 = vmatpush1.msra.mxu0 %v5438
        %7029 = vmatprep.mubr.f32.mxu0 %v4885
        %7030 = vmatmul.mubr.f32.gmra.mrb[0].mxu0 %v4884
        %v7031 = vpop.f32.mrb[0].mxu0
        %v7032 = vadd.f32 0.0, %v7031
        %v7033 = vpop.f32.mrb[0].mxu0
        %v7034 = vadd.f32 0.0, %v7033
        %7035 = vdwg.mxu0
        %7036 = vmatprep.subr.mxu0 %v5456
        %7037 = vmatpush1.msra.mxu0 %v5455
        %7038 = vmatprep.subr.mxu0 %v5473
        %7039 = vmatpush1.msra.mxu0 %v5472
        %7040 = vmatprep.subr.mxu0 %v5490
        %7041 = vmatpush1.msra.mxu0 %v5489
        %7042 = vmatprep.subr.mxu0 %v5507
        %7043 = vmatpush1.msra.mxu0 %v5506
        %7044 = vmatprep.subr.mxu0 %v5524
        %7045 = vmatpush1.msra.mxu0 %v5523
        %7046 = vmatprep.subr.mxu0 %v5541
        %7047 = vmatpush1.msra.mxu0 %v5540
        %7048 = vmatprep.subr.mxu0 %v5558
        %7049 = vmatpush1.msra.mxu0 %v5557
        %7050 = vmatprep.subr.mxu0 %v5575
        %7051 = vmatpush1.msra.mxu0 %v5574
        %7052 = vmatprep.subr.mxu0 %v5592
        %7053 = vmatpush1.msra.mxu0 %v5591
        %7054 = vmatprep.subr.mxu0 %v5609
        %7055 = vmatpush1.msra.mxu0 %v5608
        %7056 = vmatprep.subr.mxu0 %v5626
        %7057 = vmatpush1.msra.mxu0 %v5625
        %7058 = vmatprep.subr.mxu0 %v5643
        %7059 = vmatpush1.msra.mxu0 %v5642
        %7060 = vmatprep.subr.mxu0 %v5660
        %7061 = vmatpush1.msra.mxu0 %v5659
        %7062 = vmatprep.subr.mxu0 %v5677
        %7063 = vmatpush1.msra.mxu0 %v5676
        %7064 = vmatprep.subr.mxu0 %v5694
        %7065 = vmatpush1.msra.mxu0 %v5693
        %7066 = vmatprep.subr.mxu0 %v5711
        %7067 = vmatpush1.msra.mxu0 %v5710
        %7068 = vmatprep.subr.mxu0 %v5728
        %7069 = vmatpush1.msra.mxu0 %v5727
        %7070 = vmatprep.subr.mxu0 %v5745
        %7071 = vmatpush1.msra.mxu0 %v5744
        %7072 = vmatprep.subr.mxu0 %v5762
        %7073 = vmatpush1.msra.mxu0 %v5761
        %7074 = vmatprep.subr.mxu0 %v5779
        %7075 = vmatpush1.msra.mxu0 %v5778
        %7076 = vmatprep.subr.mxu0 %v5796
        %7077 = vmatpush1.msra.mxu0 %v5795
        %7078 = vmatprep.subr.mxu0 %v5813
        %7079 = vmatpush1.msra.mxu0 %v5812
        %7080 = vmatprep.subr.mxu0 %v5830
        %7081 = vmatpush1.msra.mxu0 %v5829
        %7082 = vmatprep.subr.mxu0 %v5847
        %7083 = vmatpush1.msra.mxu0 %v5846
        %7084 = vmatprep.subr.mxu0 %v5864
        %7085 = vmatpush1.msra.mxu0 %v5863
        %7086 = vmatprep.subr.mxu0 %v5881
        %7087 = vmatpush1.msra.mxu0 %v5880
        %7088 = vmatprep.subr.mxu0 %v5898
        %7089 = vmatpush1.msra.mxu0 %v5897
        %7090 = vmatprep.subr.mxu0 %v5915
        %7091 = vmatpush1.msra.mxu0 %v5914
        %7092 = vmatprep.subr.mxu0 %v5932
        %7093 = vmatpush1.msra.mxu0 %v5931
        %7094 = vmatprep.subr.mxu0 %v5949
        %7095 = vmatpush1.msra.mxu0 %v5948
        %7096 = vmatprep.subr.mxu0 %v5966
        %7097 = vmatpush1.msra.mxu0 %v5965
        %7098 = vmatprep.subr.mxu0 %v5983
        %7099 = vmatpush1.msra.mxu0 %v5982
        %7100 = vmatprep.mubr.f32.mxu0 %v4887
        %7101 = vmatmul.mubr.f32.gmra.mrb[0].mxu0 %v4886
        %v7102 = vpop.f32.mrb[0].mxu0
        %v7103 = vadd.f32 %v7032, %v7102
        %v7104 = vpop.f32.mrb[0].mxu0
        %v7105 = vadd.f32 %v7034, %v7104
        %7106 = vdwg.mxu0
        %7107 = vmatprep.subr.mxu0 %v6000
        %7108 = vmatpush1.msra.mxu0 %v5999
        %7109 = vmatprep.subr.mxu0 %v6017
        %7110 = vmatpush1.msra.mxu0 %v6016
        %7111 = vmatprep.subr.mxu0 %v6034
        %7112 = vmatpush1.msra.mxu0 %v6033
        %7113 = vmatprep.subr.mxu0 %v6051
        %7114 = vmatpush1.msra.mxu0 %v6050
        %7115 = vmatprep.subr.mxu0 %v6068
        %7116 = vmatpush1.msra.mxu0 %v6067
        %7117 = vmatprep.subr.mxu0 %v6085
        %7118 = vmatpush1.msra.mxu0 %v6084
        %7119 = vmatprep.subr.mxu0 %v6102
        %7120 = vmatpush1.msra.mxu0 %v6101
        %7121 = vmatprep.subr.mxu0 %v6119
        %7122 = vmatpush1.msra.mxu0 %v6118
        %7123 = vmatprep.subr.mxu0 %v6136
        %7124 = vmatpush1.msra.mxu0 %v6135
        %7125 = vmatprep.subr.mxu0 %v6153
        %7126 = vmatpush1.msra.mxu0 %v6152
        %7127 = vmatprep.subr.mxu0 %v6170
        %7128 = vmatpush1.msra.mxu0 %v6169
        %7129 = vmatprep.subr.mxu0 %v6187
        %7130 = vmatpush1.msra.mxu0 %v6186
        %7131 = vmatprep.subr.mxu0 %v6204
        %7132 = vmatpush1.msra.mxu0 %v6203
        %7133 = vmatprep.subr.mxu0 %v6221
        %7134 = vmatpush1.msra.mxu0 %v6220
        %7135 = vmatprep.subr.mxu0 %v6238
        %7136 = vmatpush1.msra.mxu0 %v6237
        %7137 = vmatprep.subr.mxu0 %v6255
        %7138 = vmatpush1.msra.mxu0 %v6254
        %7139 = vmatprep.subr.mxu0 %v6272
        %7140 = vmatpush1.msra.mxu0 %v6271
        %7141 = vmatprep.subr.mxu0 %v6289
        %7142 = vmatpush1.msra.mxu0 %v6288
        %7143 = vmatprep.subr.mxu0 %v6306
        %7144 = vmatpush1.msra.mxu0 %v6305
        %7145 = vmatprep.subr.mxu0 %v6323
        %7146 = vmatpush1.msra.mxu0 %v6322
        %7147 = vmatprep.subr.mxu0 %v6340
        %7148 = vmatpush1.msra.mxu0 %v6339
        %7149 = vmatprep.subr.mxu0 %v6357
        %7150 = vmatpush1.msra.mxu0 %v6356
        %7151 = vmatprep.subr.mxu0 %v6374
        %7152 = vmatpush1.msra.mxu0 %v6373
        %7153 = vmatprep.subr.mxu0 %v6391
        %7154 = vmatpush1.msra.mxu0 %v6390
        %7155 = vmatprep.subr.mxu0 %v6408
        %7156 = vmatpush1.msra.mxu0 %v6407
        %7157 = vmatprep.subr.mxu0 %v6425
        %7158 = vmatpush1.msra.mxu0 %v6424
        %7159 = vmatprep.subr.mxu0 %v6442
        %7160 = vmatpush1.msra.mxu0 %v6441
        %7161 = vmatprep.subr.mxu0 %v6459
        %7162 = vmatpush1.msra.mxu0 %v6458
        %7163 = vmatprep.subr.mxu0 %v6476
        %7164 = vmatpush1.msra.mxu0 %v6475
        %7165 = vmatprep.subr.mxu0 %v6493
        %7166 = vmatpush1.msra.mxu0 %v6492
        %7167 = vmatprep.subr.mxu0 %v6510
        %7168 = vmatpush1.msra.mxu0 %v6509
        %7169 = vmatprep.subr.mxu0 %v6527
        %7170 = vmatpush1.msra.mxu0 %v6526
        %7171 = vmatprep.mubr.f32.mxu0 %v4889
        %7172 = vmatmul.mubr.f32.gmra.mrb[0].mxu0 %v4888
        %v7173 = vpop.f32.mrb[0].mxu0
        %v7174 = vadd.f32 %v7103, %v7173
        %v7175 = vpop.f32.mrb[0].mxu0
        %v7176 = vadd.f32 %v7105, %v7175
        %7177 = vdwg.mxu0
        %7178 = vmatprep.subr.mxu0 %v4914
        %7179 = vmatpush1.msra.mxu0 %v4913
        %7180 = vmatprep.subr.mxu0 %v4931
        %7181 = vmatpush1.msra.mxu0 %v4930
        %7182 = vmatprep.subr.mxu0 %v4948
        %7183 = vmatpush1.msra.mxu0 %v4947
        %7184 = vmatprep.subr.mxu0 %v4965
        %7185 = vmatpush1.msra.mxu0 %v4964
        %7186 = vmatprep.subr.mxu0 %v4982
        %7187 = vmatpush1.msra.mxu0 %v4981
        %7188 = vmatprep.subr.mxu0 %v4999
        %7189 = vmatpush1.msra.mxu0 %v4998
        %7190 = vmatprep.subr.mxu0 %v5016
        %7191 = vmatpush1.msra.mxu0 %v5015
        %7192 = vmatprep.subr.mxu0 %v5033
        %7193 = vmatpush1.msra.mxu0 %v5032
        %7194 = vmatprep.subr.mxu0 %v5050
        %7195 = vmatpush1.msra.mxu0 %v5049
        %7196 = vmatprep.subr.mxu0 %v5067
        %7197 = vmatpush1.msra.mxu0 %v5066
        %7198 = vmatprep.subr.mxu0 %v5084
        %7199 = vmatpush1.msra.mxu0 %v5083
        %7200 = vmatprep.subr.mxu0 %v5101
        %7201 = vmatpush1.msra.mxu0 %v5100
        %7202 = vmatprep.subr.mxu0 %v5118
        %7203 = vmatpush1.msra.mxu0 %v5117
        %7204 = vmatprep.subr.mxu0 %v5135
        %7205 = vmatpush1.msra.mxu0 %v5134
        %7206 = vmatprep.subr.mxu0 %v5152
        %7207 = vmatpush1.msra.mxu0 %v5151
        %7208 = vmatprep.subr.mxu0 %v5169
        %7209 = vmatpush1.msra.mxu0 %v5168
        %7210 = vmatprep.subr.mxu0 %v5186
        %7211 = vmatpush1.msra.mxu0 %v5185
        %7212 = vmatprep.subr.mxu0 %v5203
        %7213 = vmatpush1.msra.mxu0 %v5202
        %7214 = vmatprep.subr.mxu0 %v5220
        %7215 = vmatpush1.msra.mxu0 %v5219
        %7216 = vmatprep.subr.mxu0 %v5237
        %7217 = vmatpush1.msra.mxu0 %v5236
        %7218 = vmatprep.subr.mxu0 %v5254
        %7219 = vmatpush1.msra.mxu0 %v5253
        %7220 = vmatprep.subr.mxu0 %v5271
        %7221 = vmatpush1.msra.mxu0 %v5270
        %7222 = vmatprep.subr.mxu0 %v5288
        %7223 = vmatpush1.msra.mxu0 %v5287
        %7224 = vmatprep.subr.mxu0 %v5305
        %7225 = vmatpush1.msra.mxu0 %v5304
        %7226 = vmatprep.subr.mxu0 %v5322
        %7227 = vmatpush1.msra.mxu0 %v5321
        %7228 = vmatprep.subr.mxu0 %v5339
        %7229 = vmatpush1.msra.mxu0 %v5338
        %7230 = vmatprep.subr.mxu0 %v5356
        %7231 = vmatpush1.msra.mxu0 %v5355
        %7232 = vmatprep.subr.mxu0 %v5373
        %7233 = vmatpush1.msra.mxu0 %v5372
        %7234 = vmatprep.subr.mxu0 %v5390
        %7235 = vmatpush1.msra.mxu0 %v5389
        %7236 = vmatprep.subr.mxu0 %v5407
        %7237 = vmatpush1.msra.mxu0 %v5406
        %7238 = vmatprep.subr.mxu0 %v5424
        %7239 = vmatpush1.msra.mxu0 %v5423
        %7240 = vmatprep.subr.mxu0 %v5441
        %7241 = vmatpush1.msra.mxu0 %v5440
        %7242 = vmatprep.mubr.f32.mxu0 %v4885
        %7243 = vmatmul.mubr.f32.gmra.mrb[0].mxu0 %v4884
        %v7244 = vpop.f32.mrb[0].mxu0
        %v7245 = vadd.f32 0.0, %v7244
        %v7246 = vpop.f32.mrb[0].mxu0
        %v7247 = vadd.f32 0.0, %v7246
        %7248 = vdwg.mxu0
        %7249 = vmatprep.subr.mxu0 %v5458
        %7250 = vmatpush1.msra.mxu0 %v5457
        %7251 = vmatprep.subr.mxu0 %v5475
        %7252 = vmatpush1.msra.mxu0 %v5474
        %7253 = vmatprep.subr.mxu0 %v5492
        %7254 = vmatpush1.msra.mxu0 %v5491
        %7255 = vmatprep.subr.mxu0 %v5509
        %7256 = vmatpush1.msra.mxu0 %v5508
        %7257 = vmatprep.subr.mxu0 %v5526
        %7258 = vmatpush1.msra.mxu0 %v5525
        %7259 = vmatprep.subr.mxu0 %v5543
        %7260 = vmatpush1.msra.mxu0 %v5542
        %7261 = vmatprep.subr.mxu0 %v5560
        %7262 = vmatpush1.msra.mxu0 %v5559
        %7263 = vmatprep.subr.mxu0 %v5577
        %7264 = vmatpush1.msra.mxu0 %v5576
        %7265 = vmatprep.subr.mxu0 %v5594
        %7266 = vmatpush1.msra.mxu0 %v5593
        %7267 = vmatprep.subr.mxu0 %v5611
        %7268 = vmatpush1.msra.mxu0 %v5610
        %7269 = vmatprep.subr.mxu0 %v5628
        %7270 = vmatpush1.msra.mxu0 %v5627
        %7271 = vmatprep.subr.mxu0 %v5645
        %7272 = vmatpush1.msra.mxu0 %v5644
        %7273 = vmatprep.subr.mxu0 %v5662
        %7274 = vmatpush1.msra.mxu0 %v5661
        %7275 = vmatprep.subr.mxu0 %v5679
        %7276 = vmatpush1.msra.mxu0 %v5678
        %7277 = vmatprep.subr.mxu0 %v5696
        %7278 = vmatpush1.msra.mxu0 %v5695
        %7279 = vmatprep.subr.mxu0 %v5713
        %7280 = vmatpush1.msra.mxu0 %v5712
        %7281 = vmatprep.subr.mxu0 %v5730
        %7282 = vmatpush1.msra.mxu0 %v5729
        %7283 = vmatprep.subr.mxu0 %v5747
        %7284 = vmatpush1.msra.mxu0 %v5746
        %7285 = vmatprep.subr.mxu0 %v5764
        %7286 = vmatpush1.msra.mxu0 %v5763
        %7287 = vmatprep.subr.mxu0 %v5781
        %7288 = vmatpush1.msra.mxu0 %v5780
        %7289 = vmatprep.subr.mxu0 %v5798
        %7290 = vmatpush1.msra.mxu0 %v5797
        %7291 = vmatprep.subr.mxu0 %v5815
        %7292 = vmatpush1.msra.mxu0 %v5814
        %7293 = vmatprep.subr.mxu0 %v5832
        %7294 = vmatpush1.msra.mxu0 %v5831
        %7295 = vmatprep.subr.mxu0 %v5849
        %7296 = vmatpush1.msra.mxu0 %v5848
        %7297 = vmatprep.subr.mxu0 %v5866
        %7298 = vmatpush1.msra.mxu0 %v5865
        %7299 = vmatprep.subr.mxu0 %v5883
        %7300 = vmatpush1.msra.mxu0 %v5882
        %7301 = vmatprep.subr.mxu0 %v5900
        %7302 = vmatpush1.msra.mxu0 %v5899
        %7303 = vmatprep.subr.mxu0 %v5917
        %7304 = vmatpush1.msra.mxu0 %v5916
        %7305 = vmatprep.subr.mxu0 %v5934
        %7306 = vmatpush1.msra.mxu0 %v5933
        %7307 = vmatprep.subr.mxu0 %v5951
        %7308 = vmatpush1.msra.mxu0 %v5950
        %7309 = vmatprep.subr.mxu0 %v5968
        %7310 = vmatpush1.msra.mxu0 %v5967
        %7311 = vmatprep.subr.mxu0 %v5985
        %7312 = vmatpush1.msra.mxu0 %v5984
        %7313 = vmatprep.mubr.f32.mxu0 %v4887
        %7314 = vmatmul.mubr.f32.gmra.mrb[0].mxu0 %v4886
        %v7315 = vpop.f32.mrb[0].mxu0
        %v7316 = vadd.f32 %v7245, %v7315
        %v7317 = vpop.f32.mrb[0].mxu0
        %v7318 = vadd.f32 %v7247, %v7317
        %7319 = vdwg.mxu0
        %7320 = vmatprep.subr.mxu0 %v6002
        %7321 = vmatpush1.msra.mxu0 %v6001
        %7322 = vmatprep.subr.mxu0 %v6019
        %7323 = vmatpush1.msra.mxu0 %v6018
        %7324 = vmatprep.subr.mxu0 %v6036
        %7325 = vmatpush1.msra.mxu0 %v6035
        %7326 = vmatprep.subr.mxu0 %v6053
        %7327 = vmatpush1.msra.mxu0 %v6052
        %7328 = vmatprep.subr.mxu0 %v6070
        %7329 = vmatpush1.msra.mxu0 %v6069
        %7330 = vmatprep.subr.mxu0 %v6087
        %7331 = vmatpush1.msra.mxu0 %v6086
        %7332 = vmatprep.subr.mxu0 %v6104
        %7333 = vmatpush1.msra.mxu0 %v6103
        %7334 = vmatprep.subr.mxu0 %v6121
        %7335 = vmatpush1.msra.mxu0 %v6120
        %7336 = vmatprep.subr.mxu0 %v6138
        %7337 = vmatpush1.msra.mxu0 %v6137
        %7338 = vmatprep.subr.mxu0 %v6155
        %7339 = vmatpush1.msra.mxu0 %v6154
        %7340 = vmatprep.subr.mxu0 %v6172
        %7341 = vmatpush1.msra.mxu0 %v6171
        %7342 = vmatprep.subr.mxu0 %v6189
        %7343 = vmatpush1.msra.mxu0 %v6188
        %7344 = vmatprep.subr.mxu0 %v6206
        %7345 = vmatpush1.msra.mxu0 %v6205
        %7346 = vmatprep.subr.mxu0 %v6223
        %7347 = vmatpush1.msra.mxu0 %v6222
        %7348 = vmatprep.subr.mxu0 %v6240
        %7349 = vmatpush1.msra.mxu0 %v6239
        %7350 = vmatprep.subr.mxu0 %v6257
        %7351 = vmatpush1.msra.mxu0 %v6256
        %7352 = vmatprep.subr.mxu0 %v6274
        %7353 = vmatpush1.msra.mxu0 %v6273
        %7354 = vmatprep.subr.mxu0 %v6291
        %7355 = vmatpush1.msra.mxu0 %v6290
        %7356 = vmatprep.subr.mxu0 %v6308
        %7357 = vmatpush1.msra.mxu0 %v6307
        %7358 = vmatprep.subr.mxu0 %v6325
        %7359 = vmatpush1.msra.mxu0 %v6324
        %7360 = vmatprep.subr.mxu0 %v6342
        %7361 = vmatpush1.msra.mxu0 %v6341
        %7362 = vmatprep.subr.mxu0 %v6359
        %7363 = vmatpush1.msra.mxu0 %v6358
        %7364 = vmatprep.subr.mxu0 %v6376
        %7365 = vmatpush1.msra.mxu0 %v6375
        %7366 = vmatprep.subr.mxu0 %v6393
        %7367 = vmatpush1.msra.mxu0 %v6392
        %7368 = vmatprep.subr.mxu0 %v6410
        %7369 = vmatpush1.msra.mxu0 %v6409
        %7370 = vmatprep.subr.mxu0 %v6427
        %7371 = vmatpush1.msra.mxu0 %v6426
        %7372 = vmatprep.subr.mxu0 %v6444
        %7373 = vmatpush1.msra.mxu0 %v6443
        %7374 = vmatprep.subr.mxu0 %v6461
        %7375 = vmatpush1.msra.mxu0 %v6460
        %7376 = vmatprep.subr.mxu0 %v6478
        %7377 = vmatpush1.msra.mxu0 %v6477
        %7378 = vmatprep.subr.mxu0 %v6495
        %7379 = vmatpush1.msra.mxu0 %v6494
        %7380 = vmatprep.subr.mxu0 %v6512
        %7381 = vmatpush1.msra.mxu0 %v6511
        %7382 = vmatprep.subr.mxu0 %v6529
        %7383 = vmatpush1.msra.mxu0 %v6528
        %7384 = vmatprep.mubr.f32.mxu0 %v4889
        %7385 = vmatmul.mubr.f32.gmra.mrb[0].mxu0 %v4888
        %v7386 = vpop.f32.mrb[0].mxu0
        %v7387 = vadd.f32 %v7316, %v7386
        %v7388 = vpop.f32.mrb[0].mxu0
        %v7389 = vadd.f32 %v7318, %v7388
        %7390 = vdwg.mxu0
        %7391 = vmatprep.subr.mxu0 %v4916
        %7392 = vmatpush1.msra.mxu0 %v4915
        %7393 = vmatprep.subr.mxu0 %v4933
        %7394 = vmatpush1.msra.mxu0 %v4932
        %7395 = vmatprep.subr.mxu0 %v4950
        %7396 = vmatpush1.msra.mxu0 %v4949
        %7397 = vmatprep.subr.mxu0 %v4967
        %7398 = vmatpush1.msra.mxu0 %v4966
        %7399 = vmatprep.subr.mxu0 %v4984
        %7400 = vmatpush1.msra.mxu0 %v4983
        %7401 = vmatprep.subr.mxu0 %v5001
        %7402 = vmatpush1.msra.mxu0 %v5000
        %7403 = vmatprep.subr.mxu0 %v5018
        %7404 = vmatpush1.msra.mxu0 %v5017
        %7405 = vmatprep.subr.mxu0 %v5035
        %7406 = vmatpush1.msra.mxu0 %v5034
        %7407 = vmatprep.subr.mxu0 %v5052
        %7408 = vmatpush1.msra.mxu0 %v5051
        %7409 = vmatprep.subr.mxu0 %v5069
        %7410 = vmatpush1.msra.mxu0 %v5068
        %7411 = vmatprep.subr.mxu0 %v5086
        %7412 = vmatpush1.msra.mxu0 %v5085
        %7413 = vmatprep.subr.mxu0 %v5103
        %7414 = vmatpush1.msra.mxu0 %v5102
        %7415 = vmatprep.subr.mxu0 %v5120
        %7416 = vmatpush1.msra.mxu0 %v5119
        %7417 = vmatprep.subr.mxu0 %v5137
        %7418 = vmatpush1.msra.mxu0 %v5136
        %7419 = vmatprep.subr.mxu0 %v5154
        %7420 = vmatpush1.msra.mxu0 %v5153
        %7421 = vmatprep.subr.mxu0 %v5171
        %7422 = vmatpush1.msra.mxu0 %v5170
        %7423 = vmatprep.subr.mxu0 %v5188
        %7424 = vmatpush1.msra.mxu0 %v5187
        %7425 = vmatprep.subr.mxu0 %v5205
        %7426 = vmatpush1.msra.mxu0 %v5204
        %7427 = vmatprep.subr.mxu0 %v5222
        %7428 = vmatpush1.msra.mxu0 %v5221
        %7429 = vmatprep.subr.mxu0 %v5239
        %7430 = vmatpush1.msra.mxu0 %v5238
        %7431 = vmatprep.subr.mxu0 %v5256
        %7432 = vmatpush1.msra.mxu0 %v5255
        %7433 = vmatprep.subr.mxu0 %v5273
        %7434 = vmatpush1.msra.mxu0 %v5272
        %7435 = vmatprep.subr.mxu0 %v5290
        %7436 = vmatpush1.msra.mxu0 %v5289
        %7437 = vmatprep.subr.mxu0 %v5307
        %7438 = vmatpush1.msra.mxu0 %v5306
        %7439 = vmatprep.subr.mxu0 %v5324
        %7440 = vmatpush1.msra.mxu0 %v5323
        %7441 = vmatprep.subr.mxu0 %v5341
        %7442 = vmatpush1.msra.mxu0 %v5340
        %7443 = vmatprep.subr.mxu0 %v5358
        %7444 = vmatpush1.msra.mxu0 %v5357
        %7445 = vmatprep.subr.mxu0 %v5375
        %7446 = vmatpush1.msra.mxu0 %v5374
        %7447 = vmatprep.subr.mxu0 %v5392
        %7448 = vmatpush1.msra.mxu0 %v5391
        %7449 = vmatprep.subr.mxu0 %v5409
        %7450 = vmatpush1.msra.mxu0 %v5408
        %7451 = vmatprep.subr.mxu0 %v5426
        %7452 = vmatpush1.msra.mxu0 %v5425
        %7453 = vmatprep.subr.mxu0 %v5443
        %7454 = vmatpush1.msra.mxu0 %v5442
        %7455 = vmatprep.mubr.f32.mxu0 %v4885
        %7456 = vmatmul.mubr.f32.gmra.mrb[0].mxu0 %v4884
        %v7457 = vpop.f32.mrb[0].mxu0
        %v7458 = vadd.f32 0.0, %v7457
        %v7459 = vpop.f32.mrb[0].mxu0
        %v7460 = vadd.f32 0.0, %v7459
        %7461 = vdwg.mxu0
        %7462 = vmatprep.subr.mxu0 %v5460
        %7463 = vmatpush1.msra.mxu0 %v5459
        %7464 = vmatprep.subr.mxu0 %v5477
        %7465 = vmatpush1.msra.mxu0 %v5476
        %7466 = vmatprep.subr.mxu0 %v5494
        %7467 = vmatpush1.msra.mxu0 %v5493
        %7468 = vmatprep.subr.mxu0 %v5511
        %7469 = vmatpush1.msra.mxu0 %v5510
        %7470 = vmatprep.subr.mxu0 %v5528
        %7471 = vmatpush1.msra.mxu0 %v5527
        %7472 = vmatprep.subr.mxu0 %v5545
        %7473 = vmatpush1.msra.mxu0 %v5544
        %7474 = vmatprep.subr.mxu0 %v5562
        %7475 = vmatpush1.msra.mxu0 %v5561
        %7476 = vmatprep.subr.mxu0 %v5579
        %7477 = vmatpush1.msra.mxu0 %v5578
        %7478 = vmatprep.subr.mxu0 %v5596
        %7479 = vmatpush1.msra.mxu0 %v5595
        %7480 = vmatprep.subr.mxu0 %v5613
        %7481 = vmatpush1.msra.mxu0 %v5612
        %7482 = vmatprep.subr.mxu0 %v5630
        %7483 = vmatpush1.msra.mxu0 %v5629
        %7484 = vmatprep.subr.mxu0 %v5647
        %7485 = vmatpush1.msra.mxu0 %v5646
        %7486 = vmatprep.subr.mxu0 %v5664
        %7487 = vmatpush1.msra.mxu0 %v5663
        %7488 = vmatprep.subr.mxu0 %v5681
        %7489 = vmatpush1.msra.mxu0 %v5680
        %7490 = vmatprep.subr.mxu0 %v5698
        %7491 = vmatpush1.msra.mxu0 %v5697
        %7492 = vmatprep.subr.mxu0 %v5715
        %7493 = vmatpush1.msra.mxu0 %v5714
        %7494 = vmatprep.subr.mxu0 %v5732
        %7495 = vmatpush1.msra.mxu0 %v5731
        %7496 = vmatprep.subr.mxu0 %v5749
        %7497 = vmatpush1.msra.mxu0 %v5748
        %7498 = vmatprep.subr.mxu0 %v5766
        %7499 = vmatpush1.msra.mxu0 %v5765
        %7500 = vmatprep.subr.mxu0 %v5783
        %7501 = vmatpush1.msra.mxu0 %v5782
        %7502 = vmatprep.subr.mxu0 %v5800
        %7503 = vmatpush1.msra.mxu0 %v5799
        %7504 = vmatprep.subr.mxu0 %v5817
        %7505 = vmatpush1.msra.mxu0 %v5816
        %7506 = vmatprep.subr.mxu0 %v5834
        %7507 = vmatpush1.msra.mxu0 %v5833
        %7508 = vmatprep.subr.mxu0 %v5851
        %7509 = vmatpush1.msra.mxu0 %v5850
        %7510 = vmatprep.subr.mxu0 %v5868
        %7511 = vmatpush1.msra.mxu0 %v5867
        %7512 = vmatprep.subr.mxu0 %v5885
        %7513 = vmatpush1.msra.mxu0 %v5884
        %7514 = vmatprep.subr.mxu0 %v5902
        %7515 = vmatpush1.msra.mxu0 %v5901
        %7516 = vmatprep.subr.mxu0 %v5919
        %7517 = vmatpush1.msra.mxu0 %v5918
        %7518 = vmatprep.subr.mxu0 %v5936
        %7519 = vmatpush1.msra.mxu0 %v5935
        %7520 = vmatprep.subr.mxu0 %v5953
        %7521 = vmatpush1.msra.mxu0 %v5952
        %7522 = vmatprep.subr.mxu0 %v5970
        %7523 = vmatpush1.msra.mxu0 %v5969
        %7524 = vmatprep.subr.mxu0 %v5987
        %7525 = vmatpush1.msra.mxu0 %v5986
        %7526 = vmatprep.mubr.f32.mxu0 %v4887
        %7527 = vmatmul.mubr.f32.gmra.mrb[0].mxu0 %v4886
        %v7528 = vpop.f32.mrb[0].mxu0
        %v7529 = vadd.f32 %v7458, %v7528
        %v7530 = vpop.f32.mrb[0].mxu0
        %v7531 = vadd.f32 %v7460, %v7530
        %7532 = vdwg.mxu0
        %7533 = vmatprep.subr.mxu0 %v6004
        %7534 = vmatpush1.msra.mxu0 %v6003
        %7535 = vmatprep.subr.mxu0 %v6021
        %7536 = vmatpush1.msra.mxu0 %v6020
        %7537 = vmatprep.subr.mxu0 %v6038
        %7538 = vmatpush1.msra.mxu0 %v6037
        %7539 = vmatprep.subr.mxu0 %v6055
        %7540 = vmatpush1.msra.mxu0 %v6054
        %7541 = vmatprep.subr.mxu0 %v6072
        %7542 = vmatpush1.msra.mxu0 %v6071
        %7543 = vmatprep.subr.mxu0 %v6089
        %7544 = vmatpush1.msra.mxu0 %v6088
        %7545 = vmatprep.subr.mxu0 %v6106
        %7546 = vmatpush1.msra.mxu0 %v6105
        %7547 = vmatprep.subr.mxu0 %v6123
        %7548 = vmatpush1.msra.mxu0 %v6122
        %7549 = vmatprep.subr.mxu0 %v6140
        %7550 = vmatpush1.msra.mxu0 %v6139
        %7551 = vmatprep.subr.mxu0 %v6157
        %7552 = vmatpush1.msra.mxu0 %v6156
        %7553 = vmatprep.subr.mxu0 %v6174
        %7554 = vmatpush1.msra.mxu0 %v6173
        %7555 = vmatprep.subr.mxu0 %v6191
        %7556 = vmatpush1.msra.mxu0 %v6190
        %7557 = vmatprep.subr.mxu0 %v6208
        %7558 = vmatpush1.msra.mxu0 %v6207
        %7559 = vmatprep.subr.mxu0 %v6225
        %7560 = vmatpush1.msra.mxu0 %v6224
        %7561 = vmatprep.subr.mxu0 %v6242
        %7562 = vmatpush1.msra.mxu0 %v6241
        %7563 = vmatprep.subr.mxu0 %v6259
        %7564 = vmatpush1.msra.mxu0 %v6258
        %7565 = vmatprep.subr.mxu0 %v6276
        %7566 = vmatpush1.msra.mxu0 %v6275
        %7567 = vmatprep.subr.mxu0 %v6293
        %7568 = vmatpush1.msra.mxu0 %v6292
        %7569 = vmatprep.subr.mxu0 %v6310
        %7570 = vmatpush1.msra.mxu0 %v6309
        %7571 = vmatprep.subr.mxu0 %v6327
        %7572 = vmatpush1.msra.mxu0 %v6326
        %7573 = vmatprep.subr.mxu0 %v6344
        %7574 = vmatpush1.msra.mxu0 %v6343
        %7575 = vmatprep.subr.mxu0 %v6361
        %7576 = vmatpush1.msra.mxu0 %v6360
        %7577 = vmatprep.subr.mxu0 %v6378
        %7578 = vmatpush1.msra.mxu0 %v6377
        %7579 = vmatprep.subr.mxu0 %v6395
        %7580 = vmatpush1.msra.mxu0 %v6394
        %7581 = vmatprep.subr.mxu0 %v6412
        %7582 = vmatpush1.msra.mxu0 %v6411
        %7583 = vmatprep.subr.mxu0 %v6429
        %7584 = vmatpush1.msra.mxu0 %v6428
        %7585 = vmatprep.subr.mxu0 %v6446
        %7586 = vmatpush1.msra.mxu0 %v6445
        %7587 = vmatprep.subr.mxu0 %v6463
        %7588 = vmatpush1.msra.mxu0 %v6462
        %7589 = vmatprep.subr.mxu0 %v6480
        %7590 = vmatpush1.msra.mxu0 %v6479
        %7591 = vmatprep.subr.mxu0 %v6497
        %7592 = vmatpush1.msra.mxu0 %v6496
        %7593 = vmatprep.subr.mxu0 %v6514
        %7594 = vmatpush1.msra.mxu0 %v6513
        %7595 = vmatprep.subr.mxu0 %v6531
        %7596 = vmatpush1.msra.mxu0 %v6530
        %7597 = vmatprep.mubr.f32.mxu0 %v4889
        %7598 = vmatmul.mubr.f32.gmra.mrb[0].mxu0 %v4888
        %v7599 = vpop.f32.mrb[0].mxu0
        %v7600 = vadd.f32 %v7529, %v7599
        %v7601 = vpop.f32.mrb[0].mxu0
        %v7602 = vadd.f32 %v7531, %v7601
        %7603 = vdwg.mxu0
        %7604 = vmatprep.subr.mxu0 %v4918
        %7605 = vmatpush1.msra.mxu0 %v4917
        %7606 = vmatprep.subr.mxu0 %v4935
        %7607 = vmatpush1.msra.mxu0 %v4934
        %7608 = vmatprep.subr.mxu0 %v4952
        %7609 = vmatpush1.msra.mxu0 %v4951
        %7610 = vmatprep.subr.mxu0 %v4969
        %7611 = vmatpush1.msra.mxu0 %v4968
        %7612 = vmatprep.subr.mxu0 %v4986
        %7613 = vmatpush1.msra.mxu0 %v4985
        %7614 = vmatprep.subr.mxu0 %v5003
        %7615 = vmatpush1.msra.mxu0 %v5002
        %7616 = vmatprep.subr.mxu0 %v5020
        %7617 = vmatpush1.msra.mxu0 %v5019
        %7618 = vmatprep.subr.mxu0 %v5037
        %7619 = vmatpush1.msra.mxu0 %v5036
        %7620 = vmatprep.subr.mxu0 %v5054
        %7621 = vmatpush1.msra.mxu0 %v5053
        %7622 = vmatprep.subr.mxu0 %v5071
        %7623 = vmatpush1.msra.mxu0 %v5070
        %7624 = vmatprep.subr.mxu0 %v5088
        %7625 = vmatpush1.msra.mxu0 %v5087
        %7626 = vmatprep.subr.mxu0 %v5105
        %7627 = vmatpush1.msra.mxu0 %v5104
        %7628 = vmatprep.subr.mxu0 %v5122
        %7629 = vmatpush1.msra.mxu0 %v5121
        %7630 = vmatprep.subr.mxu0 %v5139
        %7631 = vmatpush1.msra.mxu0 %v5138
        %7632 = vmatprep.subr.mxu0 %v5156
        %7633 = vmatpush1.msra.mxu0 %v5155
        %7634 = vmatprep.subr.mxu0 %v5173
        %7635 = vmatpush1.msra.mxu0 %v5172
        %7636 = vmatprep.subr.mxu0 %v5190
        %7637 = vmatpush1.msra.mxu0 %v5189
        %7638 = vmatprep.subr.mxu0 %v5207
        %7639 = vmatpush1.msra.mxu0 %v5206
        %7640 = vmatprep.subr.mxu0 %v5224
        %7641 = vmatpush1.msra.mxu0 %v5223
        %7642 = vmatprep.subr.mxu0 %v5241
        %7643 = vmatpush1.msra.mxu0 %v5240
        %7644 = vmatprep.subr.mxu0 %v5258
        %7645 = vmatpush1.msra.mxu0 %v5257
        %7646 = vmatprep.subr.mxu0 %v5275
        %7647 = vmatpush1.msra.mxu0 %v5274
        %7648 = vmatprep.subr.mxu0 %v5292
        %7649 = vmatpush1.msra.mxu0 %v5291
        %7650 = vmatprep.subr.mxu0 %v5309
        %7651 = vmatpush1.msra.mxu0 %v5308
        %7652 = vmatprep.subr.mxu0 %v5326
        %7653 = vmatpush1.msra.mxu0 %v5325
        %7654 = vmatprep.subr.mxu0 %v5343
        %7655 = vmatpush1.msra.mxu0 %v5342
        %7656 = vmatprep.subr.mxu0 %v5360
        %7657 = vmatpush1.msra.mxu0 %v5359
        %7658 = vmatprep.subr.mxu0 %v5377
        %7659 = vmatpush1.msra.mxu0 %v5376
        %7660 = vmatprep.subr.mxu0 %v5394
        %7661 = vmatpush1.msra.mxu0 %v5393
        %7662 = vmatprep.subr.mxu0 %v5411
        %7663 = vmatpush1.msra.mxu0 %v5410
        %7664 = vmatprep.subr.mxu0 %v5428
        %7665 = vmatpush1.msra.mxu0 %v5427
        %7666 = vmatprep.subr.mxu0 %v5445
        %7667 = vmatpush1.msra.mxu0 %v5444
        %7668 = vmatprep.mubr.f32.mxu0 %v4885
        %7669 = vmatmul.mubr.f32.gmra.mrb[0].mxu0 %v4884
        %v7670 = vpop.f32.mrb[0].mxu0
        %v7671 = vadd.f32 0.0, %v7670
        %v7672 = vpop.f32.mrb[0].mxu0
        %v7673 = vadd.f32 0.0, %v7672
        %7674 = vdwg.mxu0
        %7675 = vmatprep.subr.mxu0 %v5462
        %7676 = vmatpush1.msra.mxu0 %v5461
        %7677 = vmatprep.subr.mxu0 %v5479
        %7678 = vmatpush1.msra.mxu0 %v5478
        %7679 = vmatprep.subr.mxu0 %v5496
        %7680 = vmatpush1.msra.mxu0 %v5495
        %7681 = vmatprep.subr.mxu0 %v5513
        %7682 = vmatpush1.msra.mxu0 %v5512
        %7683 = vmatprep.subr.mxu0 %v5530
        %7684 = vmatpush1.msra.mxu0 %v5529
        %7685 = vmatprep.subr.mxu0 %v5547
        %7686 = vmatpush1.msra.mxu0 %v5546
        %7687 = vmatprep.subr.mxu0 %v5564
        %7688 = vmatpush1.msra.mxu0 %v5563
        %7689 = vmatprep.subr.mxu0 %v5581
        %7690 = vmatpush1.msra.mxu0 %v5580
        %7691 = vmatprep.subr.mxu0 %v5598
        %7692 = vmatpush1.msra.mxu0 %v5597
        %7693 = vmatprep.subr.mxu0 %v5615
        %7694 = vmatpush1.msra.mxu0 %v5614
        %7695 = vmatprep.subr.mxu0 %v5632
        %7696 = vmatpush1.msra.mxu0 %v5631
        %7697 = vmatprep.subr.mxu0 %v5649
        %7698 = vmatpush1.msra.mxu0 %v5648
        %7699 = vmatprep.subr.mxu0 %v5666
        %7700 = vmatpush1.msra.mxu0 %v5665
        %7701 = vmatprep.subr.mxu0 %v5683
        %7702 = vmatpush1.msra.mxu0 %v5682
        %7703 = vmatprep.subr.mxu0 %v5700
        %7704 = vmatpush1.msra.mxu0 %v5699
        %7705 = vmatprep.subr.mxu0 %v5717
        %7706 = vmatpush1.msra.mxu0 %v5716
        %7707 = vmatprep.subr.mxu0 %v5734
        %7708 = vmatpush1.msra.mxu0 %v5733
        %7709 = vmatprep.subr.mxu0 %v5751
        %7710 = vmatpush1.msra.mxu0 %v5750
        %7711 = vmatprep.subr.mxu0 %v5768
        %7712 = vmatpush1.msra.mxu0 %v5767
        %7713 = vmatprep.subr.mxu0 %v5785
        %7714 = vmatpush1.msra.mxu0 %v5784
        %7715 = vmatprep.subr.mxu0 %v5802
        %7716 = vmatpush1.msra.mxu0 %v5801
        %7717 = vmatprep.subr.mxu0 %v5819
        %7718 = vmatpush1.msra.mxu0 %v5818
        %7719 = vmatprep.subr.mxu0 %v5836
        %7720 = vmatpush1.msra.mxu0 %v5835
        %7721 = vmatprep.subr.mxu0 %v5853
        %7722 = vmatpush1.msra.mxu0 %v5852
        %7723 = vmatprep.subr.mxu0 %v5870
        %7724 = vmatpush1.msra.mxu0 %v5869
        %7725 = vmatprep.subr.mxu0 %v5887
        %7726 = vmatpush1.msra.mxu0 %v5886
        %7727 = vmatprep.subr.mxu0 %v5904
        %7728 = vmatpush1.msra.mxu0 %v5903
        %7729 = vmatprep.subr.mxu0 %v5921
        %7730 = vmatpush1.msra.mxu0 %v5920
        %7731 = vmatprep.subr.mxu0 %v5938
        %7732 = vmatpush1.msra.mxu0 %v5937
        %7733 = vmatprep.subr.mxu0 %v5955
        %7734 = vmatpush1.msra.mxu0 %v5954
        %7735 = vmatprep.subr.mxu0 %v5972
        %7736 = vmatpush1.msra.mxu0 %v5971
        %7737 = vmatprep.subr.mxu0 %v5989
        %7738 = vmatpush1.msra.mxu0 %v5988
        %7739 = vmatprep.mubr.f32.mxu0 %v4887
        %7740 = vmatmul.mubr.f32.gmra.mrb[0].mxu0 %v4886
        %v7741 = vpop.f32.mrb[0].mxu0
        %v7742 = vadd.f32 %v7671, %v7741
        %v7743 = vpop.f32.mrb[0].mxu0
        %v7744 = vadd.f32 %v7673, %v7743
        %7745 = vdwg.mxu0
        %7746 = vmatprep.subr.mxu0 %v6006
        %7747 = vmatpush1.msra.mxu0 %v6005
        %7748 = vmatprep.subr.mxu0 %v6023
        %7749 = vmatpush1.msra.mxu0 %v6022
        %7750 = vmatprep.subr.mxu0 %v6040
        %7751 = vmatpush1.msra.mxu0 %v6039
        %7752 = vmatprep.subr.mxu0 %v6057
        %7753 = vmatpush1.msra.mxu0 %v6056
        %7754 = vmatprep.subr.mxu0 %v6074
        %7755 = vmatpush1.msra.mxu0 %v6073
        %7756 = vmatprep.subr.mxu0 %v6091
        %7757 = vmatpush1.msra.mxu0 %v6090
        %7758 = vmatprep.subr.mxu0 %v6108
        %7759 = vmatpush1.msra.mxu0 %v6107
        %7760 = vmatprep.subr.mxu0 %v6125
        %7761 = vmatpush1.msra.mxu0 %v6124
        %7762 = vmatprep.subr.mxu0 %v6142
        %7763 = vmatpush1.msra.mxu0 %v6141
        %7764 = vmatprep.subr.mxu0 %v6159
        %7765 = vmatpush1.msra.mxu0 %v6158
        %7766 = vmatprep.subr.mxu0 %v6176
        %7767 = vmatpush1.msra.mxu0 %v6175
        %7768 = vmatprep.subr.mxu0 %v6193
        %7769 = vmatpush1.msra.mxu0 %v6192
        %7770 = vmatprep.subr.mxu0 %v6210
        %7771 = vmatpush1.msra.mxu0 %v6209
        %7772 = vmatprep.subr.mxu0 %v6227
        %7773 = vmatpush1.msra.mxu0 %v6226
        %7774 = vmatprep.subr.mxu0 %v6244
        %7775 = vmatpush1.msra.mxu0 %v6243
        %7776 = vmatprep.subr.mxu0 %v6261
        %7777 = vmatpush1.msra.mxu0 %v6260
        %7778 = vmatprep.subr.mxu0 %v6278
        %7779 = vmatpush1.msra.mxu0 %v6277
        %7780 = vmatprep.subr.mxu0 %v6295
        %7781 = vmatpush1.msra.mxu0 %v6294
        %7782 = vmatprep.subr.mxu0 %v6312
        %7783 = vmatpush1.msra.mxu0 %v6311
        %7784 = vmatprep.subr.mxu0 %v6329
        %7785 = vmatpush1.msra.mxu0 %v6328
        %7786 = vmatprep.subr.mxu0 %v6346
        %7787 = vmatpush1.msra.mxu0 %v6345
        %7788 = vmatprep.subr.mxu0 %v6363
        %7789 = vmatpush1.msra.mxu0 %v6362
        %7790 = vmatprep.subr.mxu0 %v6380
        %7791 = vmatpush1.msra.mxu0 %v6379
        %7792 = vmatprep.subr.mxu0 %v6397
        %7793 = vmatpush1.msra.mxu0 %v6396
        %7794 = vmatprep.subr.mxu0 %v6414
        %7795 = vmatpush1.msra.mxu0 %v6413
        %7796 = vmatprep.subr.mxu0 %v6431
        %7797 = vmatpush1.msra.mxu0 %v6430
        %7798 = vmatprep.subr.mxu0 %v6448
        %7799 = vmatpush1.msra.mxu0 %v6447
        %7800 = vmatprep.subr.mxu0 %v6465
        %7801 = vmatpush1.msra.mxu0 %v6464
        %7802 = vmatprep.subr.mxu0 %v6482
        %7803 = vmatpush1.msra.mxu0 %v6481
        %7804 = vmatprep.subr.mxu0 %v6499
        %7805 = vmatpush1.msra.mxu0 %v6498
        %7806 = vmatprep.subr.mxu0 %v6516
        %7807 = vmatpush1.msra.mxu0 %v6515
        %7808 = vmatprep.subr.mxu0 %v6533
        %7809 = vmatpush1.msra.mxu0 %v6532
        %7810 = vmatprep.mubr.f32.mxu0 %v4889
        %7811 = vmatmul.mubr.f32.gmra.mrb[0].mxu0 %v4888
        %v7812 = vpop.f32.mrb[0].mxu0
        %v7813 = vadd.f32 %v7742, %v7812
        %v7814 = vpop.f32.mrb[0].mxu0
        %v7815 = vadd.f32 %v7744, %v7814
        %7816 = vdwg.mxu0
        %7817 = vmatprep.subr.mxu0 %v4920
        %7818 = vmatpush1.msra.mxu0 %v4919
        %7819 = vmatprep.subr.mxu0 %v4937
        %7820 = vmatpush1.msra.mxu0 %v4936
        %7821 = vmatprep.subr.mxu0 %v4954
        %7822 = vmatpush1.msra.mxu0 %v4953
        %7823 = vmatprep.subr.mxu0 %v4971
        %7824 = vmatpush1.msra.mxu0 %v4970
        %7825 = vmatprep.subr.mxu0 %v4988
        %7826 = vmatpush1.msra.mxu0 %v4987
        %7827 = vmatprep.subr.mxu0 %v5005
        %7828 = vmatpush1.msra.mxu0 %v5004
        %7829 = vmatprep.subr.mxu0 %v5022
        %7830 = vmatpush1.msra.mxu0 %v5021
        %7831 = vmatprep.subr.mxu0 %v5039
        %7832 = vmatpush1.msra.mxu0 %v5038
        %7833 = vmatprep.subr.mxu0 %v5056
        %7834 = vmatpush1.msra.mxu0 %v5055
        %7835 = vmatprep.subr.mxu0 %v5073
        %7836 = vmatpush1.msra.mxu0 %v5072
        %7837 = vmatprep.subr.mxu0 %v5090
        %7838 = vmatpush1.msra.mxu0 %v5089
        %7839 = vmatprep.subr.mxu0 %v5107
        %7840 = vmatpush1.msra.mxu0 %v5106
        %7841 = vmatprep.subr.mxu0 %v5124
        %7842 = vmatpush1.msra.mxu0 %v5123
        %7843 = vmatprep.subr.mxu0 %v5141
        %7844 = vmatpush1.msra.mxu0 %v5140
        %7845 = vmatprep.subr.mxu0 %v5158
        %7846 = vmatpush1.msra.mxu0 %v5157
        %7847 = vmatprep.subr.mxu0 %v5175
        %7848 = vmatpush1.msra.mxu0 %v5174
        %7849 = vmatprep.subr.mxu0 %v5192
        %7850 = vmatpush1.msra.mxu0 %v5191
        %7851 = vmatprep.subr.mxu0 %v5209
        %7852 = vmatpush1.msra.mxu0 %v5208
        %7853 = vmatprep.subr.mxu0 %v5226
        %7854 = vmatpush1.msra.mxu0 %v5225
        %7855 = vmatprep.subr.mxu0 %v5243
        %7856 = vmatpush1.msra.mxu0 %v5242
        %7857 = vmatprep.subr.mxu0 %v5260
        %7858 = vmatpush1.msra.mxu0 %v5259
        %7859 = vmatprep.subr.mxu0 %v5277
        %7860 = vmatpush1.msra.mxu0 %v5276
        %7861 = vmatprep.subr.mxu0 %v5294
        %7862 = vmatpush1.msra.mxu0 %v5293
        %7863 = vmatprep.subr.mxu0 %v5311
        %7864 = vmatpush1.msra.mxu0 %v5310
        %7865 = vmatprep.subr.mxu0 %v5328
        %7866 = vmatpush1.msra.mxu0 %v5327
        %7867 = vmatprep.subr.mxu0 %v5345
        %7868 = vmatpush1.msra.mxu0 %v5344
        %7869 = vmatprep.subr.mxu0 %v5362
        %7870 = vmatpush1.msra.mxu0 %v5361
        %7871 = vmatprep.subr.mxu0 %v5379
        %7872 = vmatpush1.msra.mxu0 %v5378
        %7873 = vmatprep.subr.mxu0 %v5396
        %7874 = vmatpush1.msra.mxu0 %v5395
        %7875 = vmatprep.subr.mxu0 %v5413
        %7876 = vmatpush1.msra.mxu0 %v5412
        %7877 = vmatprep.subr.mxu0 %v5430
        %7878 = vmatpush1.msra.mxu0 %v5429
        %7879 = vmatprep.subr.mxu0 %v5447
        %7880 = vmatpush1.msra.mxu0 %v5446
        %7881 = vmatprep.mubr.f32.mxu0 %v4885
        %7882 = vmatmul.mubr.f32.gmra.mrb[0].mxu0 %v4884
        %v7883 = vpop.f32.mrb[0].mxu0
        %v7884 = vadd.f32 0.0, %v7883
        %v7885 = vpop.f32.mrb[0].mxu0
        %v7886 = vadd.f32 0.0, %v7885
        %7887 = vdwg.mxu0
        %7888 = vmatprep.subr.mxu0 %v5464
        %7889 = vmatpush1.msra.mxu0 %v5463
        %7890 = vmatprep.subr.mxu0 %v5481
        %7891 = vmatpush1.msra.mxu0 %v5480
        %7892 = vmatprep.subr.mxu0 %v5498
        %7893 = vmatpush1.msra.mxu0 %v5497
        %7894 = vmatprep.subr.mxu0 %v5515
        %7895 = vmatpush1.msra.mxu0 %v5514
        %7896 = vmatprep.subr.mxu0 %v5532
        %7897 = vmatpush1.msra.mxu0 %v5531
        %7898 = vmatprep.subr.mxu0 %v5549
        %7899 = vmatpush1.msra.mxu0 %v5548
        %7900 = vmatprep.subr.mxu0 %v5566
        %7901 = vmatpush1.msra.mxu0 %v5565
        %7902 = vmatprep.subr.mxu0 %v5583
        %7903 = vmatpush1.msra.mxu0 %v5582
        %7904 = vmatprep.subr.mxu0 %v5600
        %7905 = vmatpush1.msra.mxu0 %v5599
        %7906 = vmatprep.subr.mxu0 %v5617
        %7907 = vmatpush1.msra.mxu0 %v5616
        %7908 = vmatprep.subr.mxu0 %v5634
        %7909 = vmatpush1.msra.mxu0 %v5633
        %7910 = vmatprep.subr.mxu0 %v5651
        %7911 = vmatpush1.msra.mxu0 %v5650
        %7912 = vmatprep.subr.mxu0 %v5668
        %7913 = vmatpush1.msra.mxu0 %v5667
        %7914 = vmatprep.subr.mxu0 %v5685
        %7915 = vmatpush1.msra.mxu0 %v5684
        %7916 = vmatprep.subr.mxu0 %v5702
        %7917 = vmatpush1.msra.mxu0 %v5701
        %7918 = vmatprep.subr.mxu0 %v5719
        %7919 = vmatpush1.msra.mxu0 %v5718
        %7920 = vmatprep.subr.mxu0 %v5736
        %7921 = vmatpush1.msra.mxu0 %v5735
        %7922 = vmatprep.subr.mxu0 %v5753
        %7923 = vmatpush1.msra.mxu0 %v5752
        %7924 = vmatprep.subr.mxu0 %v5770
        %7925 = vmatpush1.msra.mxu0 %v5769
        %7926 = vmatprep.subr.mxu0 %v5787
        %7927 = vmatpush1.msra.mxu0 %v5786
        %7928 = vmatprep.subr.mxu0 %v5804
        %7929 = vmatpush1.msra.mxu0 %v5803
        %7930 = vmatprep.subr.mxu0 %v5821
        %7931 = vmatpush1.msra.mxu0 %v5820
        %7932 = vmatprep.subr.mxu0 %v5838
        %7933 = vmatpush1.msra.mxu0 %v5837
        %7934 = vmatprep.subr.mxu0 %v5855
        %7935 = vmatpush1.msra.mxu0 %v5854
        %7936 = vmatprep.subr.mxu0 %v5872
        %7937 = vmatpush1.msra.mxu0 %v5871
        %7938 = vmatprep.subr.mxu0 %v5889
        %7939 = vmatpush1.msra.mxu0 %v5888
        %7940 = vmatprep.subr.mxu0 %v5906
        %7941 = vmatpush1.msra.mxu0 %v5905
        %7942 = vmatprep.subr.mxu0 %v5923
        %7943 = vmatpush1.msra.mxu0 %v5922
        %7944 = vmatprep.subr.mxu0 %v5940
        %7945 = vmatpush1.msra.mxu0 %v5939
        %7946 = vmatprep.subr.mxu0 %v5957
        %7947 = vmatpush1.msra.mxu0 %v5956
        %7948 = vmatprep.subr.mxu0 %v5974
        %7949 = vmatpush1.msra.mxu0 %v5973
        %7950 = vmatprep.subr.mxu0 %v5991
        %7951 = vmatpush1.msra.mxu0 %v5990
        %7952 = vmatprep.mubr.f32.mxu0 %v4887
        %7953 = vmatmul.mubr.f32.gmra.mrb[0].mxu0 %v4886
        %v7954 = vpop.f32.mrb[0].mxu0
        %v7955 = vadd.f32 %v7884, %v7954
        %v7956 = vpop.f32.mrb[0].mxu0
        %v7957 = vadd.f32 %v7886, %v7956
        %7958 = vdwg.mxu0
        %7959 = vmatprep.subr.mxu0 %v6008
        %7960 = vmatpush1.msra.mxu0 %v6007
        %7961 = vmatprep.subr.mxu0 %v6025
        %7962 = vmatpush1.msra.mxu0 %v6024
        %7963 = vmatprep.subr.mxu0 %v6042
        %7964 = vmatpush1.msra.mxu0 %v6041
        %7965 = vmatprep.subr.mxu0 %v6059
        %7966 = vmatpush1.msra.mxu0 %v6058
        %7967 = vmatprep.subr.mxu0 %v6076
        %7968 = vmatpush1.msra.mxu0 %v6075
        %7969 = vmatprep.subr.mxu0 %v6093
        %7970 = vmatpush1.msra.mxu0 %v6092
        %7971 = vmatprep.subr.mxu0 %v6110
        %7972 = vmatpush1.msra.mxu0 %v6109
        %7973 = vmatprep.subr.mxu0 %v6127
        %7974 = vmatpush1.msra.mxu0 %v6126
        %7975 = vmatprep.subr.mxu0 %v6144
        %7976 = vmatpush1.msra.mxu0 %v6143
        %7977 = vmatprep.subr.mxu0 %v6161
        %7978 = vmatpush1.msra.mxu0 %v6160
        %7979 = vmatprep.subr.mxu0 %v6178
        %7980 = vmatpush1.msra.mxu0 %v6177
        %7981 = vmatprep.subr.mxu0 %v6195
        %7982 = vmatpush1.msra.mxu0 %v6194
        %7983 = vmatprep.subr.mxu0 %v6212
        %7984 = vmatpush1.msra.mxu0 %v6211
        %7985 = vmatprep.subr.mxu0 %v6229
        %7986 = vmatpush1.msra.mxu0 %v6228
        %7987 = vmatprep.subr.mxu0 %v6246
        %7988 = vmatpush1.msra.mxu0 %v6245
        %7989 = vmatprep.subr.mxu0 %v6263
        %7990 = vmatpush1.msra.mxu0 %v6262
        %7991 = vmatprep.subr.mxu0 %v6280
        %7992 = vmatpush1.msra.mxu0 %v6279
        %7993 = vmatprep.subr.mxu0 %v6297
        %7994 = vmatpush1.msra.mxu0 %v6296
        %7995 = vmatprep.subr.mxu0 %v6314
        %7996 = vmatpush1.msra.mxu0 %v6313
        %7997 = vmatprep.subr.mxu0 %v6331
        %7998 = vmatpush1.msra.mxu0 %v6330
        %7999 = vmatprep.subr.mxu0 %v6348
        %8000 = vmatpush1.msra.mxu0 %v6347
        %8001 = vmatprep.subr.mxu0 %v6365
        %8002 = vmatpush1.msra.mxu0 %v6364
        %8003 = vmatprep.subr.mxu0 %v6382
        %8004 = vmatpush1.msra.mxu0 %v6381
        %8005 = vmatprep.subr.mxu0 %v6399
        %8006 = vmatpush1.msra.mxu0 %v6398
        %8007 = vmatprep.subr.mxu0 %v6416
        %8008 = vmatpush1.msra.mxu0 %v6415
        %8009 = vmatprep.subr.mxu0 %v6433
        %8010 = vmatpush1.msra.mxu0 %v6432
        %8011 = vmatprep.subr.mxu0 %v6450
        %8012 = vmatpush1.msra.mxu0 %v6449
        %8013 = vmatprep.subr.mxu0 %v6467
        %8014 = vmatpush1.msra.mxu0 %v6466
        %8015 = vmatprep.subr.mxu0 %v6484
        %8016 = vmatpush1.msra.mxu0 %v6483
        %8017 = vmatprep.subr.mxu0 %v6501
        %8018 = vmatpush1.msra.mxu0 %v6500
        %8019 = vmatprep.subr.mxu0 %v6518
        %8020 = vmatpush1.msra.mxu0 %v6517
        %8021 = vmatprep.subr.mxu0 %v6535
        %8022 = vmatpush1.msra.mxu0 %v6534
        %8023 = vmatprep.mubr.f32.mxu0 %v4889
        %8024 = vmatmul.mubr.f32.gmra.mrb[0].mxu0 %v4888
        %v8025 = vpop.f32.mrb[0].mxu0
        %v8026 = vadd.f32 %v7955, %v8025
        %v8027 = vpop.f32.mrb[0].mxu0
        %v8028 = vadd.f32 %v7957, %v8027
        %8029 = vdwg.mxu0
        %8030 = vmatprep.subr.mxu0 %v4922
        %8031 = vmatpush1.msra.mxu0 %v4921
        %8032 = vmatprep.subr.mxu0 %v4939
        %8033 = vmatpush1.msra.mxu0 %v4938
        %8034 = vmatprep.subr.mxu0 %v4956
        %8035 = vmatpush1.msra.mxu0 %v4955
        %8036 = vmatprep.subr.mxu0 %v4973
        %8037 = vmatpush1.msra.mxu0 %v4972
        %8038 = vmatprep.subr.mxu0 %v4990
        %8039 = vmatpush1.msra.mxu0 %v4989
        %8040 = vmatprep.subr.mxu0 %v5007
        %8041 = vmatpush1.msra.mxu0 %v5006
        %8042 = vmatprep.subr.mxu0 %v5024
        %8043 = vmatpush1.msra.mxu0 %v5023
        %8044 = vmatprep.subr.mxu0 %v5041
        %8045 = vmatpush1.msra.mxu0 %v5040
        %8046 = vmatprep.subr.mxu0 %v5058
        %8047 = vmatpush1.msra.mxu0 %v5057
        %8048 = vmatprep.subr.mxu0 %v5075
        %8049 = vmatpush1.msra.mxu0 %v5074
        %8050 = vmatprep.subr.mxu0 %v5092
        %8051 = vmatpush1.msra.mxu0 %v5091
        %8052 = vmatprep.subr.mxu0 %v5109
        %8053 = vmatpush1.msra.mxu0 %v5108
        %8054 = vmatprep.subr.mxu0 %v5126
        %8055 = vmatpush1.msra.mxu0 %v5125
        %8056 = vmatprep.subr.mxu0 %v5143
        %8057 = vmatpush1.msra.mxu0 %v5142
        %8058 = vmatprep.subr.mxu0 %v5160
        %8059 = vmatpush1.msra.mxu0 %v5159
        %8060 = vmatprep.subr.mxu0 %v5177
        %8061 = vmatpush1.msra.mxu0 %v5176
        %8062 = vmatprep.subr.mxu0 %v5194
        %8063 = vmatpush1.msra.mxu0 %v5193
        %8064 = vmatprep.subr.mxu0 %v5211
        %8065 = vmatpush1.msra.mxu0 %v5210
        %8066 = vmatprep.subr.mxu0 %v5228
        %8067 = vmatpush1.msra.mxu0 %v5227
        %8068 = vmatprep.subr.mxu0 %v5245
        %8069 = vmatpush1.msra.mxu0 %v5244
        %8070 = vmatprep.subr.mxu0 %v5262
        %8071 = vmatpush1.msra.mxu0 %v5261
        %8072 = vmatprep.subr.mxu0 %v5279
        %8073 = vmatpush1.msra.mxu0 %v5278
        %8074 = vmatprep.subr.mxu0 %v5296
        %8075 = vmatpush1.msra.mxu0 %v5295
        %8076 = vmatprep.subr.mxu0 %v5313
        %8077 = vmatpush1.msra.mxu0 %v5312
        %8078 = vmatprep.subr.mxu0 %v5330
        %8079 = vmatpush1.msra.mxu0 %v5329
        %8080 = vmatprep.subr.mxu0 %v5347
        %8081 = vmatpush1.msra.mxu0 %v5346
        %8082 = vmatprep.subr.mxu0 %v5364
        %8083 = vmatpush1.msra.mxu0 %v5363
        %8084 = vmatprep.subr.mxu0 %v5381
        %8085 = vmatpush1.msra.mxu0 %v5380
        %8086 = vmatprep.subr.mxu0 %v5398
        %8087 = vmatpush1.msra.mxu0 %v5397
        %8088 = vmatprep.subr.mxu0 %v5415
        %8089 = vmatpush1.msra.mxu0 %v5414
        %8090 = vmatprep.subr.mxu0 %v5432
        %8091 = vmatpush1.msra.mxu0 %v5431
        %8092 = vmatprep.subr.mxu0 %v5449
        %8093 = vmatpush1.msra.mxu0 %v5448
        %8094 = vmatprep.mubr.f32.mxu0 %v4885
        %8095 = vmatmul.mubr.f32.gmra.mrb[0].mxu0 %v4884
        %v8096 = vpop.f32.mrb[0].mxu0
        %v8097 = vadd.f32 0.0, %v8096
        %v8098 = vpop.f32.mrb[0].mxu0
        %v8099 = vadd.f32 0.0, %v8098
        %8100 = vdwg.mxu0
        %8101 = vmatprep.subr.mxu0 %v5466
        %8102 = vmatpush1.msra.mxu0 %v5465
        %8103 = vmatprep.subr.mxu0 %v5483
        %8104 = vmatpush1.msra.mxu0 %v5482
        %8105 = vmatprep.subr.mxu0 %v5500
        %8106 = vmatpush1.msra.mxu0 %v5499
        %8107 = vmatprep.subr.mxu0 %v5517
        %8108 = vmatpush1.msra.mxu0 %v5516
        %8109 = vmatprep.subr.mxu0 %v5534
        %8110 = vmatpush1.msra.mxu0 %v5533
        %8111 = vmatprep.subr.mxu0 %v5551
        %8112 = vmatpush1.msra.mxu0 %v5550
        %8113 = vmatprep.subr.mxu0 %v5568
        %8114 = vmatpush1.msra.mxu0 %v5567
        %8115 = vmatprep.subr.mxu0 %v5585
        %8116 = vmatpush1.msra.mxu0 %v5584
        %8117 = vmatprep.subr.mxu0 %v5602
        %8118 = vmatpush1.msra.mxu0 %v5601
        %8119 = vmatprep.subr.mxu0 %v5619
        %8120 = vmatpush1.msra.mxu0 %v5618
        %8121 = vmatprep.subr.mxu0 %v5636
        %8122 = vmatpush1.msra.mxu0 %v5635
        %8123 = vmatprep.subr.mxu0 %v5653
        %8124 = vmatpush1.msra.mxu0 %v5652
        %8125 = vmatprep.subr.mxu0 %v5670
        %8126 = vmatpush1.msra.mxu0 %v5669
        %8127 = vmatprep.subr.mxu0 %v5687
        %8128 = vmatpush1.msra.mxu0 %v5686
        %8129 = vmatprep.subr.mxu0 %v5704
        %8130 = vmatpush1.msra.mxu0 %v5703
        %8131 = vmatprep.subr.mxu0 %v5721
        %8132 = vmatpush1.msra.mxu0 %v5720
        %8133 = vmatprep.subr.mxu0 %v5738
        %8134 = vmatpush1.msra.mxu0 %v5737
        %8135 = vmatprep.subr.mxu0 %v5755
        %8136 = vmatpush1.msra.mxu0 %v5754
        %8137 = vmatprep.subr.mxu0 %v5772
        %8138 = vmatpush1.msra.mxu0 %v5771
        %8139 = vmatprep.subr.mxu0 %v5789
        %8140 = vmatpush1.msra.mxu0 %v5788
        %8141 = vmatprep.subr.mxu0 %v5806
        %8142 = vmatpush1.msra.mxu0 %v5805
        %8143 = vmatprep.subr.mxu0 %v5823
        %8144 = vmatpush1.msra.mxu0 %v5822
        %8145 = vmatprep.subr.mxu0 %v5840
        %8146 = vmatpush1.msra.mxu0 %v5839
        %8147 = vmatprep.subr.mxu0 %v5857
        %8148 = vmatpush1.msra.mxu0 %v5856
        %8149 = vmatprep.subr.mxu0 %v5874
        %8150 = vmatpush1.msra.mxu0 %v5873
        %8151 = vmatprep.subr.mxu0 %v5891
        %8152 = vmatpush1.msra.mxu0 %v5890
        %8153 = vmatprep.subr.mxu0 %v5908
        %8154 = vmatpush1.msra.mxu0 %v5907
        %8155 = vmatprep.subr.mxu0 %v5925
        %8156 = vmatpush1.msra.mxu0 %v5924
        %8157 = vmatprep.subr.mxu0 %v5942
        %8158 = vmatpush1.msra.mxu0 %v5941
        %8159 = vmatprep.subr.mxu0 %v5959
        %8160 = vmatpush1.msra.mxu0 %v5958
        %8161 = vmatprep.subr.mxu0 %v5976
        %8162 = vmatpush1.msra.mxu0 %v5975
        %8163 = vmatprep.subr.mxu0 %v5993
        %8164 = vmatpush1.msra.mxu0 %v5992
        %8165 = vmatprep.mubr.f32.mxu0 %v4887
        %8166 = vmatmul.mubr.f32.gmra.mrb[0].mxu0 %v4886
        %v8167 = vpop.f32.mrb[0].mxu0
        %v8168 = vadd.f32 %v8097, %v8167
        %v8169 = vpop.f32.mrb[0].mxu0
        %v8170 = vadd.f32 %v8099, %v8169
        %8171 = vdwg.mxu0
        %8172 = vmatprep.subr.mxu0 %v6010
        %8173 = vmatpush1.msra.mxu0 %v6009
        %8174 = vmatprep.subr.mxu0 %v6027
        %8175 = vmatpush1.msra.mxu0 %v6026
        %8176 = vmatprep.subr.mxu0 %v6044
        %8177 = vmatpush1.msra.mxu0 %v6043
        %8178 = vmatprep.subr.mxu0 %v6061
        %8179 = vmatpush1.msra.mxu0 %v6060
        %8180 = vmatprep.subr.mxu0 %v6078
        %8181 = vmatpush1.msra.mxu0 %v6077
        %8182 = vmatprep.subr.mxu0 %v6095
        %8183 = vmatpush1.msra.mxu0 %v6094
        %8184 = vmatprep.subr.mxu0 %v6112
        %8185 = vmatpush1.msra.mxu0 %v6111
        %8186 = vmatprep.subr.mxu0 %v6129
        %8187 = vmatpush1.msra.mxu0 %v6128
        %8188 = vmatprep.subr.mxu0 %v6146
        %8189 = vmatpush1.msra.mxu0 %v6145
        %8190 = vmatprep.subr.mxu0 %v6163
        %8191 = vmatpush1.msra.mxu0 %v6162
        %8192 = vmatprep.subr.mxu0 %v6180
        %8193 = vmatpush1.msra.mxu0 %v6179
        %8194 = vmatprep.subr.mxu0 %v6197
        %8195 = vmatpush1.msra.mxu0 %v6196
        %8196 = vmatprep.subr.mxu0 %v6214
        %8197 = vmatpush1.msra.mxu0 %v6213
        %8198 = vmatprep.subr.mxu0 %v6231
        %8199 = vmatpush1.msra.mxu0 %v6230
        %8200 = vmatprep.subr.mxu0 %v6248
        %8201 = vmatpush1.msra.mxu0 %v6247
        %8202 = vmatprep.subr.mxu0 %v6265
        %8203 = vmatpush1.msra.mxu0 %v6264
        %8204 = vmatprep.subr.mxu0 %v6282
        %8205 = vmatpush1.msra.mxu0 %v6281
        %8206 = vmatprep.subr.mxu0 %v6299
        %8207 = vmatpush1.msra.mxu0 %v6298
        %8208 = vmatprep.subr.mxu0 %v6316
        %8209 = vmatpush1.msra.mxu0 %v6315
        %8210 = vmatprep.subr.mxu0 %v6333
        %8211 = vmatpush1.msra.mxu0 %v6332
        %8212 = vmatprep.subr.mxu0 %v6350
        %8213 = vmatpush1.msra.mxu0 %v6349
        %8214 = vmatprep.subr.mxu0 %v6367
        %8215 = vmatpush1.msra.mxu0 %v6366
        %8216 = vmatprep.subr.mxu0 %v6384
        %8217 = vmatpush1.msra.mxu0 %v6383
        %8218 = vmatprep.subr.mxu0 %v6401
        %8219 = vmatpush1.msra.mxu0 %v6400
        %8220 = vmatprep.subr.mxu0 %v6418
        %8221 = vmatpush1.msra.mxu0 %v6417
        %8222 = vmatprep.subr.mxu0 %v6435
        %8223 = vmatpush1.msra.mxu0 %v6434
        %8224 = vmatprep.subr.mxu0 %v6452
        %8225 = vmatpush1.msra.mxu0 %v6451
        %8226 = vmatprep.subr.mxu0 %v6469
        %8227 = vmatpush1.msra.mxu0 %v6468
        %8228 = vmatprep.subr.mxu0 %v6486
        %8229 = vmatpush1.msra.mxu0 %v6485
        %8230 = vmatprep.subr.mxu0 %v6503
        %8231 = vmatpush1.msra.mxu0 %v6502
        %8232 = vmatprep.subr.mxu0 %v6520
        %8233 = vmatpush1.msra.mxu0 %v6519
        %8234 = vmatprep.subr.mxu0 %v6537
        %8235 = vmatpush1.msra.mxu0 %v6536
        %8236 = vmatprep.mubr.f32.mxu0 %v4889
        %8237 = vmatmul.mubr.f32.gmra.mrb[0].mxu0 %v4888
        %v8238 = vpop.f32.mrb[0].mxu0
        %v8239 = vadd.f32 %v8168, %v8238
        %v8240 = vpop.f32.mrb[0].mxu0
        %v8241 = vadd.f32 %v8170, %v8240
        %8242 = vdwg.mxu0
        %8243 = vmatprep.subr.mxu0 0.0
        %8244 = vmatpush1.msra.mxu0 %v4923
        %8245 = vmatprep.subr.mxu0 0.0
        %8246 = vmatpush1.msra.mxu0 %v4940
        %8247 = vmatprep.subr.mxu0 0.0
        %8248 = vmatpush1.msra.mxu0 %v4957
        %8249 = vmatprep.subr.mxu0 0.0
        %8250 = vmatpush1.msra.mxu0 %v4974
        %8251 = vmatprep.subr.mxu0 0.0
        %8252 = vmatpush1.msra.mxu0 %v4991
        %8253 = vmatprep.subr.mxu0 0.0
        %8254 = vmatpush1.msra.mxu0 %v5008
        %8255 = vmatprep.subr.mxu0 0.0
        %8256 = vmatpush1.msra.mxu0 %v5025
        %8257 = vmatprep.subr.mxu0 0.0
        %8258 = vmatpush1.msra.mxu0 %v5042
        %8259 = vmatprep.subr.mxu0 0.0
        %8260 = vmatpush1.msra.mxu0 %v5059
        %8261 = vmatprep.subr.mxu0 0.0
        %8262 = vmatpush1.msra.mxu0 %v5076
        %8263 = vmatprep.subr.mxu0 0.0
        %8264 = vmatpush1.msra.mxu0 %v5093
        %8265 = vmatprep.subr.mxu0 0.0
        %8266 = vmatpush1.msra.mxu0 %v5110
        %8267 = vmatprep.subr.mxu0 0.0
        %8268 = vmatpush1.msra.mxu0 %v5127
        %8269 = vmatprep.subr.mxu0 0.0
        %8270 = vmatpush1.msra.mxu0 %v5144
        %8271 = vmatprep.subr.mxu0 0.0
        %8272 = vmatpush1.msra.mxu0 %v5161
        %8273 = vmatprep.subr.mxu0 0.0
        %8274 = vmatpush1.msra.mxu0 %v5178
        %8275 = vmatprep.subr.mxu0 0.0
        %8276 = vmatpush1.msra.mxu0 %v5195
        %8277 = vmatprep.subr.mxu0 0.0
        %8278 = vmatpush1.msra.mxu0 %v5212
        %8279 = vmatprep.subr.mxu0 0.0
        %8280 = vmatpush1.msra.mxu0 %v5229
        %8281 = vmatprep.subr.mxu0 0.0
        %8282 = vmatpush1.msra.mxu0 %v5246
        %8283 = vmatprep.subr.mxu0 0.0
        %8284 = vmatpush1.msra.mxu0 %v5263
        %8285 = vmatprep.subr.mxu0 0.0
        %8286 = vmatpush1.msra.mxu0 %v5280
        %8287 = vmatprep.subr.mxu0 0.0
        %8288 = vmatpush1.msra.mxu0 %v5297
        %8289 = vmatprep.subr.mxu0 0.0
        %8290 = vmatpush1.msra.mxu0 %v5314
        %8291 = vmatprep.subr.mxu0 0.0
        %8292 = vmatpush1.msra.mxu0 %v5331
        %8293 = vmatprep.subr.mxu0 0.0
        %8294 = vmatpush1.msra.mxu0 %v5348
        %8295 = vmatprep.subr.mxu0 0.0
        %8296 = vmatpush1.msra.mxu0 %v5365
        %8297 = vmatprep.subr.mxu0 0.0
        %8298 = vmatpush1.msra.mxu0 %v5382
        %8299 = vmatprep.subr.mxu0 0.0
        %8300 = vmatpush1.msra.mxu0 %v5399
        %8301 = vmatprep.subr.mxu0 0.0
        %8302 = vmatpush1.msra.mxu0 %v5416
        %8303 = vmatprep.subr.mxu0 0.0
        %8304 = vmatpush1.msra.mxu0 %v5433
        %8305 = vmatprep.subr.mxu0 0.0
        %8306 = vmatpush1.msra.mxu0 %v5450
        %8307 = vmatprep.mubr.f32.mxu0 %v4885
        %8308 = vmatmul.mubr.f32.gmra.mrb[0].mxu0 %v4884
        %v8309 = vpop.f32.mrb[0].mxu0
        %v8310 = vadd.f32 0.0, %v8309
        %v8311 = vpop.f32.mrb[0].mxu0
        %8312 = vdwg.mxu0
        %8313 = vmatprep.subr.mxu0 0.0
        %8314 = vmatpush1.msra.mxu0 %v5467
        %8315 = vmatprep.subr.mxu0 0.0
        %8316 = vmatpush1.msra.mxu0 %v5484
        %8317 = vmatprep.subr.mxu0 0.0
        %8318 = vmatpush1.msra.mxu0 %v5501
        %8319 = vmatprep.subr.mxu0 0.0
        %8320 = vmatpush1.msra.mxu0 %v5518
        %8321 = vmatprep.subr.mxu0 0.0
        %8322 = vmatpush1.msra.mxu0 %v5535
        %8323 = vmatprep.subr.mxu0 0.0
        %8324 = vmatpush1.msra.mxu0 %v5552
        %8325 = vmatprep.subr.mxu0 0.0
        %8326 = vmatpush1.msra.mxu0 %v5569
        %8327 = vmatprep.subr.mxu0 0.0
        %8328 = vmatpush1.msra.mxu0 %v5586
        %8329 = vmatprep.subr.mxu0 0.0
        %8330 = vmatpush1.msra.mxu0 %v5603
        %8331 = vmatprep.subr.mxu0 0.0
        %8332 = vmatpush1.msra.mxu0 %v5620
        %8333 = vmatprep.subr.mxu0 0.0
        %8334 = vmatpush1.msra.mxu0 %v5637
        %8335 = vmatprep.subr.mxu0 0.0
        %8336 = vmatpush1.msra.mxu0 %v5654
        %8337 = vmatprep.subr.mxu0 0.0
        %8338 = vmatpush1.msra.mxu0 %v5671
        %8339 = vmatprep.subr.mxu0 0.0
        %8340 = vmatpush1.msra.mxu0 %v5688
        %8341 = vmatprep.subr.mxu0 0.0
        %8342 = vmatpush1.msra.mxu0 %v5705
        %8343 = vmatprep.subr.mxu0 0.0
        %8344 = vmatpush1.msra.mxu0 %v5722
        %8345 = vmatprep.subr.mxu0 0.0
        %8346 = vmatpush1.msra.mxu0 %v5739
        %8347 = vmatprep.subr.mxu0 0.0
        %8348 = vmatpush1.msra.mxu0 %v5756
        %8349 = vmatprep.subr.mxu0 0.0
        %8350 = vmatpush1.msra.mxu0 %v5773
        %8351 = vmatprep.subr.mxu0 0.0
        %8352 = vmatpush1.msra.mxu0 %v5790
        %8353 = vmatprep.subr.mxu0 0.0
        %8354 = vmatpush1.msra.mxu0 %v5807
        %8355 = vmatprep.subr.mxu0 0.0
        %8356 = vmatpush1.msra.mxu0 %v5824
        %8357 = vmatprep.subr.mxu0 0.0
        %8358 = vmatpush1.msra.mxu0 %v5841
        %8359 = vmatprep.subr.mxu0 0.0
        %8360 = vmatpush1.msra.mxu0 %v5858
        %8361 = vmatprep.subr.mxu0 0.0
        %8362 = vmatpush1.msra.mxu0 %v5875
        %8363 = vmatprep.subr.mxu0 0.0
        %8364 = vmatpush1.msra.mxu0 %v5892
        %8365 = vmatprep.subr.mxu0 0.0
        %8366 = vmatpush1.msra.mxu0 %v5909
        %8367 = vmatprep.subr.mxu0 0.0
        %8368 = vmatpush1.msra.mxu0 %v5926
        %8369 = vmatprep.subr.mxu0 0.0
        %8370 = vmatpush1.msra.mxu0 %v5943
        %8371 = vmatprep.subr.mxu0 0.0
        %8372 = vmatpush1.msra.mxu0 %v5960
        %8373 = vmatprep.subr.mxu0 0.0
        %8374 = vmatpush1.msra.mxu0 %v5977
        %8375 = vmatprep.subr.mxu0 0.0
        %8376 = vmatpush1.msra.mxu0 %v5994
        %8377 = vmatprep.mubr.f32.mxu0 %v4887
        %8378 = vmatmul.mubr.f32.gmra.mrb[0].mxu0 %v4886
        %v8379 = vpop.f32.mrb[0].mxu0
        %v8380 = vadd.f32 %v8310, %v8379
        %v8381 = vpop.f32.mrb[0].mxu0
        %8382 = vdwg.mxu0
        %8383 = vmatprep.subr.mxu0 0.0
        %8384 = vmatpush1.msra.mxu0 %v6011
        %8385 = vmatprep.subr.mxu0 0.0
        %8386 = vmatpush1.msra.mxu0 %v6028
        %8387 = vmatprep.subr.mxu0 0.0
        %8388 = vmatpush1.msra.mxu0 %v6045
        %8389 = vmatprep.subr.mxu0 0.0
        %8390 = vmatpush1.msra.mxu0 %v6062
        %8391 = vmatprep.subr.mxu0 0.0
        %8392 = vmatpush1.msra.mxu0 %v6079
        %8393 = vmatprep.subr.mxu0 0.0
        %8394 = vmatpush1.msra.mxu0 %v6096
        %8395 = vmatprep.subr.mxu0 0.0
        %8396 = vmatpush1.msra.mxu0 %v6113
        %8397 = vmatprep.subr.mxu0 0.0
        %8398 = vmatpush1.msra.mxu0 %v6130
        %8399 = vmatprep.subr.mxu0 0.0
        %8400 = vmatpush1.msra.mxu0 %v6147
        %8401 = vmatprep.subr.mxu0 0.0
        %8402 = vmatpush1.msra.mxu0 %v6164
        %8403 = vmatprep.subr.mxu0 0.0
        %8404 = vmatpush1.msra.mxu0 %v6181
        %8405 = vmatprep.subr.mxu0 0.0
        %8406 = vmatpush1.msra.mxu0 %v6198
        %8407 = vmatprep.subr.mxu0 0.0
        %8408 = vmatpush1.msra.mxu0 %v6215
        %8409 = vmatprep.subr.mxu0 0.0
        %8410 = vmatpush1.msra.mxu0 %v6232
        %8411 = vmatprep.subr.mxu0 0.0
        %8412 = vmatpush1.msra.mxu0 %v6249
        %8413 = vmatprep.subr.mxu0 0.0
        %8414 = vmatpush1.msra.mxu0 %v6266
        %8415 = vmatprep.subr.mxu0 0.0
        %8416 = vmatpush1.msra.mxu0 %v6283
        %8417 = vmatprep.subr.mxu0 0.0
        %8418 = vmatpush1.msra.mxu0 %v6300
        %8419 = vmatprep.subr.mxu0 0.0
        %8420 = vmatpush1.msra.mxu0 %v6317
        %8421 = vmatprep.subr.mxu0 0.0
        %8422 = vmatpush1.msra.mxu0 %v6334
        %8423 = vmatprep.subr.mxu0 0.0
        %8424 = vmatpush1.msra.mxu0 %v6351
        %8425 = vmatprep.subr.mxu0 0.0
        %8426 = vmatpush1.msra.mxu0 %v6368
        %8427 = vmatprep.subr.mxu0 0.0
        %8428 = vmatpush1.msra.mxu0 %v6385
        %8429 = vmatprep.subr.mxu0 0.0
        %8430 = vmatpush1.msra.mxu0 %v6402
        %8431 = vmatprep.subr.mxu0 0.0
        %8432 = vmatpush1.msra.mxu0 %v6419
        %8433 = vmatprep.subr.mxu0 0.0
        %8434 = vmatpush1.msra.mxu0 %v6436
        %8435 = vmatprep.subr.mxu0 0.0
        %8436 = vmatpush1.msra.mxu0 %v6453
        %8437 = vmatprep.subr.mxu0 0.0
        %8438 = vmatpush1.msra.mxu0 %v6470
        %8439 = vmatprep.subr.mxu0 0.0
        %8440 = vmatpush1.msra.mxu0 %v6487
        %8441 = vmatprep.subr.mxu0 0.0
        %8442 = vmatpush1.msra.mxu0 %v6504
        %8443 = vmatprep.subr.mxu0 0.0
        %8444 = vmatpush1.msra.mxu0 %v6521
        %8445 = vmatprep.subr.mxu0 0.0
        %8446 = vmatpush1.msra.mxu0 %v6538
        %8447 = vmatprep.mubr.f32.mxu0 %v4889
        %8448 = vmatmul.mubr.f32.gmra.mrb[0].mxu0 %v4888
        %v8449 = vpop.f32.mrb[0].mxu0
        %v8450 = vadd.f32 %v8380, %v8449
        %v8451 = vpop.f32.mrb[0].mxu0
        %8452 = vdwg.mxu0
        %v8453 = vadd.f32 %v4890, %v6748
        %v8454 = vadd.f32 %v4891, %v6750
        %v8455 = vadd.f32 %v4892, %v6961
        %v8456 = vadd.f32 %v4893, %v6963
        %v8457 = vadd.f32 %v4894, %v7174
        %v8458 = vadd.f32 %v4895, %v7176
        %v8459 = vadd.f32 %v4896, %v7387
        %v8460 = vadd.f32 %v4897, %v7389
        %v8461 = vadd.f32 %v4898, %v7600
        %v8462 = vadd.f32 %v4899, %v7602
        %v8463 = vadd.f32 %v4900, %v7813
        %v8464 = vadd.f32 %v4901, %v7815
        %v8465 = vadd.f32 %v4902, %v8026
        %v8466 = vadd.f32 %v4903, %v8028
        %v8467 = vadd.f32 %v4904, %v8239
        %v8468 = vadd.f32 %v4905, %v8241
        %v8469 = vadd.f32 %v4906, %v8450
        %8470 = vst [vmem:[#allocation3] sm:$0xff] %v8453
        %8471 = vst [vmem:[#allocation3 + $0x8] sm:$0xff] %v8454
        %8472 = vst [vmem:[#allocation3 + $0x10] sm:$0xff] %v8455
        %8473 = vst [vmem:[#allocation3 + $0x18] sm:$0xff] %v8456
        %8474 = vst [vmem:[#allocation3 + $0x20] sm:$0xff] %v8457
        %8475 = vst [vmem:[#allocation3 + $0x28] sm:$0xff] %v8458
        %8476 = vst [vmem:[#allocation3 + $0x30] sm:$0xff] %v8459
        %8477 = vst [vmem:[#allocation3 + $0x38] sm:$0xff] %v8460
        %8478 = vst [vmem:[#allocation3 + $0x40] sm:$0xff] %v8461
        %8479 = vst [vmem:[#allocation3 + $0x48] sm:$0xff] %v8462
        %8480 = vst [vmem:[#allocation3 + $0x50] sm:$0xff] %v8463
        %8481 = vst [vmem:[#allocation3 + $0x58] sm:$0xff] %v8464
        %8482 = vst [vmem:[#allocation3 + $0x60] sm:$0xff] %v8465
        %8483 = vst [vmem:[#allocation3 + $0x68] sm:$0xff] %v8466
        %8484 = vst [vmem:[#allocation3 + $0x70] sm:$0xff] %v8467
        %8485 = vst [vmem:[#allocation3 + $0x78] sm:$0xff] %v8468
        %8486 = vst [vmem:[#allocation3 + $0x80] sm:$0xff] %v8469
        %p8487 = scmp.eq.s32.totalorder %s20, 10
        // Predicated region
        $region77: #{ae_rtm_corr_forward.3} parent=47 // pred_check
          %p8488 = pneg %p8487
        $region78: #{ae_rtm_corr_forward.3} parent=47 // pred_check_branch
          %8490 = sbr.rel (%p8488) target = $region80
        $region79: #{ae_rtm_corr_forward.3} parent=47 // pred_region
          %v8491 = vld [vmem:[#allocation3] sm:$0xff]
          %v8492 = vld [vmem:[#allocation3 + $0x8] sm:$0xff]
          %v8493 = vld [vmem:[#allocation3 + $0x10] sm:$0xff]
          %v8494 = vld [vmem:[#allocation3 + $0x18] sm:$0xff]
          %v8495 = vld [vmem:[#allocation3 + $0x20] sm:$0xff]
          %v8496 = vld [vmem:[#allocation3 + $0x28] sm:$0xff]
          %v8497 = vld [vmem:[#allocation3 + $0x30] sm:$0xff]
          %v8498 = vld [vmem:[#allocation3 + $0x38] sm:$0xff]
          %v8499 = vld [vmem:[#allocation3 + $0x40] sm:$0xff]
          %v8500 = vld [vmem:[#allocation3 + $0x48] sm:$0xff]
          %v8501 = vld [vmem:[#allocation3 + $0x50] sm:$0xff]
          %v8502 = vld [vmem:[#allocation3 + $0x58] sm:$0xff]
          %v8503 = vld [vmem:[#allocation3 + $0x60] sm:$0xff]
          %v8504 = vld [vmem:[#allocation3 + $0x68] sm:$0xff]
          %v8505 = vld [vmem:[#allocation3 + $0x70] sm:$0xff]
          %v8506 = vld [vmem:[#allocation3 + $0x78] sm:$0xff]
          %v8507 = vld [vmem:[#allocation3 + $0x80] sm:$0xff]
          %v8508 = vld [vmem:[#allocation11] sm:$0xff]
          %v8509 = vld [vmem:[#allocation11 + $0x8] sm:$0xff]
          %v8510 = vld [vmem:[#allocation11 + $0x10] sm:$0x1]
          %v8514 = vlaneseq
          %v8515 = vshrl.u32 %v8514, 7
          %v8516 = vsub.s32 0, %v8515
          %v8517 = vrot.slane %v8508, %v8516
          %v8518 = vlaneseq
          %v8519 = vshrl.u32 %v8518, 7
          %v8520 = vsub.s32 1, %v8519
          %v8521 = vrot.slane %v8508, %v8520
          %v8522 = vlaneseq
          %v8523 = vshrl.u32 %v8522, 7
          %v8524 = vsub.s32 2, %v8523
          %v8525 = vrot.slane %v8508, %v8524
          %v8526 = vlaneseq
          %v8527 = vshrl.u32 %v8526, 7
          %v8528 = vsub.s32 3, %v8527
          %v8529 = vrot.slane %v8508, %v8528
          %v8530 = vlaneseq
          %v8531 = vshrl.u32 %v8530, 7
          %v8532 = vsub.s32 4, %v8531
          %v8533 = vrot.slane %v8508, %v8532
          %v8534 = vlaneseq
          %v8535 = vshrl.u32 %v8534, 7
          %v8536 = vsub.s32 5, %v8535
          %v8537 = vrot.slane %v8508, %v8536
          %v8538 = vlaneseq
          %v8539 = vshrl.u32 %v8538, 7
          %v8540 = vsub.s32 6, %v8539
          %v8541 = vrot.slane %v8508, %v8540
          %v8542 = vlaneseq
          %v8543 = vshrl.u32 %v8542, 7
          %v8544 = vsub.s32 7, %v8543
          %v8545 = vrot.slane %v8508, %v8544
          %v8546 = vlaneseq
          %v8547 = vshrl.u32 %v8546, 7
          %v8548 = vsub.s32 0, %v8547
          %v8549 = vrot.slane %v8509, %v8548
          %v8550 = vlaneseq
          %v8551 = vshrl.u32 %v8550, 7
          %v8552 = vsub.s32 1, %v8551
          %v8553 = vrot.slane %v8509, %v8552
          %v8554 = vlaneseq
          %v8555 = vshrl.u32 %v8554, 7
          %v8556 = vsub.s32 2, %v8555
          %v8557 = vrot.slane %v8509, %v8556
          %v8558 = vlaneseq
          %v8559 = vshrl.u32 %v8558, 7
          %v8560 = vsub.s32 3, %v8559
          %v8561 = vrot.slane %v8509, %v8560
          %v8562 = vlaneseq
          %v8563 = vshrl.u32 %v8562, 7
          %v8564 = vsub.s32 4, %v8563
          %v8565 = vrot.slane %v8509, %v8564
          %v8566 = vlaneseq
          %v8567 = vshrl.u32 %v8566, 7
          %v8568 = vsub.s32 5, %v8567
          %v8569 = vrot.slane %v8509, %v8568
          %v8570 = vlaneseq
          %v8571 = vshrl.u32 %v8570, 7
          %v8572 = vsub.s32 6, %v8571
          %v8573 = vrot.slane %v8509, %v8572
          %v8574 = vlaneseq
          %v8575 = vshrl.u32 %v8574, 7
          %v8576 = vsub.s32 7, %v8575
          %v8577 = vrot.slane %v8509, %v8576
          %v8578 = vlaneseq
          %v8579 = vshrl.u32 %v8578, 7
          %v8580 = vsub.s32 0, %v8579
          %v8581 = vrot.slane %v8510, %v8580
          %v8599 = vadd.f32 %v8491, %v8517
          %v8600 = vadd.f32 %v8492, %v8521
          %v8601 = vadd.f32 %v8493, %v8525
          %v8602 = vadd.f32 %v8494, %v8529
          %v8603 = vadd.f32 %v8495, %v8533
          %v8604 = vadd.f32 %v8496, %v8537
          %v8605 = vadd.f32 %v8497, %v8541
          %v8606 = vadd.f32 %v8498, %v8545
          %v8607 = vadd.f32 %v8499, %v8549
          %v8608 = vadd.f32 %v8500, %v8553
          %v8609 = vadd.f32 %v8501, %v8557
          %v8610 = vadd.f32 %v8502, %v8561
          %v8611 = vadd.f32 %v8503, %v8565
          %v8612 = vadd.f32 %v8504, %v8569
          %v8613 = vadd.f32 %v8505, %v8573
          %v8614 = vadd.f32 %v8506, %v8577
          %v8615 = vadd.f32 %v8507, %v8581
          %8616 = vst [vmem:[%s7] sm:$0xff] %v8599
          %8617 = vst [vmem:[%s7 + $0x8] sm:$0xff] %v8600
          %8618 = vst [vmem:[%s7 + $0x10] sm:$0xff] %v8601
          %8619 = vst [vmem:[%s7 + $0x18] sm:$0xff] %v8602
          %8620 = vst [vmem:[%s7 + $0x20] sm:$0xff] %v8603
          %8621 = vst [vmem:[%s7 + $0x28] sm:$0xff] %v8604
          %8622 = vst [vmem:[%s7 + $0x30] sm:$0xff] %v8605
          %8623 = vst [vmem:[%s7 + $0x38] sm:$0xff] %v8606
          %8624 = vst [vmem:[%s7 + $0x40] sm:$0xff] %v8607
          %8625 = vst [vmem:[%s7 + $0x48] sm:$0xff] %v8608
          %8626 = vst [vmem:[%s7 + $0x50] sm:$0xff] %v8609
          %8627 = vst [vmem:[%s7 + $0x58] sm:$0xff] %v8610
          %8628 = vst [vmem:[%s7 + $0x60] sm:$0xff] %v8611
          %8629 = vst [vmem:[%s7 + $0x68] sm:$0xff] %v8612
          %8630 = vst [vmem:[%s7 + $0x70] sm:$0xff] %v8613
          %8631 = vst [vmem:[%s7 + $0x78] sm:$0xff] %v8614
          %8632 = vst [vmem:[%s7 + $0x80] sm:$0xff] %v8615
        $region80: #{ae_rtm_corr_forward.3} parent=47 // pred_fallthru
          _
        // Predicated region
        $region81: #{ae_rtm_corr_forward.3} parent=47 // pred_check
          %p8633 = pneg %p195
        $region82: #{ae_rtm_corr_forward.3} parent=47 // pred_check_branch
          %8635 = sbr.rel (%p8633) target = $region84
        $region83: #{ae_rtm_corr_forward.3} parent=47 // pred_region
          _
        $region84: #{ae_rtm_corr_forward.3} parent=47 // pred_fallthru
          _
        // Predicated region
        $region85: #{ae_rtm_corr_forward.3} parent=47 // pred_check
          %p8636 = pneg %p195
        $region86: #{ae_rtm_corr_forward.3} parent=47 // pred_check_branch
          %8638 = sbr.rel (%p8636) target = $region88
        $region87: #{ae_rtm_corr_forward.3} parent=47 // pred_region
          _
        $region88: #{ae_rtm_corr_forward.3} parent=47 // pred_fallthru
          _
      $region48: #{ae_rtm_corr_forward.3} parent=5 // pred_fallthru
        _
      %p8639 = scmp.le.s32.totalorder 2, %s15
      // Predicated region
      $region89: #{ae_rtm_corr_forward.3} parent=5 // pred_check
        %p8640 = pneg %p8639
      $region90: #{ae_rtm_corr_forward.3} parent=5 // pred_check_branch
        %8642 = sbr.rel (%p8640) target = $region92
      $region91: #{ae_rtm_corr_forward.3} parent=5 // pred_region
        %s8643 = ssub.s32 %s15, 2
      $region92: #{ae_rtm_corr_forward.3} parent=5 // pred_fallthru
        _
    $region6: #{ae_rtm_corr_forward.3} parent=1 // loop_footer
      %s19 = sadd.s32 1, %s15
    $region7: #{ae_rtm_corr_forward.3} parent=1 // loop_footer_branch
      %14 = sbr.rel target = $region3
    $region8: #{ae_rtm_corr_forward.3} parent=1 // loop_exit
      _
    %8644 = vsyncpa [#allocation5], 1
    %s8645 = scalar_lea.sflag [#allocation5], 1
    %8646 = vsyncpa %s8645, 1
    %8647 = vsyncpa [#allocation7], 1

</llo_original>
